<compile_context>
chip_gen: v7x
topology: tpu7x:2x2x1
jax: 0.10.0
libtpu: 0.0.40
codegen_flags: <defaults>
</compile_context>

<pallas_src>
import jax
import jax.numpy as jnp
from jax.experimental import pallas as pl
from jax.experimental.pallas import tpu as pltpu


def _make_basic_block_kernel(H, W, planes, dilation):
    d = dilation

    def kernel(xp_ref, w1_ref, s1_ref, b1_ref, w2_ref, s2_ref, b2_ref,
               o_ref, h1pad_ref):
        # xp_ref : (1, H+2d, W+2d, Cin)   padded input image (one batch element)
        # w1_ref : (9, Cin, planes)       conv1 weights, tap-major (kh*3+kw)
        # w2_ref : (9, planes, planes)    conv2 weights
        # s*_ref, b*_ref : (1, planes)    folded BatchNorm scale / bias (eval)
        # o_ref  : (1, H, W, planes)
        # h1pad_ref : VMEM scratch (H+2d, W+2d, planes) f32, zero border
        cin = xp_ref.shape[-1]

        @pl.when(pl.program_id(0) == 0)
        def _():
            # Zero once; border stays zero, interior is rewritten every step.
            h1pad_ref[...] = jnp.zeros(h1pad_ref.shape, h1pad_ref.dtype)

        xp = xp_ref[0]                                   # (H+2d, W+2d, Cin)

        # ---- conv1: 9 tap matmuls on the MXU, f32 accumulate ----
        acc = jnp.zeros((H * W, planes), jnp.float32)
        for kh in range(3):
            for kw in range(3):
                tap = xp[kh * d:kh * d + H, kw * d:kw * d + W, :]
                acc = acc + jnp.dot(tap.reshape(H * W, cin),
                                    w1_ref[kh * 3 + kw],
                                    preferred_element_type=jnp.float32)

        # ---- bn1 (folded) + relu ----
        h1 = jnp.maximum(acc * s1_ref[...] + b1_ref[...], 0.0)

        # stash activation with zero halo for conv2
        h1pad_ref[pl.ds(d, H), pl.ds(d, W), :] = h1.reshape(H, W, planes)

        # ---- conv2: 9 tap matmuls ----
        h1p = h1pad_ref[...]
        acc2 = jnp.zeros((H * W, planes), jnp.float32)
        for kh in range(3):
            for kw in range(3):
                tap = h1p[kh * d:kh * d + H, kw * d:kw * d + W, :]
                acc2 = acc2 + jnp.dot(tap.reshape(H * W, planes),
                                      w2_ref[kh * 3 + kw],
                                      preferred_element_type=jnp.float32)

        # ---- bn2 + identity residual + relu ----
        y = acc2 * s2_ref[...] + b2_ref[...]
        residual = xp[d:d + H, d:d + W, :].reshape(H * W, cin).astype(jnp.float32)
        y = jnp.maximum(y + residual, 0.0)

        o_ref[0] = y.reshape(H, W, planes).astype(o_ref.dtype)

    return kernel


def _fold_bn(gamma, beta, mean, var, eps):
    scale = gamma * jax.lax.rsqrt(var + eps)
    bias = beta - mean * scale
    return scale.reshape(1, -1), bias.reshape(1, -1)


def basic_block(x, w1, bn1, w2, bn2, *, stride=1, dilation=1, eps=1e-5):
    """Fused BasicBlock forward (eval mode).

    x  : (N, H, W, Cin)          NHWC
    w1 : (3, 3, Cin, planes)     HWIO
    w2 : (3, 3, planes, planes)  HWIO
    bn1, bn2 : tuples (gamma, beta, running_mean, running_var), each (planes,)
    """
    # TODO(synk): downsample path / stride>1 not implemented (identity residual only).
    assert stride == 1, "identity residual requires stride == 1"
    assert dilation >= 1
    N, H, W, cin = x.shape
    planes = w1.shape[-1]
    assert cin == planes, "identity residual requires inplanes == planes"
    d = dilation

    # TODO(synk): training-mode BatchNorm (batch statistics) not implemented.
    s1, b1 = _fold_bn(*bn1, eps=eps)
    s2, b2 = _fold_bn(*bn2, eps=eps)
    w1_t = w1.reshape(9, cin, planes)
    w2_t = w2.reshape(9, planes, planes)

    xp = jnp.pad(x, ((0, 0), (d, d), (d, d), (0, 0)))
    Hp, Wp = H + 2 * d, W + 2 * d

    kernel = _make_basic_block_kernel(H, W, planes, d)

    itemsize = x.dtype.itemsize
    cost = pl.CostEstimate(
        flops=2 * N * H * W * 9 * (cin * planes + planes * planes),
        transcendentals=0,
        bytes_accessed=(xp.size + N * H * W * planes) * itemsize
        + (w1_t.size + w2_t.size + 4 * planes) * 4,
    )

    out = pl.pallas_call(
        kernel,
        out_shape=jax.ShapeDtypeStruct((N, H, W, planes), x.dtype),
        grid_spec=pltpu.PrefetchScalarGridSpec(
            num_scalar_prefetch=0,
            grid=(N,),
            in_specs=[
                pl.BlockSpec((1, Hp, Wp, cin), lambda n: (n, 0, 0, 0)),   # padded x
                pl.BlockSpec((9, cin, planes), lambda n: (0, 0, 0)),      # W1 (resident)
                pl.BlockSpec((1, planes), lambda n: (0, 0)),              # bn1 scale
                pl.BlockSpec((1, planes), lambda n: (0, 0)),              # bn1 bias
                pl.BlockSpec((9, planes, planes), lambda n: (0, 0, 0)),   # W2 (resident)
                pl.BlockSpec((1, planes), lambda n: (0, 0)),              # bn2 scale
                pl.BlockSpec((1, planes), lambda n: (0, 0)),              # bn2 bias
            ],
            out_specs=pl.BlockSpec((1, H, W, planes), lambda n: (n, 0, 0, 0)),
            scratch_shapes=[pltpu.VMEM((Hp, Wp, planes), jnp.float32)],
        ),
        compiler_params=pltpu.CompilerParams(
            dimension_semantics=("parallel",),
            vmem_limit_bytes=32 * 1024 * 1024,
        ),
        cost_estimate=cost,
    )(xp, w1_t, s1, b1, w2_t, s2, b2)
    return out


def basic_block_ref(x, w1, bn1, w2, bn2, *, dilation=1, eps=1e-5):
    """Pure-JAX reference matching PyTorch BasicBlock.forward in eval mode."""
    def conv(inp, w):
        return jax.lax.conv_general_dilated(
            inp, w, window_strides=(1, 1),
            padding=[(dilation, dilation)] * 2,
            rhs_dilation=(dilation, dilation),
            dimension_numbers=("NHWC", "HWIO", "NHWC"),
            precision=jax.lax.Precision.HIGHEST,
        )

    def bn(h, params):
        g, b, m, v = params
        return (h - m) * (g * jax.lax.rsqrt(v + eps)) + b

    out = jax.nn.relu(bn(conv(x, w1), bn1))
    out = bn(conv(out, w2), bn2)
    return jax.nn.relu(out + x)


if __name__ == "__main__":
    # Small shapes consistent with the module; channels chosen lane-dense (128).
    N, H, W = 2, 16, 16
    planes = 128
    dilation = 1

    key = jax.random.PRNGKey(0)
    (kx, kw1, kw2, kg1, kb1, km1, kv1, kg2, kb2, km2, kv2) = jax.random.split(key, 11)

    x = jax.random.normal(kx, (N, H, W, planes), dtype=jnp.float32)

    fan_in = 9 * planes
    w1 = jax.random.normal(kw1, (3, 3, planes, planes), jnp.float32) * (1.0 / fan_in) ** 0.5
    w2 = jax.random.normal(kw2, (3, 3, planes, planes), jnp.float32) * (1.0 / fan_in) ** 0.5

    bn1 = (1.0 + 0.1 * jax.random.normal(kg1, (planes,), jnp.float32),
           0.1 * jax.random.normal(kb1, (planes,), jnp.float32),
           0.1 * jax.random.normal(km1, (planes,), jnp.float32),
           0.5 + jax.nn.softplus(jax.random.normal(kv1, (planes,), jnp.float32)))
    bn2 = (1.0 + 0.1 * jax.random.normal(kg2, (planes,), jnp.float32),
           0.1 * jax.random.normal(kb2, (planes,), jnp.float32),
           0.1 * jax.random.normal(km2, (planes,), jnp.float32),
           0.5 + jax.nn.softplus(jax.random.normal(kv2, (planes,), jnp.float32)))

    out = basic_block(x, w1, bn1, w2, bn2, stride=1, dilation=dilation)
    out = jax.block_until_ready(out)

    ref = basic_block_ref(x, w1, bn1, w2, bn2, dilation=dilation)
    assert out.shape == (N, H, W, planes)
    assert jnp.allclose(out, ref, atol=2e-3, rtol=2e-3), "Pallas output mismatch vs reference"

    print("KERNEL_OK")
</pallas_src>

<mosaic_0001>
module attributes {stable_mosaic.version = 11 : i64} {
  func.func @kernel(%arg0: i32, %arg1: memref<1x18x18x128xf32, #tpu.memory_space<vmem>>, %arg2: memref<9x128x128xf32, #tpu.memory_space<vmem>>, %arg3: memref<1x128xf32, #tpu.memory_space<vmem>>, %arg4: memref<1x128xf32, #tpu.memory_space<vmem>>, %arg5: memref<9x128x128xf32, #tpu.memory_space<vmem>>, %arg6: memref<1x128xf32, #tpu.memory_space<vmem>>, %arg7: memref<1x128xf32, #tpu.memory_space<vmem>>, %arg8: memref<1x16x16x128xf32, #tpu.memory_space<vmem>>, %arg9: memref<18x18x128xf32, #tpu.memory_space<vmem>>) attributes {dimension_semantics = [#tpu.dimension_semantics<parallel>], iteration_bounds = array<i64: 2>, scalar_prefetch = 0 : i64, scratch_operands = 1 : i64, tpu.core_type = #tpu.core_type<tc>, window_params = [{transform_indices = @transform_0, window_bounds = array<i64: 1, 18, 18, 128>}, {pipeline_mode = #tpu.pipeline_mode<synchronous>, transform_indices = @transform_1, window_bounds = array<i64: 9, 128, 128>}, {pipeline_mode = #tpu.pipeline_mode<synchronous>, transform_indices = @transform_2, window_bounds = array<i64: 1, 128>}, {pipeline_mode = #tpu.pipeline_mode<synchronous>, transform_indices = @transform_3, window_bounds = array<i64: 1, 128>}, {pipeline_mode = #tpu.pipeline_mode<synchronous>, transform_indices = @transform_4, window_bounds = array<i64: 9, 128, 128>}, {pipeline_mode = #tpu.pipeline_mode<synchronous>, transform_indices = @transform_5, window_bounds = array<i64: 1, 128>}, {pipeline_mode = #tpu.pipeline_mode<synchronous>, transform_indices = @transform_6, window_bounds = array<i64: 1, 128>}, {transform_indices = @transform_7, window_bounds = array<i64: 1, 16, 16, 128>}]} {
    %c0_i32 = arith.constant 0 : i32
    %0 = arith.cmpi eq, %arg0, %c0_i32 : i32
    %1 = arith.extui %0 : i1 to i32
    %c0_i32_0 = arith.constant 0 : i32
    %2 = arith.cmpi ne, %1, %c0_i32_0 : i32
    scf.if %2 {
      %cst_89 = arith.constant 0.000000e+00 : f32
      %141 = vector.broadcast %cst_89 : f32 to vector<18x18x128xf32>
      %c0_90 = arith.constant 0 : index
      %c0_91 = arith.constant 0 : index
      %c0_92 = arith.constant 0 : index
      %142 = vector.load %arg9[%c0_90, %c0_91, %c0_92] : memref<18x18x128xf32, #tpu.memory_space<vmem>>, vector<18x18x128xf32>
      tpu.vector_store %arg9[%c0_90, %c0_91, %c0_92], %141 {strides = array<i32>} : memref<18x18x128xf32, #tpu.memory_space<vmem>>, vector<18x18x128xf32>,
    } else {
    }
    %c0 = arith.constant 0 : index
    %c0_1 = arith.constant 0 : index
    %c0_2 = arith.constant 0 : index
    %c0_3 = arith.constant 0 : index
    %3 = vector.load %arg1[%c0, %c0_1, %c0_2, %c0_3] : memref<1x18x18x128xf32, #tpu.memory_space<vmem>>, vector<1x18x18x128xf32>
    %4 = vector.shape_cast %3 : vector<1x18x18x128xf32> to vector<18x18x128xf32>
    %cst = arith.constant 0.000000e+00 : f32
    %5 = vector.broadcast %cst : f32 to vector<256x128xf32>
    %6 = vector.extract_strided_slice %4 {offsets = [0, 0, 0], sizes = [16, 16, 128], strides = [1, 1, 1]} : vector<18x18x128xf32> to vector<16x16x128xf32>
    %7 = vector.shape_cast %6 : vector<16x16x128xf32> to vector<256x128xf32>
    %c0_4 = arith.constant 0 : index
    %c0_5 = arith.constant 0 : index
    %c0_6 = arith.constant 0 : index
    %8 = vector.load %arg2[%c0_4, %c0_5, %c0_6] : memref<9x128x128xf32, #tpu.memory_space<vmem>>, vector<1x128x128xf32>
    %9 = vector.shape_cast %8 : vector<1x128x128xf32> to vector<128x128xf32>
    %cst_7 = arith.constant dense<0.000000e+00> : vector<256x128xf32>
    %10 = tpu.matmul %7, %9, %cst_7 {dimension_numbers = #tpu.dot_dimension_numbers<[1], [0], [0], [1], [0, 0, 1, 1], [], []>} : vector<256x128xf32>, vector<128x128xf32>, vector<256x128xf32> -> vector<256x128xf32>
    %11 = arith.addf %5, %10 : vector<256x128xf32>
    %12 = vector.extract_strided_slice %4 {offsets = [0, 1, 0], sizes = [16, 16, 128], strides = [1, 1, 1]} : vector<18x18x128xf32> to vector<16x16x128xf32>
    %13 = vector.shape_cast %12 : vector<16x16x128xf32> to vector<256x128xf32>
    %c1 = arith.constant 1 : index
    %c0_8 = arith.constant 0 : index
    %c0_9 = arith.constant 0 : index
    %14 = vector.load %arg2[%c1, %c0_8, %c0_9] : memref<9x128x128xf32, #tpu.memory_space<vmem>>, vector<1x128x128xf32>
    %15 = vector.shape_cast %14 : vector<1x128x128xf32> to vector<128x128xf32>
    %cst_10 = arith.constant dense<0.000000e+00> : vector<256x128xf32>
    %16 = tpu.matmul %13, %15, %cst_10 {dimension_numbers = #tpu.dot_dimension_numbers<[1], [0], [0], [1], [0, 0, 1, 1], [], []>} : vector<256x128xf32>, vector<128x128xf32>, vector<256x128xf32> -> vector<256x128xf32>
    %17 = arith.addf %11, %16 : vector<256x128xf32>
    %18 = vector.extract_strided_slice %4 {offsets = [0, 2, 0], sizes = [16, 16, 128], strides = [1, 1, 1]} : vector<18x18x128xf32> to vector<16x16x128xf32>
    %19 = vector.shape_cast %18 : vector<16x16x128xf32> to vector<256x128xf32>
    %c2 = arith.constant 2 : index
    %c0_11 = arith.constant 0 : index
    %c0_12 = arith.constant 0 : index
    %20 = vector.load %arg2[%c2, %c0_11, %c0_12] : memref<9x128x128xf32, #tpu.memory_space<vmem>>, vector<1x128x128xf32>
    %21 = vector.shape_cast %20 : vector<1x128x128xf32> to vector<128x128xf32>
    %cst_13 = arith.constant dense<0.000000e+00> : vector<256x128xf32>
    %22 = tpu.matmul %19, %21, %cst_13 {dimension_numbers = #tpu.dot_dimension_numbers<[1], [0], [0], [1], [0, 0, 1, 1], [], []>} : vector<256x128xf32>, vector<128x128xf32>, vector<256x128xf32> -> vector<256x128xf32>
    %23 = arith.addf %17, %22 : vector<256x128xf32>
    %24 = vector.extract_strided_slice %4 {offsets = [1, 0, 0], sizes = [16, 16, 128], strides = [1, 1, 1]} : vector<18x18x128xf32> to vector<16x16x128xf32>
    %25 = vector.shape_cast %24 : vector<16x16x128xf32> to vector<256x128xf32>
    %c3 = arith.constant 3 : index
    %c0_14 = arith.constant 0 : index
    %c0_15 = arith.constant 0 : index
    %26 = vector.load %arg2[%c3, %c0_14, %c0_15] : memref<9x128x128xf32, #tpu.memory_space<vmem>>, vector<1x128x128xf32>
    %27 = vector.shape_cast %26 : vector<1x128x128xf32> to vector<128x128xf32>
    %cst_16 = arith.constant dense<0.000000e+00> : vector<256x128xf32>
    %28 = tpu.matmul %25, %27, %cst_16 {dimension_numbers = #tpu.dot_dimension_numbers<[1], [0], [0], [1], [0, 0, 1, 1], [], []>} : vector<256x128xf32>, vector<128x128xf32>, vector<256x128xf32> -> vector<256x128xf32>
    %29 = arith.addf %23, %28 : vector<256x128xf32>
    %30 = vector.extract_strided_slice %4 {offsets = [1, 1, 0], sizes = [16, 16, 128], strides = [1, 1, 1]} : vector<18x18x128xf32> to vector<16x16x128xf32>
    %31 = vector.shape_cast %30 : vector<16x16x128xf32> to vector<256x128xf32>
    %c4 = arith.constant 4 : index
    %c0_17 = arith.constant 0 : index
    %c0_18 = arith.constant 0 : index
    %32 = vector.load %arg2[%c4, %c0_17, %c0_18] : memref<9x128x128xf32, #tpu.memory_space<vmem>>, vector<1x128x128xf32>
    %33 = vector.shape_cast %32 : vector<1x128x128xf32> to vector<128x128xf32>
    %cst_19 = arith.constant dense<0.000000e+00> : vector<256x128xf32>
    %34 = tpu.matmul %31, %33, %cst_19 {dimension_numbers = #tpu.dot_dimension_numbers<[1], [0], [0], [1], [0, 0, 1, 1], [], []>} : vector<256x128xf32>, vector<128x128xf32>, vector<256x128xf32> -> vector<256x128xf32>
    %35 = arith.addf %29, %34 : vector<256x128xf32>
    %36 = vector.extract_strided_slice %4 {offsets = [1, 2, 0], sizes = [16, 16, 128], strides = [1, 1, 1]} : vector<18x18x128xf32> to vector<16x16x128xf32>
    %37 = vector.shape_cast %36 : vector<16x16x128xf32> to vector<256x128xf32>
    %c5 = arith.constant 5 : index
    %c0_20 = arith.constant 0 : index
    %c0_21 = arith.constant 0 : index
    %38 = vector.load %arg2[%c5, %c0_20, %c0_21] : memref<9x128x128xf32, #tpu.memory_space<vmem>>, vector<1x128x128xf32>
    %39 = vector.shape_cast %38 : vector<1x128x128xf32> to vector<128x128xf32>
    %cst_22 = arith.constant dense<0.000000e+00> : vector<256x128xf32>
    %40 = tpu.matmul %37, %39, %cst_22 {dimension_numbers = #tpu.dot_dimension_numbers<[1], [0], [0], [1], [0, 0, 1, 1], [], []>} : vector<256x128xf32>, vector<128x128xf32>, vector<256x128xf32> -> vector<256x128xf32>
    %41 = arith.addf %35, %40 : vector<256x128xf32>
    %42 = vector.extract_strided_slice %4 {offsets = [2, 0, 0], sizes = [16, 16, 128], strides = [1, 1, 1]} : vector<18x18x128xf32> to vector<16x16x128xf32>
    %43 = vector.shape_cast %42 : vector<16x16x128xf32> to vector<256x128xf32>
    %c6 = arith.constant 6 : index
    %c0_23 = arith.constant 0 : index
    %c0_24 = arith.constant 0 : index
    %44 = vector.load %arg2[%c6, %c0_23, %c0_24] : memref<9x128x128xf32, #tpu.memory_space<vmem>>, vector<1x128x128xf32>
    %45 = vector.shape_cast %44 : vector<1x128x128xf32> to vector<128x128xf32>
    %cst_25 = arith.constant dense<0.000000e+00> : vector<256x128xf32>
    %46 = tpu.matmul %43, %45, %cst_25 {dimension_numbers = #tpu.dot_dimension_numbers<[1], [0], [0], [1], [0, 0, 1, 1], [], []>} : vector<256x128xf32>, vector<128x128xf32>, vector<256x128xf32> -> vector<256x128xf32>
    %47 = arith.addf %41, %46 : vector<256x128xf32>
    %48 = vector.extract_strided_slice %4 {offsets = [2, 1, 0], sizes = [16, 16, 128], strides = [1, 1, 1]} : vector<18x18x128xf32> to vector<16x16x128xf32>
    %49 = vector.shape_cast %48 : vector<16x16x128xf32> to vector<256x128xf32>
    %c7 = arith.constant 7 : index
    %c0_26 = arith.constant 0 : index
    %c0_27 = arith.constant 0 : index
    %50 = vector.load %arg2[%c7, %c0_26, %c0_27] : memref<9x128x128xf32, #tpu.memory_space<vmem>>, vector<1x128x128xf32>
    %51 = vector.shape_cast %50 : vector<1x128x128xf32> to vector<128x128xf32>
    %cst_28 = arith.constant dense<0.000000e+00> : vector<256x128xf32>
    %52 = tpu.matmul %49, %51, %cst_28 {dimension_numbers = #tpu.dot_dimension_numbers<[1], [0], [0], [1], [0, 0, 1, 1], [], []>} : vector<256x128xf32>, vector<128x128xf32>, vector<256x128xf32> -> vector<256x128xf32>
    %53 = arith.addf %47, %52 : vector<256x128xf32>
    %54 = vector.extract_strided_slice %4 {offsets = [2, 2, 0], sizes = [16, 16, 128], strides = [1, 1, 1]} : vector<18x18x128xf32> to vector<16x16x128xf32>
    %55 = vector.shape_cast %54 : vector<16x16x128xf32> to vector<256x128xf32>
    %c8 = arith.constant 8 : index
    %c0_29 = arith.constant 0 : index
    %c0_30 = arith.constant 0 : index
    %56 = vector.load %arg2[%c8, %c0_29, %c0_30] : memref<9x128x128xf32, #tpu.memory_space<vmem>>, vector<1x128x128xf32>
    %57 = vector.shape_cast %56 : vector<1x128x128xf32> to vector<128x128xf32>
    %cst_31 = arith.constant dense<0.000000e+00> : vector<256x128xf32>
    %58 = tpu.matmul %55, %57, %cst_31 {dimension_numbers = #tpu.dot_dimension_numbers<[1], [0], [0], [1], [0, 0, 1, 1], [], []>} : vector<256x128xf32>, vector<128x128xf32>, vector<256x128xf32> -> vector<256x128xf32>
    %59 = arith.addf %53, %58 : vector<256x128xf32>
    %c0_32 = arith.constant 0 : index
    %c0_33 = arith.constant 0 : index
    %60 = vector.load %arg3[%c0_32, %c0_33] : memref<1x128xf32, #tpu.memory_space<vmem>>, vector<1x128xf32>
    %61 = vector.broadcast %60 : vector<1x128xf32> to vector<256x128xf32>
    %62 = arith.mulf %59, %61 : vector<256x128xf32>
    %c0_34 = arith.constant 0 : index
    %c0_35 = arith.constant 0 : index
    %63 = vector.load %arg4[%c0_34, %c0_35] : memref<1x128xf32, #tpu.memory_space<vmem>>, vector<1x128xf32>
    %64 = vector.broadcast %63 : vector<1x128xf32> to vector<256x128xf32>
    %65 = arith.addf %62, %64 : vector<256x128xf32>
    %cst_36 = arith.constant 0.000000e+00 : f32
    %66 = vector.broadcast %cst_36 : f32 to vector<256x128xf32>
    %67 = arith.maximumf %65, %66 : vector<256x128xf32>
    %68 = vector.shape_cast %67 : vector<256x128xf32> to vector<16x16x128xf32>
    %c1_37 = arith.constant 1 : index
    %c1_38 = arith.constant 1 : index
    %c0_39 = arith.constant 0 : index
    %69 = vector.load %arg9[%c1_37, %c1_38, %c0_39] : memref<18x18x128xf32, #tpu.memory_space<vmem>>, vector<16x16x128xf32>
    tpu.vector_store %arg9[%c1_37, %c1_38, %c0_39], %68 {strides = array<i32>} : memref<18x18x128xf32, #tpu.memory_space<vmem>>, vector<16x16x128xf32>,
    %c0_40 = arith.constant 0 : index
    %c0_41 = arith.constant 0 : index
    %c0_42 = arith.constant 0 : index
    %70 = vector.load %arg9[%c0_40, %c0_41, %c0_42] : memref<18x18x128xf32, #tpu.memory_space<vmem>>, vector<18x18x128xf32>
    %cst_43 = arith.constant 0.000000e+00 : f32
    %71 = vector.broadcast %cst_43 : f32 to vector<256x128xf32>
    %72 = vector.extract_strided_slice %70 {offsets = [0, 0, 0], sizes = [16, 16, 128], strides = [1, 1, 1]} : vector<18x18x128xf32> to vector<16x16x128xf32>
    %73 = vector.shape_cast %72 : vector<16x16x128xf32> to vector<256x128xf32>
    %c0_44 = arith.constant 0 : index
    %c0_45 = arith.constant 0 : index
    %c0_46 = arith.constant 0 : index
    %74 = vector.load %arg5[%c0_44, %c0_45, %c0_46] : memref<9x128x128xf32, #tpu.memory_space<vmem>>, vector<1x128x128xf32>
    %75 = vector.shape_cast %74 : vector<1x128x128xf32> to vector<128x128xf32>
    %cst_47 = arith.constant dense<0.000000e+00> : vector<256x128xf32>
    %76 = tpu.matmul %73, %75, %cst_47 {dimension_numbers = #tpu.dot_dimension_numbers<[1], [0], [0], [1], [0, 0, 1, 1], [], []>} : vector<256x128xf32>, vector<128x128xf32>, vector<256x128xf32> -> vector<256x128xf32>
    %77 = arith.addf %71, %76 : vector<256x128xf32>
    %78 = vector.extract_strided_slice %70 {offsets = [0, 1, 0], sizes = [16, 16, 128], strides = [1, 1, 1]} : vector<18x18x128xf32> to vector<16x16x128xf32>
    %79 = vector.shape_cast %78 : vector<16x16x128xf32> to vector<256x128xf32>
    %c1_48 = arith.constant 1 : index
    %c0_49 = arith.constant 0 : index
    %c0_50 = arith.constant 0 : index
    %80 = vector.load %arg5[%c1_48, %c0_49, %c0_50] : memref<9x128x128xf32, #tpu.memory_space<vmem>>, vector<1x128x128xf32>
    %81 = vector.shape_cast %80 : vector<1x128x128xf32> to vector<128x128xf32>
    %cst_51 = arith.constant dense<0.000000e+00> : vector<256x128xf32>
    %82 = tpu.matmul %79, %81, %cst_51 {dimension_numbers = #tpu.dot_dimension_numbers<[1], [0], [0], [1], [0, 0, 1, 1], [], []>} : vector<256x128xf32>, vector<128x128xf32>, vector<256x128xf32> -> vector<256x128xf32>
    %83 = arith.addf %77, %82 : vector<256x128xf32>
    %84 = vector.extract_strided_slice %70 {offsets = [0, 2, 0], sizes = [16, 16, 128], strides = [1, 1, 1]} : vector<18x18x128xf32> to vector<16x16x128xf32>
    %85 = vector.shape_cast %84 : vector<16x16x128xf32> to vector<256x128xf32>
    %c2_52 = arith.constant 2 : index
    %c0_53 = arith.constant 0 : index
    %c0_54 = arith.constant 0 : index
    %86 = vector.load %arg5[%c2_52, %c0_53, %c0_54] : memref<9x128x128xf32, #tpu.memory_space<vmem>>, vector<1x128x128xf32>
    %87 = vector.shape_cast %86 : vector<1x128x128xf32> to vector<128x128xf32>
    %cst_55 = arith.constant dense<0.000000e+00> : vector<256x128xf32>
    %88 = tpu.matmul %85, %87, %cst_55 {dimension_numbers = #tpu.dot_dimension_numbers<[1], [0], [0], [1], [0, 0, 1, 1], [], []>} : vector<256x128xf32>, vector<128x128xf32>, vector<256x128xf32> -> vector<256x128xf32>
    %89 = arith.addf %83, %88 : vector<256x128xf32>
    %90 = vector.extract_strided_slice %70 {offsets = [1, 0, 0], sizes = [16, 16, 128], strides = [1, 1, 1]} : vector<18x18x128xf32> to vector<16x16x128xf32>
    %91 = vector.shape_cast %90 : vector<16x16x128xf32> to vector<256x128xf32>
    %c3_56 = arith.constant 3 : index
    %c0_57 = arith.constant 0 : index
    %c0_58 = arith.constant 0 : index
    %92 = vector.load %arg5[%c3_56, %c0_57, %c0_58] : memref<9x128x128xf32, #tpu.memory_space<vmem>>, vector<1x128x128xf32>
    %93 = vector.shape_cast %92 : vector<1x128x128xf32> to vector<128x128xf32>
    %cst_59 = arith.constant dense<0.000000e+00> : vector<256x128xf32>
    %94 = tpu.matmul %91, %93, %cst_59 {dimension_numbers = #tpu.dot_dimension_numbers<[1], [0], [0], [1], [0, 0, 1, 1], [], []>} : vector<256x128xf32>, vector<128x128xf32>, vector<256x128xf32> -> vector<256x128xf32>
    %95 = arith.addf %89, %94 : vector<256x128xf32>
    %96 = vector.extract_strided_slice %70 {offsets = [1, 1, 0], sizes = [16, 16, 128], strides = [1, 1, 1]} : vector<18x18x128xf32> to vector<16x16x128xf32>
    %97 = vector.shape_cast %96 : vector<16x16x128xf32> to vector<256x128xf32>
    %c4_60 = arith.constant 4 : index
    %c0_61 = arith.constant 0 : index
    %c0_62 = arith.constant 0 : index
    %98 = vector.load %arg5[%c4_60, %c0_61, %c0_62] : memref<9x128x128xf32, #tpu.memory_space<vmem>>, vector<1x128x128xf32>
    %99 = vector.shape_cast %98 : vector<1x128x128xf32> to vector<128x128xf32>
    %cst_63 = arith.constant dense<0.000000e+00> : vector<256x128xf32>
    %100 = tpu.matmul %97, %99, %cst_63 {dimension_numbers = #tpu.dot_dimension_numbers<[1], [0], [0], [1], [0, 0, 1, 1], [], []>} : vector<256x128xf32>, vector<128x128xf32>, vector<256x128xf32> -> vector<256x128xf32>
    %101 = arith.addf %95, %100 : vector<256x128xf32>
    %102 = vector.extract_strided_slice %70 {offsets = [1, 2, 0], sizes = [16, 16, 128], strides = [1, 1, 1]} : vector<18x18x128xf32> to vector<16x16x128xf32>
    %103 = vector.shape_cast %102 : vector<16x16x128xf32> to vector<256x128xf32>
    %c5_64 = arith.constant 5 : index
    %c0_65 = arith.constant 0 : index
    %c0_66 = arith.constant 0 : index
    %104 = vector.load %arg5[%c5_64, %c0_65, %c0_66] : memref<9x128x128xf32, #tpu.memory_space<vmem>>, vector<1x128x128xf32>
    %105 = vector.shape_cast %104 : vector<1x128x128xf32> to vector<128x128xf32>
    %cst_67 = arith.constant dense<0.000000e+00> : vector<256x128xf32>
    %106 = tpu.matmul %103, %105, %cst_67 {dimension_numbers = #tpu.dot_dimension_numbers<[1], [0], [0], [1], [0, 0, 1, 1], [], []>} : vector<256x128xf32>, vector<128x128xf32>, vector<256x128xf32> -> vector<256x128xf32>
    %107 = arith.addf %101, %106 : vector<256x128xf32>
    %108 = vector.extract_strided_slice %70 {offsets = [2, 0, 0], sizes = [16, 16, 128], strides = [1, 1, 1]} : vector<18x18x128xf32> to vector<16x16x128xf32>
    %109 = vector.shape_cast %108 : vector<16x16x128xf32> to vector<256x128xf32>
    %c6_68 = arith.constant 6 : index
    %c0_69 = arith.constant 0 : index
    %c0_70 = arith.constant 0 : index
    %110 = vector.load %arg5[%c6_68, %c0_69, %c0_70] : memref<9x128x128xf32, #tpu.memory_space<vmem>>, vector<1x128x128xf32>
    %111 = vector.shape_cast %110 : vector<1x128x128xf32> to vector<128x128xf32>
    %cst_71 = arith.constant dense<0.000000e+00> : vector<256x128xf32>
    %112 = tpu.matmul %109, %111, %cst_71 {dimension_numbers = #tpu.dot_dimension_numbers<[1], [0], [0], [1], [0, 0, 1, 1], [], []>} : vector<256x128xf32>, vector<128x128xf32>, vector<256x128xf32> -> vector<256x128xf32>
    %113 = arith.addf %107, %112 : vector<256x128xf32>
    %114 = vector.extract_strided_slice %70 {offsets = [2, 1, 0], sizes = [16, 16, 128], strides = [1, 1, 1]} : vector<18x18x128xf32> to vector<16x16x128xf32>
    %115 = vector.shape_cast %114 : vector<16x16x128xf32> to vector<256x128xf32>
    %c7_72 = arith.constant 7 : index
    %c0_73 = arith.constant 0 : index
    %c0_74 = arith.constant 0 : index
    %116 = vector.load %arg5[%c7_72, %c0_73, %c0_74] : memref<9x128x128xf32, #tpu.memory_space<vmem>>, vector<1x128x128xf32>
    %117 = vector.shape_cast %116 : vector<1x128x128xf32> to vector<128x128xf32>
    %cst_75 = arith.constant dense<0.000000e+00> : vector<256x128xf32>
    %118 = tpu.matmul %115, %117, %cst_75 {dimension_numbers = #tpu.dot_dimension_numbers<[1], [0], [0], [1], [0, 0, 1, 1], [], []>} : vector<256x128xf32>, vector<128x128xf32>, vector<256x128xf32> -> vector<256x128xf32>
    %119 = arith.addf %113, %118 : vector<256x128xf32>
    %120 = vector.extract_strided_slice %70 {offsets = [2, 2, 0], sizes = [16, 16, 128], strides = [1, 1, 1]} : vector<18x18x128xf32> to vector<16x16x128xf32>
    %121 = vector.shape_cast %120 : vector<16x16x128xf32> to vector<256x128xf32>
    %c8_76 = arith.constant 8 : index
    %c0_77 = arith.constant 0 : index
    %c0_78 = arith.constant 0 : index
    %122 = vector.load %arg5[%c8_76, %c0_77, %c0_78] : memref<9x128x128xf32, #tpu.memory_space<vmem>>, vector<1x128x128xf32>
    %123 = vector.shape_cast %122 : vector<1x128x128xf32> to vector<128x128xf32>
    %cst_79 = arith.constant dense<0.000000e+00> : vector<256x128xf32>
    %124 = tpu.matmul %121, %123, %cst_79 {dimension_numbers = #tpu.dot_dimension_numbers<[1], [0], [0], [1], [0, 0, 1, 1], [], []>} : vector<256x128xf32>, vector<128x128xf32>, vector<256x128xf32> -> vector<256x128xf32>
    %125 = arith.addf %119, %124 : vector<256x128xf32>
    %c0_80 = arith.constant 0 : index
    %c0_81 = arith.constant 0 : index
    %126 = vector.load %arg6[%c0_80, %c0_81] : memref<1x128xf32, #tpu.memory_space<vmem>>, vector<1x128xf32>
    %127 = vector.broadcast %126 : vector<1x128xf32> to vector<256x128xf32>
    %128 = arith.mulf %125, %127 : vector<256x128xf32>
    %c0_82 = arith.constant 0 : index
    %c0_83 = arith.constant 0 : index
    %129 = vector.load %arg7[%c0_82, %c0_83] : memref<1x128xf32, #tpu.memory_space<vmem>>, vector<1x128xf32>
    %130 = vector.broadcast %129 : vector<1x128xf32> to vector<256x128xf32>
    %131 = arith.addf %128, %130 : vector<256x128xf32>
    %132 = vector.extract_strided_slice %4 {offsets = [1, 1, 0], sizes = [16, 16, 128], strides = [1, 1, 1]} : vector<18x18x128xf32> to vector<16x16x128xf32>
    %133 = vector.shape_cast %132 : vector<16x16x128xf32> to vector<256x128xf32>
    %134 = arith.addf %131, %133 : vector<256x128xf32>
    %cst_84 = arith.constant 0.000000e+00 : f32
    %135 = vector.broadcast %cst_84 : f32 to vector<256x128xf32>
    %136 = arith.maximumf %134, %135 : vector<256x128xf32>
    %137 = vector.shape_cast %136 : vector<256x128xf32> to vector<16x16x128xf32>
    %c0_85 = arith.constant 0 : index
    %c0_86 = arith.constant 0 : index
    %c0_87 = arith.constant 0 : index
    %c0_88 = arith.constant 0 : index
    %138 = vector.load %arg8[%c0_85, %c0_86, %c0_87, %c0_88] : memref<1x16x16x128xf32, #tpu.memory_space<vmem>>, vector<1x16x16x128xf32>
    %139 = vector.shape_cast %138 : vector<1x16x16x128xf32> to vector<16x16x128xf32>
    %140 = vector.shape_cast %137 : vector<16x16x128xf32> to vector<1x16x16x128xf32>
    tpu.vector_store %arg8[%c0_85, %c0_86, %c0_87, %c0_88], %140 {strides = array<i32>} : memref<1x16x16x128xf32, #tpu.memory_space<vmem>>, vector<1x16x16x128xf32>,
    return
  }
  func.func @transform_0(%arg0: i32) -> (i32, i32, i32, i32) {
    %c0_i32 = arith.constant 0 : i32
    %c0_i32_0 = arith.constant 0 : i32
    %c0_i32_1 = arith.constant 0 : i32
    %c0_i32_2 = arith.constant 0 : i32
    return %arg0, %c0_i32, %c0_i32_0, %c0_i32_1 : i32, i32, i32, i32
  }
  func.func @transform_1(%arg0: i32) -> (i32, i32, i32) {
    %c0_i32 = arith.constant 0 : i32
    %c0_i32_0 = arith.constant 0 : i32
    %c0_i32_1 = arith.constant 0 : i32
    %c0_i32_2 = arith.constant 0 : i32
    return %c0_i32, %c0_i32_0, %c0_i32_1 : i32, i32, i32
  }
  func.func @transform_2(%arg0: i32) -> (i32, i32) {
    %c0_i32 = arith.constant 0 : i32
    %c0_i32_0 = arith.constant 0 : i32
    %c0_i32_1 = arith.constant 0 : i32
    return %c0_i32, %c0_i32_0 : i32, i32
  }
  func.func @transform_3(%arg0: i32) -> (i32, i32) {
    %c0_i32 = arith.constant 0 : i32
    %c0_i32_0 = arith.constant 0 : i32
    %c0_i32_1 = arith.constant 0 : i32
    return %c0_i32, %c0_i32_0 : i32, i32
  }
  func.func @transform_4(%arg0: i32) -> (i32, i32, i32) {
    %c0_i32 = arith.constant 0 : i32
    %c0_i32_0 = arith.constant 0 : i32
    %c0_i32_1 = arith.constant 0 : i32
    %c0_i32_2 = arith.constant 0 : i32
    return %c0_i32, %c0_i32_0, %c0_i32_1 : i32, i32, i32
  }
  func.func @transform_5(%arg0: i32) -> (i32, i32) {
    %c0_i32 = arith.constant 0 : i32
    %c0_i32_0 = arith.constant 0 : i32
    %c0_i32_1 = arith.constant 0 : i32
    return %c0_i32, %c0_i32_0 : i32, i32
  }
  func.func @transform_6(%arg0: i32) -> (i32, i32) {
    %c0_i32 = arith.constant 0 : i32
    %c0_i32_0 = arith.constant 0 : i32
    %c0_i32_1 = arith.constant 0 : i32
    return %c0_i32, %c0_i32_0 : i32, i32
  }
  func.func @transform_7(%arg0: i32) -> (i32, i32, i32, i32) {
    %c0_i32 = arith.constant 0 : i32
    %c0_i32_0 = arith.constant 0 : i32
    %c0_i32_1 = arith.constant 0 : i32
    %c0_i32_2 = arith.constant 0 : i32
    return %arg0, %c0_i32, %c0_i32_0, %c0_i32_1 : i32, i32, i32, i32
  }
}

</mosaic_0001>

<llo_original>
// kernel: tpu_custom_call.1
$region0: #{tpu_custom_call.1}
  #allocation0 [shape = 'u32[]', space=smem, size = 0x4, offset = 0x4, fixed_abs, tag = 'smem constant byte address 0x4 - core index']
  #allocation1 [shape = 'u32[144,128]{1,0:T(1,128)}', space=vmem, size = 0x12000, scoped, tag = 'internal scratch']
  #allocation2 [shape = 'f32[18,18,128]{2,1,0:T(8,128)}', space=vmem, size = 0x36000, scoped, tag = 'scratch operand']
  %s0 = inlined_call_operand.vmem [shape: f32[2,18,18,128], index: 0, kind: input, shape index: {}]
  %s1 = inlined_call_operand.vmem [shape: f32[9,128,128], index: 1, kind: input, shape index: {}]
  %s2 = inlined_call_operand.vmem [shape: f32[1,128], index: 2, kind: input, shape index: {}]
  %s3 = inlined_call_operand.vmem [shape: f32[1,128], index: 3, kind: input, shape index: {}]
  %s4 = inlined_call_operand.hbm [shape: f32[9,128,128], index: 4, kind: input, shape index: {}]
  %s5 = inlined_call_operand.vmem [shape: f32[1,128], index: 5, kind: input, shape index: {}]
  %s6 = inlined_call_operand.vmem [shape: f32[1,128], index: 6, kind: input, shape index: {}]
  %s7 = inlined_call_operand.hbm [shape: f32[2,16,16,128], index: 7, kind: output, shape index: {}]
  %s8 = sld [smem:[#allocation0]]
  $region69: #{tpu_custom_call.1} parent=0
    _
  %s10 = ssub.s32 1, %s8
  %s11 = scalar_select 0, %s10, %s8
  $region1: #{tpu_custom_call.1} parent=0
    #allocation3 [shape = 'u8[589824]{0}', space=vmem, size = 0x90000, scoped, tag = 'input window, operand 4, single buffered']
    #allocation4 [shape = 's32[2]{0}', space=sflag, size = 0x8, scoped, tag = 'scoped memory for tpu_custom_call.1']
    #allocation5 [shape = 's32[2]{0}', space=sflag, size = 0x8, scoped, tag = 'scoped memory for tpu_custom_call.1']
    #allocation6 [shape = 'u8[262144]{0}', space=vmem, size = 0x40000, scoped, tag = 'output window, operand 0']
    %12 = vsyncpa [#allocation4], 0
    %13 = vsyncpa [#allocation5], 0
    %s14 = scalar_lea.sflag [#allocation5], 1
    %15 = vsyncpa %s14, 0
    loop: start=0, step=1, limit=4
    $region2: #{tpu_custom_call.1} parent=1 // loop_pre_header
      _
    $region3: #{tpu_custom_call.1} parent=1 // loop_header
      %s17 = sphi 0, %s21
      %p18 = scmp.ge.s32.totalorder %s17, 4
      %s27 = sphi 0, %s29
      %s30 = sphi 0, %s27
      %s31 = sphi 0, %s30
      %s47 = sphi 0, %s31
      %s51 = sphi 0, %s51
      %s53 = sphi 0, %s51
      %s54 = sphi 0, %s53
      %s68 = sphi 0, %s54
      %s72 = sphi 0, %s72
      %s74 = sphi 0, %s72
      %s75 = sphi 0, %s74
      %s89 = sphi 0, %s75
      %s93 = sphi 0, %s93
      %s95 = sphi 0, %s93
      %s96 = sphi 0, %s95
      %s110 = sphi 0, %s96
      %s114 = sphi 0, %s114
      %s116 = sphi 0, %s114
      %s117 = sphi 0, %s116
      %s131 = sphi 0, %s117
      %s135 = sphi 0, %s135
      %s137 = sphi 0, %s135
      %s138 = sphi 0, %s137
      %s152 = sphi 0, %s138
      %s156 = sphi 0, %s156
      %s158 = sphi 0, %s156
      %s159 = sphi 0, %s158
      %s173 = sphi 0, %s159
      %s179 = sphi 0, %s181
      %s182 = sphi 0, %s179
      %s183 = sphi 0, %s182
      %s199 = sphi 0, %s183
    $region4: #{tpu_custom_call.1} parent=1 // loop_header_branch
      %20 = sbr.rel (%p18) target = $region8
    $region5: #{tpu_custom_call.1} parent=1 // loop_body
      %s22 = ssub.s32 %s17, 1
      %s23 = ssub.s32 %s17, 2
      %s24 = sadd.s32 %s17, 1
      %s25 = ssub.s32 %s17, %s24
      %p26 = scmp.eq.s32.totalorder %s25, 0
      %s28 = sadd.s32 %s27, 1
      %s29 = scalar_select %p26, %s27, %s28
      %p32 = pneg %p26
      %p33 = scmp.eq.s32.totalorder %s17, 1
      %p34 = por %p32, %p33
      %p35 = scmp.ne.s32.totalorder %s27, %s30
      %p36 = scmp.eq.s32.totalorder %s17, 0
      %p37 = por %p35, %p36
      %p38 = scmp.ne.s32.totalorder %s27, %s30
      %p39 = scmp.eq.s32.totalorder %s22, 1
      %p40 = por %p38, %p39
      %p41 = scmp.ne.s32.totalorder %s30, %s31
      %p42 = scmp.eq.s32.totalorder %s22, 0
      %p43 = por %p41, %p42
      %p44 = scmp.ne.s32.totalorder %s30, %s31
      %p45 = scmp.eq.s32.totalorder %s23, 1
      %p46 = por %p44, %p45
      %p48 = scmp.ne.s32.totalorder %s31, %s47
      %p49 = scmp.eq.s32.totalorder %s23, 0
      %p50 = por %p48, %p49
      %s52 = sadd.s32 %s51, 1
      %p55 = scmp.eq.s32.totalorder %s17, 1
      %p56 = scmp.ne.s32.totalorder %s51, %s53
      %p57 = scmp.eq.s32.totalorder %s17, 0
      %p58 = por %p56, %p57
      %p59 = scmp.ne.s32.totalorder %s51, %s53
      %p60 = scmp.eq.s32.totalorder %s22, 1
      %p61 = por %p59, %p60
      %p62 = scmp.ne.s32.totalorder %s53, %s54
      %p63 = scmp.eq.s32.totalorder %s22, 0
      %p64 = por %p62, %p63
      %p65 = scmp.ne.s32.totalorder %s53, %s54
      %p66 = scmp.eq.s32.totalorder %s23, 1
      %p67 = por %p65, %p66
      %p69 = scmp.ne.s32.totalorder %s54, %s68
      %p70 = scmp.eq.s32.totalorder %s23, 0
      %p71 = por %p69, %p70
      %s73 = sadd.s32 %s72, 1
      %p76 = scmp.eq.s32.totalorder %s17, 1
      %p77 = scmp.ne.s32.totalorder %s72, %s74
      %p78 = scmp.eq.s32.totalorder %s17, 0
      %p79 = por %p77, %p78
      %p80 = scmp.ne.s32.totalorder %s72, %s74
      %p81 = scmp.eq.s32.totalorder %s22, 1
      %p82 = por %p80, %p81
      %p83 = scmp.ne.s32.totalorder %s74, %s75
      %p84 = scmp.eq.s32.totalorder %s22, 0
      %p85 = por %p83, %p84
      %p86 = scmp.ne.s32.totalorder %s74, %s75
      %p87 = scmp.eq.s32.totalorder %s23, 1
      %p88 = por %p86, %p87
      %p90 = scmp.ne.s32.totalorder %s75, %s89
      %p91 = scmp.eq.s32.totalorder %s23, 0
      %p92 = por %p90, %p91
      %s94 = sadd.s32 %s93, 1
      %p97 = scmp.eq.s32.totalorder %s17, 1
      %p98 = scmp.ne.s32.totalorder %s93, %s95
      %p99 = scmp.eq.s32.totalorder %s17, 0
      %p100 = por %p98, %p99
      %p101 = scmp.ne.s32.totalorder %s93, %s95
      %p102 = scmp.eq.s32.totalorder %s22, 1
      %p103 = por %p101, %p102
      %p104 = scmp.ne.s32.totalorder %s95, %s96
      %p105 = scmp.eq.s32.totalorder %s22, 0
      %p106 = por %p104, %p105
      %p107 = scmp.ne.s32.totalorder %s95, %s96
      %p108 = scmp.eq.s32.totalorder %s23, 1
      %p109 = por %p107, %p108
      %p111 = scmp.ne.s32.totalorder %s96, %s110
      %p112 = scmp.eq.s32.totalorder %s23, 0
      %p113 = por %p111, %p112
      %s115 = sadd.s32 %s114, 1
      %p118 = scmp.eq.s32.totalorder %s17, 1
      %p119 = scmp.ne.s32.totalorder %s114, %s116
      %p120 = scmp.eq.s32.totalorder %s17, 0
      %p121 = por %p119, %p120
      %p122 = scmp.ne.s32.totalorder %s114, %s116
      %p123 = scmp.eq.s32.totalorder %s22, 1
      %p124 = por %p122, %p123
      %p125 = scmp.ne.s32.totalorder %s116, %s117
      %p126 = scmp.eq.s32.totalorder %s22, 0
      %p127 = por %p125, %p126
      %p128 = scmp.ne.s32.totalorder %s116, %s117
      %p129 = scmp.eq.s32.totalorder %s23, 1
      %p130 = por %p128, %p129
      %p132 = scmp.ne.s32.totalorder %s117, %s131
      %p133 = scmp.eq.s32.totalorder %s23, 0
      %p134 = por %p132, %p133
      %s136 = sadd.s32 %s135, 1
      %p139 = scmp.eq.s32.totalorder %s17, 1
      %p140 = scmp.ne.s32.totalorder %s135, %s137
      %p141 = scmp.eq.s32.totalorder %s17, 0
      %p142 = por %p140, %p141
      %p143 = scmp.ne.s32.totalorder %s135, %s137
      %p144 = scmp.eq.s32.totalorder %s22, 1
      %p145 = por %p143, %p144
      %p146 = scmp.ne.s32.totalorder %s137, %s138
      %p147 = scmp.eq.s32.totalorder %s22, 0
      %p148 = por %p146, %p147
      %p149 = scmp.ne.s32.totalorder %s137, %s138
      %p150 = scmp.eq.s32.totalorder %s23, 1
      %p151 = por %p149, %p150
      %p153 = scmp.ne.s32.totalorder %s138, %s152
      %p154 = scmp.eq.s32.totalorder %s23, 0
      %p155 = por %p153, %p154
      %s157 = sadd.s32 %s156, 1
      %p160 = scmp.eq.s32.totalorder %s17, 1
      %p161 = scmp.ne.s32.totalorder %s156, %s158
      %p162 = scmp.eq.s32.totalorder %s17, 0
      %p163 = por %p161, %p162
      %p164 = scmp.ne.s32.totalorder %s156, %s158
      %p165 = scmp.eq.s32.totalorder %s22, 1
      %p166 = por %p164, %p165
      %p167 = scmp.ne.s32.totalorder %s158, %s159
      %p168 = scmp.eq.s32.totalorder %s22, 0
      %p169 = por %p167, %p168
      %p170 = scmp.ne.s32.totalorder %s158, %s159
      %p171 = scmp.eq.s32.totalorder %s23, 1
      %p172 = por %p170, %p171
      %p174 = scmp.ne.s32.totalorder %s159, %s173
      %p175 = scmp.eq.s32.totalorder %s23, 0
      %p176 = por %p174, %p175
      %s177 = ssub.s32 %s17, %s24
      %p178 = scmp.eq.s32.totalorder %s177, 0
      %s180 = sadd.s32 %s179, 1
      %s181 = scalar_select %p178, %s179, %s180
      %p184 = pneg %p178
      %p185 = scmp.eq.s32.totalorder %s17, 1
      %p186 = por %p184, %p185
      %p187 = scmp.ne.s32.totalorder %s179, %s182
      %p188 = scmp.eq.s32.totalorder %s17, 0
      %p189 = por %p187, %p188
      %p190 = scmp.ne.s32.totalorder %s179, %s182
      %p191 = scmp.eq.s32.totalorder %s22, 1
      %p192 = por %p190, %p191
      %p193 = scmp.ne.s32.totalorder %s182, %s183
      %p194 = scmp.eq.s32.totalorder %s22, 0
      %p195 = por %p193, %p194
      %p196 = scmp.ne.s32.totalorder %s182, %s183
      %p197 = scmp.eq.s32.totalorder %s23, 1
      %p198 = por %p196, %p197
      %p200 = scmp.ne.s32.totalorder %s183, %s199
      %p201 = scmp.eq.s32.totalorder %s23, 0
      %p202 = por %p200, %p201
      %p203 = scmp.le.s32.totalorder 1, %s17
      %p204 = scmp.lt.s32.totalorder %s17, 3
      %p205 = pnand %p203, %p204
      %p206 = pneg %p205
      // Predicated region
      $region9: #{tpu_custom_call.1} parent=5 // pred_check
        _
      $region10: #{tpu_custom_call.1} parent=5 // pred_check_branch
        %208 = sbr.rel (%p205) target = $region12
      $region11: #{tpu_custom_call.1} parent=5 // pred_region
        %s209 = ssub.s32 %s17, 1
        // Predicated region
        $region13: #{tpu_custom_call.1} parent=11 // pred_check
          %p210 = pneg %p64
        $region14: #{tpu_custom_call.1} parent=11 // pred_check_branch
          %212 = sbr.rel (%p210) target = $region16
        $region15: #{tpu_custom_call.1} parent=11 // pred_region
          _
        $region16: #{tpu_custom_call.1} parent=11 // pred_fallthru
          _
        // Predicated region
        $region17: #{tpu_custom_call.1} parent=11 // pred_check
          %p213 = pneg %p85
        $region18: #{tpu_custom_call.1} parent=11 // pred_check_branch
          %215 = sbr.rel (%p213) target = $region20
        $region19: #{tpu_custom_call.1} parent=11 // pred_region
          _
        $region20: #{tpu_custom_call.1} parent=11 // pred_fallthru
          _
        // Predicated region
        $region21: #{tpu_custom_call.1} parent=11 // pred_check
          %p216 = pneg %p106
        $region22: #{tpu_custom_call.1} parent=11 // pred_check_branch
          %218 = sbr.rel (%p216) target = $region24
        $region23: #{tpu_custom_call.1} parent=11 // pred_region
          _
        $region24: #{tpu_custom_call.1} parent=11 // pred_fallthru
          _
        // Predicated region
        $region25: #{tpu_custom_call.1} parent=11 // pred_check
          %p219 = pneg %p127
        $region26: #{tpu_custom_call.1} parent=11 // pred_check_branch
          %221 = sbr.rel (%p219) target = $region28
        $region27: #{tpu_custom_call.1} parent=11 // pred_region
          %s223 = ssub.s32 18432, 18432
          %224 = vsyncadd [#allocation4], %s223
          %s225 = sshll.u32 [#allocation3], 4
          %s226 = int_to_ptr.vmem [resolvable:$true] %s225
          %231 = dma.hbm_to_vmem [thread:$0]  %s4, 18432, %s226, [#allocation4], 128, 128, 8
        $region28: #{tpu_custom_call.1} parent=11 // pred_fallthru
          _
        // Predicated region
        $region29: #{tpu_custom_call.1} parent=11 // pred_check
          %p232 = pneg %p148
        $region30: #{tpu_custom_call.1} parent=11 // pred_check_branch
          %234 = sbr.rel (%p232) target = $region32
        $region31: #{tpu_custom_call.1} parent=11 // pred_region
          _
        $region32: #{tpu_custom_call.1} parent=11 // pred_fallthru
          _
        // Predicated region
        $region33: #{tpu_custom_call.1} parent=11 // pred_check
          %p235 = pneg %p169
        $region34: #{tpu_custom_call.1} parent=11 // pred_check_branch
          %237 = sbr.rel (%p235) target = $region36
        $region35: #{tpu_custom_call.1} parent=11 // pred_region
          _
        $region36: #{tpu_custom_call.1} parent=11 // pred_fallthru
          _
      $region12: #{tpu_custom_call.1} parent=5 // pred_fallthru
        _
      %p238 = scmp.lt.s32.totalorder %s17, 2
      // Predicated region
      $region37: #{tpu_custom_call.1} parent=5 // pred_check
        %p239 = pneg %p238
      $region38: #{tpu_custom_call.1} parent=5 // pred_check_branch
        %241 = sbr.rel (%p239) target = $region40
      $region39: #{tpu_custom_call.1} parent=5 // pred_region
        // Predicated region
        $region41: #{tpu_custom_call.1} parent=39 // pred_check
          %p242 = pneg %p37
        $region42: #{tpu_custom_call.1} parent=39 // pred_check_branch
          %244 = sbr.rel (%p242) target = $region44
        $region43: #{tpu_custom_call.1} parent=39 // pred_region
          %p245 = scmp.lt.s32.totalorder %s17, 1
          %s246 = scalar_select %p245, %s17, 1
          %s247 = smul.addr %s246, 54
          %s248 = smul.addr %s247, 8
          %s249 = scalar_lea.vmem %s0, %s248
        $region44: #{tpu_custom_call.1} parent=39 // pred_fallthru
          _
      $region40: #{tpu_custom_call.1} parent=5 // pred_fallthru
        _
      %p250 = scmp.le.s32.totalorder 1, %s17
      %p251 = scmp.lt.s32.totalorder %s17, 3
      %p252 = pnand %p250, %p251
      %p253 = pneg %p252
      // Predicated region
      $region45: #{tpu_custom_call.1} parent=5 // pred_check
        _
      $region46: #{tpu_custom_call.1} parent=5 // pred_check_branch
        %255 = sbr.rel (%p252) target = $region48
      $region47: #{tpu_custom_call.1} parent=5 // pred_region
        %s256 = ssub.s32 %s17, 1
        // Predicated region
        $region49: #{tpu_custom_call.1} parent=47 // pred_check
          %p257 = pneg %p127
        $region50: #{tpu_custom_call.1} parent=47 // pred_check_branch
          %259 = sbr.rel (%p257) target = $region52
        $region51: #{tpu_custom_call.1} parent=47 // pred_region
          %260 = dma.done [#allocation4], 18432
        $region52: #{tpu_custom_call.1} parent=47 // pred_fallthru
          _
        %p261 = scmp.lt.s32.totalorder %s22, 1
        %s262 = scalar_select %p261, %s22, 1
        %s263 = smul.addr %s262, 54
        %s264 = smul.addr %s263, 8
        %s265 = scalar_lea.vmem %s0, %s264
        %p266 = pneg %p43
        %p267 = pneg %p40
        %p268 = pneg %p64
        %p269 = pneg %p61
        %p270 = pneg %p85
        %p271 = pneg %p82
        %p272 = pneg %p106
        %p273 = pneg %p103
        %p274 = pneg %p127
        %p275 = pneg %p124
        %p276 = pneg %p148
        %p277 = pneg %p145
        %p278 = pneg %p169
        %p279 = pneg %p166
        %p280 = pneg %p195
        %p281 = pneg %p192
        %s282 = sand.u32 %s182, 1
        %s283 = scalar_lea.sflag [#allocation5], %s282
        %s284 = sand.u32 %s182, 1
        %s285 = smul.addr %s284, 256
        %s286 = scalar_lea.vmem [#allocation6], %s285
        %p287 = scmp.lt.s32.totalorder %s22, 1
        %s288 = scalar_select %p287, %s22, 1
        %s289 = smul.addr %s288, 54
        %s290 = smul.addr %s289, 8
        %s291 = scalar_lea.vmem %s0, %s290
        %p292 = scmp.eq.s32.totalorder %s22, 0
        // Predicated region
        $region53: #{tpu_custom_call.1} parent=47 // pred_check
          %p293 = pneg %p292
        $region54: #{tpu_custom_call.1} parent=47 // pred_check_branch
          %295 = sbr.rel (%p293) target = $region56
        $region55: #{tpu_custom_call.1} parent=47 // pred_region
          %296 = vst [vmem:[#allocation2] sm:$0xff] 0.0
          %297 = vst [vmem:[#allocation2 + $0x8] sm:$0xff] 0.0
          %298 = vst [vmem:[#allocation2 + $0x10] sm:$0x3] 0.0
          %299 = vst [vmem:[#allocation2 + $0x18] sm:$0xff] 0.0
          %300 = vst [vmem:[#allocation2 + $0x20] sm:$0xff] 0.0
          %301 = vst [vmem:[#allocation2 + $0x28] sm:$0x3] 0.0
          %302 = vst [vmem:[#allocation2 + $0x30] sm:$0xff] 0.0
          %303 = vst [vmem:[#allocation2 + $0x38] sm:$0xff] 0.0
          %304 = vst [vmem:[#allocation2 + $0x40] sm:$0x3] 0.0
          %305 = vst [vmem:[#allocation2 + $0x48] sm:$0xff] 0.0
          %306 = vst [vmem:[#allocation2 + $0x50] sm:$0xff] 0.0
          %307 = vst [vmem:[#allocation2 + $0x58] sm:$0x3] 0.0
          %308 = vst [vmem:[#allocation2 + $0x60] sm:$0xff] 0.0
          %309 = vst [vmem:[#allocation2 + $0x68] sm:$0xff] 0.0
          %310 = vst [vmem:[#allocation2 + $0x70] sm:$0x3] 0.0
          %311 = vst [vmem:[#allocation2 + $0x78] sm:$0xff] 0.0
          %312 = vst [vmem:[#allocation2 + $0x80] sm:$0xff] 0.0
          %313 = vst [vmem:[#allocation2 + $0x88] sm:$0x3] 0.0
          %314 = vst [vmem:[#allocation2 + $0x90] sm:$0xff] 0.0
          %315 = vst [vmem:[#allocation2 + $0x98] sm:$0xff] 0.0
          %316 = vst [vmem:[#allocation2 + $0xa0] sm:$0x3] 0.0
          %317 = vst [vmem:[#allocation2 + $0xa8] sm:$0xff] 0.0
          %318 = vst [vmem:[#allocation2 + $0xb0] sm:$0xff] 0.0
          %319 = vst [vmem:[#allocation2 + $0xb8] sm:$0x3] 0.0
          %320 = vst [vmem:[#allocation2 + $0xc0] sm:$0xff] 0.0
          %321 = vst [vmem:[#allocation2 + $0xc8] sm:$0xff] 0.0
          %322 = vst [vmem:[#allocation2 + $0xd0] sm:$0x3] 0.0
          %323 = vst [vmem:[#allocation2 + $0xd8] sm:$0xff] 0.0
          %324 = vst [vmem:[#allocation2 + $0xe0] sm:$0xff] 0.0
          %325 = vst [vmem:[#allocation2 + $0xe8] sm:$0x3] 0.0
          %326 = vst [vmem:[#allocation2 + $0xf0] sm:$0xff] 0.0
          %327 = vst [vmem:[#allocation2 + $0xf8] sm:$0xff] 0.0
          %328 = vst [vmem:[#allocation2 + $0x100] sm:$0x3] 0.0
          %329 = vst [vmem:[#allocation2 + $0x108] sm:$0xff] 0.0
          %330 = vst [vmem:[#allocation2 + $0x110] sm:$0xff] 0.0
          %331 = vst [vmem:[#allocation2 + $0x118] sm:$0x3] 0.0
          %332 = vst [vmem:[#allocation2 + $0x120] sm:$0xff] 0.0
          %333 = vst [vmem:[#allocation2 + $0x128] sm:$0xff] 0.0
          %334 = vst [vmem:[#allocation2 + $0x130] sm:$0x3] 0.0
          %335 = vst [vmem:[#allocation2 + $0x138] sm:$0xff] 0.0
          %336 = vst [vmem:[#allocation2 + $0x140] sm:$0xff] 0.0
          %337 = vst [vmem:[#allocation2 + $0x148] sm:$0x3] 0.0
          %338 = vst [vmem:[#allocation2 + $0x150] sm:$0xff] 0.0
          %339 = vst [vmem:[#allocation2 + $0x158] sm:$0xff] 0.0
          %340 = vst [vmem:[#allocation2 + $0x160] sm:$0x3] 0.0
          %341 = vst [vmem:[#allocation2 + $0x168] sm:$0xff] 0.0
          %342 = vst [vmem:[#allocation2 + $0x170] sm:$0xff] 0.0
          %343 = vst [vmem:[#allocation2 + $0x178] sm:$0x3] 0.0
          %344 = vst [vmem:[#allocation2 + $0x180] sm:$0xff] 0.0
          %345 = vst [vmem:[#allocation2 + $0x188] sm:$0xff] 0.0
          %346 = vst [vmem:[#allocation2 + $0x190] sm:$0x3] 0.0
          %347 = vst [vmem:[#allocation2 + $0x198] sm:$0xff] 0.0
          %348 = vst [vmem:[#allocation2 + $0x1a0] sm:$0xff] 0.0
          %349 = vst [vmem:[#allocation2 + $0x1a8] sm:$0x3] 0.0
        $region56: #{tpu_custom_call.1} parent=47 // pred_fallthru
          _
        %v350 = vld [vmem:[%s291] sm:$0xff]
        %v351 = vld [vmem:[%s291 + $0x8] sm:$0xff]
        %v352 = vld [vmem:[%s291 + $0x10] sm:$0x3]
        %v353 = vld [vmem:[%s291 + $0x18] sm:$0xff]
        %v354 = vld [vmem:[%s291 + $0x20] sm:$0xff]
        %v355 = vld [vmem:[%s291 + $0x28] sm:$0x3]
        %v356 = vld [vmem:[%s291 + $0x30] sm:$0xff]
        %v357 = vld [vmem:[%s291 + $0x38] sm:$0xff]
        %v358 = vld [vmem:[%s291 + $0x40] sm:$0x3]
        %v359 = vld [vmem:[%s291 + $0x48] sm:$0xff]
        %v360 = vld [vmem:[%s291 + $0x50] sm:$0xff]
        %v361 = vld [vmem:[%s291 + $0x58] sm:$0x3]
        %v362 = vld [vmem:[%s291 + $0x60] sm:$0xff]
        %v363 = vld [vmem:[%s291 + $0x68] sm:$0xff]
        %v364 = vld [vmem:[%s291 + $0x70] sm:$0x3]
        %v365 = vld [vmem:[%s291 + $0x78] sm:$0xff]
        %v366 = vld [vmem:[%s291 + $0x80] sm:$0xff]
        %v367 = vld [vmem:[%s291 + $0x88] sm:$0x3]
        %v368 = vld [vmem:[%s291 + $0x90] sm:$0xff]
        %v369 = vld [vmem:[%s291 + $0x98] sm:$0xff]
        %v370 = vld [vmem:[%s291 + $0xa0] sm:$0x3]
        %v371 = vld [vmem:[%s291 + $0xa8] sm:$0xff]
        %v372 = vld [vmem:[%s291 + $0xb0] sm:$0xff]
        %v373 = vld [vmem:[%s291 + $0xb8] sm:$0x3]
        %v374 = vld [vmem:[%s291 + $0xc0] sm:$0xff]
        %v375 = vld [vmem:[%s291 + $0xc8] sm:$0xff]
        %v376 = vld [vmem:[%s291 + $0xd0] sm:$0x3]
        %v377 = vld [vmem:[%s291 + $0xd8] sm:$0xff]
        %v378 = vld [vmem:[%s291 + $0xe0] sm:$0xff]
        %v379 = vld [vmem:[%s291 + $0xe8] sm:$0x3]
        %v380 = vld [vmem:[%s291 + $0xf0] sm:$0xff]
        %v381 = vld [vmem:[%s291 + $0xf8] sm:$0xff]
        %v382 = vld [vmem:[%s291 + $0x100] sm:$0x3]
        %v383 = vld [vmem:[%s291 + $0x108] sm:$0xff]
        %v384 = vld [vmem:[%s291 + $0x110] sm:$0xff]
        %v385 = vld [vmem:[%s291 + $0x118] sm:$0x3]
        %v386 = vld [vmem:[%s291 + $0x120] sm:$0xff]
        %v387 = vld [vmem:[%s291 + $0x128] sm:$0xff]
        %v388 = vld [vmem:[%s291 + $0x130] sm:$0x3]
        %v389 = vld [vmem:[%s291 + $0x138] sm:$0xff]
        %v390 = vld [vmem:[%s291 + $0x140] sm:$0xff]
        %v391 = vld [vmem:[%s291 + $0x148] sm:$0x3]
        %v392 = vld [vmem:[%s291 + $0x150] sm:$0xff]
        %v393 = vld [vmem:[%s291 + $0x158] sm:$0xff]
        %v394 = vld [vmem:[%s291 + $0x160] sm:$0x3]
        %v395 = vld [vmem:[%s291 + $0x168] sm:$0xff]
        %v396 = vld [vmem:[%s291 + $0x170] sm:$0xff]
        %v397 = vld [vmem:[%s291 + $0x178] sm:$0x3]
        %v398 = vld [vmem:[%s291 + $0x180] sm:$0xff]
        %v399 = vld [vmem:[%s291 + $0x188] sm:$0xff]
        %v400 = vld [vmem:[%s291 + $0x190] sm:$0x3]
        %v401 = vld [vmem:[%s291 + $0x198] sm:$0xff]
        %v402 = vld [vmem:[%s291 + $0x1a0] sm:$0xff]
        %v403 = vld [vmem:[%s291 + $0x1a8] sm:$0x3]
        %v404 = vld [vmem:[%s1] sm:$0xff]
        %v405 = vld [vmem:[%s1 + $0x8] sm:$0xff]
        %v406 = vld [vmem:[%s1 + $0x10] sm:$0xff]
        %v407 = vld [vmem:[%s1 + $0x18] sm:$0xff]
        %v408 = vld [vmem:[%s1 + $0x20] sm:$0xff]
        %v409 = vld [vmem:[%s1 + $0x28] sm:$0xff]
        %v410 = vld [vmem:[%s1 + $0x30] sm:$0xff]
        %v411 = vld [vmem:[%s1 + $0x38] sm:$0xff]
        %v412 = vld [vmem:[%s1 + $0x40] sm:$0xff]
        %v413 = vld [vmem:[%s1 + $0x48] sm:$0xff]
        %v414 = vld [vmem:[%s1 + $0x50] sm:$0xff]
        %v415 = vld [vmem:[%s1 + $0x58] sm:$0xff]
        %v416 = vld [vmem:[%s1 + $0x60] sm:$0xff]
        %v417 = vld [vmem:[%s1 + $0x68] sm:$0xff]
        %v418 = vld [vmem:[%s1 + $0x70] sm:$0xff]
        %v419 = vld [vmem:[%s1 + $0x78] sm:$0xff]
        %vm468 = vcmask 1046528
        %v469 = vrot.slane %v350, 1
        %v470 = vrot.slane %v351, 1
        %v471 = vsel %vm468, %v469, %v470
        %v472 = vrot.slane %v352, 1
        %v473 = vsel %vm468, %v470, %v472
        %v474 = vrot.slane %v353, 1
        %v475 = vrot.slane %v354, 1
        %v476 = vsel %vm468, %v474, %v475
        %v477 = vrot.slane %v355, 1
        %v478 = vsel %vm468, %v475, %v477
        %v479 = vrot.slane %v356, 1
        %v480 = vrot.slane %v357, 1
        %v481 = vsel %vm468, %v479, %v480
        %v482 = vrot.slane %v358, 1
        %v483 = vsel %vm468, %v480, %v482
        %v484 = vrot.slane %v359, 1
        %v485 = vrot.slane %v360, 1
        %v486 = vsel %vm468, %v484, %v485
        %v487 = vrot.slane %v361, 1
        %v488 = vsel %vm468, %v485, %v487
        %v489 = vrot.slane %v362, 1
        %v490 = vrot.slane %v363, 1
        %v491 = vsel %vm468, %v489, %v490
        %v492 = vrot.slane %v364, 1
        %v493 = vsel %vm468, %v490, %v492
        %v494 = vrot.slane %v365, 1
        %v495 = vrot.slane %v366, 1
        %v496 = vsel %vm468, %v494, %v495
        %v497 = vrot.slane %v367, 1
        %v498 = vsel %vm468, %v495, %v497
        %v499 = vrot.slane %v368, 1
        %v500 = vrot.slane %v369, 1
        %v501 = vsel %vm468, %v499, %v500
        %v502 = vrot.slane %v370, 1
        %v503 = vsel %vm468, %v500, %v502
        %v504 = vrot.slane %v371, 1
        %v505 = vrot.slane %v372, 1
        %v506 = vsel %vm468, %v504, %v505
        %v507 = vrot.slane %v373, 1
        %v508 = vsel %vm468, %v505, %v507
        %v509 = vrot.slane %v374, 1
        %v510 = vrot.slane %v375, 1
        %v511 = vsel %vm468, %v509, %v510
        %v512 = vrot.slane %v376, 1
        %v513 = vsel %vm468, %v510, %v512
        %v514 = vrot.slane %v377, 1
        %v515 = vrot.slane %v378, 1
        %v516 = vsel %vm468, %v514, %v515
        %v517 = vrot.slane %v379, 1
        %v518 = vsel %vm468, %v515, %v517
        %v519 = vrot.slane %v380, 1
        %v520 = vrot.slane %v381, 1
        %v521 = vsel %vm468, %v519, %v520
        %v522 = vrot.slane %v382, 1
        %v523 = vsel %vm468, %v520, %v522
        %v524 = vrot.slane %v383, 1
        %v525 = vrot.slane %v384, 1
        %v526 = vsel %vm468, %v524, %v525
        %v527 = vrot.slane %v385, 1
        %v528 = vsel %vm468, %v525, %v527
        %v529 = vrot.slane %v386, 1
        %v530 = vrot.slane %v387, 1
        %v531 = vsel %vm468, %v529, %v530
        %v532 = vrot.slane %v388, 1
        %v533 = vsel %vm468, %v530, %v532
        %v534 = vrot.slane %v389, 1
        %v535 = vrot.slane %v390, 1
        %v536 = vsel %vm468, %v534, %v535
        %v537 = vrot.slane %v391, 1
        %v538 = vsel %vm468, %v535, %v537
        %v539 = vrot.slane %v392, 1
        %v540 = vrot.slane %v393, 1
        %v541 = vsel %vm468, %v539, %v540
        %v542 = vrot.slane %v394, 1
        %v543 = vsel %vm468, %v540, %v542
        %v544 = vrot.slane %v395, 1
        %v545 = vrot.slane %v396, 1
        %v546 = vsel %vm468, %v544, %v545
        %v547 = vrot.slane %v397, 1
        %v548 = vsel %vm468, %v545, %v547
        %s581 = scalar_lea.vmem %s1, 128
        %v582 = vld [vmem:[%s581] sm:$0xff]
        %v583 = vld [vmem:[%s581 + $0x8] sm:$0xff]
        %v584 = vld [vmem:[%s581 + $0x10] sm:$0xff]
        %v585 = vld [vmem:[%s581 + $0x18] sm:$0xff]
        %v586 = vld [vmem:[%s581 + $0x20] sm:$0xff]
        %v587 = vld [vmem:[%s581 + $0x28] sm:$0xff]
        %v588 = vld [vmem:[%s581 + $0x30] sm:$0xff]
        %v589 = vld [vmem:[%s581 + $0x38] sm:$0xff]
        %v590 = vld [vmem:[%s581 + $0x40] sm:$0xff]
        %v591 = vld [vmem:[%s581 + $0x48] sm:$0xff]
        %v592 = vld [vmem:[%s581 + $0x50] sm:$0xff]
        %v593 = vld [vmem:[%s581 + $0x58] sm:$0xff]
        %v594 = vld [vmem:[%s581 + $0x60] sm:$0xff]
        %v595 = vld [vmem:[%s581 + $0x68] sm:$0xff]
        %v596 = vld [vmem:[%s581 + $0x70] sm:$0xff]
        %v597 = vld [vmem:[%s581 + $0x78] sm:$0xff]
        %598 = vmatprep.subr.mxu0 0.0
        %599 = vmatpush1.msra.mxu0 %v582
        %600 = vmatprep.subr.mxu0 0.0
        %601 = vmatpush1.msra.mxu0 %v583
        %602 = vmatprep.subr.mxu0 0.0
        %603 = vmatpush1.msra.mxu0 %v584
        %604 = vmatprep.subr.mxu0 0.0
        %605 = vmatpush1.msra.mxu0 %v585
        %606 = vmatprep.subr.mxu0 0.0
        %607 = vmatpush1.msra.mxu0 %v586
        %608 = vmatprep.subr.mxu0 0.0
        %609 = vmatpush1.msra.mxu0 %v587
        %610 = vmatprep.subr.mxu0 0.0
        %611 = vmatpush1.msra.mxu0 %v588
        %612 = vmatprep.subr.mxu0 0.0
        %613 = vmatpush1.msra.mxu0 %v589
        %614 = vmatprep.subr.mxu0 0.0
        %615 = vmatpush1.msra.mxu0 %v590
        %616 = vmatprep.subr.mxu0 0.0
        %617 = vmatpush1.msra.mxu0 %v591
        %618 = vmatprep.subr.mxu0 0.0
        %619 = vmatpush1.msra.mxu0 %v592
        %620 = vmatprep.subr.mxu0 0.0
        %621 = vmatpush1.msra.mxu0 %v593
        %622 = vmatprep.subr.mxu0 0.0
        %623 = vmatpush1.msra.mxu0 %v594
        %624 = vmatprep.subr.mxu0 0.0
        %625 = vmatpush1.msra.mxu0 %v595
        %626 = vmatprep.subr.mxu0 0.0
        %627 = vmatpush1.msra.mxu0 %v596
        %628 = vmatprep.subr.mxu0 0.0
        %629 = vmatpush1.msra.mxu0 %v597
        %630 = vmatprep.subr.mxu0 0.0
        %631 = vmatpush1.msra.mxu0 0.0
        %632 = vmatprep.subr.mxu0 0.0
        %633 = vmatpush1.msra.mxu0 0.0
        %634 = vmatprep.subr.mxu0 0.0
        %635 = vmatpush1.msra.mxu0 0.0
        %636 = vmatprep.subr.mxu0 0.0
        %637 = vmatpush1.msra.mxu0 0.0
        %638 = vmatprep.subr.mxu0 0.0
        %639 = vmatpush1.msra.mxu0 0.0
        %640 = vmatprep.subr.mxu0 0.0
        %641 = vmatpush1.msra.mxu0 0.0
        %642 = vmatprep.subr.mxu0 0.0
        %643 = vmatpush1.msra.mxu0 0.0
        %644 = vmatprep.subr.mxu0 0.0
        %645 = vmatpush1.msra.mxu0 0.0
        %646 = vmatprep.subr.mxu0 0.0
        %647 = vmatpush1.msra.mxu0 0.0
        %648 = vmatprep.subr.mxu0 0.0
        %649 = vmatpush1.msra.mxu0 0.0
        %650 = vmatprep.subr.mxu0 0.0
        %651 = vmatpush1.msra.mxu0 0.0
        %652 = vmatprep.subr.mxu0 0.0
        %653 = vmatpush1.msra.mxu0 0.0
        %654 = vmatprep.subr.mxu0 0.0
        %655 = vmatpush1.msra.mxu0 0.0
        %656 = vmatprep.subr.mxu0 0.0
        %657 = vmatpush1.msra.mxu0 0.0
        %658 = vmatprep.subr.mxu0 0.0
        %659 = vmatpush1.msra.mxu0 0.0
        %660 = vmatprep.subr.mxu0 0.0
        %661 = vmatpush1.msra.mxu0 0.0
        %662 = vmatprep.mubr.f32.mxu0 0.0
        %663 = vmatmul.mubr.f32.gmra.mrb[0].mxu0 %v471
        %v664 = vpop.f32.mrb[0].mxu0
        %v665 = vadd.f32 0.0, %v664
        %v666 = vpop.f32.mrb[0].mxu0
        %667 = vmatprep.mubr.f32.mxu0 0.0
        %668 = vmatmul.mubr.f32.gmra.mrb[0].mxu0 %v473
        %v669 = vpop.f32.mrb[0].mxu0
        %v670 = vadd.f32 0.0, %v669
        %v671 = vpop.f32.mrb[0].mxu0
        %672 = vmatprep.mubr.f32.mxu0 0.0
        %673 = vmatmul.mubr.f32.gmra.mrb[0].mxu0 %v476
        %v674 = vpop.f32.mrb[0].mxu0
        %v675 = vadd.f32 0.0, %v674
        %v676 = vpop.f32.mrb[0].mxu0
        %677 = vmatprep.mubr.f32.mxu0 0.0
        %678 = vmatmul.mubr.f32.gmra.mrb[0].mxu0 %v478
        %v679 = vpop.f32.mrb[0].mxu0
        %v680 = vadd.f32 0.0, %v679
        %v681 = vpop.f32.mrb[0].mxu0
        %682 = vmatprep.mubr.f32.mxu0 0.0
        %683 = vmatmul.mubr.f32.gmra.mrb[0].mxu0 %v481
        %v684 = vpop.f32.mrb[0].mxu0
        %v685 = vadd.f32 0.0, %v684
        %v686 = vpop.f32.mrb[0].mxu0
        %687 = vmatprep.mubr.f32.mxu0 0.0
        %688 = vmatmul.mubr.f32.gmra.mrb[0].mxu0 %v483
        %v689 = vpop.f32.mrb[0].mxu0
        %v690 = vadd.f32 0.0, %v689
        %v691 = vpop.f32.mrb[0].mxu0
        %692 = vmatprep.mubr.f32.mxu0 0.0
        %693 = vmatmul.mubr.f32.gmra.mrb[0].mxu0 %v486
        %v694 = vpop.f32.mrb[0].mxu0
        %v695 = vadd.f32 0.0, %v694
        %v696 = vpop.f32.mrb[0].mxu0
        %697 = vmatprep.mubr.f32.mxu0 0.0
        %698 = vmatmul.mubr.f32.gmra.mrb[0].mxu0 %v488
        %v699 = vpop.f32.mrb[0].mxu0
        %v700 = vadd.f32 0.0, %v699
        %v701 = vpop.f32.mrb[0].mxu0
        %702 = vmatprep.mubr.f32.mxu0 0.0
        %703 = vmatmul.mubr.f32.gmra.mrb[0].mxu0 %v491
        %v704 = vpop.f32.mrb[0].mxu0
        %v705 = vadd.f32 0.0, %v704
        %v706 = vpop.f32.mrb[0].mxu0
        %707 = vmatprep.mubr.f32.mxu0 0.0
        %708 = vmatmul.mubr.f32.gmra.mrb[0].mxu0 %v493
        %v709 = vpop.f32.mrb[0].mxu0
        %v710 = vadd.f32 0.0, %v709
        %v711 = vpop.f32.mrb[0].mxu0
        %712 = vmatprep.mubr.f32.mxu0 0.0
        %713 = vmatmul.mubr.f32.gmra.mrb[0].mxu0 %v496
        %v714 = vpop.f32.mrb[0].mxu0
        %v715 = vadd.f32 0.0, %v714
        %v716 = vpop.f32.mrb[0].mxu0
        %717 = vmatprep.mubr.f32.mxu0 0.0
        %718 = vmatmul.mubr.f32.gmra.mrb[0].mxu0 %v498
        %v719 = vpop.f32.mrb[0].mxu0
        %v720 = vadd.f32 0.0, %v719
        %v721 = vpop.f32.mrb[0].mxu0
        %722 = vmatprep.mubr.f32.mxu0 0.0
        %723 = vmatmul.mubr.f32.gmra.mrb[0].mxu0 %v501
        %v724 = vpop.f32.mrb[0].mxu0
        %v725 = vadd.f32 0.0, %v724
        %v726 = vpop.f32.mrb[0].mxu0
        %727 = vmatprep.mubr.f32.mxu0 0.0
        %728 = vmatmul.mubr.f32.gmra.mrb[0].mxu0 %v503
        %v729 = vpop.f32.mrb[0].mxu0
        %v730 = vadd.f32 0.0, %v729
        %v731 = vpop.f32.mrb[0].mxu0
        %732 = vmatprep.mubr.f32.mxu0 0.0
        %733 = vmatmul.mubr.f32.gmra.mrb[0].mxu0 %v506
        %v734 = vpop.f32.mrb[0].mxu0
        %v735 = vadd.f32 0.0, %v734
        %v736 = vpop.f32.mrb[0].mxu0
        %737 = vmatprep.mubr.f32.mxu0 0.0
        %738 = vmatmul.mubr.f32.gmra.mrb[0].mxu0 %v508
        %v739 = vpop.f32.mrb[0].mxu0
        %v740 = vadd.f32 0.0, %v739
        %v741 = vpop.f32.mrb[0].mxu0
        %742 = vmatprep.mubr.f32.mxu0 0.0
        %743 = vmatmul.mubr.f32.gmra.mrb[0].mxu0 %v511
        %v744 = vpop.f32.mrb[0].mxu0
        %v745 = vadd.f32 0.0, %v744
        %v746 = vpop.f32.mrb[0].mxu0
        %747 = vmatprep.mubr.f32.mxu0 0.0
        %748 = vmatmul.mubr.f32.gmra.mrb[0].mxu0 %v513
        %v749 = vpop.f32.mrb[0].mxu0
        %v750 = vadd.f32 0.0, %v749
        %v751 = vpop.f32.mrb[0].mxu0
        %752 = vmatprep.mubr.f32.mxu0 0.0
        %753 = vmatmul.mubr.f32.gmra.mrb[0].mxu0 %v516
        %v754 = vpop.f32.mrb[0].mxu0
        %v755 = vadd.f32 0.0, %v754
        %v756 = vpop.f32.mrb[0].mxu0
        %757 = vmatprep.mubr.f32.mxu0 0.0
        %758 = vmatmul.mubr.f32.gmra.mrb[0].mxu0 %v518
        %v759 = vpop.f32.mrb[0].mxu0
        %v760 = vadd.f32 0.0, %v759
        %v761 = vpop.f32.mrb[0].mxu0
        %762 = vmatprep.mubr.f32.mxu0 0.0
        %763 = vmatmul.mubr.f32.gmra.mrb[0].mxu0 %v521
        %v764 = vpop.f32.mrb[0].mxu0
        %v765 = vadd.f32 0.0, %v764
        %v766 = vpop.f32.mrb[0].mxu0
        %767 = vmatprep.mubr.f32.mxu0 0.0
        %768 = vmatmul.mubr.f32.gmra.mrb[0].mxu0 %v523
        %v769 = vpop.f32.mrb[0].mxu0
        %v770 = vadd.f32 0.0, %v769
        %v771 = vpop.f32.mrb[0].mxu0
        %772 = vmatprep.mubr.f32.mxu0 0.0
        %773 = vmatmul.mubr.f32.gmra.mrb[0].mxu0 %v526
        %v774 = vpop.f32.mrb[0].mxu0
        %v775 = vadd.f32 0.0, %v774
        %v776 = vpop.f32.mrb[0].mxu0
        %777 = vmatprep.mubr.f32.mxu0 0.0
        %778 = vmatmul.mubr.f32.gmra.mrb[0].mxu0 %v528
        %v779 = vpop.f32.mrb[0].mxu0
        %v780 = vadd.f32 0.0, %v779
        %v781 = vpop.f32.mrb[0].mxu0
        %782 = vmatprep.mubr.f32.mxu0 0.0
        %783 = vmatmul.mubr.f32.gmra.mrb[0].mxu0 %v531
        %v784 = vpop.f32.mrb[0].mxu0
        %v785 = vadd.f32 0.0, %v784
        %v786 = vpop.f32.mrb[0].mxu0
        %787 = vmatprep.mubr.f32.mxu0 0.0
        %788 = vmatmul.mubr.f32.gmra.mrb[0].mxu0 %v533
        %v789 = vpop.f32.mrb[0].mxu0
        %v790 = vadd.f32 0.0, %v789
        %v791 = vpop.f32.mrb[0].mxu0
        %792 = vmatprep.mubr.f32.mxu0 0.0
        %793 = vmatmul.mubr.f32.gmra.mrb[0].mxu0 %v536
        %v794 = vpop.f32.mrb[0].mxu0
        %v795 = vadd.f32 0.0, %v794
        %v796 = vpop.f32.mrb[0].mxu0
        %797 = vmatprep.mubr.f32.mxu0 0.0
        %798 = vmatmul.mubr.f32.gmra.mrb[0].mxu0 %v538
        %v799 = vpop.f32.mrb[0].mxu0
        %v800 = vadd.f32 0.0, %v799
        %v801 = vpop.f32.mrb[0].mxu0
        %802 = vmatprep.mubr.f32.mxu0 0.0
        %803 = vmatmul.mubr.f32.gmra.mrb[0].mxu0 %v541
        %v804 = vpop.f32.mrb[0].mxu0
        %v805 = vadd.f32 0.0, %v804
        %v806 = vpop.f32.mrb[0].mxu0
        %807 = vmatprep.mubr.f32.mxu0 0.0
        %808 = vmatmul.mubr.f32.gmra.mrb[0].mxu0 %v543
        %v809 = vpop.f32.mrb[0].mxu0
        %v810 = vadd.f32 0.0, %v809
        %v811 = vpop.f32.mrb[0].mxu0
        %812 = vmatprep.mubr.f32.mxu0 0.0
        %813 = vmatmul.mubr.f32.gmra.mrb[0].mxu0 %v546
        %v814 = vpop.f32.mrb[0].mxu0
        %v815 = vadd.f32 0.0, %v814
        %v816 = vpop.f32.mrb[0].mxu0
        %817 = vmatprep.mubr.f32.mxu0 0.0
        %818 = vmatmul.mubr.f32.gmra.mrb[0].mxu0 %v548
        %v819 = vpop.f32.mrb[0].mxu0
        %v820 = vadd.f32 0.0, %v819
        %v821 = vpop.f32.mrb[0].mxu0
        %822 = vdwg.mxu0
        %823 = vmatprep.subr.mxu0 0.0
        %824 = vmatpush1.msra.mxu0 %v404
        %825 = vmatprep.subr.mxu0 0.0
        %826 = vmatpush1.msra.mxu0 %v405
        %827 = vmatprep.subr.mxu0 0.0
        %828 = vmatpush1.msra.mxu0 %v406
        %829 = vmatprep.subr.mxu0 0.0
        %830 = vmatpush1.msra.mxu0 %v407
        %831 = vmatprep.subr.mxu0 0.0
        %832 = vmatpush1.msra.mxu0 %v408
        %833 = vmatprep.subr.mxu0 0.0
        %834 = vmatpush1.msra.mxu0 %v409
        %835 = vmatprep.subr.mxu0 0.0
        %836 = vmatpush1.msra.mxu0 %v410
        %837 = vmatprep.subr.mxu0 0.0
        %838 = vmatpush1.msra.mxu0 %v411
        %839 = vmatprep.subr.mxu0 0.0
        %840 = vmatpush1.msra.mxu0 %v412
        %841 = vmatprep.subr.mxu0 0.0
        %842 = vmatpush1.msra.mxu0 %v413
        %843 = vmatprep.subr.mxu0 0.0
        %844 = vmatpush1.msra.mxu0 %v414
        %845 = vmatprep.subr.mxu0 0.0
        %846 = vmatpush1.msra.mxu0 %v415
        %847 = vmatprep.subr.mxu0 0.0
        %848 = vmatpush1.msra.mxu0 %v416
        %849 = vmatprep.subr.mxu0 0.0
        %850 = vmatpush1.msra.mxu0 %v417
        %851 = vmatprep.subr.mxu0 0.0
        %852 = vmatpush1.msra.mxu0 %v418
        %853 = vmatprep.subr.mxu0 0.0
        %854 = vmatpush1.msra.mxu0 %v419
        %855 = vmatprep.subr.mxu0 0.0
        %856 = vmatpush1.msra.mxu0 0.0
        %857 = vmatprep.subr.mxu0 0.0
        %858 = vmatpush1.msra.mxu0 0.0
        %859 = vmatprep.subr.mxu0 0.0
        %860 = vmatpush1.msra.mxu0 0.0
        %861 = vmatprep.subr.mxu0 0.0
        %862 = vmatpush1.msra.mxu0 0.0
        %863 = vmatprep.subr.mxu0 0.0
        %864 = vmatpush1.msra.mxu0 0.0
        %865 = vmatprep.subr.mxu0 0.0
        %866 = vmatpush1.msra.mxu0 0.0
        %867 = vmatprep.subr.mxu0 0.0
        %868 = vmatpush1.msra.mxu0 0.0
        %869 = vmatprep.subr.mxu0 0.0
        %870 = vmatpush1.msra.mxu0 0.0
        %871 = vmatprep.subr.mxu0 0.0
        %872 = vmatpush1.msra.mxu0 0.0
        %873 = vmatprep.subr.mxu0 0.0
        %874 = vmatpush1.msra.mxu0 0.0
        %875 = vmatprep.subr.mxu0 0.0
        %876 = vmatpush1.msra.mxu0 0.0
        %877 = vmatprep.subr.mxu0 0.0
        %878 = vmatpush1.msra.mxu0 0.0
        %879 = vmatprep.subr.mxu0 0.0
        %880 = vmatpush1.msra.mxu0 0.0
        %881 = vmatprep.subr.mxu0 0.0
        %882 = vmatpush1.msra.mxu0 0.0
        %883 = vmatprep.subr.mxu0 0.0
        %884 = vmatpush1.msra.mxu0 0.0
        %885 = vmatprep.subr.mxu0 0.0
        %886 = vmatpush1.msra.mxu0 0.0
        %887 = vmatprep.mubr.f32.mxu0 0.0
        %888 = vmatmul.mubr.f32.gmra.mrb[0].mxu0 %v350
        %v889 = vpop.f32.mrb[0].mxu0
        %v890 = vadd.f32 %v665, %v889
        %v891 = vpop.f32.mrb[0].mxu0
        %892 = vmatprep.mubr.f32.mxu0 0.0
        %893 = vmatmul.mubr.f32.gmra.mrb[0].mxu0 %v351
        %v894 = vpop.f32.mrb[0].mxu0
        %v895 = vadd.f32 %v670, %v894
        %v896 = vpop.f32.mrb[0].mxu0
        %897 = vmatprep.mubr.f32.mxu0 0.0
        %898 = vmatmul.mubr.f32.gmra.mrb[0].mxu0 %v353
        %v899 = vpop.f32.mrb[0].mxu0
        %v900 = vadd.f32 %v675, %v899
        %v901 = vpop.f32.mrb[0].mxu0
        %902 = vmatprep.mubr.f32.mxu0 0.0
        %903 = vmatmul.mubr.f32.gmra.mrb[0].mxu0 %v354
        %v904 = vpop.f32.mrb[0].mxu0
        %v905 = vadd.f32 %v680, %v904
        %v906 = vpop.f32.mrb[0].mxu0
        %907 = vmatprep.mubr.f32.mxu0 0.0
        %908 = vmatmul.mubr.f32.gmra.mrb[0].mxu0 %v356
        %v909 = vpop.f32.mrb[0].mxu0
        %v910 = vadd.f32 %v685, %v909
        %v911 = vpop.f32.mrb[0].mxu0
        %912 = vmatprep.mubr.f32.mxu0 0.0
        %913 = vmatmul.mubr.f32.gmra.mrb[0].mxu0 %v357
        %v914 = vpop.f32.mrb[0].mxu0
        %v915 = vadd.f32 %v690, %v914
        %v916 = vpop.f32.mrb[0].mxu0
        %917 = vmatprep.mubr.f32.mxu0 0.0
        %918 = vmatmul.mubr.f32.gmra.mrb[0].mxu0 %v359
        %v919 = vpop.f32.mrb[0].mxu0
        %v920 = vadd.f32 %v695, %v919
        %v921 = vpop.f32.mrb[0].mxu0
        %922 = vmatprep.mubr.f32.mxu0 0.0
        %923 = vmatmul.mubr.f32.gmra.mrb[0].mxu0 %v360
        %v924 = vpop.f32.mrb[0].mxu0
        %v925 = vadd.f32 %v700, %v924
        %v926 = vpop.f32.mrb[0].mxu0
        %927 = vmatprep.mubr.f32.mxu0 0.0
        %928 = vmatmul.mubr.f32.gmra.mrb[0].mxu0 %v362
        %v929 = vpop.f32.mrb[0].mxu0
        %v930 = vadd.f32 %v705, %v929
        %v931 = vpop.f32.mrb[0].mxu0
        %932 = vmatprep.mubr.f32.mxu0 0.0
        %933 = vmatmul.mubr.f32.gmra.mrb[0].mxu0 %v363
        %v934 = vpop.f32.mrb[0].mxu0
        %v935 = vadd.f32 %v710, %v934
        %v936 = vpop.f32.mrb[0].mxu0
        %937 = vmatprep.mubr.f32.mxu0 0.0
        %938 = vmatmul.mubr.f32.gmra.mrb[0].mxu0 %v365
        %v939 = vpop.f32.mrb[0].mxu0
        %v940 = vadd.f32 %v715, %v939
        %v941 = vpop.f32.mrb[0].mxu0
        %942 = vmatprep.mubr.f32.mxu0 0.0
        %943 = vmatmul.mubr.f32.gmra.mrb[0].mxu0 %v366
        %v944 = vpop.f32.mrb[0].mxu0
        %v945 = vadd.f32 %v720, %v944
        %v946 = vpop.f32.mrb[0].mxu0
        %947 = vmatprep.mubr.f32.mxu0 0.0
        %948 = vmatmul.mubr.f32.gmra.mrb[0].mxu0 %v368
        %v949 = vpop.f32.mrb[0].mxu0
        %v950 = vadd.f32 %v725, %v949
        %v951 = vpop.f32.mrb[0].mxu0
        %952 = vmatprep.mubr.f32.mxu0 0.0
        %953 = vmatmul.mubr.f32.gmra.mrb[0].mxu0 %v369
        %v954 = vpop.f32.mrb[0].mxu0
        %v955 = vadd.f32 %v730, %v954
        %v956 = vpop.f32.mrb[0].mxu0
        %957 = vmatprep.mubr.f32.mxu0 0.0
        %958 = vmatmul.mubr.f32.gmra.mrb[0].mxu0 %v371
        %v959 = vpop.f32.mrb[0].mxu0
        %v960 = vadd.f32 %v735, %v959
        %v961 = vpop.f32.mrb[0].mxu0
        %962 = vmatprep.mubr.f32.mxu0 0.0
        %963 = vmatmul.mubr.f32.gmra.mrb[0].mxu0 %v372
        %v964 = vpop.f32.mrb[0].mxu0
        %v965 = vadd.f32 %v740, %v964
        %v966 = vpop.f32.mrb[0].mxu0
        %967 = vmatprep.mubr.f32.mxu0 0.0
        %968 = vmatmul.mubr.f32.gmra.mrb[0].mxu0 %v374
        %v969 = vpop.f32.mrb[0].mxu0
        %v970 = vadd.f32 %v745, %v969
        %v971 = vpop.f32.mrb[0].mxu0
        %972 = vmatprep.mubr.f32.mxu0 0.0
        %973 = vmatmul.mubr.f32.gmra.mrb[0].mxu0 %v375
        %v974 = vpop.f32.mrb[0].mxu0
        %v975 = vadd.f32 %v750, %v974
        %v976 = vpop.f32.mrb[0].mxu0
        %977 = vmatprep.mubr.f32.mxu0 0.0
        %978 = vmatmul.mubr.f32.gmra.mrb[0].mxu0 %v377
        %v979 = vpop.f32.mrb[0].mxu0
        %v980 = vadd.f32 %v755, %v979
        %v981 = vpop.f32.mrb[0].mxu0
        %982 = vmatprep.mubr.f32.mxu0 0.0
        %983 = vmatmul.mubr.f32.gmra.mrb[0].mxu0 %v378
        %v984 = vpop.f32.mrb[0].mxu0
        %v985 = vadd.f32 %v760, %v984
        %v986 = vpop.f32.mrb[0].mxu0
        %987 = vmatprep.mubr.f32.mxu0 0.0
        %988 = vmatmul.mubr.f32.gmra.mrb[0].mxu0 %v380
        %v989 = vpop.f32.mrb[0].mxu0
        %v990 = vadd.f32 %v765, %v989
        %v991 = vpop.f32.mrb[0].mxu0
        %992 = vmatprep.mubr.f32.mxu0 0.0
        %993 = vmatmul.mubr.f32.gmra.mrb[0].mxu0 %v381
        %v994 = vpop.f32.mrb[0].mxu0
        %v995 = vadd.f32 %v770, %v994
        %v996 = vpop.f32.mrb[0].mxu0
        %997 = vmatprep.mubr.f32.mxu0 0.0
        %998 = vmatmul.mubr.f32.gmra.mrb[0].mxu0 %v383
        %v999 = vpop.f32.mrb[0].mxu0
        %v1000 = vadd.f32 %v775, %v999
        %v1001 = vpop.f32.mrb[0].mxu0
        %1002 = vmatprep.mubr.f32.mxu0 0.0
        %1003 = vmatmul.mubr.f32.gmra.mrb[0].mxu0 %v384
        %v1004 = vpop.f32.mrb[0].mxu0
        %v1005 = vadd.f32 %v780, %v1004
        %v1006 = vpop.f32.mrb[0].mxu0
        %1007 = vmatprep.mubr.f32.mxu0 0.0
        %1008 = vmatmul.mubr.f32.gmra.mrb[0].mxu0 %v386
        %v1009 = vpop.f32.mrb[0].mxu0
        %v1010 = vadd.f32 %v785, %v1009
        %v1011 = vpop.f32.mrb[0].mxu0
        %1012 = vmatprep.mubr.f32.mxu0 0.0
        %1013 = vmatmul.mubr.f32.gmra.mrb[0].mxu0 %v387
        %v1014 = vpop.f32.mrb[0].mxu0
        %v1015 = vadd.f32 %v790, %v1014
        %v1016 = vpop.f32.mrb[0].mxu0
        %1017 = vmatprep.mubr.f32.mxu0 0.0
        %1018 = vmatmul.mubr.f32.gmra.mrb[0].mxu0 %v389
        %v1019 = vpop.f32.mrb[0].mxu0
        %v1020 = vadd.f32 %v795, %v1019
        %v1021 = vpop.f32.mrb[0].mxu0
        %1022 = vmatprep.mubr.f32.mxu0 0.0
        %1023 = vmatmul.mubr.f32.gmra.mrb[0].mxu0 %v390
        %v1024 = vpop.f32.mrb[0].mxu0
        %v1025 = vadd.f32 %v800, %v1024
        %v1026 = vpop.f32.mrb[0].mxu0
        %1027 = vmatprep.mubr.f32.mxu0 0.0
        %1028 = vmatmul.mubr.f32.gmra.mrb[0].mxu0 %v392
        %v1029 = vpop.f32.mrb[0].mxu0
        %v1030 = vadd.f32 %v805, %v1029
        %v1031 = vpop.f32.mrb[0].mxu0
        %1032 = vmatprep.mubr.f32.mxu0 0.0
        %1033 = vmatmul.mubr.f32.gmra.mrb[0].mxu0 %v393
        %v1034 = vpop.f32.mrb[0].mxu0
        %v1035 = vadd.f32 %v810, %v1034
        %v1036 = vpop.f32.mrb[0].mxu0
        %1037 = vmatprep.mubr.f32.mxu0 0.0
        %1038 = vmatmul.mubr.f32.gmra.mrb[0].mxu0 %v395
        %v1039 = vpop.f32.mrb[0].mxu0
        %v1040 = vadd.f32 %v815, %v1039
        %v1041 = vpop.f32.mrb[0].mxu0
        %1042 = vmatprep.mubr.f32.mxu0 0.0
        %1043 = vmatmul.mubr.f32.gmra.mrb[0].mxu0 %v396
        %v1044 = vpop.f32.mrb[0].mxu0
        %v1045 = vadd.f32 %v820, %v1044
        %v1046 = vpop.f32.mrb[0].mxu0
        %1047 = vdwg.mxu0
        %vm1048 = vcmask 1045504
        %v1049 = vrot.slane %v350, 2
        %v1050 = vrot.slane %v351, 2
        %v1051 = vsel %vm1048, %v1049, %v1050
        %v1052 = vrot.slane %v352, 2
        %v1053 = vsel %vm1048, %v1050, %v1052
        %v1054 = vrot.slane %v353, 2
        %v1055 = vrot.slane %v354, 2
        %v1056 = vsel %vm1048, %v1054, %v1055
        %v1057 = vrot.slane %v355, 2
        %v1058 = vsel %vm1048, %v1055, %v1057
        %v1059 = vrot.slane %v356, 2
        %v1060 = vrot.slane %v357, 2
        %v1061 = vsel %vm1048, %v1059, %v1060
        %v1062 = vrot.slane %v358, 2
        %v1063 = vsel %vm1048, %v1060, %v1062
        %v1064 = vrot.slane %v359, 2
        %v1065 = vrot.slane %v360, 2
        %v1066 = vsel %vm1048, %v1064, %v1065
        %v1067 = vrot.slane %v361, 2
        %v1068 = vsel %vm1048, %v1065, %v1067
        %v1069 = vrot.slane %v362, 2
        %v1070 = vrot.slane %v363, 2
        %v1071 = vsel %vm1048, %v1069, %v1070
        %v1072 = vrot.slane %v364, 2
        %v1073 = vsel %vm1048, %v1070, %v1072
        %v1074 = vrot.slane %v365, 2
        %v1075 = vrot.slane %v366, 2
        %v1076 = vsel %vm1048, %v1074, %v1075
        %v1077 = vrot.slane %v367, 2
        %v1078 = vsel %vm1048, %v1075, %v1077
        %v1079 = vrot.slane %v368, 2
        %v1080 = vrot.slane %v369, 2
        %v1081 = vsel %vm1048, %v1079, %v1080
        %v1082 = vrot.slane %v370, 2
        %v1083 = vsel %vm1048, %v1080, %v1082
        %v1084 = vrot.slane %v371, 2
        %v1085 = vrot.slane %v372, 2
        %v1086 = vsel %vm1048, %v1084, %v1085
        %v1087 = vrot.slane %v373, 2
        %v1088 = vsel %vm1048, %v1085, %v1087
        %v1089 = vrot.slane %v374, 2
        %v1090 = vrot.slane %v375, 2
        %v1091 = vsel %vm1048, %v1089, %v1090
        %v1092 = vrot.slane %v376, 2
        %v1093 = vsel %vm1048, %v1090, %v1092
        %v1094 = vrot.slane %v377, 2
        %v1095 = vrot.slane %v378, 2
        %v1096 = vsel %vm1048, %v1094, %v1095
        %v1097 = vrot.slane %v379, 2
        %v1098 = vsel %vm1048, %v1095, %v1097
        %v1099 = vrot.slane %v380, 2
        %v1100 = vrot.slane %v381, 2
        %v1101 = vsel %vm1048, %v1099, %v1100
        %v1102 = vrot.slane %v382, 2
        %v1103 = vsel %vm1048, %v1100, %v1102
        %v1104 = vrot.slane %v383, 2
        %v1105 = vrot.slane %v384, 2
        %v1106 = vsel %vm1048, %v1104, %v1105
        %v1107 = vrot.slane %v385, 2
        %v1108 = vsel %vm1048, %v1105, %v1107
        %v1109 = vrot.slane %v386, 2
        %v1110 = vrot.slane %v387, 2
        %v1111 = vsel %vm1048, %v1109, %v1110
        %v1112 = vrot.slane %v388, 2
        %v1113 = vsel %vm1048, %v1110, %v1112
        %v1114 = vrot.slane %v389, 2
        %v1115 = vrot.slane %v390, 2
        %v1116 = vsel %vm1048, %v1114, %v1115
        %v1117 = vrot.slane %v391, 2
        %v1118 = vsel %vm1048, %v1115, %v1117
        %v1119 = vrot.slane %v392, 2
        %v1120 = vrot.slane %v393, 2
        %v1121 = vsel %vm1048, %v1119, %v1120
        %v1122 = vrot.slane %v394, 2
        %v1123 = vsel %vm1048, %v1120, %v1122
        %v1124 = vrot.slane %v395, 2
        %v1125 = vrot.slane %v396, 2
        %v1126 = vsel %vm1048, %v1124, %v1125
        %v1127 = vrot.slane %v397, 2
        %v1128 = vsel %vm1048, %v1125, %v1127
        %s1161 = scalar_lea.vmem %s1, 256
        %v1162 = vld [vmem:[%s1161] sm:$0xff]
        %v1163 = vld [vmem:[%s1161 + $0x8] sm:$0xff]
        %v1164 = vld [vmem:[%s1161 + $0x10] sm:$0xff]
        %v1165 = vld [vmem:[%s1161 + $0x18] sm:$0xff]
        %v1166 = vld [vmem:[%s1161 + $0x20] sm:$0xff]
        %v1167 = vld [vmem:[%s1161 + $0x28] sm:$0xff]
        %v1168 = vld [vmem:[%s1161 + $0x30] sm:$0xff]
        %v1169 = vld [vmem:[%s1161 + $0x38] sm:$0xff]
        %v1170 = vld [vmem:[%s1161 + $0x40] sm:$0xff]
        %v1171 = vld [vmem:[%s1161 + $0x48] sm:$0xff]
        %v1172 = vld [vmem:[%s1161 + $0x50] sm:$0xff]
        %v1173 = vld [vmem:[%s1161 + $0x58] sm:$0xff]
        %v1174 = vld [vmem:[%s1161 + $0x60] sm:$0xff]
        %v1175 = vld [vmem:[%s1161 + $0x68] sm:$0xff]
        %v1176 = vld [vmem:[%s1161 + $0x70] sm:$0xff]
        %v1177 = vld [vmem:[%s1161 + $0x78] sm:$0xff]
        %1178 = vmatprep.subr.mxu0 0.0
        %1179 = vmatpush1.msra.mxu0 %v1162
        %1180 = vmatprep.subr.mxu0 0.0
        %1181 = vmatpush1.msra.mxu0 %v1163
        %1182 = vmatprep.subr.mxu0 0.0
        %1183 = vmatpush1.msra.mxu0 %v1164
        %1184 = vmatprep.subr.mxu0 0.0
        %1185 = vmatpush1.msra.mxu0 %v1165
        %1186 = vmatprep.subr.mxu0 0.0
        %1187 = vmatpush1.msra.mxu0 %v1166
        %1188 = vmatprep.subr.mxu0 0.0
        %1189 = vmatpush1.msra.mxu0 %v1167
        %1190 = vmatprep.subr.mxu0 0.0
        %1191 = vmatpush1.msra.mxu0 %v1168
        %1192 = vmatprep.subr.mxu0 0.0
        %1193 = vmatpush1.msra.mxu0 %v1169
        %1194 = vmatprep.subr.mxu0 0.0
        %1195 = vmatpush1.msra.mxu0 %v1170
        %1196 = vmatprep.subr.mxu0 0.0
        %1197 = vmatpush1.msra.mxu0 %v1171
        %1198 = vmatprep.subr.mxu0 0.0
        %1199 = vmatpush1.msra.mxu0 %v1172
        %1200 = vmatprep.subr.mxu0 0.0
        %1201 = vmatpush1.msra.mxu0 %v1173
        %1202 = vmatprep.subr.mxu0 0.0
        %1203 = vmatpush1.msra.mxu0 %v1174
        %1204 = vmatprep.subr.mxu0 0.0
        %1205 = vmatpush1.msra.mxu0 %v1175
        %1206 = vmatprep.subr.mxu0 0.0
        %1207 = vmatpush1.msra.mxu0 %v1176
        %1208 = vmatprep.subr.mxu0 0.0
        %1209 = vmatpush1.msra.mxu0 %v1177
        %1210 = vmatprep.subr.mxu0 0.0
        %1211 = vmatpush1.msra.mxu0 0.0
        %1212 = vmatprep.subr.mxu0 0.0
        %1213 = vmatpush1.msra.mxu0 0.0
        %1214 = vmatprep.subr.mxu0 0.0
        %1215 = vmatpush1.msra.mxu0 0.0
        %1216 = vmatprep.subr.mxu0 0.0
        %1217 = vmatpush1.msra.mxu0 0.0
        %1218 = vmatprep.subr.mxu0 0.0
        %1219 = vmatpush1.msra.mxu0 0.0
        %1220 = vmatprep.subr.mxu0 0.0
        %1221 = vmatpush1.msra.mxu0 0.0
        %1222 = vmatprep.subr.mxu0 0.0
        %1223 = vmatpush1.msra.mxu0 0.0
        %1224 = vmatprep.subr.mxu0 0.0
        %1225 = vmatpush1.msra.mxu0 0.0
        %1226 = vmatprep.subr.mxu0 0.0
        %1227 = vmatpush1.msra.mxu0 0.0
        %1228 = vmatprep.subr.mxu0 0.0
        %1229 = vmatpush1.msra.mxu0 0.0
        %1230 = vmatprep.subr.mxu0 0.0
        %1231 = vmatpush1.msra.mxu0 0.0
        %1232 = vmatprep.subr.mxu0 0.0
        %1233 = vmatpush1.msra.mxu0 0.0
        %1234 = vmatprep.subr.mxu0 0.0
        %1235 = vmatpush1.msra.mxu0 0.0
        %1236 = vmatprep.subr.mxu0 0.0
        %1237 = vmatpush1.msra.mxu0 0.0
        %1238 = vmatprep.subr.mxu0 0.0
        %1239 = vmatpush1.msra.mxu0 0.0
        %1240 = vmatprep.subr.mxu0 0.0
        %1241 = vmatpush1.msra.mxu0 0.0
        %1242 = vmatprep.mubr.f32.mxu0 0.0
        %1243 = vmatmul.mubr.f32.gmra.mrb[0].mxu0 %v1051
        %v1244 = vpop.f32.mrb[0].mxu0
        %v1245 = vadd.f32 0.0, %v1244
        %v1246 = vpop.f32.mrb[0].mxu0
        %1247 = vmatprep.mubr.f32.mxu0 0.0
        %1248 = vmatmul.mubr.f32.gmra.mrb[0].mxu0 %v1053
        %v1249 = vpop.f32.mrb[0].mxu0
        %v1250 = vadd.f32 0.0, %v1249
        %v1251 = vpop.f32.mrb[0].mxu0
        %1252 = vmatprep.mubr.f32.mxu0 0.0
        %1253 = vmatmul.mubr.f32.gmra.mrb[0].mxu0 %v1056
        %v1254 = vpop.f32.mrb[0].mxu0
        %v1255 = vadd.f32 0.0, %v1254
        %v1256 = vpop.f32.mrb[0].mxu0
        %1257 = vmatprep.mubr.f32.mxu0 0.0
        %1258 = vmatmul.mubr.f32.gmra.mrb[0].mxu0 %v1058
        %v1259 = vpop.f32.mrb[0].mxu0
        %v1260 = vadd.f32 0.0, %v1259
        %v1261 = vpop.f32.mrb[0].mxu0
        %1262 = vmatprep.mubr.f32.mxu0 0.0
        %1263 = vmatmul.mubr.f32.gmra.mrb[0].mxu0 %v1061
        %v1264 = vpop.f32.mrb[0].mxu0
        %v1265 = vadd.f32 0.0, %v1264
        %v1266 = vpop.f32.mrb[0].mxu0
        %1267 = vmatprep.mubr.f32.mxu0 0.0
        %1268 = vmatmul.mubr.f32.gmra.mrb[0].mxu0 %v1063
        %v1269 = vpop.f32.mrb[0].mxu0
        %v1270 = vadd.f32 0.0, %v1269
        %v1271 = vpop.f32.mrb[0].mxu0
        %1272 = vmatprep.mubr.f32.mxu0 0.0
        %1273 = vmatmul.mubr.f32.gmra.mrb[0].mxu0 %v1066
        %v1274 = vpop.f32.mrb[0].mxu0
        %v1275 = vadd.f32 0.0, %v1274
        %v1276 = vpop.f32.mrb[0].mxu0
        %1277 = vmatprep.mubr.f32.mxu0 0.0
        %1278 = vmatmul.mubr.f32.gmra.mrb[0].mxu0 %v1068
        %v1279 = vpop.f32.mrb[0].mxu0
        %v1280 = vadd.f32 0.0, %v1279
        %v1281 = vpop.f32.mrb[0].mxu0
        %1282 = vmatprep.mubr.f32.mxu0 0.0
        %1283 = vmatmul.mubr.f32.gmra.mrb[0].mxu0 %v1071
        %v1284 = vpop.f32.mrb[0].mxu0
        %v1285 = vadd.f32 0.0, %v1284
        %v1286 = vpop.f32.mrb[0].mxu0
        %1287 = vmatprep.mubr.f32.mxu0 0.0
        %1288 = vmatmul.mubr.f32.gmra.mrb[0].mxu0 %v1073
        %v1289 = vpop.f32.mrb[0].mxu0
        %v1290 = vadd.f32 0.0, %v1289
        %v1291 = vpop.f32.mrb[0].mxu0
        %1292 = vmatprep.mubr.f32.mxu0 0.0
        %1293 = vmatmul.mubr.f32.gmra.mrb[0].mxu0 %v1076
        %v1294 = vpop.f32.mrb[0].mxu0
        %v1295 = vadd.f32 0.0, %v1294
        %v1296 = vpop.f32.mrb[0].mxu0
        %1297 = vmatprep.mubr.f32.mxu0 0.0
        %1298 = vmatmul.mubr.f32.gmra.mrb[0].mxu0 %v1078
        %v1299 = vpop.f32.mrb[0].mxu0
        %v1300 = vadd.f32 0.0, %v1299
        %v1301 = vpop.f32.mrb[0].mxu0
        %1302 = vmatprep.mubr.f32.mxu0 0.0
        %1303 = vmatmul.mubr.f32.gmra.mrb[0].mxu0 %v1081
        %v1304 = vpop.f32.mrb[0].mxu0
        %v1305 = vadd.f32 0.0, %v1304
        %v1306 = vpop.f32.mrb[0].mxu0
        %1307 = vmatprep.mubr.f32.mxu0 0.0
        %1308 = vmatmul.mubr.f32.gmra.mrb[0].mxu0 %v1083
        %v1309 = vpop.f32.mrb[0].mxu0
        %v1310 = vadd.f32 0.0, %v1309
        %v1311 = vpop.f32.mrb[0].mxu0
        %1312 = vmatprep.mubr.f32.mxu0 0.0
        %1313 = vmatmul.mubr.f32.gmra.mrb[0].mxu0 %v1086
        %v1314 = vpop.f32.mrb[0].mxu0
        %v1315 = vadd.f32 0.0, %v1314
        %v1316 = vpop.f32.mrb[0].mxu0
        %1317 = vmatprep.mubr.f32.mxu0 0.0
        %1318 = vmatmul.mubr.f32.gmra.mrb[0].mxu0 %v1088
        %v1319 = vpop.f32.mrb[0].mxu0
        %v1320 = vadd.f32 0.0, %v1319
        %v1321 = vpop.f32.mrb[0].mxu0
        %1322 = vmatprep.mubr.f32.mxu0 0.0
        %1323 = vmatmul.mubr.f32.gmra.mrb[0].mxu0 %v1091
        %v1324 = vpop.f32.mrb[0].mxu0
        %v1325 = vadd.f32 0.0, %v1324
        %v1326 = vpop.f32.mrb[0].mxu0
        %1327 = vmatprep.mubr.f32.mxu0 0.0
        %1328 = vmatmul.mubr.f32.gmra.mrb[0].mxu0 %v1093
        %v1329 = vpop.f32.mrb[0].mxu0
        %v1330 = vadd.f32 0.0, %v1329
        %v1331 = vpop.f32.mrb[0].mxu0
        %1332 = vmatprep.mubr.f32.mxu0 0.0
        %1333 = vmatmul.mubr.f32.gmra.mrb[0].mxu0 %v1096
        %v1334 = vpop.f32.mrb[0].mxu0
        %v1335 = vadd.f32 0.0, %v1334
        %v1336 = vpop.f32.mrb[0].mxu0
        %1337 = vmatprep.mubr.f32.mxu0 0.0
        %1338 = vmatmul.mubr.f32.gmra.mrb[0].mxu0 %v1098
        %v1339 = vpop.f32.mrb[0].mxu0
        %v1340 = vadd.f32 0.0, %v1339
        %v1341 = vpop.f32.mrb[0].mxu0
        %1342 = vmatprep.mubr.f32.mxu0 0.0
        %1343 = vmatmul.mubr.f32.gmra.mrb[0].mxu0 %v1101
        %v1344 = vpop.f32.mrb[0].mxu0
        %v1345 = vadd.f32 0.0, %v1344
        %v1346 = vpop.f32.mrb[0].mxu0
        %1347 = vmatprep.mubr.f32.mxu0 0.0
        %1348 = vmatmul.mubr.f32.gmra.mrb[0].mxu0 %v1103
        %v1349 = vpop.f32.mrb[0].mxu0
        %v1350 = vadd.f32 0.0, %v1349
        %v1351 = vpop.f32.mrb[0].mxu0
        %1352 = vmatprep.mubr.f32.mxu0 0.0
        %1353 = vmatmul.mubr.f32.gmra.mrb[0].mxu0 %v1106
        %v1354 = vpop.f32.mrb[0].mxu0
        %v1355 = vadd.f32 0.0, %v1354
        %v1356 = vpop.f32.mrb[0].mxu0
        %1357 = vmatprep.mubr.f32.mxu0 0.0
        %1358 = vmatmul.mubr.f32.gmra.mrb[0].mxu0 %v1108
        %v1359 = vpop.f32.mrb[0].mxu0
        %v1360 = vadd.f32 0.0, %v1359
        %v1361 = vpop.f32.mrb[0].mxu0
        %1362 = vmatprep.mubr.f32.mxu0 0.0
        %1363 = vmatmul.mubr.f32.gmra.mrb[0].mxu0 %v1111
        %v1364 = vpop.f32.mrb[0].mxu0
        %v1365 = vadd.f32 0.0, %v1364
        %v1366 = vpop.f32.mrb[0].mxu0
        %1367 = vmatprep.mubr.f32.mxu0 0.0
        %1368 = vmatmul.mubr.f32.gmra.mrb[0].mxu0 %v1113
        %v1369 = vpop.f32.mrb[0].mxu0
        %v1370 = vadd.f32 0.0, %v1369
        %v1371 = vpop.f32.mrb[0].mxu0
        %1372 = vmatprep.mubr.f32.mxu0 0.0
        %1373 = vmatmul.mubr.f32.gmra.mrb[0].mxu0 %v1116
        %v1374 = vpop.f32.mrb[0].mxu0
        %v1375 = vadd.f32 0.0, %v1374
        %v1376 = vpop.f32.mrb[0].mxu0
        %1377 = vmatprep.mubr.f32.mxu0 0.0
        %1378 = vmatmul.mubr.f32.gmra.mrb[0].mxu0 %v1118
        %v1379 = vpop.f32.mrb[0].mxu0
        %v1380 = vadd.f32 0.0, %v1379
        %v1381 = vpop.f32.mrb[0].mxu0
        %1382 = vmatprep.mubr.f32.mxu0 0.0
        %1383 = vmatmul.mubr.f32.gmra.mrb[0].mxu0 %v1121
        %v1384 = vpop.f32.mrb[0].mxu0
        %v1385 = vadd.f32 0.0, %v1384
        %v1386 = vpop.f32.mrb[0].mxu0
        %1387 = vmatprep.mubr.f32.mxu0 0.0
        %1388 = vmatmul.mubr.f32.gmra.mrb[0].mxu0 %v1123
        %v1389 = vpop.f32.mrb[0].mxu0
        %v1390 = vadd.f32 0.0, %v1389
        %v1391 = vpop.f32.mrb[0].mxu0
        %1392 = vmatprep.mubr.f32.mxu0 0.0
        %1393 = vmatmul.mubr.f32.gmra.mrb[0].mxu0 %v1126
        %v1394 = vpop.f32.mrb[0].mxu0
        %v1395 = vadd.f32 0.0, %v1394
        %v1396 = vpop.f32.mrb[0].mxu0
        %1397 = vmatprep.mubr.f32.mxu0 0.0
        %1398 = vmatmul.mubr.f32.gmra.mrb[0].mxu0 %v1128
        %v1399 = vpop.f32.mrb[0].mxu0
        %v1400 = vadd.f32 0.0, %v1399
        %v1401 = vpop.f32.mrb[0].mxu0
        %1402 = vdwg.mxu0
        %v1403 = vadd.f32 %v890, %v1245
        %v1404 = vadd.f32 %v895, %v1250
        %v1405 = vadd.f32 %v900, %v1255
        %v1406 = vadd.f32 %v905, %v1260
        %v1407 = vadd.f32 %v910, %v1265
        %v1408 = vadd.f32 %v915, %v1270
        %v1409 = vadd.f32 %v920, %v1275
        %v1410 = vadd.f32 %v925, %v1280
        %v1411 = vadd.f32 %v930, %v1285
        %v1412 = vadd.f32 %v935, %v1290
        %v1413 = vadd.f32 %v940, %v1295
        %v1414 = vadd.f32 %v945, %v1300
        %v1415 = vadd.f32 %v950, %v1305
        %v1416 = vadd.f32 %v955, %v1310
        %v1417 = vadd.f32 %v960, %v1315
        %v1418 = vadd.f32 %v965, %v1320
        %v1419 = vadd.f32 %v970, %v1325
        %v1420 = vadd.f32 %v975, %v1330
        %v1421 = vadd.f32 %v980, %v1335
        %v1422 = vadd.f32 %v985, %v1340
        %v1423 = vadd.f32 %v990, %v1345
        %v1424 = vadd.f32 %v995, %v1350
        %v1425 = vadd.f32 %v1000, %v1355
        %v1426 = vadd.f32 %v1005, %v1360
        %v1427 = vadd.f32 %v1010, %v1365
        %v1428 = vadd.f32 %v1015, %v1370
        %v1429 = vadd.f32 %v1020, %v1375
        %v1430 = vadd.f32 %v1025, %v1380
        %v1431 = vadd.f32 %v1030, %v1385
        %v1432 = vadd.f32 %v1035, %v1390
        %v1433 = vadd.f32 %v1040, %v1395
        %v1434 = vadd.f32 %v1045, %v1400
        %s1435 = scalar_lea.vmem %s1, 384
        %v1436 = vld [vmem:[%s1435] sm:$0xff]
        %v1437 = vld [vmem:[%s1435 + $0x8] sm:$0xff]
        %v1438 = vld [vmem:[%s1435 + $0x10] sm:$0xff]
        %v1439 = vld [vmem:[%s1435 + $0x18] sm:$0xff]
        %v1440 = vld [vmem:[%s1435 + $0x20] sm:$0xff]
        %v1441 = vld [vmem:[%s1435 + $0x28] sm:$0xff]
        %v1442 = vld [vmem:[%s1435 + $0x30] sm:$0xff]
        %v1443 = vld [vmem:[%s1435 + $0x38] sm:$0xff]
        %v1444 = vld [vmem:[%s1435 + $0x40] sm:$0xff]
        %v1445 = vld [vmem:[%s1435 + $0x48] sm:$0xff]
        %v1446 = vld [vmem:[%s1435 + $0x50] sm:$0xff]
        %v1447 = vld [vmem:[%s1435 + $0x58] sm:$0xff]
        %v1448 = vld [vmem:[%s1435 + $0x60] sm:$0xff]
        %v1449 = vld [vmem:[%s1435 + $0x68] sm:$0xff]
        %v1450 = vld [vmem:[%s1435 + $0x70] sm:$0xff]
        %v1451 = vld [vmem:[%s1435 + $0x78] sm:$0xff]
        %1452 = vmatprep.subr.mxu0 0.0
        %1453 = vmatpush1.msra.mxu0 %v1436
        %1454 = vmatprep.subr.mxu0 0.0
        %1455 = vmatpush1.msra.mxu0 %v1437
        %1456 = vmatprep.subr.mxu0 0.0
        %1457 = vmatpush1.msra.mxu0 %v1438
        %1458 = vmatprep.subr.mxu0 0.0
        %1459 = vmatpush1.msra.mxu0 %v1439
        %1460 = vmatprep.subr.mxu0 0.0
        %1461 = vmatpush1.msra.mxu0 %v1440
        %1462 = vmatprep.subr.mxu0 0.0
        %1463 = vmatpush1.msra.mxu0 %v1441
        %1464 = vmatprep.subr.mxu0 0.0
        %1465 = vmatpush1.msra.mxu0 %v1442
        %1466 = vmatprep.subr.mxu0 0.0
        %1467 = vmatpush1.msra.mxu0 %v1443
        %1468 = vmatprep.subr.mxu0 0.0
        %1469 = vmatpush1.msra.mxu0 %v1444
        %1470 = vmatprep.subr.mxu0 0.0
        %1471 = vmatpush1.msra.mxu0 %v1445
        %1472 = vmatprep.subr.mxu0 0.0
        %1473 = vmatpush1.msra.mxu0 %v1446
        %1474 = vmatprep.subr.mxu0 0.0
        %1475 = vmatpush1.msra.mxu0 %v1447
        %1476 = vmatprep.subr.mxu0 0.0
        %1477 = vmatpush1.msra.mxu0 %v1448
        %1478 = vmatprep.subr.mxu0 0.0
        %1479 = vmatpush1.msra.mxu0 %v1449
        %1480 = vmatprep.subr.mxu0 0.0
        %1481 = vmatpush1.msra.mxu0 %v1450
        %1482 = vmatprep.subr.mxu0 0.0
        %1483 = vmatpush1.msra.mxu0 %v1451
        %1484 = vmatprep.subr.mxu0 0.0
        %1485 = vmatpush1.msra.mxu0 0.0
        %1486 = vmatprep.subr.mxu0 0.0
        %1487 = vmatpush1.msra.mxu0 0.0
        %1488 = vmatprep.subr.mxu0 0.0
        %1489 = vmatpush1.msra.mxu0 0.0
        %1490 = vmatprep.subr.mxu0 0.0
        %1491 = vmatpush1.msra.mxu0 0.0
        %1492 = vmatprep.subr.mxu0 0.0
        %1493 = vmatpush1.msra.mxu0 0.0
        %1494 = vmatprep.subr.mxu0 0.0
        %1495 = vmatpush1.msra.mxu0 0.0
        %1496 = vmatprep.subr.mxu0 0.0
        %1497 = vmatpush1.msra.mxu0 0.0
        %1498 = vmatprep.subr.mxu0 0.0
        %1499 = vmatpush1.msra.mxu0 0.0
        %1500 = vmatprep.subr.mxu0 0.0
        %1501 = vmatpush1.msra.mxu0 0.0
        %1502 = vmatprep.subr.mxu0 0.0
        %1503 = vmatpush1.msra.mxu0 0.0
        %1504 = vmatprep.subr.mxu0 0.0
        %1505 = vmatpush1.msra.mxu0 0.0
        %1506 = vmatprep.subr.mxu0 0.0
        %1507 = vmatpush1.msra.mxu0 0.0
        %1508 = vmatprep.subr.mxu0 0.0
        %1509 = vmatpush1.msra.mxu0 0.0
        %1510 = vmatprep.subr.mxu0 0.0
        %1511 = vmatpush1.msra.mxu0 0.0
        %1512 = vmatprep.subr.mxu0 0.0
        %1513 = vmatpush1.msra.mxu0 0.0
        %1514 = vmatprep.subr.mxu0 0.0
        %1515 = vmatpush1.msra.mxu0 0.0
        %1516 = vmatprep.mubr.f32.mxu0 0.0
        %1517 = vmatmul.mubr.f32.gmra.mrb[0].mxu0 %v353
        %v1518 = vpop.f32.mrb[0].mxu0
        %v1519 = vadd.f32 0.0, %v1518
        %v1520 = vpop.f32.mrb[0].mxu0
        %1521 = vmatprep.mubr.f32.mxu0 0.0
        %1522 = vmatmul.mubr.f32.gmra.mrb[0].mxu0 %v354
        %v1523 = vpop.f32.mrb[0].mxu0
        %v1524 = vadd.f32 0.0, %v1523
        %v1525 = vpop.f32.mrb[0].mxu0
        %1526 = vmatprep.mubr.f32.mxu0 0.0
        %1527 = vmatmul.mubr.f32.gmra.mrb[0].mxu0 %v356
        %v1528 = vpop.f32.mrb[0].mxu0
        %v1529 = vadd.f32 0.0, %v1528
        %v1530 = vpop.f32.mrb[0].mxu0
        %1531 = vmatprep.mubr.f32.mxu0 0.0
        %1532 = vmatmul.mubr.f32.gmra.mrb[0].mxu0 %v357
        %v1533 = vpop.f32.mrb[0].mxu0
        %v1534 = vadd.f32 0.0, %v1533
        %v1535 = vpop.f32.mrb[0].mxu0
        %1536 = vmatprep.mubr.f32.mxu0 0.0
        %1537 = vmatmul.mubr.f32.gmra.mrb[0].mxu0 %v359
        %v1538 = vpop.f32.mrb[0].mxu0
        %v1539 = vadd.f32 0.0, %v1538
        %v1540 = vpop.f32.mrb[0].mxu0
        %1541 = vmatprep.mubr.f32.mxu0 0.0
        %1542 = vmatmul.mubr.f32.gmra.mrb[0].mxu0 %v360
        %v1543 = vpop.f32.mrb[0].mxu0
        %v1544 = vadd.f32 0.0, %v1543
        %v1545 = vpop.f32.mrb[0].mxu0
        %1546 = vmatprep.mubr.f32.mxu0 0.0
        %1547 = vmatmul.mubr.f32.gmra.mrb[0].mxu0 %v362
        %v1548 = vpop.f32.mrb[0].mxu0
        %v1549 = vadd.f32 0.0, %v1548
        %v1550 = vpop.f32.mrb[0].mxu0
        %1551 = vmatprep.mubr.f32.mxu0 0.0
        %1552 = vmatmul.mubr.f32.gmra.mrb[0].mxu0 %v363
        %v1553 = vpop.f32.mrb[0].mxu0
        %v1554 = vadd.f32 0.0, %v1553
        %v1555 = vpop.f32.mrb[0].mxu0
        %1556 = vmatprep.mubr.f32.mxu0 0.0
        %1557 = vmatmul.mubr.f32.gmra.mrb[0].mxu0 %v365
        %v1558 = vpop.f32.mrb[0].mxu0
        %v1559 = vadd.f32 0.0, %v1558
        %v1560 = vpop.f32.mrb[0].mxu0
        %1561 = vmatprep.mubr.f32.mxu0 0.0
        %1562 = vmatmul.mubr.f32.gmra.mrb[0].mxu0 %v366
        %v1563 = vpop.f32.mrb[0].mxu0
        %v1564 = vadd.f32 0.0, %v1563
        %v1565 = vpop.f32.mrb[0].mxu0
        %1566 = vmatprep.mubr.f32.mxu0 0.0
        %1567 = vmatmul.mubr.f32.gmra.mrb[0].mxu0 %v368
        %v1568 = vpop.f32.mrb[0].mxu0
        %v1569 = vadd.f32 0.0, %v1568
        %v1570 = vpop.f32.mrb[0].mxu0
        %1571 = vmatprep.mubr.f32.mxu0 0.0
        %1572 = vmatmul.mubr.f32.gmra.mrb[0].mxu0 %v369
        %v1573 = vpop.f32.mrb[0].mxu0
        %v1574 = vadd.f32 0.0, %v1573
        %v1575 = vpop.f32.mrb[0].mxu0
        %1576 = vmatprep.mubr.f32.mxu0 0.0
        %1577 = vmatmul.mubr.f32.gmra.mrb[0].mxu0 %v371
        %v1578 = vpop.f32.mrb[0].mxu0
        %v1579 = vadd.f32 0.0, %v1578
        %v1580 = vpop.f32.mrb[0].mxu0
        %1581 = vmatprep.mubr.f32.mxu0 0.0
        %1582 = vmatmul.mubr.f32.gmra.mrb[0].mxu0 %v372
        %v1583 = vpop.f32.mrb[0].mxu0
        %v1584 = vadd.f32 0.0, %v1583
        %v1585 = vpop.f32.mrb[0].mxu0
        %1586 = vmatprep.mubr.f32.mxu0 0.0
        %1587 = vmatmul.mubr.f32.gmra.mrb[0].mxu0 %v374
        %v1588 = vpop.f32.mrb[0].mxu0
        %v1589 = vadd.f32 0.0, %v1588
        %v1590 = vpop.f32.mrb[0].mxu0
        %1591 = vmatprep.mubr.f32.mxu0 0.0
        %1592 = vmatmul.mubr.f32.gmra.mrb[0].mxu0 %v375
        %v1593 = vpop.f32.mrb[0].mxu0
        %v1594 = vadd.f32 0.0, %v1593
        %v1595 = vpop.f32.mrb[0].mxu0
        %1596 = vmatprep.mubr.f32.mxu0 0.0
        %1597 = vmatmul.mubr.f32.gmra.mrb[0].mxu0 %v377
        %v1598 = vpop.f32.mrb[0].mxu0
        %v1599 = vadd.f32 0.0, %v1598
        %v1600 = vpop.f32.mrb[0].mxu0
        %1601 = vmatprep.mubr.f32.mxu0 0.0
        %1602 = vmatmul.mubr.f32.gmra.mrb[0].mxu0 %v378
        %v1603 = vpop.f32.mrb[0].mxu0
        %v1604 = vadd.f32 0.0, %v1603
        %v1605 = vpop.f32.mrb[0].mxu0
        %1606 = vmatprep.mubr.f32.mxu0 0.0
        %1607 = vmatmul.mubr.f32.gmra.mrb[0].mxu0 %v380
        %v1608 = vpop.f32.mrb[0].mxu0
        %v1609 = vadd.f32 0.0, %v1608
        %v1610 = vpop.f32.mrb[0].mxu0
        %1611 = vmatprep.mubr.f32.mxu0 0.0
        %1612 = vmatmul.mubr.f32.gmra.mrb[0].mxu0 %v381
        %v1613 = vpop.f32.mrb[0].mxu0
        %v1614 = vadd.f32 0.0, %v1613
        %v1615 = vpop.f32.mrb[0].mxu0
        %1616 = vmatprep.mubr.f32.mxu0 0.0
        %1617 = vmatmul.mubr.f32.gmra.mrb[0].mxu0 %v383
        %v1618 = vpop.f32.mrb[0].mxu0
        %v1619 = vadd.f32 0.0, %v1618
        %v1620 = vpop.f32.mrb[0].mxu0
        %1621 = vmatprep.mubr.f32.mxu0 0.0
        %1622 = vmatmul.mubr.f32.gmra.mrb[0].mxu0 %v384
        %v1623 = vpop.f32.mrb[0].mxu0
        %v1624 = vadd.f32 0.0, %v1623
        %v1625 = vpop.f32.mrb[0].mxu0
        %1626 = vmatprep.mubr.f32.mxu0 0.0
        %1627 = vmatmul.mubr.f32.gmra.mrb[0].mxu0 %v386
        %v1628 = vpop.f32.mrb[0].mxu0
        %v1629 = vadd.f32 0.0, %v1628
        %v1630 = vpop.f32.mrb[0].mxu0
        %1631 = vmatprep.mubr.f32.mxu0 0.0
        %1632 = vmatmul.mubr.f32.gmra.mrb[0].mxu0 %v387
        %v1633 = vpop.f32.mrb[0].mxu0
        %v1634 = vadd.f32 0.0, %v1633
        %v1635 = vpop.f32.mrb[0].mxu0
        %1636 = vmatprep.mubr.f32.mxu0 0.0
        %1637 = vmatmul.mubr.f32.gmra.mrb[0].mxu0 %v389
        %v1638 = vpop.f32.mrb[0].mxu0
        %v1639 = vadd.f32 0.0, %v1638
        %v1640 = vpop.f32.mrb[0].mxu0
        %1641 = vmatprep.mubr.f32.mxu0 0.0
        %1642 = vmatmul.mubr.f32.gmra.mrb[0].mxu0 %v390
        %v1643 = vpop.f32.mrb[0].mxu0
        %v1644 = vadd.f32 0.0, %v1643
        %v1645 = vpop.f32.mrb[0].mxu0
        %1646 = vmatprep.mubr.f32.mxu0 0.0
        %1647 = vmatmul.mubr.f32.gmra.mrb[0].mxu0 %v392
        %v1648 = vpop.f32.mrb[0].mxu0
        %v1649 = vadd.f32 0.0, %v1648
        %v1650 = vpop.f32.mrb[0].mxu0
        %1651 = vmatprep.mubr.f32.mxu0 0.0
        %1652 = vmatmul.mubr.f32.gmra.mrb[0].mxu0 %v393
        %v1653 = vpop.f32.mrb[0].mxu0
        %v1654 = vadd.f32 0.0, %v1653
        %v1655 = vpop.f32.mrb[0].mxu0
        %1656 = vmatprep.mubr.f32.mxu0 0.0
        %1657 = vmatmul.mubr.f32.gmra.mrb[0].mxu0 %v395
        %v1658 = vpop.f32.mrb[0].mxu0
        %v1659 = vadd.f32 0.0, %v1658
        %v1660 = vpop.f32.mrb[0].mxu0
        %1661 = vmatprep.mubr.f32.mxu0 0.0
        %1662 = vmatmul.mubr.f32.gmra.mrb[0].mxu0 %v396
        %v1663 = vpop.f32.mrb[0].mxu0
        %v1664 = vadd.f32 0.0, %v1663
        %v1665 = vpop.f32.mrb[0].mxu0
        %1666 = vmatprep.mubr.f32.mxu0 0.0
        %1667 = vmatmul.mubr.f32.gmra.mrb[0].mxu0 %v398
        %v1668 = vpop.f32.mrb[0].mxu0
        %v1669 = vadd.f32 0.0, %v1668
        %v1670 = vpop.f32.mrb[0].mxu0
        %1671 = vmatprep.mubr.f32.mxu0 0.0
        %1672 = vmatmul.mubr.f32.gmra.mrb[0].mxu0 %v399
        %v1673 = vpop.f32.mrb[0].mxu0
        %v1674 = vadd.f32 0.0, %v1673
        %v1675 = vpop.f32.mrb[0].mxu0
        %1676 = vdwg.mxu0
        %v1677 = vadd.f32 %v1403, %v1519
        %v1678 = vadd.f32 %v1404, %v1524
        %v1679 = vadd.f32 %v1405, %v1529
        %v1680 = vadd.f32 %v1406, %v1534
        %v1681 = vadd.f32 %v1407, %v1539
        %v1682 = vadd.f32 %v1408, %v1544
        %v1683 = vadd.f32 %v1409, %v1549
        %v1684 = vadd.f32 %v1410, %v1554
        %v1685 = vadd.f32 %v1411, %v1559
        %v1686 = vadd.f32 %v1412, %v1564
        %v1687 = vadd.f32 %v1413, %v1569
        %v1688 = vadd.f32 %v1414, %v1574
        %v1689 = vadd.f32 %v1415, %v1579
        %v1690 = vadd.f32 %v1416, %v1584
        %v1691 = vadd.f32 %v1417, %v1589
        %v1692 = vadd.f32 %v1418, %v1594
        %v1693 = vadd.f32 %v1419, %v1599
        %v1694 = vadd.f32 %v1420, %v1604
        %v1695 = vadd.f32 %v1421, %v1609
        %v1696 = vadd.f32 %v1422, %v1614
        %v1697 = vadd.f32 %v1423, %v1619
        %v1698 = vadd.f32 %v1424, %v1624
        %v1699 = vadd.f32 %v1425, %v1629
        %v1700 = vadd.f32 %v1426, %v1634
        %v1701 = vadd.f32 %v1427, %v1639
        %v1702 = vadd.f32 %v1428, %v1644
        %v1703 = vadd.f32 %v1429, %v1649
        %v1704 = vadd.f32 %v1430, %v1654
        %v1705 = vadd.f32 %v1431, %v1659
        %v1706 = vadd.f32 %v1432, %v1664
        %v1707 = vadd.f32 %v1433, %v1669
        %v1708 = vadd.f32 %v1434, %v1674
        %v1712 = vrot.slane %v398, 1
        %v1713 = vrot.slane %v399, 1
        %v1714 = vsel %vm468, %v1712, %v1713
        %v1715 = vrot.slane %v400, 1
        %v1716 = vsel %vm468, %v1713, %v1715
        %s1719 = scalar_lea.vmem %s1, 512
        %v1720 = vld [vmem:[%s1719] sm:$0xff]
        %v1721 = vld [vmem:[%s1719 + $0x8] sm:$0xff]
        %v1722 = vld [vmem:[%s1719 + $0x10] sm:$0xff]
        %v1723 = vld [vmem:[%s1719 + $0x18] sm:$0xff]
        %v1724 = vld [vmem:[%s1719 + $0x20] sm:$0xff]
        %v1725 = vld [vmem:[%s1719 + $0x28] sm:$0xff]
        %v1726 = vld [vmem:[%s1719 + $0x30] sm:$0xff]
        %v1727 = vld [vmem:[%s1719 + $0x38] sm:$0xff]
        %v1728 = vld [vmem:[%s1719 + $0x40] sm:$0xff]
        %v1729 = vld [vmem:[%s1719 + $0x48] sm:$0xff]
        %v1730 = vld [vmem:[%s1719 + $0x50] sm:$0xff]
        %v1731 = vld [vmem:[%s1719 + $0x58] sm:$0xff]
        %v1732 = vld [vmem:[%s1719 + $0x60] sm:$0xff]
        %v1733 = vld [vmem:[%s1719 + $0x68] sm:$0xff]
        %v1734 = vld [vmem:[%s1719 + $0x70] sm:$0xff]
        %v1735 = vld [vmem:[%s1719 + $0x78] sm:$0xff]
        %1736 = vmatprep.subr.mxu0 0.0
        %1737 = vmatpush1.msra.mxu0 %v1720
        %1738 = vmatprep.subr.mxu0 0.0
        %1739 = vmatpush1.msra.mxu0 %v1721
        %1740 = vmatprep.subr.mxu0 0.0
        %1741 = vmatpush1.msra.mxu0 %v1722
        %1742 = vmatprep.subr.mxu0 0.0
        %1743 = vmatpush1.msra.mxu0 %v1723
        %1744 = vmatprep.subr.mxu0 0.0
        %1745 = vmatpush1.msra.mxu0 %v1724
        %1746 = vmatprep.subr.mxu0 0.0
        %1747 = vmatpush1.msra.mxu0 %v1725
        %1748 = vmatprep.subr.mxu0 0.0
        %1749 = vmatpush1.msra.mxu0 %v1726
        %1750 = vmatprep.subr.mxu0 0.0
        %1751 = vmatpush1.msra.mxu0 %v1727
        %1752 = vmatprep.subr.mxu0 0.0
        %1753 = vmatpush1.msra.mxu0 %v1728
        %1754 = vmatprep.subr.mxu0 0.0
        %1755 = vmatpush1.msra.mxu0 %v1729
        %1756 = vmatprep.subr.mxu0 0.0
        %1757 = vmatpush1.msra.mxu0 %v1730
        %1758 = vmatprep.subr.mxu0 0.0
        %1759 = vmatpush1.msra.mxu0 %v1731
        %1760 = vmatprep.subr.mxu0 0.0
        %1761 = vmatpush1.msra.mxu0 %v1732
        %1762 = vmatprep.subr.mxu0 0.0
        %1763 = vmatpush1.msra.mxu0 %v1733
        %1764 = vmatprep.subr.mxu0 0.0
        %1765 = vmatpush1.msra.mxu0 %v1734
        %1766 = vmatprep.subr.mxu0 0.0
        %1767 = vmatpush1.msra.mxu0 %v1735
        %1768 = vmatprep.subr.mxu0 0.0
        %1769 = vmatpush1.msra.mxu0 0.0
        %1770 = vmatprep.subr.mxu0 0.0
        %1771 = vmatpush1.msra.mxu0 0.0
        %1772 = vmatprep.subr.mxu0 0.0
        %1773 = vmatpush1.msra.mxu0 0.0
        %1774 = vmatprep.subr.mxu0 0.0
        %1775 = vmatpush1.msra.mxu0 0.0
        %1776 = vmatprep.subr.mxu0 0.0
        %1777 = vmatpush1.msra.mxu0 0.0
        %1778 = vmatprep.subr.mxu0 0.0
        %1779 = vmatpush1.msra.mxu0 0.0
        %1780 = vmatprep.subr.mxu0 0.0
        %1781 = vmatpush1.msra.mxu0 0.0
        %1782 = vmatprep.subr.mxu0 0.0
        %1783 = vmatpush1.msra.mxu0 0.0
        %1784 = vmatprep.subr.mxu0 0.0
        %1785 = vmatpush1.msra.mxu0 0.0
        %1786 = vmatprep.subr.mxu0 0.0
        %1787 = vmatpush1.msra.mxu0 0.0
        %1788 = vmatprep.subr.mxu0 0.0
        %1789 = vmatpush1.msra.mxu0 0.0
        %1790 = vmatprep.subr.mxu0 0.0
        %1791 = vmatpush1.msra.mxu0 0.0
        %1792 = vmatprep.subr.mxu0 0.0
        %1793 = vmatpush1.msra.mxu0 0.0
        %1794 = vmatprep.subr.mxu0 0.0
        %1795 = vmatpush1.msra.mxu0 0.0
        %1796 = vmatprep.subr.mxu0 0.0
        %1797 = vmatpush1.msra.mxu0 0.0
        %1798 = vmatprep.subr.mxu0 0.0
        %1799 = vmatpush1.msra.mxu0 0.0
        %1800 = vmatprep.mubr.f32.mxu0 0.0
        %1801 = vmatmul.mubr.f32.gmra.mrb[0].mxu0 %v476
        %v1802 = vpop.f32.mrb[0].mxu0
        %v1803 = vadd.f32 0.0, %v1802
        %v1804 = vpop.f32.mrb[0].mxu0
        %1805 = vmatprep.mubr.f32.mxu0 0.0
        %1806 = vmatmul.mubr.f32.gmra.mrb[0].mxu0 %v478
        %v1807 = vpop.f32.mrb[0].mxu0
        %v1808 = vadd.f32 0.0, %v1807
        %v1809 = vpop.f32.mrb[0].mxu0
        %1810 = vmatprep.mubr.f32.mxu0 0.0
        %1811 = vmatmul.mubr.f32.gmra.mrb[0].mxu0 %v481
        %v1812 = vpop.f32.mrb[0].mxu0
        %v1813 = vadd.f32 0.0, %v1812
        %v1814 = vpop.f32.mrb[0].mxu0
        %1815 = vmatprep.mubr.f32.mxu0 0.0
        %1816 = vmatmul.mubr.f32.gmra.mrb[0].mxu0 %v483
        %v1817 = vpop.f32.mrb[0].mxu0
        %v1818 = vadd.f32 0.0, %v1817
        %v1819 = vpop.f32.mrb[0].mxu0
        %1820 = vmatprep.mubr.f32.mxu0 0.0
        %1821 = vmatmul.mubr.f32.gmra.mrb[0].mxu0 %v486
        %v1822 = vpop.f32.mrb[0].mxu0
        %v1823 = vadd.f32 0.0, %v1822
        %v1824 = vpop.f32.mrb[0].mxu0
        %1825 = vmatprep.mubr.f32.mxu0 0.0
        %1826 = vmatmul.mubr.f32.gmra.mrb[0].mxu0 %v488
        %v1827 = vpop.f32.mrb[0].mxu0
        %v1828 = vadd.f32 0.0, %v1827
        %v1829 = vpop.f32.mrb[0].mxu0
        %1830 = vmatprep.mubr.f32.mxu0 0.0
        %1831 = vmatmul.mubr.f32.gmra.mrb[0].mxu0 %v491
        %v1832 = vpop.f32.mrb[0].mxu0
        %v1833 = vadd.f32 0.0, %v1832
        %v1834 = vpop.f32.mrb[0].mxu0
        %1835 = vmatprep.mubr.f32.mxu0 0.0
        %1836 = vmatmul.mubr.f32.gmra.mrb[0].mxu0 %v493
        %v1837 = vpop.f32.mrb[0].mxu0
        %v1838 = vadd.f32 0.0, %v1837
        %v1839 = vpop.f32.mrb[0].mxu0
        %1840 = vmatprep.mubr.f32.mxu0 0.0
        %1841 = vmatmul.mubr.f32.gmra.mrb[0].mxu0 %v496
        %v1842 = vpop.f32.mrb[0].mxu0
        %v1843 = vadd.f32 0.0, %v1842
        %v1844 = vpop.f32.mrb[0].mxu0
        %1845 = vmatprep.mubr.f32.mxu0 0.0
        %1846 = vmatmul.mubr.f32.gmra.mrb[0].mxu0 %v498
        %v1847 = vpop.f32.mrb[0].mxu0
        %v1848 = vadd.f32 0.0, %v1847
        %v1849 = vpop.f32.mrb[0].mxu0
        %1850 = vmatprep.mubr.f32.mxu0 0.0
        %1851 = vmatmul.mubr.f32.gmra.mrb[0].mxu0 %v501
        %v1852 = vpop.f32.mrb[0].mxu0
        %v1853 = vadd.f32 0.0, %v1852
        %v1854 = vpop.f32.mrb[0].mxu0
        %1855 = vmatprep.mubr.f32.mxu0 0.0
        %1856 = vmatmul.mubr.f32.gmra.mrb[0].mxu0 %v503
        %v1857 = vpop.f32.mrb[0].mxu0
        %v1858 = vadd.f32 0.0, %v1857
        %v1859 = vpop.f32.mrb[0].mxu0
        %1860 = vmatprep.mubr.f32.mxu0 0.0
        %1861 = vmatmul.mubr.f32.gmra.mrb[0].mxu0 %v506
        %v1862 = vpop.f32.mrb[0].mxu0
        %v1863 = vadd.f32 0.0, %v1862
        %v1864 = vpop.f32.mrb[0].mxu0
        %1865 = vmatprep.mubr.f32.mxu0 0.0
        %1866 = vmatmul.mubr.f32.gmra.mrb[0].mxu0 %v508
        %v1867 = vpop.f32.mrb[0].mxu0
        %v1868 = vadd.f32 0.0, %v1867
        %v1869 = vpop.f32.mrb[0].mxu0
        %1870 = vmatprep.mubr.f32.mxu0 0.0
        %1871 = vmatmul.mubr.f32.gmra.mrb[0].mxu0 %v511
        %v1872 = vpop.f32.mrb[0].mxu0
        %v1873 = vadd.f32 0.0, %v1872
        %v1874 = vpop.f32.mrb[0].mxu0
        %1875 = vmatprep.mubr.f32.mxu0 0.0
        %1876 = vmatmul.mubr.f32.gmra.mrb[0].mxu0 %v513
        %v1877 = vpop.f32.mrb[0].mxu0
        %v1878 = vadd.f32 0.0, %v1877
        %v1879 = vpop.f32.mrb[0].mxu0
        %1880 = vmatprep.mubr.f32.mxu0 0.0
        %1881 = vmatmul.mubr.f32.gmra.mrb[0].mxu0 %v516
        %v1882 = vpop.f32.mrb[0].mxu0
        %v1883 = vadd.f32 0.0, %v1882
        %v1884 = vpop.f32.mrb[0].mxu0
        %1885 = vmatprep.mubr.f32.mxu0 0.0
        %1886 = vmatmul.mubr.f32.gmra.mrb[0].mxu0 %v518
        %v1887 = vpop.f32.mrb[0].mxu0
        %v1888 = vadd.f32 0.0, %v1887
        %v1889 = vpop.f32.mrb[0].mxu0
        %1890 = vmatprep.mubr.f32.mxu0 0.0
        %1891 = vmatmul.mubr.f32.gmra.mrb[0].mxu0 %v521
        %v1892 = vpop.f32.mrb[0].mxu0
        %v1893 = vadd.f32 0.0, %v1892
        %v1894 = vpop.f32.mrb[0].mxu0
        %1895 = vmatprep.mubr.f32.mxu0 0.0
        %1896 = vmatmul.mubr.f32.gmra.mrb[0].mxu0 %v523
        %v1897 = vpop.f32.mrb[0].mxu0
        %v1898 = vadd.f32 0.0, %v1897
        %v1899 = vpop.f32.mrb[0].mxu0
        %1900 = vmatprep.mubr.f32.mxu0 0.0
        %1901 = vmatmul.mubr.f32.gmra.mrb[0].mxu0 %v526
        %v1902 = vpop.f32.mrb[0].mxu0
        %v1903 = vadd.f32 0.0, %v1902
        %v1904 = vpop.f32.mrb[0].mxu0
        %1905 = vmatprep.mubr.f32.mxu0 0.0
        %1906 = vmatmul.mubr.f32.gmra.mrb[0].mxu0 %v528
        %v1907 = vpop.f32.mrb[0].mxu0
        %v1908 = vadd.f32 0.0, %v1907
        %v1909 = vpop.f32.mrb[0].mxu0
        %1910 = vmatprep.mubr.f32.mxu0 0.0
        %1911 = vmatmul.mubr.f32.gmra.mrb[0].mxu0 %v531
        %v1912 = vpop.f32.mrb[0].mxu0
        %v1913 = vadd.f32 0.0, %v1912
        %v1914 = vpop.f32.mrb[0].mxu0
        %1915 = vmatprep.mubr.f32.mxu0 0.0
        %1916 = vmatmul.mubr.f32.gmra.mrb[0].mxu0 %v533
        %v1917 = vpop.f32.mrb[0].mxu0
        %v1918 = vadd.f32 0.0, %v1917
        %v1919 = vpop.f32.mrb[0].mxu0
        %1920 = vmatprep.mubr.f32.mxu0 0.0
        %1921 = vmatmul.mubr.f32.gmra.mrb[0].mxu0 %v536
        %v1922 = vpop.f32.mrb[0].mxu0
        %v1923 = vadd.f32 0.0, %v1922
        %v1924 = vpop.f32.mrb[0].mxu0
        %1925 = vmatprep.mubr.f32.mxu0 0.0
        %1926 = vmatmul.mubr.f32.gmra.mrb[0].mxu0 %v538
        %v1927 = vpop.f32.mrb[0].mxu0
        %v1928 = vadd.f32 0.0, %v1927
        %v1929 = vpop.f32.mrb[0].mxu0
        %1930 = vmatprep.mubr.f32.mxu0 0.0
        %1931 = vmatmul.mubr.f32.gmra.mrb[0].mxu0 %v541
        %v1932 = vpop.f32.mrb[0].mxu0
        %v1933 = vadd.f32 0.0, %v1932
        %v1934 = vpop.f32.mrb[0].mxu0
        %1935 = vmatprep.mubr.f32.mxu0 0.0
        %1936 = vmatmul.mubr.f32.gmra.mrb[0].mxu0 %v543
        %v1937 = vpop.f32.mrb[0].mxu0
        %v1938 = vadd.f32 0.0, %v1937
        %v1939 = vpop.f32.mrb[0].mxu0
        %1940 = vmatprep.mubr.f32.mxu0 0.0
        %1941 = vmatmul.mubr.f32.gmra.mrb[0].mxu0 %v546
        %v1942 = vpop.f32.mrb[0].mxu0
        %v1943 = vadd.f32 0.0, %v1942
        %v1944 = vpop.f32.mrb[0].mxu0
        %1945 = vmatprep.mubr.f32.mxu0 0.0
        %1946 = vmatmul.mubr.f32.gmra.mrb[0].mxu0 %v548
        %v1947 = vpop.f32.mrb[0].mxu0
        %v1948 = vadd.f32 0.0, %v1947
        %v1949 = vpop.f32.mrb[0].mxu0
        %1950 = vmatprep.mubr.f32.mxu0 0.0
        %1951 = vmatmul.mubr.f32.gmra.mrb[0].mxu0 %v1714
        %v1952 = vpop.f32.mrb[0].mxu0
        %v1953 = vadd.f32 0.0, %v1952
        %v1954 = vpop.f32.mrb[0].mxu0
        %1955 = vmatprep.mubr.f32.mxu0 0.0
        %1956 = vmatmul.mubr.f32.gmra.mrb[0].mxu0 %v1716
        %v1957 = vpop.f32.mrb[0].mxu0
        %v1958 = vadd.f32 0.0, %v1957
        %v1959 = vpop.f32.mrb[0].mxu0
        %1960 = vdwg.mxu0
        %v1961 = vadd.f32 %v1677, %v1803
        %v1962 = vadd.f32 %v1678, %v1808
        %v1963 = vadd.f32 %v1679, %v1813
        %v1964 = vadd.f32 %v1680, %v1818
        %v1965 = vadd.f32 %v1681, %v1823
        %v1966 = vadd.f32 %v1682, %v1828
        %v1967 = vadd.f32 %v1683, %v1833
        %v1968 = vadd.f32 %v1684, %v1838
        %v1969 = vadd.f32 %v1685, %v1843
        %v1970 = vadd.f32 %v1686, %v1848
        %v1971 = vadd.f32 %v1687, %v1853
        %v1972 = vadd.f32 %v1688, %v1858
        %v1973 = vadd.f32 %v1689, %v1863
        %v1974 = vadd.f32 %v1690, %v1868
        %v1975 = vadd.f32 %v1691, %v1873
        %v1976 = vadd.f32 %v1692, %v1878
        %v1977 = vadd.f32 %v1693, %v1883
        %v1978 = vadd.f32 %v1694, %v1888
        %v1979 = vadd.f32 %v1695, %v1893
        %v1980 = vadd.f32 %v1696, %v1898
        %v1981 = vadd.f32 %v1697, %v1903
        %v1982 = vadd.f32 %v1698, %v1908
        %v1983 = vadd.f32 %v1699, %v1913
        %v1984 = vadd.f32 %v1700, %v1918
        %v1985 = vadd.f32 %v1701, %v1923
        %v1986 = vadd.f32 %v1702, %v1928
        %v1987 = vadd.f32 %v1703, %v1933
        %v1988 = vadd.f32 %v1704, %v1938
        %v1989 = vadd.f32 %v1705, %v1943
        %v1990 = vadd.f32 %v1706, %v1948
        %v1991 = vadd.f32 %v1707, %v1953
        %v1992 = vadd.f32 %v1708, %v1958
        %v1993 = vrot.slane %v398, 2
        %v1994 = vrot.slane %v399, 2
        %v1995 = vsel %vm1048, %v1993, %v1994
        %v1996 = vrot.slane %v400, 2
        %v1997 = vsel %vm1048, %v1994, %v1996
        %s2000 = scalar_lea.vmem %s1, 640
        %v2001 = vld [vmem:[%s2000] sm:$0xff]
        %v2002 = vld [vmem:[%s2000 + $0x8] sm:$0xff]
        %v2003 = vld [vmem:[%s2000 + $0x10] sm:$0xff]
        %v2004 = vld [vmem:[%s2000 + $0x18] sm:$0xff]
        %v2005 = vld [vmem:[%s2000 + $0x20] sm:$0xff]
        %v2006 = vld [vmem:[%s2000 + $0x28] sm:$0xff]
        %v2007 = vld [vmem:[%s2000 + $0x30] sm:$0xff]
        %v2008 = vld [vmem:[%s2000 + $0x38] sm:$0xff]
        %v2009 = vld [vmem:[%s2000 + $0x40] sm:$0xff]
        %v2010 = vld [vmem:[%s2000 + $0x48] sm:$0xff]
        %v2011 = vld [vmem:[%s2000 + $0x50] sm:$0xff]
        %v2012 = vld [vmem:[%s2000 + $0x58] sm:$0xff]
        %v2013 = vld [vmem:[%s2000 + $0x60] sm:$0xff]
        %v2014 = vld [vmem:[%s2000 + $0x68] sm:$0xff]
        %v2015 = vld [vmem:[%s2000 + $0x70] sm:$0xff]
        %v2016 = vld [vmem:[%s2000 + $0x78] sm:$0xff]
        %2017 = vmatprep.subr.mxu0 0.0
        %2018 = vmatpush1.msra.mxu0 %v2001
        %2019 = vmatprep.subr.mxu0 0.0
        %2020 = vmatpush1.msra.mxu0 %v2002
        %2021 = vmatprep.subr.mxu0 0.0
        %2022 = vmatpush1.msra.mxu0 %v2003
        %2023 = vmatprep.subr.mxu0 0.0
        %2024 = vmatpush1.msra.mxu0 %v2004
        %2025 = vmatprep.subr.mxu0 0.0
        %2026 = vmatpush1.msra.mxu0 %v2005
        %2027 = vmatprep.subr.mxu0 0.0
        %2028 = vmatpush1.msra.mxu0 %v2006
        %2029 = vmatprep.subr.mxu0 0.0
        %2030 = vmatpush1.msra.mxu0 %v2007
        %2031 = vmatprep.subr.mxu0 0.0
        %2032 = vmatpush1.msra.mxu0 %v2008
        %2033 = vmatprep.subr.mxu0 0.0
        %2034 = vmatpush1.msra.mxu0 %v2009
        %2035 = vmatprep.subr.mxu0 0.0
        %2036 = vmatpush1.msra.mxu0 %v2010
        %2037 = vmatprep.subr.mxu0 0.0
        %2038 = vmatpush1.msra.mxu0 %v2011
        %2039 = vmatprep.subr.mxu0 0.0
        %2040 = vmatpush1.msra.mxu0 %v2012
        %2041 = vmatprep.subr.mxu0 0.0
        %2042 = vmatpush1.msra.mxu0 %v2013
        %2043 = vmatprep.subr.mxu0 0.0
        %2044 = vmatpush1.msra.mxu0 %v2014
        %2045 = vmatprep.subr.mxu0 0.0
        %2046 = vmatpush1.msra.mxu0 %v2015
        %2047 = vmatprep.subr.mxu0 0.0
        %2048 = vmatpush1.msra.mxu0 %v2016
        %2049 = vmatprep.subr.mxu0 0.0
        %2050 = vmatpush1.msra.mxu0 0.0
        %2051 = vmatprep.subr.mxu0 0.0
        %2052 = vmatpush1.msra.mxu0 0.0
        %2053 = vmatprep.subr.mxu0 0.0
        %2054 = vmatpush1.msra.mxu0 0.0
        %2055 = vmatprep.subr.mxu0 0.0
        %2056 = vmatpush1.msra.mxu0 0.0
        %2057 = vmatprep.subr.mxu0 0.0
        %2058 = vmatpush1.msra.mxu0 0.0
        %2059 = vmatprep.subr.mxu0 0.0
        %2060 = vmatpush1.msra.mxu0 0.0
        %2061 = vmatprep.subr.mxu0 0.0
        %2062 = vmatpush1.msra.mxu0 0.0
        %2063 = vmatprep.subr.mxu0 0.0
        %2064 = vmatpush1.msra.mxu0 0.0
        %2065 = vmatprep.subr.mxu0 0.0
        %2066 = vmatpush1.msra.mxu0 0.0
        %2067 = vmatprep.subr.mxu0 0.0
        %2068 = vmatpush1.msra.mxu0 0.0
        %2069 = vmatprep.subr.mxu0 0.0
        %2070 = vmatpush1.msra.mxu0 0.0
        %2071 = vmatprep.subr.mxu0 0.0
        %2072 = vmatpush1.msra.mxu0 0.0
        %2073 = vmatprep.subr.mxu0 0.0
        %2074 = vmatpush1.msra.mxu0 0.0
        %2075 = vmatprep.subr.mxu0 0.0
        %2076 = vmatpush1.msra.mxu0 0.0
        %2077 = vmatprep.subr.mxu0 0.0
        %2078 = vmatpush1.msra.mxu0 0.0
        %2079 = vmatprep.subr.mxu0 0.0
        %2080 = vmatpush1.msra.mxu0 0.0
        %2081 = vmatprep.mubr.f32.mxu0 0.0
        %2082 = vmatmul.mubr.f32.gmra.mrb[0].mxu0 %v1056
        %v2083 = vpop.f32.mrb[0].mxu0
        %v2084 = vadd.f32 0.0, %v2083
        %v2085 = vpop.f32.mrb[0].mxu0
        %2086 = vmatprep.mubr.f32.mxu0 0.0
        %2087 = vmatmul.mubr.f32.gmra.mrb[0].mxu0 %v1058
        %v2088 = vpop.f32.mrb[0].mxu0
        %v2089 = vadd.f32 0.0, %v2088
        %v2090 = vpop.f32.mrb[0].mxu0
        %2091 = vmatprep.mubr.f32.mxu0 0.0
        %2092 = vmatmul.mubr.f32.gmra.mrb[0].mxu0 %v1061
        %v2093 = vpop.f32.mrb[0].mxu0
        %v2094 = vadd.f32 0.0, %v2093
        %v2095 = vpop.f32.mrb[0].mxu0
        %2096 = vmatprep.mubr.f32.mxu0 0.0
        %2097 = vmatmul.mubr.f32.gmra.mrb[0].mxu0 %v1063
        %v2098 = vpop.f32.mrb[0].mxu0
        %v2099 = vadd.f32 0.0, %v2098
        %v2100 = vpop.f32.mrb[0].mxu0
        %2101 = vmatprep.mubr.f32.mxu0 0.0
        %2102 = vmatmul.mubr.f32.gmra.mrb[0].mxu0 %v1066
        %v2103 = vpop.f32.mrb[0].mxu0
        %v2104 = vadd.f32 0.0, %v2103
        %v2105 = vpop.f32.mrb[0].mxu0
        %2106 = vmatprep.mubr.f32.mxu0 0.0
        %2107 = vmatmul.mubr.f32.gmra.mrb[0].mxu0 %v1068
        %v2108 = vpop.f32.mrb[0].mxu0
        %v2109 = vadd.f32 0.0, %v2108
        %v2110 = vpop.f32.mrb[0].mxu0
        %2111 = vmatprep.mubr.f32.mxu0 0.0
        %2112 = vmatmul.mubr.f32.gmra.mrb[0].mxu0 %v1071
        %v2113 = vpop.f32.mrb[0].mxu0
        %v2114 = vadd.f32 0.0, %v2113
        %v2115 = vpop.f32.mrb[0].mxu0
        %2116 = vmatprep.mubr.f32.mxu0 0.0
        %2117 = vmatmul.mubr.f32.gmra.mrb[0].mxu0 %v1073
        %v2118 = vpop.f32.mrb[0].mxu0
        %v2119 = vadd.f32 0.0, %v2118
        %v2120 = vpop.f32.mrb[0].mxu0
        %2121 = vmatprep.mubr.f32.mxu0 0.0
        %2122 = vmatmul.mubr.f32.gmra.mrb[0].mxu0 %v1076
        %v2123 = vpop.f32.mrb[0].mxu0
        %v2124 = vadd.f32 0.0, %v2123
        %v2125 = vpop.f32.mrb[0].mxu0
        %2126 = vmatprep.mubr.f32.mxu0 0.0
        %2127 = vmatmul.mubr.f32.gmra.mrb[0].mxu0 %v1078
        %v2128 = vpop.f32.mrb[0].mxu0
        %v2129 = vadd.f32 0.0, %v2128
        %v2130 = vpop.f32.mrb[0].mxu0
        %2131 = vmatprep.mubr.f32.mxu0 0.0
        %2132 = vmatmul.mubr.f32.gmra.mrb[0].mxu0 %v1081
        %v2133 = vpop.f32.mrb[0].mxu0
        %v2134 = vadd.f32 0.0, %v2133
        %v2135 = vpop.f32.mrb[0].mxu0
        %2136 = vmatprep.mubr.f32.mxu0 0.0
        %2137 = vmatmul.mubr.f32.gmra.mrb[0].mxu0 %v1083
        %v2138 = vpop.f32.mrb[0].mxu0
        %v2139 = vadd.f32 0.0, %v2138
        %v2140 = vpop.f32.mrb[0].mxu0
        %2141 = vmatprep.mubr.f32.mxu0 0.0
        %2142 = vmatmul.mubr.f32.gmra.mrb[0].mxu0 %v1086
        %v2143 = vpop.f32.mrb[0].mxu0
        %v2144 = vadd.f32 0.0, %v2143
        %v2145 = vpop.f32.mrb[0].mxu0
        %2146 = vmatprep.mubr.f32.mxu0 0.0
        %2147 = vmatmul.mubr.f32.gmra.mrb[0].mxu0 %v1088
        %v2148 = vpop.f32.mrb[0].mxu0
        %v2149 = vadd.f32 0.0, %v2148
        %v2150 = vpop.f32.mrb[0].mxu0
        %2151 = vmatprep.mubr.f32.mxu0 0.0
        %2152 = vmatmul.mubr.f32.gmra.mrb[0].mxu0 %v1091
        %v2153 = vpop.f32.mrb[0].mxu0
        %v2154 = vadd.f32 0.0, %v2153
        %v2155 = vpop.f32.mrb[0].mxu0
        %2156 = vmatprep.mubr.f32.mxu0 0.0
        %2157 = vmatmul.mubr.f32.gmra.mrb[0].mxu0 %v1093
        %v2158 = vpop.f32.mrb[0].mxu0
        %v2159 = vadd.f32 0.0, %v2158
        %v2160 = vpop.f32.mrb[0].mxu0
        %2161 = vmatprep.mubr.f32.mxu0 0.0
        %2162 = vmatmul.mubr.f32.gmra.mrb[0].mxu0 %v1096
        %v2163 = vpop.f32.mrb[0].mxu0
        %v2164 = vadd.f32 0.0, %v2163
        %v2165 = vpop.f32.mrb[0].mxu0
        %2166 = vmatprep.mubr.f32.mxu0 0.0
        %2167 = vmatmul.mubr.f32.gmra.mrb[0].mxu0 %v1098
        %v2168 = vpop.f32.mrb[0].mxu0
        %v2169 = vadd.f32 0.0, %v2168
        %v2170 = vpop.f32.mrb[0].mxu0
        %2171 = vmatprep.mubr.f32.mxu0 0.0
        %2172 = vmatmul.mubr.f32.gmra.mrb[0].mxu0 %v1101
        %v2173 = vpop.f32.mrb[0].mxu0
        %v2174 = vadd.f32 0.0, %v2173
        %v2175 = vpop.f32.mrb[0].mxu0
        %2176 = vmatprep.mubr.f32.mxu0 0.0
        %2177 = vmatmul.mubr.f32.gmra.mrb[0].mxu0 %v1103
        %v2178 = vpop.f32.mrb[0].mxu0
        %v2179 = vadd.f32 0.0, %v2178
        %v2180 = vpop.f32.mrb[0].mxu0
        %2181 = vmatprep.mubr.f32.mxu0 0.0
        %2182 = vmatmul.mubr.f32.gmra.mrb[0].mxu0 %v1106
        %v2183 = vpop.f32.mrb[0].mxu0
        %v2184 = vadd.f32 0.0, %v2183
        %v2185 = vpop.f32.mrb[0].mxu0
        %2186 = vmatprep.mubr.f32.mxu0 0.0
        %2187 = vmatmul.mubr.f32.gmra.mrb[0].mxu0 %v1108
        %v2188 = vpop.f32.mrb[0].mxu0
        %v2189 = vadd.f32 0.0, %v2188
        %v2190 = vpop.f32.mrb[0].mxu0
        %2191 = vmatprep.mubr.f32.mxu0 0.0
        %2192 = vmatmul.mubr.f32.gmra.mrb[0].mxu0 %v1111
        %v2193 = vpop.f32.mrb[0].mxu0
        %v2194 = vadd.f32 0.0, %v2193
        %v2195 = vpop.f32.mrb[0].mxu0
        %2196 = vmatprep.mubr.f32.mxu0 0.0
        %2197 = vmatmul.mubr.f32.gmra.mrb[0].mxu0 %v1113
        %v2198 = vpop.f32.mrb[0].mxu0
        %v2199 = vadd.f32 0.0, %v2198
        %v2200 = vpop.f32.mrb[0].mxu0
        %2201 = vmatprep.mubr.f32.mxu0 0.0
        %2202 = vmatmul.mubr.f32.gmra.mrb[0].mxu0 %v1116
        %v2203 = vpop.f32.mrb[0].mxu0
        %v2204 = vadd.f32 0.0, %v2203
        %v2205 = vpop.f32.mrb[0].mxu0
        %2206 = vmatprep.mubr.f32.mxu0 0.0
        %2207 = vmatmul.mubr.f32.gmra.mrb[0].mxu0 %v1118
        %v2208 = vpop.f32.mrb[0].mxu0
        %v2209 = vadd.f32 0.0, %v2208
        %v2210 = vpop.f32.mrb[0].mxu0
        %2211 = vmatprep.mubr.f32.mxu0 0.0
        %2212 = vmatmul.mubr.f32.gmra.mrb[0].mxu0 %v1121
        %v2213 = vpop.f32.mrb[0].mxu0
        %v2214 = vadd.f32 0.0, %v2213
        %v2215 = vpop.f32.mrb[0].mxu0
        %2216 = vmatprep.mubr.f32.mxu0 0.0
        %2217 = vmatmul.mubr.f32.gmra.mrb[0].mxu0 %v1123
        %v2218 = vpop.f32.mrb[0].mxu0
        %v2219 = vadd.f32 0.0, %v2218
        %v2220 = vpop.f32.mrb[0].mxu0
        %2221 = vmatprep.mubr.f32.mxu0 0.0
        %2222 = vmatmul.mubr.f32.gmra.mrb[0].mxu0 %v1126
        %v2223 = vpop.f32.mrb[0].mxu0
        %v2224 = vadd.f32 0.0, %v2223
        %v2225 = vpop.f32.mrb[0].mxu0
        %2226 = vmatprep.mubr.f32.mxu0 0.0
        %2227 = vmatmul.mubr.f32.gmra.mrb[0].mxu0 %v1128
        %v2228 = vpop.f32.mrb[0].mxu0
        %v2229 = vadd.f32 0.0, %v2228
        %v2230 = vpop.f32.mrb[0].mxu0
        %2231 = vmatprep.mubr.f32.mxu0 0.0
        %2232 = vmatmul.mubr.f32.gmra.mrb[0].mxu0 %v1995
        %v2233 = vpop.f32.mrb[0].mxu0
        %v2234 = vadd.f32 0.0, %v2233
        %v2235 = vpop.f32.mrb[0].mxu0
        %2236 = vmatprep.mubr.f32.mxu0 0.0
        %2237 = vmatmul.mubr.f32.gmra.mrb[0].mxu0 %v1997
        %v2238 = vpop.f32.mrb[0].mxu0
        %v2239 = vadd.f32 0.0, %v2238
        %v2240 = vpop.f32.mrb[0].mxu0
        %2241 = vdwg.mxu0
        %v2242 = vadd.f32 %v1961, %v2084
        %v2243 = vadd.f32 %v1962, %v2089
        %v2244 = vadd.f32 %v1963, %v2094
        %v2245 = vadd.f32 %v1964, %v2099
        %v2246 = vadd.f32 %v1965, %v2104
        %v2247 = vadd.f32 %v1966, %v2109
        %v2248 = vadd.f32 %v1967, %v2114
        %v2249 = vadd.f32 %v1968, %v2119
        %v2250 = vadd.f32 %v1969, %v2124
        %v2251 = vadd.f32 %v1970, %v2129
        %v2252 = vadd.f32 %v1971, %v2134
        %v2253 = vadd.f32 %v1972, %v2139
        %v2254 = vadd.f32 %v1973, %v2144
        %v2255 = vadd.f32 %v1974, %v2149
        %v2256 = vadd.f32 %v1975, %v2154
        %v2257 = vadd.f32 %v1976, %v2159
        %v2258 = vadd.f32 %v1977, %v2164
        %v2259 = vadd.f32 %v1978, %v2169
        %v2260 = vadd.f32 %v1979, %v2174
        %v2261 = vadd.f32 %v1980, %v2179
        %v2262 = vadd.f32 %v1981, %v2184
        %v2263 = vadd.f32 %v1982, %v2189
        %v2264 = vadd.f32 %v1983, %v2194
        %v2265 = vadd.f32 %v1984, %v2199
        %v2266 = vadd.f32 %v1985, %v2204
        %v2267 = vadd.f32 %v1986, %v2209
        %v2268 = vadd.f32 %v1987, %v2214
        %v2269 = vadd.f32 %v1988, %v2219
        %v2270 = vadd.f32 %v1989, %v2224
        %v2271 = vadd.f32 %v1990, %v2229
        %v2272 = vadd.f32 %v1991, %v2234
        %v2273 = vadd.f32 %v1992, %v2239
        %s2274 = scalar_lea.vmem %s1, 768
        %v2275 = vld [vmem:[%s2274] sm:$0xff]
        %v2276 = vld [vmem:[%s2274 + $0x8] sm:$0xff]
        %v2277 = vld [vmem:[%s2274 + $0x10] sm:$0xff]
        %v2278 = vld [vmem:[%s2274 + $0x18] sm:$0xff]
        %v2279 = vld [vmem:[%s2274 + $0x20] sm:$0xff]
        %v2280 = vld [vmem:[%s2274 + $0x28] sm:$0xff]
        %v2281 = vld [vmem:[%s2274 + $0x30] sm:$0xff]
        %v2282 = vld [vmem:[%s2274 + $0x38] sm:$0xff]
        %v2283 = vld [vmem:[%s2274 + $0x40] sm:$0xff]
        %v2284 = vld [vmem:[%s2274 + $0x48] sm:$0xff]
        %v2285 = vld [vmem:[%s2274 + $0x50] sm:$0xff]
        %v2286 = vld [vmem:[%s2274 + $0x58] sm:$0xff]
        %v2287 = vld [vmem:[%s2274 + $0x60] sm:$0xff]
        %v2288 = vld [vmem:[%s2274 + $0x68] sm:$0xff]
        %v2289 = vld [vmem:[%s2274 + $0x70] sm:$0xff]
        %v2290 = vld [vmem:[%s2274 + $0x78] sm:$0xff]
        %2291 = vmatprep.subr.mxu0 0.0
        %2292 = vmatpush1.msra.mxu0 %v2275
        %2293 = vmatprep.subr.mxu0 0.0
        %2294 = vmatpush1.msra.mxu0 %v2276
        %2295 = vmatprep.subr.mxu0 0.0
        %2296 = vmatpush1.msra.mxu0 %v2277
        %2297 = vmatprep.subr.mxu0 0.0
        %2298 = vmatpush1.msra.mxu0 %v2278
        %2299 = vmatprep.subr.mxu0 0.0
        %2300 = vmatpush1.msra.mxu0 %v2279
        %2301 = vmatprep.subr.mxu0 0.0
        %2302 = vmatpush1.msra.mxu0 %v2280
        %2303 = vmatprep.subr.mxu0 0.0
        %2304 = vmatpush1.msra.mxu0 %v2281
        %2305 = vmatprep.subr.mxu0 0.0
        %2306 = vmatpush1.msra.mxu0 %v2282
        %2307 = vmatprep.subr.mxu0 0.0
        %2308 = vmatpush1.msra.mxu0 %v2283
        %2309 = vmatprep.subr.mxu0 0.0
        %2310 = vmatpush1.msra.mxu0 %v2284
        %2311 = vmatprep.subr.mxu0 0.0
        %2312 = vmatpush1.msra.mxu0 %v2285
        %2313 = vmatprep.subr.mxu0 0.0
        %2314 = vmatpush1.msra.mxu0 %v2286
        %2315 = vmatprep.subr.mxu0 0.0
        %2316 = vmatpush1.msra.mxu0 %v2287
        %2317 = vmatprep.subr.mxu0 0.0
        %2318 = vmatpush1.msra.mxu0 %v2288
        %2319 = vmatprep.subr.mxu0 0.0
        %2320 = vmatpush1.msra.mxu0 %v2289
        %2321 = vmatprep.subr.mxu0 0.0
        %2322 = vmatpush1.msra.mxu0 %v2290
        %2323 = vmatprep.subr.mxu0 0.0
        %2324 = vmatpush1.msra.mxu0 0.0
        %2325 = vmatprep.subr.mxu0 0.0
        %2326 = vmatpush1.msra.mxu0 0.0
        %2327 = vmatprep.subr.mxu0 0.0
        %2328 = vmatpush1.msra.mxu0 0.0
        %2329 = vmatprep.subr.mxu0 0.0
        %2330 = vmatpush1.msra.mxu0 0.0
        %2331 = vmatprep.subr.mxu0 0.0
        %2332 = vmatpush1.msra.mxu0 0.0
        %2333 = vmatprep.subr.mxu0 0.0
        %2334 = vmatpush1.msra.mxu0 0.0
        %2335 = vmatprep.subr.mxu0 0.0
        %2336 = vmatpush1.msra.mxu0 0.0
        %2337 = vmatprep.subr.mxu0 0.0
        %2338 = vmatpush1.msra.mxu0 0.0
        %2339 = vmatprep.subr.mxu0 0.0
        %2340 = vmatpush1.msra.mxu0 0.0
        %2341 = vmatprep.subr.mxu0 0.0
        %2342 = vmatpush1.msra.mxu0 0.0
        %2343 = vmatprep.subr.mxu0 0.0
        %2344 = vmatpush1.msra.mxu0 0.0
        %2345 = vmatprep.subr.mxu0 0.0
        %2346 = vmatpush1.msra.mxu0 0.0
        %2347 = vmatprep.subr.mxu0 0.0
        %2348 = vmatpush1.msra.mxu0 0.0
        %2349 = vmatprep.subr.mxu0 0.0
        %2350 = vmatpush1.msra.mxu0 0.0
        %2351 = vmatprep.subr.mxu0 0.0
        %2352 = vmatpush1.msra.mxu0 0.0
        %2353 = vmatprep.subr.mxu0 0.0
        %2354 = vmatpush1.msra.mxu0 0.0
        %2355 = vmatprep.mubr.f32.mxu0 0.0
        %2356 = vmatmul.mubr.f32.gmra.mrb[0].mxu0 %v356
        %v2357 = vpop.f32.mrb[0].mxu0
        %v2358 = vadd.f32 0.0, %v2357
        %v2359 = vpop.f32.mrb[0].mxu0
        %2360 = vmatprep.mubr.f32.mxu0 0.0
        %2361 = vmatmul.mubr.f32.gmra.mrb[0].mxu0 %v357
        %v2362 = vpop.f32.mrb[0].mxu0
        %v2363 = vadd.f32 0.0, %v2362
        %v2364 = vpop.f32.mrb[0].mxu0
        %2365 = vmatprep.mubr.f32.mxu0 0.0
        %2366 = vmatmul.mubr.f32.gmra.mrb[0].mxu0 %v359
        %v2367 = vpop.f32.mrb[0].mxu0
        %v2368 = vadd.f32 0.0, %v2367
        %v2369 = vpop.f32.mrb[0].mxu0
        %2370 = vmatprep.mubr.f32.mxu0 0.0
        %2371 = vmatmul.mubr.f32.gmra.mrb[0].mxu0 %v360
        %v2372 = vpop.f32.mrb[0].mxu0
        %v2373 = vadd.f32 0.0, %v2372
        %v2374 = vpop.f32.mrb[0].mxu0
        %2375 = vmatprep.mubr.f32.mxu0 0.0
        %2376 = vmatmul.mubr.f32.gmra.mrb[0].mxu0 %v362
        %v2377 = vpop.f32.mrb[0].mxu0
        %v2378 = vadd.f32 0.0, %v2377
        %v2379 = vpop.f32.mrb[0].mxu0
        %2380 = vmatprep.mubr.f32.mxu0 0.0
        %2381 = vmatmul.mubr.f32.gmra.mrb[0].mxu0 %v363
        %v2382 = vpop.f32.mrb[0].mxu0
        %v2383 = vadd.f32 0.0, %v2382
        %v2384 = vpop.f32.mrb[0].mxu0
        %2385 = vmatprep.mubr.f32.mxu0 0.0
        %2386 = vmatmul.mubr.f32.gmra.mrb[0].mxu0 %v365
        %v2387 = vpop.f32.mrb[0].mxu0
        %v2388 = vadd.f32 0.0, %v2387
        %v2389 = vpop.f32.mrb[0].mxu0
        %2390 = vmatprep.mubr.f32.mxu0 0.0
        %2391 = vmatmul.mubr.f32.gmra.mrb[0].mxu0 %v366
        %v2392 = vpop.f32.mrb[0].mxu0
        %v2393 = vadd.f32 0.0, %v2392
        %v2394 = vpop.f32.mrb[0].mxu0
        %2395 = vmatprep.mubr.f32.mxu0 0.0
        %2396 = vmatmul.mubr.f32.gmra.mrb[0].mxu0 %v368
        %v2397 = vpop.f32.mrb[0].mxu0
        %v2398 = vadd.f32 0.0, %v2397
        %v2399 = vpop.f32.mrb[0].mxu0
        %2400 = vmatprep.mubr.f32.mxu0 0.0
        %2401 = vmatmul.mubr.f32.gmra.mrb[0].mxu0 %v369
        %v2402 = vpop.f32.mrb[0].mxu0
        %v2403 = vadd.f32 0.0, %v2402
        %v2404 = vpop.f32.mrb[0].mxu0
        %2405 = vmatprep.mubr.f32.mxu0 0.0
        %2406 = vmatmul.mubr.f32.gmra.mrb[0].mxu0 %v371
        %v2407 = vpop.f32.mrb[0].mxu0
        %v2408 = vadd.f32 0.0, %v2407
        %v2409 = vpop.f32.mrb[0].mxu0
        %2410 = vmatprep.mubr.f32.mxu0 0.0
        %2411 = vmatmul.mubr.f32.gmra.mrb[0].mxu0 %v372
        %v2412 = vpop.f32.mrb[0].mxu0
        %v2413 = vadd.f32 0.0, %v2412
        %v2414 = vpop.f32.mrb[0].mxu0
        %2415 = vmatprep.mubr.f32.mxu0 0.0
        %2416 = vmatmul.mubr.f32.gmra.mrb[0].mxu0 %v374
        %v2417 = vpop.f32.mrb[0].mxu0
        %v2418 = vadd.f32 0.0, %v2417
        %v2419 = vpop.f32.mrb[0].mxu0
        %2420 = vmatprep.mubr.f32.mxu0 0.0
        %2421 = vmatmul.mubr.f32.gmra.mrb[0].mxu0 %v375
        %v2422 = vpop.f32.mrb[0].mxu0
        %v2423 = vadd.f32 0.0, %v2422
        %v2424 = vpop.f32.mrb[0].mxu0
        %2425 = vmatprep.mubr.f32.mxu0 0.0
        %2426 = vmatmul.mubr.f32.gmra.mrb[0].mxu0 %v377
        %v2427 = vpop.f32.mrb[0].mxu0
        %v2428 = vadd.f32 0.0, %v2427
        %v2429 = vpop.f32.mrb[0].mxu0
        %2430 = vmatprep.mubr.f32.mxu0 0.0
        %2431 = vmatmul.mubr.f32.gmra.mrb[0].mxu0 %v378
        %v2432 = vpop.f32.mrb[0].mxu0
        %v2433 = vadd.f32 0.0, %v2432
        %v2434 = vpop.f32.mrb[0].mxu0
        %2435 = vmatprep.mubr.f32.mxu0 0.0
        %2436 = vmatmul.mubr.f32.gmra.mrb[0].mxu0 %v380
        %v2437 = vpop.f32.mrb[0].mxu0
        %v2438 = vadd.f32 0.0, %v2437
        %v2439 = vpop.f32.mrb[0].mxu0
        %2440 = vmatprep.mubr.f32.mxu0 0.0
        %2441 = vmatmul.mubr.f32.gmra.mrb[0].mxu0 %v381
        %v2442 = vpop.f32.mrb[0].mxu0
        %v2443 = vadd.f32 0.0, %v2442
        %v2444 = vpop.f32.mrb[0].mxu0
        %2445 = vmatprep.mubr.f32.mxu0 0.0
        %2446 = vmatmul.mubr.f32.gmra.mrb[0].mxu0 %v383
        %v2447 = vpop.f32.mrb[0].mxu0
        %v2448 = vadd.f32 0.0, %v2447
        %v2449 = vpop.f32.mrb[0].mxu0
        %2450 = vmatprep.mubr.f32.mxu0 0.0
        %2451 = vmatmul.mubr.f32.gmra.mrb[0].mxu0 %v384
        %v2452 = vpop.f32.mrb[0].mxu0
        %v2453 = vadd.f32 0.0, %v2452
        %v2454 = vpop.f32.mrb[0].mxu0
        %2455 = vmatprep.mubr.f32.mxu0 0.0
        %2456 = vmatmul.mubr.f32.gmra.mrb[0].mxu0 %v386
        %v2457 = vpop.f32.mrb[0].mxu0
        %v2458 = vadd.f32 0.0, %v2457
        %v2459 = vpop.f32.mrb[0].mxu0
        %2460 = vmatprep.mubr.f32.mxu0 0.0
        %2461 = vmatmul.mubr.f32.gmra.mrb[0].mxu0 %v387
        %v2462 = vpop.f32.mrb[0].mxu0
        %v2463 = vadd.f32 0.0, %v2462
        %v2464 = vpop.f32.mrb[0].mxu0
        %2465 = vmatprep.mubr.f32.mxu0 0.0
        %2466 = vmatmul.mubr.f32.gmra.mrb[0].mxu0 %v389
        %v2467 = vpop.f32.mrb[0].mxu0
        %v2468 = vadd.f32 0.0, %v2467
        %v2469 = vpop.f32.mrb[0].mxu0
        %2470 = vmatprep.mubr.f32.mxu0 0.0
        %2471 = vmatmul.mubr.f32.gmra.mrb[0].mxu0 %v390
        %v2472 = vpop.f32.mrb[0].mxu0
        %v2473 = vadd.f32 0.0, %v2472
        %v2474 = vpop.f32.mrb[0].mxu0
        %2475 = vmatprep.mubr.f32.mxu0 0.0
        %2476 = vmatmul.mubr.f32.gmra.mrb[0].mxu0 %v392
        %v2477 = vpop.f32.mrb[0].mxu0
        %v2478 = vadd.f32 0.0, %v2477
        %v2479 = vpop.f32.mrb[0].mxu0
        %2480 = vmatprep.mubr.f32.mxu0 0.0
        %2481 = vmatmul.mubr.f32.gmra.mrb[0].mxu0 %v393
        %v2482 = vpop.f32.mrb[0].mxu0
        %v2483 = vadd.f32 0.0, %v2482
        %v2484 = vpop.f32.mrb[0].mxu0
        %2485 = vmatprep.mubr.f32.mxu0 0.0
        %2486 = vmatmul.mubr.f32.gmra.mrb[0].mxu0 %v395
        %v2487 = vpop.f32.mrb[0].mxu0
        %v2488 = vadd.f32 0.0, %v2487
        %v2489 = vpop.f32.mrb[0].mxu0
        %2490 = vmatprep.mubr.f32.mxu0 0.0
        %2491 = vmatmul.mubr.f32.gmra.mrb[0].mxu0 %v396
        %v2492 = vpop.f32.mrb[0].mxu0
        %v2493 = vadd.f32 0.0, %v2492
        %v2494 = vpop.f32.mrb[0].mxu0
        %2495 = vmatprep.mubr.f32.mxu0 0.0
        %2496 = vmatmul.mubr.f32.gmra.mrb[0].mxu0 %v398
        %v2497 = vpop.f32.mrb[0].mxu0
        %v2498 = vadd.f32 0.0, %v2497
        %v2499 = vpop.f32.mrb[0].mxu0
        %2500 = vmatprep.mubr.f32.mxu0 0.0
        %2501 = vmatmul.mubr.f32.gmra.mrb[0].mxu0 %v399
        %v2502 = vpop.f32.mrb[0].mxu0
        %v2503 = vadd.f32 0.0, %v2502
        %v2504 = vpop.f32.mrb[0].mxu0
        %2505 = vmatprep.mubr.f32.mxu0 0.0
        %2506 = vmatmul.mubr.f32.gmra.mrb[0].mxu0 %v401
        %v2507 = vpop.f32.mrb[0].mxu0
        %v2508 = vadd.f32 0.0, %v2507
        %v2509 = vpop.f32.mrb[0].mxu0
        %2510 = vmatprep.mubr.f32.mxu0 0.0
        %2511 = vmatmul.mubr.f32.gmra.mrb[0].mxu0 %v402
        %v2512 = vpop.f32.mrb[0].mxu0
        %v2513 = vadd.f32 0.0, %v2512
        %v2514 = vpop.f32.mrb[0].mxu0
        %2515 = vdwg.mxu0
        %v2516 = vadd.f32 %v2242, %v2358
        %v2517 = vadd.f32 %v2243, %v2363
        %v2518 = vadd.f32 %v2244, %v2368
        %v2519 = vadd.f32 %v2245, %v2373
        %v2520 = vadd.f32 %v2246, %v2378
        %v2521 = vadd.f32 %v2247, %v2383
        %v2522 = vadd.f32 %v2248, %v2388
        %v2523 = vadd.f32 %v2249, %v2393
        %v2524 = vadd.f32 %v2250, %v2398
        %v2525 = vadd.f32 %v2251, %v2403
        %v2526 = vadd.f32 %v2252, %v2408
        %v2527 = vadd.f32 %v2253, %v2413
        %v2528 = vadd.f32 %v2254, %v2418
        %v2529 = vadd.f32 %v2255, %v2423
        %v2530 = vadd.f32 %v2256, %v2428
        %v2531 = vadd.f32 %v2257, %v2433
        %v2532 = vadd.f32 %v2258, %v2438
        %v2533 = vadd.f32 %v2259, %v2443
        %v2534 = vadd.f32 %v2260, %v2448
        %v2535 = vadd.f32 %v2261, %v2453
        %v2536 = vadd.f32 %v2262, %v2458
        %v2537 = vadd.f32 %v2263, %v2463
        %v2538 = vadd.f32 %v2264, %v2468
        %v2539 = vadd.f32 %v2265, %v2473
        %v2540 = vadd.f32 %v2266, %v2478
        %v2541 = vadd.f32 %v2267, %v2483
        %v2542 = vadd.f32 %v2268, %v2488
        %v2543 = vadd.f32 %v2269, %v2493
        %v2544 = vadd.f32 %v2270, %v2498
        %v2545 = vadd.f32 %v2271, %v2503
        %v2546 = vadd.f32 %v2272, %v2508
        %v2547 = vadd.f32 %v2273, %v2513
        %v2551 = vrot.slane %v401, 1
        %v2552 = vrot.slane %v402, 1
        %v2553 = vsel %vm468, %v2551, %v2552
        %v2554 = vrot.slane %v403, 1
        %v2555 = vsel %vm468, %v2552, %v2554
        %s2558 = scalar_lea.vmem %s1, 896
        %v2559 = vld [vmem:[%s2558] sm:$0xff]
        %v2560 = vld [vmem:[%s2558 + $0x8] sm:$0xff]
        %v2561 = vld [vmem:[%s2558 + $0x10] sm:$0xff]
        %v2562 = vld [vmem:[%s2558 + $0x18] sm:$0xff]
        %v2563 = vld [vmem:[%s2558 + $0x20] sm:$0xff]
        %v2564 = vld [vmem:[%s2558 + $0x28] sm:$0xff]
        %v2565 = vld [vmem:[%s2558 + $0x30] sm:$0xff]
        %v2566 = vld [vmem:[%s2558 + $0x38] sm:$0xff]
        %v2567 = vld [vmem:[%s2558 + $0x40] sm:$0xff]
        %v2568 = vld [vmem:[%s2558 + $0x48] sm:$0xff]
        %v2569 = vld [vmem:[%s2558 + $0x50] sm:$0xff]
        %v2570 = vld [vmem:[%s2558 + $0x58] sm:$0xff]
        %v2571 = vld [vmem:[%s2558 + $0x60] sm:$0xff]
        %v2572 = vld [vmem:[%s2558 + $0x68] sm:$0xff]
        %v2573 = vld [vmem:[%s2558 + $0x70] sm:$0xff]
        %v2574 = vld [vmem:[%s2558 + $0x78] sm:$0xff]
        %2575 = vmatprep.subr.mxu0 0.0
        %2576 = vmatpush1.msra.mxu0 %v2559
        %2577 = vmatprep.subr.mxu0 0.0
        %2578 = vmatpush1.msra.mxu0 %v2560
        %2579 = vmatprep.subr.mxu0 0.0
        %2580 = vmatpush1.msra.mxu0 %v2561
        %2581 = vmatprep.subr.mxu0 0.0
        %2582 = vmatpush1.msra.mxu0 %v2562
        %2583 = vmatprep.subr.mxu0 0.0
        %2584 = vmatpush1.msra.mxu0 %v2563
        %2585 = vmatprep.subr.mxu0 0.0
        %2586 = vmatpush1.msra.mxu0 %v2564
        %2587 = vmatprep.subr.mxu0 0.0
        %2588 = vmatpush1.msra.mxu0 %v2565
        %2589 = vmatprep.subr.mxu0 0.0
        %2590 = vmatpush1.msra.mxu0 %v2566
        %2591 = vmatprep.subr.mxu0 0.0
        %2592 = vmatpush1.msra.mxu0 %v2567
        %2593 = vmatprep.subr.mxu0 0.0
        %2594 = vmatpush1.msra.mxu0 %v2568
        %2595 = vmatprep.subr.mxu0 0.0
        %2596 = vmatpush1.msra.mxu0 %v2569
        %2597 = vmatprep.subr.mxu0 0.0
        %2598 = vmatpush1.msra.mxu0 %v2570
        %2599 = vmatprep.subr.mxu0 0.0
        %2600 = vmatpush1.msra.mxu0 %v2571
        %2601 = vmatprep.subr.mxu0 0.0
        %2602 = vmatpush1.msra.mxu0 %v2572
        %2603 = vmatprep.subr.mxu0 0.0
        %2604 = vmatpush1.msra.mxu0 %v2573
        %2605 = vmatprep.subr.mxu0 0.0
        %2606 = vmatpush1.msra.mxu0 %v2574
        %2607 = vmatprep.subr.mxu0 0.0
        %2608 = vmatpush1.msra.mxu0 0.0
        %2609 = vmatprep.subr.mxu0 0.0
        %2610 = vmatpush1.msra.mxu0 0.0
        %2611 = vmatprep.subr.mxu0 0.0
        %2612 = vmatpush1.msra.mxu0 0.0
        %2613 = vmatprep.subr.mxu0 0.0
        %2614 = vmatpush1.msra.mxu0 0.0
        %2615 = vmatprep.subr.mxu0 0.0
        %2616 = vmatpush1.msra.mxu0 0.0
        %2617 = vmatprep.subr.mxu0 0.0
        %2618 = vmatpush1.msra.mxu0 0.0
        %2619 = vmatprep.subr.mxu0 0.0
        %2620 = vmatpush1.msra.mxu0 0.0
        %2621 = vmatprep.subr.mxu0 0.0
        %2622 = vmatpush1.msra.mxu0 0.0
        %2623 = vmatprep.subr.mxu0 0.0
        %2624 = vmatpush1.msra.mxu0 0.0
        %2625 = vmatprep.subr.mxu0 0.0
        %2626 = vmatpush1.msra.mxu0 0.0
        %2627 = vmatprep.subr.mxu0 0.0
        %2628 = vmatpush1.msra.mxu0 0.0
        %2629 = vmatprep.subr.mxu0 0.0
        %2630 = vmatpush1.msra.mxu0 0.0
        %2631 = vmatprep.subr.mxu0 0.0
        %2632 = vmatpush1.msra.mxu0 0.0
        %2633 = vmatprep.subr.mxu0 0.0
        %2634 = vmatpush1.msra.mxu0 0.0
        %2635 = vmatprep.subr.mxu0 0.0
        %2636 = vmatpush1.msra.mxu0 0.0
        %2637 = vmatprep.subr.mxu0 0.0
        %2638 = vmatpush1.msra.mxu0 0.0
        %2639 = vmatprep.mubr.f32.mxu0 0.0
        %2640 = vmatmul.mubr.f32.gmra.mrb[0].mxu0 %v481
        %v2641 = vpop.f32.mrb[0].mxu0
        %v2642 = vadd.f32 0.0, %v2641
        %v2643 = vpop.f32.mrb[0].mxu0
        %2644 = vmatprep.mubr.f32.mxu0 0.0
        %2645 = vmatmul.mubr.f32.gmra.mrb[0].mxu0 %v483
        %v2646 = vpop.f32.mrb[0].mxu0
        %v2647 = vadd.f32 0.0, %v2646
        %v2648 = vpop.f32.mrb[0].mxu0
        %2649 = vmatprep.mubr.f32.mxu0 0.0
        %2650 = vmatmul.mubr.f32.gmra.mrb[0].mxu0 %v486
        %v2651 = vpop.f32.mrb[0].mxu0
        %v2652 = vadd.f32 0.0, %v2651
        %v2653 = vpop.f32.mrb[0].mxu0
        %2654 = vmatprep.mubr.f32.mxu0 0.0
        %2655 = vmatmul.mubr.f32.gmra.mrb[0].mxu0 %v488
        %v2656 = vpop.f32.mrb[0].mxu0
        %v2657 = vadd.f32 0.0, %v2656
        %v2658 = vpop.f32.mrb[0].mxu0
        %2659 = vmatprep.mubr.f32.mxu0 0.0
        %2660 = vmatmul.mubr.f32.gmra.mrb[0].mxu0 %v491
        %v2661 = vpop.f32.mrb[0].mxu0
        %v2662 = vadd.f32 0.0, %v2661
        %v2663 = vpop.f32.mrb[0].mxu0
        %2664 = vmatprep.mubr.f32.mxu0 0.0
        %2665 = vmatmul.mubr.f32.gmra.mrb[0].mxu0 %v493
        %v2666 = vpop.f32.mrb[0].mxu0
        %v2667 = vadd.f32 0.0, %v2666
        %v2668 = vpop.f32.mrb[0].mxu0
        %2669 = vmatprep.mubr.f32.mxu0 0.0
        %2670 = vmatmul.mubr.f32.gmra.mrb[0].mxu0 %v496
        %v2671 = vpop.f32.mrb[0].mxu0
        %v2672 = vadd.f32 0.0, %v2671
        %v2673 = vpop.f32.mrb[0].mxu0
        %2674 = vmatprep.mubr.f32.mxu0 0.0
        %2675 = vmatmul.mubr.f32.gmra.mrb[0].mxu0 %v498
        %v2676 = vpop.f32.mrb[0].mxu0
        %v2677 = vadd.f32 0.0, %v2676
        %v2678 = vpop.f32.mrb[0].mxu0
        %2679 = vmatprep.mubr.f32.mxu0 0.0
        %2680 = vmatmul.mubr.f32.gmra.mrb[0].mxu0 %v501
        %v2681 = vpop.f32.mrb[0].mxu0
        %v2682 = vadd.f32 0.0, %v2681
        %v2683 = vpop.f32.mrb[0].mxu0
        %2684 = vmatprep.mubr.f32.mxu0 0.0
        %2685 = vmatmul.mubr.f32.gmra.mrb[0].mxu0 %v503
        %v2686 = vpop.f32.mrb[0].mxu0
        %v2687 = vadd.f32 0.0, %v2686
        %v2688 = vpop.f32.mrb[0].mxu0
        %2689 = vmatprep.mubr.f32.mxu0 0.0
        %2690 = vmatmul.mubr.f32.gmra.mrb[0].mxu0 %v506
        %v2691 = vpop.f32.mrb[0].mxu0
        %v2692 = vadd.f32 0.0, %v2691
        %v2693 = vpop.f32.mrb[0].mxu0
        %2694 = vmatprep.mubr.f32.mxu0 0.0
        %2695 = vmatmul.mubr.f32.gmra.mrb[0].mxu0 %v508
        %v2696 = vpop.f32.mrb[0].mxu0
        %v2697 = vadd.f32 0.0, %v2696
        %v2698 = vpop.f32.mrb[0].mxu0
        %2699 = vmatprep.mubr.f32.mxu0 0.0
        %2700 = vmatmul.mubr.f32.gmra.mrb[0].mxu0 %v511
        %v2701 = vpop.f32.mrb[0].mxu0
        %v2702 = vadd.f32 0.0, %v2701
        %v2703 = vpop.f32.mrb[0].mxu0
        %2704 = vmatprep.mubr.f32.mxu0 0.0
        %2705 = vmatmul.mubr.f32.gmra.mrb[0].mxu0 %v513
        %v2706 = vpop.f32.mrb[0].mxu0
        %v2707 = vadd.f32 0.0, %v2706
        %v2708 = vpop.f32.mrb[0].mxu0
        %2709 = vmatprep.mubr.f32.mxu0 0.0
        %2710 = vmatmul.mubr.f32.gmra.mrb[0].mxu0 %v516
        %v2711 = vpop.f32.mrb[0].mxu0
        %v2712 = vadd.f32 0.0, %v2711
        %v2713 = vpop.f32.mrb[0].mxu0
        %2714 = vmatprep.mubr.f32.mxu0 0.0
        %2715 = vmatmul.mubr.f32.gmra.mrb[0].mxu0 %v518
        %v2716 = vpop.f32.mrb[0].mxu0
        %v2717 = vadd.f32 0.0, %v2716
        %v2718 = vpop.f32.mrb[0].mxu0
        %2719 = vmatprep.mubr.f32.mxu0 0.0
        %2720 = vmatmul.mubr.f32.gmra.mrb[0].mxu0 %v521
        %v2721 = vpop.f32.mrb[0].mxu0
        %v2722 = vadd.f32 0.0, %v2721
        %v2723 = vpop.f32.mrb[0].mxu0
        %2724 = vmatprep.mubr.f32.mxu0 0.0
        %2725 = vmatmul.mubr.f32.gmra.mrb[0].mxu0 %v523
        %v2726 = vpop.f32.mrb[0].mxu0
        %v2727 = vadd.f32 0.0, %v2726
        %v2728 = vpop.f32.mrb[0].mxu0
        %2729 = vmatprep.mubr.f32.mxu0 0.0
        %2730 = vmatmul.mubr.f32.gmra.mrb[0].mxu0 %v526
        %v2731 = vpop.f32.mrb[0].mxu0
        %v2732 = vadd.f32 0.0, %v2731
        %v2733 = vpop.f32.mrb[0].mxu0
        %2734 = vmatprep.mubr.f32.mxu0 0.0
        %2735 = vmatmul.mubr.f32.gmra.mrb[0].mxu0 %v528
        %v2736 = vpop.f32.mrb[0].mxu0
        %v2737 = vadd.f32 0.0, %v2736
        %v2738 = vpop.f32.mrb[0].mxu0
        %2739 = vmatprep.mubr.f32.mxu0 0.0
        %2740 = vmatmul.mubr.f32.gmra.mrb[0].mxu0 %v531
        %v2741 = vpop.f32.mrb[0].mxu0
        %v2742 = vadd.f32 0.0, %v2741
        %v2743 = vpop.f32.mrb[0].mxu0
        %2744 = vmatprep.mubr.f32.mxu0 0.0
        %2745 = vmatmul.mubr.f32.gmra.mrb[0].mxu0 %v533
        %v2746 = vpop.f32.mrb[0].mxu0
        %v2747 = vadd.f32 0.0, %v2746
        %v2748 = vpop.f32.mrb[0].mxu0
        %2749 = vmatprep.mubr.f32.mxu0 0.0
        %2750 = vmatmul.mubr.f32.gmra.mrb[0].mxu0 %v536
        %v2751 = vpop.f32.mrb[0].mxu0
        %v2752 = vadd.f32 0.0, %v2751
        %v2753 = vpop.f32.mrb[0].mxu0
        %2754 = vmatprep.mubr.f32.mxu0 0.0
        %2755 = vmatmul.mubr.f32.gmra.mrb[0].mxu0 %v538
        %v2756 = vpop.f32.mrb[0].mxu0
        %v2757 = vadd.f32 0.0, %v2756
        %v2758 = vpop.f32.mrb[0].mxu0
        %2759 = vmatprep.mubr.f32.mxu0 0.0
        %2760 = vmatmul.mubr.f32.gmra.mrb[0].mxu0 %v541
        %v2761 = vpop.f32.mrb[0].mxu0
        %v2762 = vadd.f32 0.0, %v2761
        %v2763 = vpop.f32.mrb[0].mxu0
        %2764 = vmatprep.mubr.f32.mxu0 0.0
        %2765 = vmatmul.mubr.f32.gmra.mrb[0].mxu0 %v543
        %v2766 = vpop.f32.mrb[0].mxu0
        %v2767 = vadd.f32 0.0, %v2766
        %v2768 = vpop.f32.mrb[0].mxu0
        %2769 = vmatprep.mubr.f32.mxu0 0.0
        %2770 = vmatmul.mubr.f32.gmra.mrb[0].mxu0 %v546
        %v2771 = vpop.f32.mrb[0].mxu0
        %v2772 = vadd.f32 0.0, %v2771
        %v2773 = vpop.f32.mrb[0].mxu0
        %2774 = vmatprep.mubr.f32.mxu0 0.0
        %2775 = vmatmul.mubr.f32.gmra.mrb[0].mxu0 %v548
        %v2776 = vpop.f32.mrb[0].mxu0
        %v2777 = vadd.f32 0.0, %v2776
        %v2778 = vpop.f32.mrb[0].mxu0
        %2779 = vmatprep.mubr.f32.mxu0 0.0
        %2780 = vmatmul.mubr.f32.gmra.mrb[0].mxu0 %v1714
        %v2781 = vpop.f32.mrb[0].mxu0
        %v2782 = vadd.f32 0.0, %v2781
        %v2783 = vpop.f32.mrb[0].mxu0
        %2784 = vmatprep.mubr.f32.mxu0 0.0
        %2785 = vmatmul.mubr.f32.gmra.mrb[0].mxu0 %v1716
        %v2786 = vpop.f32.mrb[0].mxu0
        %v2787 = vadd.f32 0.0, %v2786
        %v2788 = vpop.f32.mrb[0].mxu0
        %2789 = vmatprep.mubr.f32.mxu0 0.0
        %2790 = vmatmul.mubr.f32.gmra.mrb[0].mxu0 %v2553
        %v2791 = vpop.f32.mrb[0].mxu0
        %v2792 = vadd.f32 0.0, %v2791
        %v2793 = vpop.f32.mrb[0].mxu0
        %2794 = vmatprep.mubr.f32.mxu0 0.0
        %2795 = vmatmul.mubr.f32.gmra.mrb[0].mxu0 %v2555
        %v2796 = vpop.f32.mrb[0].mxu0
        %v2797 = vadd.f32 0.0, %v2796
        %v2798 = vpop.f32.mrb[0].mxu0
        %2799 = vdwg.mxu0
        %v2800 = vadd.f32 %v2516, %v2642
        %v2801 = vadd.f32 %v2517, %v2647
        %v2802 = vadd.f32 %v2518, %v2652
        %v2803 = vadd.f32 %v2519, %v2657
        %v2804 = vadd.f32 %v2520, %v2662
        %v2805 = vadd.f32 %v2521, %v2667
        %v2806 = vadd.f32 %v2522, %v2672
        %v2807 = vadd.f32 %v2523, %v2677
        %v2808 = vadd.f32 %v2524, %v2682
        %v2809 = vadd.f32 %v2525, %v2687
        %v2810 = vadd.f32 %v2526, %v2692
        %v2811 = vadd.f32 %v2527, %v2697
        %v2812 = vadd.f32 %v2528, %v2702
        %v2813 = vadd.f32 %v2529, %v2707
        %v2814 = vadd.f32 %v2530, %v2712
        %v2815 = vadd.f32 %v2531, %v2717
        %v2816 = vadd.f32 %v2532, %v2722
        %v2817 = vadd.f32 %v2533, %v2727
        %v2818 = vadd.f32 %v2534, %v2732
        %v2819 = vadd.f32 %v2535, %v2737
        %v2820 = vadd.f32 %v2536, %v2742
        %v2821 = vadd.f32 %v2537, %v2747
        %v2822 = vadd.f32 %v2538, %v2752
        %v2823 = vadd.f32 %v2539, %v2757
        %v2824 = vadd.f32 %v2540, %v2762
        %v2825 = vadd.f32 %v2541, %v2767
        %v2826 = vadd.f32 %v2542, %v2772
        %v2827 = vadd.f32 %v2543, %v2777
        %v2828 = vadd.f32 %v2544, %v2782
        %v2829 = vadd.f32 %v2545, %v2787
        %v2830 = vadd.f32 %v2546, %v2792
        %v2831 = vadd.f32 %v2547, %v2797
        %v2832 = vrot.slane %v401, 2
        %v2833 = vrot.slane %v402, 2
        %v2834 = vsel %vm1048, %v2832, %v2833
        %v2835 = vrot.slane %v403, 2
        %v2836 = vsel %vm1048, %v2833, %v2835
        %s2839 = scalar_lea.vmem %s1, 1024
        %v2840 = vld [vmem:[%s2839] sm:$0xff]
        %v2841 = vld [vmem:[%s2839 + $0x8] sm:$0xff]
        %v2842 = vld [vmem:[%s2839 + $0x10] sm:$0xff]
        %v2843 = vld [vmem:[%s2839 + $0x18] sm:$0xff]
        %v2844 = vld [vmem:[%s2839 + $0x20] sm:$0xff]
        %v2845 = vld [vmem:[%s2839 + $0x28] sm:$0xff]
        %v2846 = vld [vmem:[%s2839 + $0x30] sm:$0xff]
        %v2847 = vld [vmem:[%s2839 + $0x38] sm:$0xff]
        %v2848 = vld [vmem:[%s2839 + $0x40] sm:$0xff]
        %v2849 = vld [vmem:[%s2839 + $0x48] sm:$0xff]
        %v2850 = vld [vmem:[%s2839 + $0x50] sm:$0xff]
        %v2851 = vld [vmem:[%s2839 + $0x58] sm:$0xff]
        %v2852 = vld [vmem:[%s2839 + $0x60] sm:$0xff]
        %v2853 = vld [vmem:[%s2839 + $0x68] sm:$0xff]
        %v2854 = vld [vmem:[%s2839 + $0x70] sm:$0xff]
        %v2855 = vld [vmem:[%s2839 + $0x78] sm:$0xff]
        %2856 = vmatprep.subr.mxu0 0.0
        %2857 = vmatpush1.msra.mxu0 %v2840
        %2858 = vmatprep.subr.mxu0 0.0
        %2859 = vmatpush1.msra.mxu0 %v2841
        %2860 = vmatprep.subr.mxu0 0.0
        %2861 = vmatpush1.msra.mxu0 %v2842
        %2862 = vmatprep.subr.mxu0 0.0
        %2863 = vmatpush1.msra.mxu0 %v2843
        %2864 = vmatprep.subr.mxu0 0.0
        %2865 = vmatpush1.msra.mxu0 %v2844
        %2866 = vmatprep.subr.mxu0 0.0
        %2867 = vmatpush1.msra.mxu0 %v2845
        %2868 = vmatprep.subr.mxu0 0.0
        %2869 = vmatpush1.msra.mxu0 %v2846
        %2870 = vmatprep.subr.mxu0 0.0
        %2871 = vmatpush1.msra.mxu0 %v2847
        %2872 = vmatprep.subr.mxu0 0.0
        %2873 = vmatpush1.msra.mxu0 %v2848
        %2874 = vmatprep.subr.mxu0 0.0
        %2875 = vmatpush1.msra.mxu0 %v2849
        %2876 = vmatprep.subr.mxu0 0.0
        %2877 = vmatpush1.msra.mxu0 %v2850
        %2878 = vmatprep.subr.mxu0 0.0
        %2879 = vmatpush1.msra.mxu0 %v2851
        %2880 = vmatprep.subr.mxu0 0.0
        %2881 = vmatpush1.msra.mxu0 %v2852
        %2882 = vmatprep.subr.mxu0 0.0
        %2883 = vmatpush1.msra.mxu0 %v2853
        %2884 = vmatprep.subr.mxu0 0.0
        %2885 = vmatpush1.msra.mxu0 %v2854
        %2886 = vmatprep.subr.mxu0 0.0
        %2887 = vmatpush1.msra.mxu0 %v2855
        %2888 = vmatprep.subr.mxu0 0.0
        %2889 = vmatpush1.msra.mxu0 0.0
        %2890 = vmatprep.subr.mxu0 0.0
        %2891 = vmatpush1.msra.mxu0 0.0
        %2892 = vmatprep.subr.mxu0 0.0
        %2893 = vmatpush1.msra.mxu0 0.0
        %2894 = vmatprep.subr.mxu0 0.0
        %2895 = vmatpush1.msra.mxu0 0.0
        %2896 = vmatprep.subr.mxu0 0.0
        %2897 = vmatpush1.msra.mxu0 0.0
        %2898 = vmatprep.subr.mxu0 0.0
        %2899 = vmatpush1.msra.mxu0 0.0
        %2900 = vmatprep.subr.mxu0 0.0
        %2901 = vmatpush1.msra.mxu0 0.0
        %2902 = vmatprep.subr.mxu0 0.0
        %2903 = vmatpush1.msra.mxu0 0.0
        %2904 = vmatprep.subr.mxu0 0.0
        %2905 = vmatpush1.msra.mxu0 0.0
        %2906 = vmatprep.subr.mxu0 0.0
        %2907 = vmatpush1.msra.mxu0 0.0
        %2908 = vmatprep.subr.mxu0 0.0
        %2909 = vmatpush1.msra.mxu0 0.0
        %2910 = vmatprep.subr.mxu0 0.0
        %2911 = vmatpush1.msra.mxu0 0.0
        %2912 = vmatprep.subr.mxu0 0.0
        %2913 = vmatpush1.msra.mxu0 0.0
        %2914 = vmatprep.subr.mxu0 0.0
        %2915 = vmatpush1.msra.mxu0 0.0
        %2916 = vmatprep.subr.mxu0 0.0
        %2917 = vmatpush1.msra.mxu0 0.0
        %2918 = vmatprep.subr.mxu0 0.0
        %2919 = vmatpush1.msra.mxu0 0.0
        %2920 = vmatprep.mubr.f32.mxu0 0.0
        %2921 = vmatmul.mubr.f32.gmra.mrb[0].mxu0 %v1061
        %v2922 = vpop.f32.mrb[0].mxu0
        %v2923 = vadd.f32 0.0, %v2922
        %v2924 = vpop.f32.mrb[0].mxu0
        %2925 = vmatprep.mubr.f32.mxu0 0.0
        %2926 = vmatmul.mubr.f32.gmra.mrb[0].mxu0 %v1063
        %v2927 = vpop.f32.mrb[0].mxu0
        %v2928 = vadd.f32 0.0, %v2927
        %v2929 = vpop.f32.mrb[0].mxu0
        %2930 = vmatprep.mubr.f32.mxu0 0.0
        %2931 = vmatmul.mubr.f32.gmra.mrb[0].mxu0 %v1066
        %v2932 = vpop.f32.mrb[0].mxu0
        %v2933 = vadd.f32 0.0, %v2932
        %v2934 = vpop.f32.mrb[0].mxu0
        %2935 = vmatprep.mubr.f32.mxu0 0.0
        %2936 = vmatmul.mubr.f32.gmra.mrb[0].mxu0 %v1068
        %v2937 = vpop.f32.mrb[0].mxu0
        %v2938 = vadd.f32 0.0, %v2937
        %v2939 = vpop.f32.mrb[0].mxu0
        %2940 = vmatprep.mubr.f32.mxu0 0.0
        %2941 = vmatmul.mubr.f32.gmra.mrb[0].mxu0 %v1071
        %v2942 = vpop.f32.mrb[0].mxu0
        %v2943 = vadd.f32 0.0, %v2942
        %v2944 = vpop.f32.mrb[0].mxu0
        %2945 = vmatprep.mubr.f32.mxu0 0.0
        %2946 = vmatmul.mubr.f32.gmra.mrb[0].mxu0 %v1073
        %v2947 = vpop.f32.mrb[0].mxu0
        %v2948 = vadd.f32 0.0, %v2947
        %v2949 = vpop.f32.mrb[0].mxu0
        %2950 = vmatprep.mubr.f32.mxu0 0.0
        %2951 = vmatmul.mubr.f32.gmra.mrb[0].mxu0 %v1076
        %v2952 = vpop.f32.mrb[0].mxu0
        %v2953 = vadd.f32 0.0, %v2952
        %v2954 = vpop.f32.mrb[0].mxu0
        %2955 = vmatprep.mubr.f32.mxu0 0.0
        %2956 = vmatmul.mubr.f32.gmra.mrb[0].mxu0 %v1078
        %v2957 = vpop.f32.mrb[0].mxu0
        %v2958 = vadd.f32 0.0, %v2957
        %v2959 = vpop.f32.mrb[0].mxu0
        %2960 = vmatprep.mubr.f32.mxu0 0.0
        %2961 = vmatmul.mubr.f32.gmra.mrb[0].mxu0 %v1081
        %v2962 = vpop.f32.mrb[0].mxu0
        %v2963 = vadd.f32 0.0, %v2962
        %v2964 = vpop.f32.mrb[0].mxu0
        %2965 = vmatprep.mubr.f32.mxu0 0.0
        %2966 = vmatmul.mubr.f32.gmra.mrb[0].mxu0 %v1083
        %v2967 = vpop.f32.mrb[0].mxu0
        %v2968 = vadd.f32 0.0, %v2967
        %v2969 = vpop.f32.mrb[0].mxu0
        %2970 = vmatprep.mubr.f32.mxu0 0.0
        %2971 = vmatmul.mubr.f32.gmra.mrb[0].mxu0 %v1086
        %v2972 = vpop.f32.mrb[0].mxu0
        %v2973 = vadd.f32 0.0, %v2972
        %v2974 = vpop.f32.mrb[0].mxu0
        %2975 = vmatprep.mubr.f32.mxu0 0.0
        %2976 = vmatmul.mubr.f32.gmra.mrb[0].mxu0 %v1088
        %v2977 = vpop.f32.mrb[0].mxu0
        %v2978 = vadd.f32 0.0, %v2977
        %v2979 = vpop.f32.mrb[0].mxu0
        %2980 = vmatprep.mubr.f32.mxu0 0.0
        %2981 = vmatmul.mubr.f32.gmra.mrb[0].mxu0 %v1091
        %v2982 = vpop.f32.mrb[0].mxu0
        %v2983 = vadd.f32 0.0, %v2982
        %v2984 = vpop.f32.mrb[0].mxu0
        %2985 = vmatprep.mubr.f32.mxu0 0.0
        %2986 = vmatmul.mubr.f32.gmra.mrb[0].mxu0 %v1093
        %v2987 = vpop.f32.mrb[0].mxu0
        %v2988 = vadd.f32 0.0, %v2987
        %v2989 = vpop.f32.mrb[0].mxu0
        %2990 = vmatprep.mubr.f32.mxu0 0.0
        %2991 = vmatmul.mubr.f32.gmra.mrb[0].mxu0 %v1096
        %v2992 = vpop.f32.mrb[0].mxu0
        %v2993 = vadd.f32 0.0, %v2992
        %v2994 = vpop.f32.mrb[0].mxu0
        %2995 = vmatprep.mubr.f32.mxu0 0.0
        %2996 = vmatmul.mubr.f32.gmra.mrb[0].mxu0 %v1098
        %v2997 = vpop.f32.mrb[0].mxu0
        %v2998 = vadd.f32 0.0, %v2997
        %v2999 = vpop.f32.mrb[0].mxu0
        %3000 = vmatprep.mubr.f32.mxu0 0.0
        %3001 = vmatmul.mubr.f32.gmra.mrb[0].mxu0 %v1101
        %v3002 = vpop.f32.mrb[0].mxu0
        %v3003 = vadd.f32 0.0, %v3002
        %v3004 = vpop.f32.mrb[0].mxu0
        %3005 = vmatprep.mubr.f32.mxu0 0.0
        %3006 = vmatmul.mubr.f32.gmra.mrb[0].mxu0 %v1103
        %v3007 = vpop.f32.mrb[0].mxu0
        %v3008 = vadd.f32 0.0, %v3007
        %v3009 = vpop.f32.mrb[0].mxu0
        %3010 = vmatprep.mubr.f32.mxu0 0.0
        %3011 = vmatmul.mubr.f32.gmra.mrb[0].mxu0 %v1106
        %v3012 = vpop.f32.mrb[0].mxu0
        %v3013 = vadd.f32 0.0, %v3012
        %v3014 = vpop.f32.mrb[0].mxu0
        %3015 = vmatprep.mubr.f32.mxu0 0.0
        %3016 = vmatmul.mubr.f32.gmra.mrb[0].mxu0 %v1108
        %v3017 = vpop.f32.mrb[0].mxu0
        %v3018 = vadd.f32 0.0, %v3017
        %v3019 = vpop.f32.mrb[0].mxu0
        %3020 = vmatprep.mubr.f32.mxu0 0.0
        %3021 = vmatmul.mubr.f32.gmra.mrb[0].mxu0 %v1111
        %v3022 = vpop.f32.mrb[0].mxu0
        %v3023 = vadd.f32 0.0, %v3022
        %v3024 = vpop.f32.mrb[0].mxu0
        %3025 = vmatprep.mubr.f32.mxu0 0.0
        %3026 = vmatmul.mubr.f32.gmra.mrb[0].mxu0 %v1113
        %v3027 = vpop.f32.mrb[0].mxu0
        %v3028 = vadd.f32 0.0, %v3027
        %v3029 = vpop.f32.mrb[0].mxu0
        %3030 = vmatprep.mubr.f32.mxu0 0.0
        %3031 = vmatmul.mubr.f32.gmra.mrb[0].mxu0 %v1116
        %v3032 = vpop.f32.mrb[0].mxu0
        %v3033 = vadd.f32 0.0, %v3032
        %v3034 = vpop.f32.mrb[0].mxu0
        %3035 = vmatprep.mubr.f32.mxu0 0.0
        %3036 = vmatmul.mubr.f32.gmra.mrb[0].mxu0 %v1118
        %v3037 = vpop.f32.mrb[0].mxu0
        %v3038 = vadd.f32 0.0, %v3037
        %v3039 = vpop.f32.mrb[0].mxu0
        %3040 = vmatprep.mubr.f32.mxu0 0.0
        %3041 = vmatmul.mubr.f32.gmra.mrb[0].mxu0 %v1121
        %v3042 = vpop.f32.mrb[0].mxu0
        %v3043 = vadd.f32 0.0, %v3042
        %v3044 = vpop.f32.mrb[0].mxu0
        %3045 = vmatprep.mubr.f32.mxu0 0.0
        %3046 = vmatmul.mubr.f32.gmra.mrb[0].mxu0 %v1123
        %v3047 = vpop.f32.mrb[0].mxu0
        %v3048 = vadd.f32 0.0, %v3047
        %v3049 = vpop.f32.mrb[0].mxu0
        %3050 = vmatprep.mubr.f32.mxu0 0.0
        %3051 = vmatmul.mubr.f32.gmra.mrb[0].mxu0 %v1126
        %v3052 = vpop.f32.mrb[0].mxu0
        %v3053 = vadd.f32 0.0, %v3052
        %v3054 = vpop.f32.mrb[0].mxu0
        %3055 = vmatprep.mubr.f32.mxu0 0.0
        %3056 = vmatmul.mubr.f32.gmra.mrb[0].mxu0 %v1128
        %v3057 = vpop.f32.mrb[0].mxu0
        %v3058 = vadd.f32 0.0, %v3057
        %v3059 = vpop.f32.mrb[0].mxu0
        %3060 = vmatprep.mubr.f32.mxu0 0.0
        %3061 = vmatmul.mubr.f32.gmra.mrb[0].mxu0 %v1995
        %v3062 = vpop.f32.mrb[0].mxu0
        %v3063 = vadd.f32 0.0, %v3062
        %v3064 = vpop.f32.mrb[0].mxu0
        %3065 = vmatprep.mubr.f32.mxu0 0.0
        %3066 = vmatmul.mubr.f32.gmra.mrb[0].mxu0 %v1997
        %v3067 = vpop.f32.mrb[0].mxu0
        %v3068 = vadd.f32 0.0, %v3067
        %v3069 = vpop.f32.mrb[0].mxu0
        %3070 = vmatprep.mubr.f32.mxu0 0.0
        %3071 = vmatmul.mubr.f32.gmra.mrb[0].mxu0 %v2834
        %v3072 = vpop.f32.mrb[0].mxu0
        %v3073 = vadd.f32 0.0, %v3072
        %v3074 = vpop.f32.mrb[0].mxu0
        %3075 = vmatprep.mubr.f32.mxu0 0.0
        %3076 = vmatmul.mubr.f32.gmra.mrb[0].mxu0 %v2836
        %v3077 = vpop.f32.mrb[0].mxu0
        %v3078 = vadd.f32 0.0, %v3077
        %v3079 = vpop.f32.mrb[0].mxu0
        %3080 = vdwg.mxu0
        %v3081 = vadd.f32 %v2800, %v2923
        %v3082 = vadd.f32 %v2801, %v2928
        %v3083 = vadd.f32 %v2802, %v2933
        %v3084 = vadd.f32 %v2803, %v2938
        %v3085 = vadd.f32 %v2804, %v2943
        %v3086 = vadd.f32 %v2805, %v2948
        %v3087 = vadd.f32 %v2806, %v2953
        %v3088 = vadd.f32 %v2807, %v2958
        %v3089 = vadd.f32 %v2808, %v2963
        %v3090 = vadd.f32 %v2809, %v2968
        %v3091 = vadd.f32 %v2810, %v2973
        %v3092 = vadd.f32 %v2811, %v2978
        %v3093 = vadd.f32 %v2812, %v2983
        %v3094 = vadd.f32 %v2813, %v2988
        %v3095 = vadd.f32 %v2814, %v2993
        %v3096 = vadd.f32 %v2815, %v2998
        %v3097 = vadd.f32 %v2816, %v3003
        %v3098 = vadd.f32 %v2817, %v3008
        %v3099 = vadd.f32 %v2818, %v3013
        %v3100 = vadd.f32 %v2819, %v3018
        %v3101 = vadd.f32 %v2820, %v3023
        %v3102 = vadd.f32 %v2821, %v3028
        %v3103 = vadd.f32 %v2822, %v3033
        %v3104 = vadd.f32 %v2823, %v3038
        %v3105 = vadd.f32 %v2824, %v3043
        %v3106 = vadd.f32 %v2825, %v3048
        %v3107 = vadd.f32 %v2826, %v3053
        %v3108 = vadd.f32 %v2827, %v3058
        %v3109 = vadd.f32 %v2828, %v3063
        %v3110 = vadd.f32 %v2829, %v3068
        %v3111 = vadd.f32 %v2830, %v3073
        %v3112 = vadd.f32 %v2831, %v3078
        %v3113 = vld [vmem:[%s2] sm:$0x1]
        %v3115 = vlaneseq
        %v3116 = vshrl.u32 %v3115, 7
        %v3117 = vsub.s32 0, %v3116
        %v3118 = vrot.slane %v3113, %v3117
        %v3120 = vmul.f32 %v3081, %v3118
        %v3121 = vmul.f32 %v3082, %v3118
        %v3122 = vmul.f32 %v3083, %v3118
        %v3123 = vmul.f32 %v3084, %v3118
        %v3124 = vmul.f32 %v3085, %v3118
        %v3125 = vmul.f32 %v3086, %v3118
        %v3126 = vmul.f32 %v3087, %v3118
        %v3127 = vmul.f32 %v3088, %v3118
        %v3128 = vmul.f32 %v3089, %v3118
        %v3129 = vmul.f32 %v3090, %v3118
        %v3130 = vmul.f32 %v3091, %v3118
        %v3131 = vmul.f32 %v3092, %v3118
        %v3132 = vmul.f32 %v3093, %v3118
        %v3133 = vmul.f32 %v3094, %v3118
        %v3134 = vmul.f32 %v3095, %v3118
        %v3135 = vmul.f32 %v3096, %v3118
        %v3136 = vmul.f32 %v3097, %v3118
        %v3137 = vmul.f32 %v3098, %v3118
        %v3138 = vmul.f32 %v3099, %v3118
        %v3139 = vmul.f32 %v3100, %v3118
        %v3140 = vmul.f32 %v3101, %v3118
        %v3141 = vmul.f32 %v3102, %v3118
        %v3142 = vmul.f32 %v3103, %v3118
        %v3143 = vmul.f32 %v3104, %v3118
        %v3144 = vmul.f32 %v3105, %v3118
        %v3145 = vmul.f32 %v3106, %v3118
        %v3146 = vmul.f32 %v3107, %v3118
        %v3147 = vmul.f32 %v3108, %v3118
        %v3148 = vmul.f32 %v3109, %v3118
        %v3149 = vmul.f32 %v3110, %v3118
        %v3150 = vmul.f32 %v3111, %v3118
        %v3151 = vmul.f32 %v3112, %v3118
        %v3152 = vld [vmem:[%s3] sm:$0x1]
        %v3154 = vlaneseq
        %v3155 = vshrl.u32 %v3154, 7
        %v3156 = vsub.s32 0, %v3155
        %v3157 = vrot.slane %v3152, %v3156
        %v3159 = vadd.f32 %v3120, %v3157
        %v3160 = vadd.f32 %v3121, %v3157
        %v3161 = vadd.f32 %v3122, %v3157
        %v3162 = vadd.f32 %v3123, %v3157
        %v3163 = vadd.f32 %v3124, %v3157
        %v3164 = vadd.f32 %v3125, %v3157
        %v3165 = vadd.f32 %v3126, %v3157
        %v3166 = vadd.f32 %v3127, %v3157
        %v3167 = vadd.f32 %v3128, %v3157
        %v3168 = vadd.f32 %v3129, %v3157
        %v3169 = vadd.f32 %v3130, %v3157
        %v3170 = vadd.f32 %v3131, %v3157
        %v3171 = vadd.f32 %v3132, %v3157
        %v3172 = vadd.f32 %v3133, %v3157
        %v3173 = vadd.f32 %v3134, %v3157
        %v3174 = vadd.f32 %v3135, %v3157
        %v3175 = vadd.f32 %v3136, %v3157
        %v3176 = vadd.f32 %v3137, %v3157
        %v3177 = vadd.f32 %v3138, %v3157
        %v3178 = vadd.f32 %v3139, %v3157
        %v3179 = vadd.f32 %v3140, %v3157
        %v3180 = vadd.f32 %v3141, %v3157
        %v3181 = vadd.f32 %v3142, %v3157
        %v3182 = vadd.f32 %v3143, %v3157
        %v3183 = vadd.f32 %v3144, %v3157
        %v3184 = vadd.f32 %v3145, %v3157
        %v3185 = vadd.f32 %v3146, %v3157
        %v3186 = vadd.f32 %v3147, %v3157
        %v3187 = vadd.f32 %v3148, %v3157
        %v3188 = vadd.f32 %v3149, %v3157
        %v3189 = vadd.f32 %v3150, %v3157
        %v3190 = vadd.f32 %v3151, %v3157
        %v3191 = vmax.f32 %v3159, 0.0
        %v3192 = vmax.f32 %v3160, 0.0
        %v3193 = vmax.f32 %v3161, 0.0
        %v3194 = vmax.f32 %v3162, 0.0
        %v3195 = vmax.f32 %v3163, 0.0
        %v3196 = vmax.f32 %v3164, 0.0
        %v3197 = vmax.f32 %v3165, 0.0
        %v3198 = vmax.f32 %v3166, 0.0
        %v3199 = vmax.f32 %v3167, 0.0
        %v3200 = vmax.f32 %v3168, 0.0
        %v3201 = vmax.f32 %v3169, 0.0
        %v3202 = vmax.f32 %v3170, 0.0
        %v3203 = vmax.f32 %v3171, 0.0
        %v3204 = vmax.f32 %v3172, 0.0
        %v3205 = vmax.f32 %v3173, 0.0
        %v3206 = vmax.f32 %v3174, 0.0
        %v3207 = vmax.f32 %v3175, 0.0
        %v3208 = vmax.f32 %v3176, 0.0
        %v3209 = vmax.f32 %v3177, 0.0
        %v3210 = vmax.f32 %v3178, 0.0
        %v3211 = vmax.f32 %v3179, 0.0
        %v3212 = vmax.f32 %v3180, 0.0
        %v3213 = vmax.f32 %v3181, 0.0
        %v3214 = vmax.f32 %v3182, 0.0
        %v3215 = vmax.f32 %v3183, 0.0
        %v3216 = vmax.f32 %v3184, 0.0
        %v3217 = vmax.f32 %v3185, 0.0
        %v3218 = vmax.f32 %v3186, 0.0
        %v3219 = vmax.f32 %v3187, 0.0
        %v3220 = vmax.f32 %v3188, 0.0
        %v3221 = vmax.f32 %v3189, 0.0
        %v3222 = vmax.f32 %v3190, 0.0
        %s3223 = scalar_lea.vmem [#allocation2], 24
        %3224 = vst [vmem:[%s3223 + $0x1] sm:$0xff] %v3191
        %3225 = vst [vmem:[%s3223 + $0x9] sm:$0xff] %v3192
        %3226 = vst [vmem:[%s3223 + $0x19] sm:$0xff] %v3193
        %3227 = vst [vmem:[%s3223 + $0x21] sm:$0xff] %v3194
        %3228 = vst [vmem:[%s3223 + $0x31] sm:$0xff] %v3195
        %3229 = vst [vmem:[%s3223 + $0x39] sm:$0xff] %v3196
        %3230 = vst [vmem:[%s3223 + $0x49] sm:$0xff] %v3197
        %3231 = vst [vmem:[%s3223 + $0x51] sm:$0xff] %v3198
        %3232 = vst [vmem:[%s3223 + $0x61] sm:$0xff] %v3199
        %3233 = vst [vmem:[%s3223 + $0x69] sm:$0xff] %v3200
        %3234 = vst [vmem:[%s3223 + $0x79] sm:$0xff] %v3201
        %3235 = vst [vmem:[%s3223 + $0x81] sm:$0xff] %v3202
        %3236 = vst [vmem:[%s3223 + $0x91] sm:$0xff] %v3203
        %3237 = vst [vmem:[%s3223 + $0x99] sm:$0xff] %v3204
        %3238 = vst [vmem:[%s3223 + $0xa9] sm:$0xff] %v3205
        %3239 = vst [vmem:[%s3223 + $0xb1] sm:$0xff] %v3206
        %3240 = vst [vmem:[%s3223 + $0xc1] sm:$0xff] %v3207
        %3241 = vst [vmem:[%s3223 + $0xc9] sm:$0xff] %v3208
        %3242 = vst [vmem:[%s3223 + $0xd9] sm:$0xff] %v3209
        %3243 = vst [vmem:[%s3223 + $0xe1] sm:$0xff] %v3210
        %3244 = vst [vmem:[%s3223 + $0xf1] sm:$0xff] %v3211
        %3245 = vst [vmem:[%s3223 + $0xf9] sm:$0xff] %v3212
        %3246 = vst [vmem:[%s3223 + $0x109] sm:$0xff] %v3213
        %3247 = vst [vmem:[%s3223 + $0x111] sm:$0xff] %v3214
        %3248 = vst [vmem:[%s3223 + $0x121] sm:$0xff] %v3215
        %3249 = vst [vmem:[%s3223 + $0x129] sm:$0xff] %v3216
        %3250 = vst [vmem:[%s3223 + $0x139] sm:$0xff] %v3217
        %3251 = vst [vmem:[%s3223 + $0x141] sm:$0xff] %v3218
        %3252 = vst [vmem:[%s3223 + $0x151] sm:$0xff] %v3219
        %3253 = vst [vmem:[%s3223 + $0x159] sm:$0xff] %v3220
        %3254 = vst [vmem:[%s3223 + $0x169] sm:$0xff] %v3221
        %3255 = vst [vmem:[%s3223 + $0x171] sm:$0xff] %v3222
        %v3256 = vld [vmem:[#allocation2] sm:$0xff]
        %v3257 = vld [vmem:[#allocation2 + $0x8] sm:$0xff]
        %v3258 = vld [vmem:[#allocation2 + $0x10] sm:$0x3]
        %v3259 = vld [vmem:[#allocation2 + $0x18] sm:$0xff]
        %v3260 = vld [vmem:[#allocation2 + $0x20] sm:$0xff]
        %v3261 = vld [vmem:[#allocation2 + $0x28] sm:$0x3]
        %v3262 = vld [vmem:[#allocation2 + $0x30] sm:$0xff]
        %v3263 = vld [vmem:[#allocation2 + $0x38] sm:$0xff]
        %v3264 = vld [vmem:[#allocation2 + $0x40] sm:$0x3]
        %v3265 = vld [vmem:[#allocation2 + $0x48] sm:$0xff]
        %v3266 = vld [vmem:[#allocation2 + $0x50] sm:$0xff]
        %v3267 = vld [vmem:[#allocation2 + $0x58] sm:$0x3]
        %v3268 = vld [vmem:[#allocation2 + $0x60] sm:$0xff]
        %v3269 = vld [vmem:[#allocation2 + $0x68] sm:$0xff]
        %v3270 = vld [vmem:[#allocation2 + $0x70] sm:$0x3]
        %v3271 = vld [vmem:[#allocation2 + $0x78] sm:$0xff]
        %v3272 = vld [vmem:[#allocation2 + $0x80] sm:$0xff]
        %v3273 = vld [vmem:[#allocation2 + $0x88] sm:$0x3]
        %v3274 = vld [vmem:[#allocation2 + $0x90] sm:$0xff]
        %v3275 = vld [vmem:[#allocation2 + $0x98] sm:$0xff]
        %v3276 = vld [vmem:[#allocation2 + $0xa0] sm:$0x3]
        %v3277 = vld [vmem:[#allocation2 + $0xa8] sm:$0xff]
        %v3278 = vld [vmem:[#allocation2 + $0xb0] sm:$0xff]
        %v3279 = vld [vmem:[#allocation2 + $0xb8] sm:$0x3]
        %v3280 = vld [vmem:[#allocation2 + $0xc0] sm:$0xff]
        %v3281 = vld [vmem:[#allocation2 + $0xc8] sm:$0xff]
        %v3282 = vld [vmem:[#allocation2 + $0xd0] sm:$0x3]
        %v3283 = vld [vmem:[#allocation2 + $0xd8] sm:$0xff]
        %v3284 = vld [vmem:[#allocation2 + $0xe0] sm:$0xff]
        %v3285 = vld [vmem:[#allocation2 + $0xe8] sm:$0x3]
        %v3286 = vld [vmem:[#allocation2 + $0xf0] sm:$0xff]
        %v3287 = vld [vmem:[#allocation2 + $0xf8] sm:$0xff]
        %v3288 = vld [vmem:[#allocation2 + $0x100] sm:$0x3]
        %v3289 = vld [vmem:[#allocation2 + $0x108] sm:$0xff]
        %v3290 = vld [vmem:[#allocation2 + $0x110] sm:$0xff]
        %v3291 = vld [vmem:[#allocation2 + $0x118] sm:$0x3]
        %v3292 = vld [vmem:[#allocation2 + $0x120] sm:$0xff]
        %v3293 = vld [vmem:[#allocation2 + $0x128] sm:$0xff]
        %v3294 = vld [vmem:[#allocation2 + $0x130] sm:$0x3]
        %v3295 = vld [vmem:[#allocation2 + $0x138] sm:$0xff]
        %v3296 = vld [vmem:[#allocation2 + $0x140] sm:$0xff]
        %v3297 = vld [vmem:[#allocation2 + $0x148] sm:$0x3]
        %v3298 = vld [vmem:[#allocation2 + $0x150] sm:$0xff]
        %v3299 = vld [vmem:[#allocation2 + $0x158] sm:$0xff]
        %v3300 = vld [vmem:[#allocation2 + $0x160] sm:$0x3]
        %v3301 = vld [vmem:[#allocation2 + $0x168] sm:$0xff]
        %v3302 = vld [vmem:[#allocation2 + $0x170] sm:$0xff]
        %v3303 = vld [vmem:[#allocation2 + $0x178] sm:$0x3]
        %v3304 = vld [vmem:[#allocation2 + $0x180] sm:$0xff]
        %v3305 = vld [vmem:[#allocation2 + $0x188] sm:$0xff]
        %v3306 = vld [vmem:[#allocation2 + $0x190] sm:$0x3]
        %v3307 = vld [vmem:[#allocation2 + $0x198] sm:$0xff]
        %v3308 = vld [vmem:[#allocation2 + $0x1a0] sm:$0xff]
        %v3309 = vld [vmem:[#allocation2 + $0x1a8] sm:$0x3]
        %v3310 = vld [vmem:[#allocation3] sm:$0xff]
        %v3311 = vld [vmem:[#allocation3 + $0x8] sm:$0xff]
        %v3312 = vld [vmem:[#allocation3 + $0x10] sm:$0xff]
        %v3313 = vld [vmem:[#allocation3 + $0x18] sm:$0xff]
        %v3314 = vld [vmem:[#allocation3 + $0x20] sm:$0xff]
        %v3315 = vld [vmem:[#allocation3 + $0x28] sm:$0xff]
        %v3316 = vld [vmem:[#allocation3 + $0x30] sm:$0xff]
        %v3317 = vld [vmem:[#allocation3 + $0x38] sm:$0xff]
        %v3318 = vld [vmem:[#allocation3 + $0x40] sm:$0xff]
        %v3319 = vld [vmem:[#allocation3 + $0x48] sm:$0xff]
        %v3320 = vld [vmem:[#allocation3 + $0x50] sm:$0xff]
        %v3321 = vld [vmem:[#allocation3 + $0x58] sm:$0xff]
        %v3322 = vld [vmem:[#allocation3 + $0x60] sm:$0xff]
        %v3323 = vld [vmem:[#allocation3 + $0x68] sm:$0xff]
        %v3324 = vld [vmem:[#allocation3 + $0x70] sm:$0xff]
        %v3325 = vld [vmem:[#allocation3 + $0x78] sm:$0xff]
        %v3374 = vrot.slane %v3256, 1
        %v3375 = vrot.slane %v3257, 1
        %v3376 = vsel %vm468, %v3374, %v3375
        %v3377 = vrot.slane %v3258, 1
        %v3378 = vsel %vm468, %v3375, %v3377
        %v3379 = vrot.slane %v3259, 1
        %v3380 = vrot.slane %v3260, 1
        %v3381 = vsel %vm468, %v3379, %v3380
        %v3382 = vrot.slane %v3261, 1
        %v3383 = vsel %vm468, %v3380, %v3382
        %v3384 = vrot.slane %v3262, 1
        %v3385 = vrot.slane %v3263, 1
        %v3386 = vsel %vm468, %v3384, %v3385
        %v3387 = vrot.slane %v3264, 1
        %v3388 = vsel %vm468, %v3385, %v3387
        %v3389 = vrot.slane %v3265, 1
        %v3390 = vrot.slane %v3266, 1
        %v3391 = vsel %vm468, %v3389, %v3390
        %v3392 = vrot.slane %v3267, 1
        %v3393 = vsel %vm468, %v3390, %v3392
        %v3394 = vrot.slane %v3268, 1
        %v3395 = vrot.slane %v3269, 1
        %v3396 = vsel %vm468, %v3394, %v3395
        %v3397 = vrot.slane %v3270, 1
        %v3398 = vsel %vm468, %v3395, %v3397
        %v3399 = vrot.slane %v3271, 1
        %v3400 = vrot.slane %v3272, 1
        %v3401 = vsel %vm468, %v3399, %v3400
        %v3402 = vrot.slane %v3273, 1
        %v3403 = vsel %vm468, %v3400, %v3402
        %v3404 = vrot.slane %v3274, 1
        %v3405 = vrot.slane %v3275, 1
        %v3406 = vsel %vm468, %v3404, %v3405
        %v3407 = vrot.slane %v3276, 1
        %v3408 = vsel %vm468, %v3405, %v3407
        %v3409 = vrot.slane %v3277, 1
        %v3410 = vrot.slane %v3278, 1
        %v3411 = vsel %vm468, %v3409, %v3410
        %v3412 = vrot.slane %v3279, 1
        %v3413 = vsel %vm468, %v3410, %v3412
        %v3414 = vrot.slane %v3280, 1
        %v3415 = vrot.slane %v3281, 1
        %v3416 = vsel %vm468, %v3414, %v3415
        %v3417 = vrot.slane %v3282, 1
        %v3418 = vsel %vm468, %v3415, %v3417
        %v3419 = vrot.slane %v3283, 1
        %v3420 = vrot.slane %v3284, 1
        %v3421 = vsel %vm468, %v3419, %v3420
        %v3422 = vrot.slane %v3285, 1
        %v3423 = vsel %vm468, %v3420, %v3422
        %v3424 = vrot.slane %v3286, 1
        %v3425 = vrot.slane %v3287, 1
        %v3426 = vsel %vm468, %v3424, %v3425
        %v3427 = vrot.slane %v3288, 1
        %v3428 = vsel %vm468, %v3425, %v3427
        %v3429 = vrot.slane %v3289, 1
        %v3430 = vrot.slane %v3290, 1
        %v3431 = vsel %vm468, %v3429, %v3430
        %v3432 = vrot.slane %v3291, 1
        %v3433 = vsel %vm468, %v3430, %v3432
        %v3434 = vrot.slane %v3292, 1
        %v3435 = vrot.slane %v3293, 1
        %v3436 = vsel %vm468, %v3434, %v3435
        %v3437 = vrot.slane %v3294, 1
        %v3438 = vsel %vm468, %v3435, %v3437
        %v3439 = vrot.slane %v3295, 1
        %v3440 = vrot.slane %v3296, 1
        %v3441 = vsel %vm468, %v3439, %v3440
        %v3442 = vrot.slane %v3297, 1
        %v3443 = vsel %vm468, %v3440, %v3442
        %v3444 = vrot.slane %v3298, 1
        %v3445 = vrot.slane %v3299, 1
        %v3446 = vsel %vm468, %v3444, %v3445
        %v3447 = vrot.slane %v3300, 1
        %v3448 = vsel %vm468, %v3445, %v3447
        %v3449 = vrot.slane %v3301, 1
        %v3450 = vrot.slane %v3302, 1
        %v3451 = vsel %vm468, %v3449, %v3450
        %v3452 = vrot.slane %v3303, 1
        %v3453 = vsel %vm468, %v3450, %v3452
        %s3486 = scalar_lea.vmem [#allocation3], 128
        %v3487 = vld [vmem:[%s3486] sm:$0xff]
        %v3488 = vld [vmem:[%s3486 + $0x8] sm:$0xff]
        %v3489 = vld [vmem:[%s3486 + $0x10] sm:$0xff]
        %v3490 = vld [vmem:[%s3486 + $0x18] sm:$0xff]
        %v3491 = vld [vmem:[%s3486 + $0x20] sm:$0xff]
        %v3492 = vld [vmem:[%s3486 + $0x28] sm:$0xff]
        %v3493 = vld [vmem:[%s3486 + $0x30] sm:$0xff]
        %v3494 = vld [vmem:[%s3486 + $0x38] sm:$0xff]
        %v3495 = vld [vmem:[%s3486 + $0x40] sm:$0xff]
        %v3496 = vld [vmem:[%s3486 + $0x48] sm:$0xff]
        %v3497 = vld [vmem:[%s3486 + $0x50] sm:$0xff]
        %v3498 = vld [vmem:[%s3486 + $0x58] sm:$0xff]
        %v3499 = vld [vmem:[%s3486 + $0x60] sm:$0xff]
        %v3500 = vld [vmem:[%s3486 + $0x68] sm:$0xff]
        %v3501 = vld [vmem:[%s3486 + $0x70] sm:$0xff]
        %v3502 = vld [vmem:[%s3486 + $0x78] sm:$0xff]
        %3503 = vmatprep.subr.mxu0 0.0
        %3504 = vmatpush1.msra.mxu0 %v3487
        %3505 = vmatprep.subr.mxu0 0.0
        %3506 = vmatpush1.msra.mxu0 %v3488
        %3507 = vmatprep.subr.mxu0 0.0
        %3508 = vmatpush1.msra.mxu0 %v3489
        %3509 = vmatprep.subr.mxu0 0.0
        %3510 = vmatpush1.msra.mxu0 %v3490
        %3511 = vmatprep.subr.mxu0 0.0
        %3512 = vmatpush1.msra.mxu0 %v3491
        %3513 = vmatprep.subr.mxu0 0.0
        %3514 = vmatpush1.msra.mxu0 %v3492
        %3515 = vmatprep.subr.mxu0 0.0
        %3516 = vmatpush1.msra.mxu0 %v3493
        %3517 = vmatprep.subr.mxu0 0.0
        %3518 = vmatpush1.msra.mxu0 %v3494
        %3519 = vmatprep.subr.mxu0 0.0
        %3520 = vmatpush1.msra.mxu0 %v3495
        %3521 = vmatprep.subr.mxu0 0.0
        %3522 = vmatpush1.msra.mxu0 %v3496
        %3523 = vmatprep.subr.mxu0 0.0
        %3524 = vmatpush1.msra.mxu0 %v3497
        %3525 = vmatprep.subr.mxu0 0.0
        %3526 = vmatpush1.msra.mxu0 %v3498
        %3527 = vmatprep.subr.mxu0 0.0
        %3528 = vmatpush1.msra.mxu0 %v3499
        %3529 = vmatprep.subr.mxu0 0.0
        %3530 = vmatpush1.msra.mxu0 %v3500
        %3531 = vmatprep.subr.mxu0 0.0
        %3532 = vmatpush1.msra.mxu0 %v3501
        %3533 = vmatprep.subr.mxu0 0.0
        %3534 = vmatpush1.msra.mxu0 %v3502
        %3535 = vmatprep.subr.mxu0 0.0
        %3536 = vmatpush1.msra.mxu0 0.0
        %3537 = vmatprep.subr.mxu0 0.0
        %3538 = vmatpush1.msra.mxu0 0.0
        %3539 = vmatprep.subr.mxu0 0.0
        %3540 = vmatpush1.msra.mxu0 0.0
        %3541 = vmatprep.subr.mxu0 0.0
        %3542 = vmatpush1.msra.mxu0 0.0
        %3543 = vmatprep.subr.mxu0 0.0
        %3544 = vmatpush1.msra.mxu0 0.0
        %3545 = vmatprep.subr.mxu0 0.0
        %3546 = vmatpush1.msra.mxu0 0.0
        %3547 = vmatprep.subr.mxu0 0.0
        %3548 = vmatpush1.msra.mxu0 0.0
        %3549 = vmatprep.subr.mxu0 0.0
        %3550 = vmatpush1.msra.mxu0 0.0
        %3551 = vmatprep.subr.mxu0 0.0
        %3552 = vmatpush1.msra.mxu0 0.0
        %3553 = vmatprep.subr.mxu0 0.0
        %3554 = vmatpush1.msra.mxu0 0.0
        %3555 = vmatprep.subr.mxu0 0.0
        %3556 = vmatpush1.msra.mxu0 0.0
        %3557 = vmatprep.subr.mxu0 0.0
        %3558 = vmatpush1.msra.mxu0 0.0
        %3559 = vmatprep.subr.mxu0 0.0
        %3560 = vmatpush1.msra.mxu0 0.0
        %3561 = vmatprep.subr.mxu0 0.0
        %3562 = vmatpush1.msra.mxu0 0.0
        %3563 = vmatprep.subr.mxu0 0.0
        %3564 = vmatpush1.msra.mxu0 0.0
        %3565 = vmatprep.subr.mxu0 0.0
        %3566 = vmatpush1.msra.mxu0 0.0
        %3567 = vmatprep.mubr.f32.mxu0 0.0
        %3568 = vmatmul.mubr.f32.gmra.mrb[0].mxu0 %v3376
        %v3569 = vpop.f32.mrb[0].mxu0
        %v3570 = vadd.f32 0.0, %v3569
        %v3571 = vpop.f32.mrb[0].mxu0
        %3572 = vmatprep.mubr.f32.mxu0 0.0
        %3573 = vmatmul.mubr.f32.gmra.mrb[0].mxu0 %v3378
        %v3574 = vpop.f32.mrb[0].mxu0
        %v3575 = vadd.f32 0.0, %v3574
        %v3576 = vpop.f32.mrb[0].mxu0
        %3577 = vmatprep.mubr.f32.mxu0 0.0
        %3578 = vmatmul.mubr.f32.gmra.mrb[0].mxu0 %v3381
        %v3579 = vpop.f32.mrb[0].mxu0
        %v3580 = vadd.f32 0.0, %v3579
        %v3581 = vpop.f32.mrb[0].mxu0
        %3582 = vmatprep.mubr.f32.mxu0 0.0
        %3583 = vmatmul.mubr.f32.gmra.mrb[0].mxu0 %v3383
        %v3584 = vpop.f32.mrb[0].mxu0
        %v3585 = vadd.f32 0.0, %v3584
        %v3586 = vpop.f32.mrb[0].mxu0
        %3587 = vmatprep.mubr.f32.mxu0 0.0
        %3588 = vmatmul.mubr.f32.gmra.mrb[0].mxu0 %v3386
        %v3589 = vpop.f32.mrb[0].mxu0
        %v3590 = vadd.f32 0.0, %v3589
        %v3591 = vpop.f32.mrb[0].mxu0
        %3592 = vmatprep.mubr.f32.mxu0 0.0
        %3593 = vmatmul.mubr.f32.gmra.mrb[0].mxu0 %v3388
        %v3594 = vpop.f32.mrb[0].mxu0
        %v3595 = vadd.f32 0.0, %v3594
        %v3596 = vpop.f32.mrb[0].mxu0
        %3597 = vmatprep.mubr.f32.mxu0 0.0
        %3598 = vmatmul.mubr.f32.gmra.mrb[0].mxu0 %v3391
        %v3599 = vpop.f32.mrb[0].mxu0
        %v3600 = vadd.f32 0.0, %v3599
        %v3601 = vpop.f32.mrb[0].mxu0
        %3602 = vmatprep.mubr.f32.mxu0 0.0
        %3603 = vmatmul.mubr.f32.gmra.mrb[0].mxu0 %v3393
        %v3604 = vpop.f32.mrb[0].mxu0
        %v3605 = vadd.f32 0.0, %v3604
        %v3606 = vpop.f32.mrb[0].mxu0
        %3607 = vmatprep.mubr.f32.mxu0 0.0
        %3608 = vmatmul.mubr.f32.gmra.mrb[0].mxu0 %v3396
        %v3609 = vpop.f32.mrb[0].mxu0
        %v3610 = vadd.f32 0.0, %v3609
        %v3611 = vpop.f32.mrb[0].mxu0
        %3612 = vmatprep.mubr.f32.mxu0 0.0
        %3613 = vmatmul.mubr.f32.gmra.mrb[0].mxu0 %v3398
        %v3614 = vpop.f32.mrb[0].mxu0
        %v3615 = vadd.f32 0.0, %v3614
        %v3616 = vpop.f32.mrb[0].mxu0
        %3617 = vmatprep.mubr.f32.mxu0 0.0
        %3618 = vmatmul.mubr.f32.gmra.mrb[0].mxu0 %v3401
        %v3619 = vpop.f32.mrb[0].mxu0
        %v3620 = vadd.f32 0.0, %v3619
        %v3621 = vpop.f32.mrb[0].mxu0
        %3622 = vmatprep.mubr.f32.mxu0 0.0
        %3623 = vmatmul.mubr.f32.gmra.mrb[0].mxu0 %v3403
        %v3624 = vpop.f32.mrb[0].mxu0
        %v3625 = vadd.f32 0.0, %v3624
        %v3626 = vpop.f32.mrb[0].mxu0
        %3627 = vmatprep.mubr.f32.mxu0 0.0
        %3628 = vmatmul.mubr.f32.gmra.mrb[0].mxu0 %v3406
        %v3629 = vpop.f32.mrb[0].mxu0
        %v3630 = vadd.f32 0.0, %v3629
        %v3631 = vpop.f32.mrb[0].mxu0
        %3632 = vmatprep.mubr.f32.mxu0 0.0
        %3633 = vmatmul.mubr.f32.gmra.mrb[0].mxu0 %v3408
        %v3634 = vpop.f32.mrb[0].mxu0
        %v3635 = vadd.f32 0.0, %v3634
        %v3636 = vpop.f32.mrb[0].mxu0
        %3637 = vmatprep.mubr.f32.mxu0 0.0
        %3638 = vmatmul.mubr.f32.gmra.mrb[0].mxu0 %v3411
        %v3639 = vpop.f32.mrb[0].mxu0
        %v3640 = vadd.f32 0.0, %v3639
        %v3641 = vpop.f32.mrb[0].mxu0
        %3642 = vmatprep.mubr.f32.mxu0 0.0
        %3643 = vmatmul.mubr.f32.gmra.mrb[0].mxu0 %v3413
        %v3644 = vpop.f32.mrb[0].mxu0
        %v3645 = vadd.f32 0.0, %v3644
        %v3646 = vpop.f32.mrb[0].mxu0
        %3647 = vmatprep.mubr.f32.mxu0 0.0
        %3648 = vmatmul.mubr.f32.gmra.mrb[0].mxu0 %v3416
        %v3649 = vpop.f32.mrb[0].mxu0
        %v3650 = vadd.f32 0.0, %v3649
        %v3651 = vpop.f32.mrb[0].mxu0
        %3652 = vmatprep.mubr.f32.mxu0 0.0
        %3653 = vmatmul.mubr.f32.gmra.mrb[0].mxu0 %v3418
        %v3654 = vpop.f32.mrb[0].mxu0
        %v3655 = vadd.f32 0.0, %v3654
        %v3656 = vpop.f32.mrb[0].mxu0
        %3657 = vmatprep.mubr.f32.mxu0 0.0
        %3658 = vmatmul.mubr.f32.gmra.mrb[0].mxu0 %v3421
        %v3659 = vpop.f32.mrb[0].mxu0
        %v3660 = vadd.f32 0.0, %v3659
        %v3661 = vpop.f32.mrb[0].mxu0
        %3662 = vmatprep.mubr.f32.mxu0 0.0
        %3663 = vmatmul.mubr.f32.gmra.mrb[0].mxu0 %v3423
        %v3664 = vpop.f32.mrb[0].mxu0
        %v3665 = vadd.f32 0.0, %v3664
        %v3666 = vpop.f32.mrb[0].mxu0
        %3667 = vmatprep.mubr.f32.mxu0 0.0
        %3668 = vmatmul.mubr.f32.gmra.mrb[0].mxu0 %v3426
        %v3669 = vpop.f32.mrb[0].mxu0
        %v3670 = vadd.f32 0.0, %v3669
        %v3671 = vpop.f32.mrb[0].mxu0
        %3672 = vmatprep.mubr.f32.mxu0 0.0
        %3673 = vmatmul.mubr.f32.gmra.mrb[0].mxu0 %v3428
        %v3674 = vpop.f32.mrb[0].mxu0
        %v3675 = vadd.f32 0.0, %v3674
        %v3676 = vpop.f32.mrb[0].mxu0
        %3677 = vmatprep.mubr.f32.mxu0 0.0
        %3678 = vmatmul.mubr.f32.gmra.mrb[0].mxu0 %v3431
        %v3679 = vpop.f32.mrb[0].mxu0
        %v3680 = vadd.f32 0.0, %v3679
        %v3681 = vpop.f32.mrb[0].mxu0
        %3682 = vmatprep.mubr.f32.mxu0 0.0
        %3683 = vmatmul.mubr.f32.gmra.mrb[0].mxu0 %v3433
        %v3684 = vpop.f32.mrb[0].mxu0
        %v3685 = vadd.f32 0.0, %v3684
        %v3686 = vpop.f32.mrb[0].mxu0
        %3687 = vmatprep.mubr.f32.mxu0 0.0
        %3688 = vmatmul.mubr.f32.gmra.mrb[0].mxu0 %v3436
        %v3689 = vpop.f32.mrb[0].mxu0
        %v3690 = vadd.f32 0.0, %v3689
        %v3691 = vpop.f32.mrb[0].mxu0
        %3692 = vmatprep.mubr.f32.mxu0 0.0
        %3693 = vmatmul.mubr.f32.gmra.mrb[0].mxu0 %v3438
        %v3694 = vpop.f32.mrb[0].mxu0
        %v3695 = vadd.f32 0.0, %v3694
        %v3696 = vpop.f32.mrb[0].mxu0
        %3697 = vmatprep.mubr.f32.mxu0 0.0
        %3698 = vmatmul.mubr.f32.gmra.mrb[0].mxu0 %v3441
        %v3699 = vpop.f32.mrb[0].mxu0
        %v3700 = vadd.f32 0.0, %v3699
        %v3701 = vpop.f32.mrb[0].mxu0
        %3702 = vmatprep.mubr.f32.mxu0 0.0
        %3703 = vmatmul.mubr.f32.gmra.mrb[0].mxu0 %v3443
        %v3704 = vpop.f32.mrb[0].mxu0
        %v3705 = vadd.f32 0.0, %v3704
        %v3706 = vpop.f32.mrb[0].mxu0
        %3707 = vmatprep.mubr.f32.mxu0 0.0
        %3708 = vmatmul.mubr.f32.gmra.mrb[0].mxu0 %v3446
        %v3709 = vpop.f32.mrb[0].mxu0
        %v3710 = vadd.f32 0.0, %v3709
        %v3711 = vpop.f32.mrb[0].mxu0
        %3712 = vmatprep.mubr.f32.mxu0 0.0
        %3713 = vmatmul.mubr.f32.gmra.mrb[0].mxu0 %v3448
        %v3714 = vpop.f32.mrb[0].mxu0
        %v3715 = vadd.f32 0.0, %v3714
        %v3716 = vpop.f32.mrb[0].mxu0
        %3717 = vmatprep.mubr.f32.mxu0 0.0
        %3718 = vmatmul.mubr.f32.gmra.mrb[0].mxu0 %v3451
        %v3719 = vpop.f32.mrb[0].mxu0
        %v3720 = vadd.f32 0.0, %v3719
        %v3721 = vpop.f32.mrb[0].mxu0
        %3722 = vmatprep.mubr.f32.mxu0 0.0
        %3723 = vmatmul.mubr.f32.gmra.mrb[0].mxu0 %v3453
        %v3724 = vpop.f32.mrb[0].mxu0
        %v3725 = vadd.f32 0.0, %v3724
        %v3726 = vpop.f32.mrb[0].mxu0
        %3727 = vdwg.mxu0
        %3728 = vmatprep.subr.mxu0 0.0
        %3729 = vmatpush1.msra.mxu0 %v3310
        %3730 = vmatprep.subr.mxu0 0.0
        %3731 = vmatpush1.msra.mxu0 %v3311
        %3732 = vmatprep.subr.mxu0 0.0
        %3733 = vmatpush1.msra.mxu0 %v3312
        %3734 = vmatprep.subr.mxu0 0.0
        %3735 = vmatpush1.msra.mxu0 %v3313
        %3736 = vmatprep.subr.mxu0 0.0
        %3737 = vmatpush1.msra.mxu0 %v3314
        %3738 = vmatprep.subr.mxu0 0.0
        %3739 = vmatpush1.msra.mxu0 %v3315
        %3740 = vmatprep.subr.mxu0 0.0
        %3741 = vmatpush1.msra.mxu0 %v3316
        %3742 = vmatprep.subr.mxu0 0.0
        %3743 = vmatpush1.msra.mxu0 %v3317
        %3744 = vmatprep.subr.mxu0 0.0
        %3745 = vmatpush1.msra.mxu0 %v3318
        %3746 = vmatprep.subr.mxu0 0.0
        %3747 = vmatpush1.msra.mxu0 %v3319
        %3748 = vmatprep.subr.mxu0 0.0
        %3749 = vmatpush1.msra.mxu0 %v3320
        %3750 = vmatprep.subr.mxu0 0.0
        %3751 = vmatpush1.msra.mxu0 %v3321
        %3752 = vmatprep.subr.mxu0 0.0
        %3753 = vmatpush1.msra.mxu0 %v3322
        %3754 = vmatprep.subr.mxu0 0.0
        %3755 = vmatpush1.msra.mxu0 %v3323
        %3756 = vmatprep.subr.mxu0 0.0
        %3757 = vmatpush1.msra.mxu0 %v3324
        %3758 = vmatprep.subr.mxu0 0.0
        %3759 = vmatpush1.msra.mxu0 %v3325
        %3760 = vmatprep.subr.mxu0 0.0
        %3761 = vmatpush1.msra.mxu0 0.0
        %3762 = vmatprep.subr.mxu0 0.0
        %3763 = vmatpush1.msra.mxu0 0.0
        %3764 = vmatprep.subr.mxu0 0.0
        %3765 = vmatpush1.msra.mxu0 0.0
        %3766 = vmatprep.subr.mxu0 0.0
        %3767 = vmatpush1.msra.mxu0 0.0
        %3768 = vmatprep.subr.mxu0 0.0
        %3769 = vmatpush1.msra.mxu0 0.0
        %3770 = vmatprep.subr.mxu0 0.0
        %3771 = vmatpush1.msra.mxu0 0.0
        %3772 = vmatprep.subr.mxu0 0.0
        %3773 = vmatpush1.msra.mxu0 0.0
        %3774 = vmatprep.subr.mxu0 0.0
        %3775 = vmatpush1.msra.mxu0 0.0
        %3776 = vmatprep.subr.mxu0 0.0
        %3777 = vmatpush1.msra.mxu0 0.0
        %3778 = vmatprep.subr.mxu0 0.0
        %3779 = vmatpush1.msra.mxu0 0.0
        %3780 = vmatprep.subr.mxu0 0.0
        %3781 = vmatpush1.msra.mxu0 0.0
        %3782 = vmatprep.subr.mxu0 0.0
        %3783 = vmatpush1.msra.mxu0 0.0
        %3784 = vmatprep.subr.mxu0 0.0
        %3785 = vmatpush1.msra.mxu0 0.0
        %3786 = vmatprep.subr.mxu0 0.0
        %3787 = vmatpush1.msra.mxu0 0.0
        %3788 = vmatprep.subr.mxu0 0.0
        %3789 = vmatpush1.msra.mxu0 0.0
        %3790 = vmatprep.subr.mxu0 0.0
        %3791 = vmatpush1.msra.mxu0 0.0
        %3792 = vmatprep.mubr.f32.mxu0 0.0
        %3793 = vmatmul.mubr.f32.gmra.mrb[0].mxu0 %v3256
        %v3794 = vpop.f32.mrb[0].mxu0
        %v3795 = vadd.f32 %v3570, %v3794
        %v3796 = vpop.f32.mrb[0].mxu0
        %3797 = vmatprep.mubr.f32.mxu0 0.0
        %3798 = vmatmul.mubr.f32.gmra.mrb[0].mxu0 %v3257
        %v3799 = vpop.f32.mrb[0].mxu0
        %v3800 = vadd.f32 %v3575, %v3799
        %v3801 = vpop.f32.mrb[0].mxu0
        %3802 = vmatprep.mubr.f32.mxu0 0.0
        %3803 = vmatmul.mubr.f32.gmra.mrb[0].mxu0 %v3259
        %v3804 = vpop.f32.mrb[0].mxu0
        %v3805 = vadd.f32 %v3580, %v3804
        %v3806 = vpop.f32.mrb[0].mxu0
        %3807 = vmatprep.mubr.f32.mxu0 0.0
        %3808 = vmatmul.mubr.f32.gmra.mrb[0].mxu0 %v3260
        %v3809 = vpop.f32.mrb[0].mxu0
        %v3810 = vadd.f32 %v3585, %v3809
        %v3811 = vpop.f32.mrb[0].mxu0
        %3812 = vmatprep.mubr.f32.mxu0 0.0
        %3813 = vmatmul.mubr.f32.gmra.mrb[0].mxu0 %v3262
        %v3814 = vpop.f32.mrb[0].mxu0
        %v3815 = vadd.f32 %v3590, %v3814
        %v3816 = vpop.f32.mrb[0].mxu0
        %3817 = vmatprep.mubr.f32.mxu0 0.0
        %3818 = vmatmul.mubr.f32.gmra.mrb[0].mxu0 %v3263
        %v3819 = vpop.f32.mrb[0].mxu0
        %v3820 = vadd.f32 %v3595, %v3819
        %v3821 = vpop.f32.mrb[0].mxu0
        %3822 = vmatprep.mubr.f32.mxu0 0.0
        %3823 = vmatmul.mubr.f32.gmra.mrb[0].mxu0 %v3265
        %v3824 = vpop.f32.mrb[0].mxu0
        %v3825 = vadd.f32 %v3600, %v3824
        %v3826 = vpop.f32.mrb[0].mxu0
        %3827 = vmatprep.mubr.f32.mxu0 0.0
        %3828 = vmatmul.mubr.f32.gmra.mrb[0].mxu0 %v3266
        %v3829 = vpop.f32.mrb[0].mxu0
        %v3830 = vadd.f32 %v3605, %v3829
        %v3831 = vpop.f32.mrb[0].mxu0
        %3832 = vmatprep.mubr.f32.mxu0 0.0
        %3833 = vmatmul.mubr.f32.gmra.mrb[0].mxu0 %v3268
        %v3834 = vpop.f32.mrb[0].mxu0
        %v3835 = vadd.f32 %v3610, %v3834
        %v3836 = vpop.f32.mrb[0].mxu0
        %3837 = vmatprep.mubr.f32.mxu0 0.0
        %3838 = vmatmul.mubr.f32.gmra.mrb[0].mxu0 %v3269
        %v3839 = vpop.f32.mrb[0].mxu0
        %v3840 = vadd.f32 %v3615, %v3839
        %v3841 = vpop.f32.mrb[0].mxu0
        %3842 = vmatprep.mubr.f32.mxu0 0.0
        %3843 = vmatmul.mubr.f32.gmra.mrb[0].mxu0 %v3271
        %v3844 = vpop.f32.mrb[0].mxu0
        %v3845 = vadd.f32 %v3620, %v3844
        %v3846 = vpop.f32.mrb[0].mxu0
        %3847 = vmatprep.mubr.f32.mxu0 0.0
        %3848 = vmatmul.mubr.f32.gmra.mrb[0].mxu0 %v3272
        %v3849 = vpop.f32.mrb[0].mxu0
        %v3850 = vadd.f32 %v3625, %v3849
        %v3851 = vpop.f32.mrb[0].mxu0
        %3852 = vmatprep.mubr.f32.mxu0 0.0
        %3853 = vmatmul.mubr.f32.gmra.mrb[0].mxu0 %v3274
        %v3854 = vpop.f32.mrb[0].mxu0
        %v3855 = vadd.f32 %v3630, %v3854
        %v3856 = vpop.f32.mrb[0].mxu0
        %3857 = vmatprep.mubr.f32.mxu0 0.0
        %3858 = vmatmul.mubr.f32.gmra.mrb[0].mxu0 %v3275
        %v3859 = vpop.f32.mrb[0].mxu0
        %v3860 = vadd.f32 %v3635, %v3859
        %v3861 = vpop.f32.mrb[0].mxu0
        %3862 = vmatprep.mubr.f32.mxu0 0.0
        %3863 = vmatmul.mubr.f32.gmra.mrb[0].mxu0 %v3277
        %v3864 = vpop.f32.mrb[0].mxu0
        %v3865 = vadd.f32 %v3640, %v3864
        %v3866 = vpop.f32.mrb[0].mxu0
        %3867 = vmatprep.mubr.f32.mxu0 0.0
        %3868 = vmatmul.mubr.f32.gmra.mrb[0].mxu0 %v3278
        %v3869 = vpop.f32.mrb[0].mxu0
        %v3870 = vadd.f32 %v3645, %v3869
        %v3871 = vpop.f32.mrb[0].mxu0
        %3872 = vmatprep.mubr.f32.mxu0 0.0
        %3873 = vmatmul.mubr.f32.gmra.mrb[0].mxu0 %v3280
        %v3874 = vpop.f32.mrb[0].mxu0
        %v3875 = vadd.f32 %v3650, %v3874
        %v3876 = vpop.f32.mrb[0].mxu0
        %3877 = vmatprep.mubr.f32.mxu0 0.0
        %3878 = vmatmul.mubr.f32.gmra.mrb[0].mxu0 %v3281
        %v3879 = vpop.f32.mrb[0].mxu0
        %v3880 = vadd.f32 %v3655, %v3879
        %v3881 = vpop.f32.mrb[0].mxu0
        %3882 = vmatprep.mubr.f32.mxu0 0.0
        %3883 = vmatmul.mubr.f32.gmra.mrb[0].mxu0 %v3283
        %v3884 = vpop.f32.mrb[0].mxu0
        %v3885 = vadd.f32 %v3660, %v3884
        %v3886 = vpop.f32.mrb[0].mxu0
        %3887 = vmatprep.mubr.f32.mxu0 0.0
        %3888 = vmatmul.mubr.f32.gmra.mrb[0].mxu0 %v3284
        %v3889 = vpop.f32.mrb[0].mxu0
        %v3890 = vadd.f32 %v3665, %v3889
        %v3891 = vpop.f32.mrb[0].mxu0
        %3892 = vmatprep.mubr.f32.mxu0 0.0
        %3893 = vmatmul.mubr.f32.gmra.mrb[0].mxu0 %v3286
        %v3894 = vpop.f32.mrb[0].mxu0
        %v3895 = vadd.f32 %v3670, %v3894
        %v3896 = vpop.f32.mrb[0].mxu0
        %3897 = vmatprep.mubr.f32.mxu0 0.0
        %3898 = vmatmul.mubr.f32.gmra.mrb[0].mxu0 %v3287
        %v3899 = vpop.f32.mrb[0].mxu0
        %v3900 = vadd.f32 %v3675, %v3899
        %v3901 = vpop.f32.mrb[0].mxu0
        %3902 = vmatprep.mubr.f32.mxu0 0.0
        %3903 = vmatmul.mubr.f32.gmra.mrb[0].mxu0 %v3289
        %v3904 = vpop.f32.mrb[0].mxu0
        %v3905 = vadd.f32 %v3680, %v3904
        %v3906 = vpop.f32.mrb[0].mxu0
        %3907 = vmatprep.mubr.f32.mxu0 0.0
        %3908 = vmatmul.mubr.f32.gmra.mrb[0].mxu0 %v3290
        %v3909 = vpop.f32.mrb[0].mxu0
        %v3910 = vadd.f32 %v3685, %v3909
        %v3911 = vpop.f32.mrb[0].mxu0
        %3912 = vmatprep.mubr.f32.mxu0 0.0
        %3913 = vmatmul.mubr.f32.gmra.mrb[0].mxu0 %v3292
        %v3914 = vpop.f32.mrb[0].mxu0
        %v3915 = vadd.f32 %v3690, %v3914
        %v3916 = vpop.f32.mrb[0].mxu0
        %3917 = vmatprep.mubr.f32.mxu0 0.0
        %3918 = vmatmul.mubr.f32.gmra.mrb[0].mxu0 %v3293
        %v3919 = vpop.f32.mrb[0].mxu0
        %v3920 = vadd.f32 %v3695, %v3919
        %v3921 = vpop.f32.mrb[0].mxu0
        %3922 = vmatprep.mubr.f32.mxu0 0.0
        %3923 = vmatmul.mubr.f32.gmra.mrb[0].mxu0 %v3295
        %v3924 = vpop.f32.mrb[0].mxu0
        %v3925 = vadd.f32 %v3700, %v3924
        %v3926 = vpop.f32.mrb[0].mxu0
        %3927 = vmatprep.mubr.f32.mxu0 0.0
        %3928 = vmatmul.mubr.f32.gmra.mrb[0].mxu0 %v3296
        %v3929 = vpop.f32.mrb[0].mxu0
        %v3930 = vadd.f32 %v3705, %v3929
        %v3931 = vpop.f32.mrb[0].mxu0
        %3932 = vmatprep.mubr.f32.mxu0 0.0
        %3933 = vmatmul.mubr.f32.gmra.mrb[0].mxu0 %v3298
        %v3934 = vpop.f32.mrb[0].mxu0
        %v3935 = vadd.f32 %v3710, %v3934
        %v3936 = vpop.f32.mrb[0].mxu0
        %3937 = vmatprep.mubr.f32.mxu0 0.0
        %3938 = vmatmul.mubr.f32.gmra.mrb[0].mxu0 %v3299
        %v3939 = vpop.f32.mrb[0].mxu0
        %v3940 = vadd.f32 %v3715, %v3939
        %v3941 = vpop.f32.mrb[0].mxu0
        %3942 = vmatprep.mubr.f32.mxu0 0.0
        %3943 = vmatmul.mubr.f32.gmra.mrb[0].mxu0 %v3301
        %v3944 = vpop.f32.mrb[0].mxu0
        %v3945 = vadd.f32 %v3720, %v3944
        %v3946 = vpop.f32.mrb[0].mxu0
        %3947 = vmatprep.mubr.f32.mxu0 0.0
        %3948 = vmatmul.mubr.f32.gmra.mrb[0].mxu0 %v3302
        %v3949 = vpop.f32.mrb[0].mxu0
        %v3950 = vadd.f32 %v3725, %v3949
        %v3951 = vpop.f32.mrb[0].mxu0
        %3952 = vdwg.mxu0
        %v3953 = vrot.slane %v3256, 2
        %v3954 = vrot.slane %v3257, 2
        %v3955 = vsel %vm1048, %v3953, %v3954
        %v3956 = vrot.slane %v3258, 2
        %v3957 = vsel %vm1048, %v3954, %v3956
        %v3958 = vrot.slane %v3259, 2
        %v3959 = vrot.slane %v3260, 2
        %v3960 = vsel %vm1048, %v3958, %v3959
        %v3961 = vrot.slane %v3261, 2
        %v3962 = vsel %vm1048, %v3959, %v3961
        %v3963 = vrot.slane %v3262, 2
        %v3964 = vrot.slane %v3263, 2
        %v3965 = vsel %vm1048, %v3963, %v3964
        %v3966 = vrot.slane %v3264, 2
        %v3967 = vsel %vm1048, %v3964, %v3966
        %v3968 = vrot.slane %v3265, 2
        %v3969 = vrot.slane %v3266, 2
        %v3970 = vsel %vm1048, %v3968, %v3969
        %v3971 = vrot.slane %v3267, 2
        %v3972 = vsel %vm1048, %v3969, %v3971
        %v3973 = vrot.slane %v3268, 2
        %v3974 = vrot.slane %v3269, 2
        %v3975 = vsel %vm1048, %v3973, %v3974
        %v3976 = vrot.slane %v3270, 2
        %v3977 = vsel %vm1048, %v3974, %v3976
        %v3978 = vrot.slane %v3271, 2
        %v3979 = vrot.slane %v3272, 2
        %v3980 = vsel %vm1048, %v3978, %v3979
        %v3981 = vrot.slane %v3273, 2
        %v3982 = vsel %vm1048, %v3979, %v3981
        %v3983 = vrot.slane %v3274, 2
        %v3984 = vrot.slane %v3275, 2
        %v3985 = vsel %vm1048, %v3983, %v3984
        %v3986 = vrot.slane %v3276, 2
        %v3987 = vsel %vm1048, %v3984, %v3986
        %v3988 = vrot.slane %v3277, 2
        %v3989 = vrot.slane %v3278, 2
        %v3990 = vsel %vm1048, %v3988, %v3989
        %v3991 = vrot.slane %v3279, 2
        %v3992 = vsel %vm1048, %v3989, %v3991
        %v3993 = vrot.slane %v3280, 2
        %v3994 = vrot.slane %v3281, 2
        %v3995 = vsel %vm1048, %v3993, %v3994
        %v3996 = vrot.slane %v3282, 2
        %v3997 = vsel %vm1048, %v3994, %v3996
        %v3998 = vrot.slane %v3283, 2
        %v3999 = vrot.slane %v3284, 2
        %v4000 = vsel %vm1048, %v3998, %v3999
        %v4001 = vrot.slane %v3285, 2
        %v4002 = vsel %vm1048, %v3999, %v4001
        %v4003 = vrot.slane %v3286, 2
        %v4004 = vrot.slane %v3287, 2
        %v4005 = vsel %vm1048, %v4003, %v4004
        %v4006 = vrot.slane %v3288, 2
        %v4007 = vsel %vm1048, %v4004, %v4006
        %v4008 = vrot.slane %v3289, 2
        %v4009 = vrot.slane %v3290, 2
        %v4010 = vsel %vm1048, %v4008, %v4009
        %v4011 = vrot.slane %v3291, 2
        %v4012 = vsel %vm1048, %v4009, %v4011
        %v4013 = vrot.slane %v3292, 2
        %v4014 = vrot.slane %v3293, 2
        %v4015 = vsel %vm1048, %v4013, %v4014
        %v4016 = vrot.slane %v3294, 2
        %v4017 = vsel %vm1048, %v4014, %v4016
        %v4018 = vrot.slane %v3295, 2
        %v4019 = vrot.slane %v3296, 2
        %v4020 = vsel %vm1048, %v4018, %v4019
        %v4021 = vrot.slane %v3297, 2
        %v4022 = vsel %vm1048, %v4019, %v4021
        %v4023 = vrot.slane %v3298, 2
        %v4024 = vrot.slane %v3299, 2
        %v4025 = vsel %vm1048, %v4023, %v4024
        %v4026 = vrot.slane %v3300, 2
        %v4027 = vsel %vm1048, %v4024, %v4026
        %v4028 = vrot.slane %v3301, 2
        %v4029 = vrot.slane %v3302, 2
        %v4030 = vsel %vm1048, %v4028, %v4029
        %v4031 = vrot.slane %v3303, 2
        %v4032 = vsel %vm1048, %v4029, %v4031
        %s4065 = scalar_lea.vmem [#allocation3], 256
        %v4066 = vld [vmem:[%s4065] sm:$0xff]
        %v4067 = vld [vmem:[%s4065 + $0x8] sm:$0xff]
        %v4068 = vld [vmem:[%s4065 + $0x10] sm:$0xff]
        %v4069 = vld [vmem:[%s4065 + $0x18] sm:$0xff]
        %v4070 = vld [vmem:[%s4065 + $0x20] sm:$0xff]
        %v4071 = vld [vmem:[%s4065 + $0x28] sm:$0xff]
        %v4072 = vld [vmem:[%s4065 + $0x30] sm:$0xff]
        %v4073 = vld [vmem:[%s4065 + $0x38] sm:$0xff]
        %v4074 = vld [vmem:[%s4065 + $0x40] sm:$0xff]
        %v4075 = vld [vmem:[%s4065 + $0x48] sm:$0xff]
        %v4076 = vld [vmem:[%s4065 + $0x50] sm:$0xff]
        %v4077 = vld [vmem:[%s4065 + $0x58] sm:$0xff]
        %v4078 = vld [vmem:[%s4065 + $0x60] sm:$0xff]
        %v4079 = vld [vmem:[%s4065 + $0x68] sm:$0xff]
        %v4080 = vld [vmem:[%s4065 + $0x70] sm:$0xff]
        %v4081 = vld [vmem:[%s4065 + $0x78] sm:$0xff]
        %4082 = vmatprep.subr.mxu0 0.0
        %4083 = vmatpush1.msra.mxu0 %v4066
        %4084 = vmatprep.subr.mxu0 0.0
        %4085 = vmatpush1.msra.mxu0 %v4067
        %4086 = vmatprep.subr.mxu0 0.0
        %4087 = vmatpush1.msra.mxu0 %v4068
        %4088 = vmatprep.subr.mxu0 0.0
        %4089 = vmatpush1.msra.mxu0 %v4069
        %4090 = vmatprep.subr.mxu0 0.0
        %4091 = vmatpush1.msra.mxu0 %v4070
        %4092 = vmatprep.subr.mxu0 0.0
        %4093 = vmatpush1.msra.mxu0 %v4071
        %4094 = vmatprep.subr.mxu0 0.0
        %4095 = vmatpush1.msra.mxu0 %v4072
        %4096 = vmatprep.subr.mxu0 0.0
        %4097 = vmatpush1.msra.mxu0 %v4073
        %4098 = vmatprep.subr.mxu0 0.0
        %4099 = vmatpush1.msra.mxu0 %v4074
        %4100 = vmatprep.subr.mxu0 0.0
        %4101 = vmatpush1.msra.mxu0 %v4075
        %4102 = vmatprep.subr.mxu0 0.0
        %4103 = vmatpush1.msra.mxu0 %v4076
        %4104 = vmatprep.subr.mxu0 0.0
        %4105 = vmatpush1.msra.mxu0 %v4077
        %4106 = vmatprep.subr.mxu0 0.0
        %4107 = vmatpush1.msra.mxu0 %v4078
        %4108 = vmatprep.subr.mxu0 0.0
        %4109 = vmatpush1.msra.mxu0 %v4079
        %4110 = vmatprep.subr.mxu0 0.0
        %4111 = vmatpush1.msra.mxu0 %v4080
        %4112 = vmatprep.subr.mxu0 0.0
        %4113 = vmatpush1.msra.mxu0 %v4081
        %4114 = vmatprep.subr.mxu0 0.0
        %4115 = vmatpush1.msra.mxu0 0.0
        %4116 = vmatprep.subr.mxu0 0.0
        %4117 = vmatpush1.msra.mxu0 0.0
        %4118 = vmatprep.subr.mxu0 0.0
        %4119 = vmatpush1.msra.mxu0 0.0
        %4120 = vmatprep.subr.mxu0 0.0
        %4121 = vmatpush1.msra.mxu0 0.0
        %4122 = vmatprep.subr.mxu0 0.0
        %4123 = vmatpush1.msra.mxu0 0.0
        %4124 = vmatprep.subr.mxu0 0.0
        %4125 = vmatpush1.msra.mxu0 0.0
        %4126 = vmatprep.subr.mxu0 0.0
        %4127 = vmatpush1.msra.mxu0 0.0
        %4128 = vmatprep.subr.mxu0 0.0
        %4129 = vmatpush1.msra.mxu0 0.0
        %4130 = vmatprep.subr.mxu0 0.0
        %4131 = vmatpush1.msra.mxu0 0.0
        %4132 = vmatprep.subr.mxu0 0.0
        %4133 = vmatpush1.msra.mxu0 0.0
        %4134 = vmatprep.subr.mxu0 0.0
        %4135 = vmatpush1.msra.mxu0 0.0
        %4136 = vmatprep.subr.mxu0 0.0
        %4137 = vmatpush1.msra.mxu0 0.0
        %4138 = vmatprep.subr.mxu0 0.0
        %4139 = vmatpush1.msra.mxu0 0.0
        %4140 = vmatprep.subr.mxu0 0.0
        %4141 = vmatpush1.msra.mxu0 0.0
        %4142 = vmatprep.subr.mxu0 0.0
        %4143 = vmatpush1.msra.mxu0 0.0
        %4144 = vmatprep.subr.mxu0 0.0
        %4145 = vmatpush1.msra.mxu0 0.0
        %4146 = vmatprep.mubr.f32.mxu0 0.0
        %4147 = vmatmul.mubr.f32.gmra.mrb[0].mxu0 %v3955
        %v4148 = vpop.f32.mrb[0].mxu0
        %v4149 = vadd.f32 0.0, %v4148
        %v4150 = vpop.f32.mrb[0].mxu0
        %4151 = vmatprep.mubr.f32.mxu0 0.0
        %4152 = vmatmul.mubr.f32.gmra.mrb[0].mxu0 %v3957
        %v4153 = vpop.f32.mrb[0].mxu0
        %v4154 = vadd.f32 0.0, %v4153
        %v4155 = vpop.f32.mrb[0].mxu0
        %4156 = vmatprep.mubr.f32.mxu0 0.0
        %4157 = vmatmul.mubr.f32.gmra.mrb[0].mxu0 %v3960
        %v4158 = vpop.f32.mrb[0].mxu0
        %v4159 = vadd.f32 0.0, %v4158
        %v4160 = vpop.f32.mrb[0].mxu0
        %4161 = vmatprep.mubr.f32.mxu0 0.0
        %4162 = vmatmul.mubr.f32.gmra.mrb[0].mxu0 %v3962
        %v4163 = vpop.f32.mrb[0].mxu0
        %v4164 = vadd.f32 0.0, %v4163
        %v4165 = vpop.f32.mrb[0].mxu0
        %4166 = vmatprep.mubr.f32.mxu0 0.0
        %4167 = vmatmul.mubr.f32.gmra.mrb[0].mxu0 %v3965
        %v4168 = vpop.f32.mrb[0].mxu0
        %v4169 = vadd.f32 0.0, %v4168
        %v4170 = vpop.f32.mrb[0].mxu0
        %4171 = vmatprep.mubr.f32.mxu0 0.0
        %4172 = vmatmul.mubr.f32.gmra.mrb[0].mxu0 %v3967
        %v4173 = vpop.f32.mrb[0].mxu0
        %v4174 = vadd.f32 0.0, %v4173
        %v4175 = vpop.f32.mrb[0].mxu0
        %4176 = vmatprep.mubr.f32.mxu0 0.0
        %4177 = vmatmul.mubr.f32.gmra.mrb[0].mxu0 %v3970
        %v4178 = vpop.f32.mrb[0].mxu0
        %v4179 = vadd.f32 0.0, %v4178
        %v4180 = vpop.f32.mrb[0].mxu0
        %4181 = vmatprep.mubr.f32.mxu0 0.0
        %4182 = vmatmul.mubr.f32.gmra.mrb[0].mxu0 %v3972
        %v4183 = vpop.f32.mrb[0].mxu0
        %v4184 = vadd.f32 0.0, %v4183
        %v4185 = vpop.f32.mrb[0].mxu0
        %4186 = vmatprep.mubr.f32.mxu0 0.0
        %4187 = vmatmul.mubr.f32.gmra.mrb[0].mxu0 %v3975
        %v4188 = vpop.f32.mrb[0].mxu0
        %v4189 = vadd.f32 0.0, %v4188
        %v4190 = vpop.f32.mrb[0].mxu0
        %4191 = vmatprep.mubr.f32.mxu0 0.0
        %4192 = vmatmul.mubr.f32.gmra.mrb[0].mxu0 %v3977
        %v4193 = vpop.f32.mrb[0].mxu0
        %v4194 = vadd.f32 0.0, %v4193
        %v4195 = vpop.f32.mrb[0].mxu0
        %4196 = vmatprep.mubr.f32.mxu0 0.0
        %4197 = vmatmul.mubr.f32.gmra.mrb[0].mxu0 %v3980
        %v4198 = vpop.f32.mrb[0].mxu0
        %v4199 = vadd.f32 0.0, %v4198
        %v4200 = vpop.f32.mrb[0].mxu0
        %4201 = vmatprep.mubr.f32.mxu0 0.0
        %4202 = vmatmul.mubr.f32.gmra.mrb[0].mxu0 %v3982
        %v4203 = vpop.f32.mrb[0].mxu0
        %v4204 = vadd.f32 0.0, %v4203
        %v4205 = vpop.f32.mrb[0].mxu0
        %4206 = vmatprep.mubr.f32.mxu0 0.0
        %4207 = vmatmul.mubr.f32.gmra.mrb[0].mxu0 %v3985
        %v4208 = vpop.f32.mrb[0].mxu0
        %v4209 = vadd.f32 0.0, %v4208
        %v4210 = vpop.f32.mrb[0].mxu0
        %4211 = vmatprep.mubr.f32.mxu0 0.0
        %4212 = vmatmul.mubr.f32.gmra.mrb[0].mxu0 %v3987
        %v4213 = vpop.f32.mrb[0].mxu0
        %v4214 = vadd.f32 0.0, %v4213
        %v4215 = vpop.f32.mrb[0].mxu0
        %4216 = vmatprep.mubr.f32.mxu0 0.0
        %4217 = vmatmul.mubr.f32.gmra.mrb[0].mxu0 %v3990
        %v4218 = vpop.f32.mrb[0].mxu0
        %v4219 = vadd.f32 0.0, %v4218
        %v4220 = vpop.f32.mrb[0].mxu0
        %4221 = vmatprep.mubr.f32.mxu0 0.0
        %4222 = vmatmul.mubr.f32.gmra.mrb[0].mxu0 %v3992
        %v4223 = vpop.f32.mrb[0].mxu0
        %v4224 = vadd.f32 0.0, %v4223
        %v4225 = vpop.f32.mrb[0].mxu0
        %4226 = vmatprep.mubr.f32.mxu0 0.0
        %4227 = vmatmul.mubr.f32.gmra.mrb[0].mxu0 %v3995
        %v4228 = vpop.f32.mrb[0].mxu0
        %v4229 = vadd.f32 0.0, %v4228
        %v4230 = vpop.f32.mrb[0].mxu0
        %4231 = vmatprep.mubr.f32.mxu0 0.0
        %4232 = vmatmul.mubr.f32.gmra.mrb[0].mxu0 %v3997
        %v4233 = vpop.f32.mrb[0].mxu0
        %v4234 = vadd.f32 0.0, %v4233
        %v4235 = vpop.f32.mrb[0].mxu0
        %4236 = vmatprep.mubr.f32.mxu0 0.0
        %4237 = vmatmul.mubr.f32.gmra.mrb[0].mxu0 %v4000
        %v4238 = vpop.f32.mrb[0].mxu0
        %v4239 = vadd.f32 0.0, %v4238
        %v4240 = vpop.f32.mrb[0].mxu0
        %4241 = vmatprep.mubr.f32.mxu0 0.0
        %4242 = vmatmul.mubr.f32.gmra.mrb[0].mxu0 %v4002
        %v4243 = vpop.f32.mrb[0].mxu0
        %v4244 = vadd.f32 0.0, %v4243
        %v4245 = vpop.f32.mrb[0].mxu0
        %4246 = vmatprep.mubr.f32.mxu0 0.0
        %4247 = vmatmul.mubr.f32.gmra.mrb[0].mxu0 %v4005
        %v4248 = vpop.f32.mrb[0].mxu0
        %v4249 = vadd.f32 0.0, %v4248
        %v4250 = vpop.f32.mrb[0].mxu0
        %4251 = vmatprep.mubr.f32.mxu0 0.0
        %4252 = vmatmul.mubr.f32.gmra.mrb[0].mxu0 %v4007
        %v4253 = vpop.f32.mrb[0].mxu0
        %v4254 = vadd.f32 0.0, %v4253
        %v4255 = vpop.f32.mrb[0].mxu0
        %4256 = vmatprep.mubr.f32.mxu0 0.0
        %4257 = vmatmul.mubr.f32.gmra.mrb[0].mxu0 %v4010
        %v4258 = vpop.f32.mrb[0].mxu0
        %v4259 = vadd.f32 0.0, %v4258
        %v4260 = vpop.f32.mrb[0].mxu0
        %4261 = vmatprep.mubr.f32.mxu0 0.0
        %4262 = vmatmul.mubr.f32.gmra.mrb[0].mxu0 %v4012
        %v4263 = vpop.f32.mrb[0].mxu0
        %v4264 = vadd.f32 0.0, %v4263
        %v4265 = vpop.f32.mrb[0].mxu0
        %4266 = vmatprep.mubr.f32.mxu0 0.0
        %4267 = vmatmul.mubr.f32.gmra.mrb[0].mxu0 %v4015
        %v4268 = vpop.f32.mrb[0].mxu0
        %v4269 = vadd.f32 0.0, %v4268
        %v4270 = vpop.f32.mrb[0].mxu0
        %4271 = vmatprep.mubr.f32.mxu0 0.0
        %4272 = vmatmul.mubr.f32.gmra.mrb[0].mxu0 %v4017
        %v4273 = vpop.f32.mrb[0].mxu0
        %v4274 = vadd.f32 0.0, %v4273
        %v4275 = vpop.f32.mrb[0].mxu0
        %4276 = vmatprep.mubr.f32.mxu0 0.0
        %4277 = vmatmul.mubr.f32.gmra.mrb[0].mxu0 %v4020
        %v4278 = vpop.f32.mrb[0].mxu0
        %v4279 = vadd.f32 0.0, %v4278
        %v4280 = vpop.f32.mrb[0].mxu0
        %4281 = vmatprep.mubr.f32.mxu0 0.0
        %4282 = vmatmul.mubr.f32.gmra.mrb[0].mxu0 %v4022
        %v4283 = vpop.f32.mrb[0].mxu0
        %v4284 = vadd.f32 0.0, %v4283
        %v4285 = vpop.f32.mrb[0].mxu0
        %4286 = vmatprep.mubr.f32.mxu0 0.0
        %4287 = vmatmul.mubr.f32.gmra.mrb[0].mxu0 %v4025
        %v4288 = vpop.f32.mrb[0].mxu0
        %v4289 = vadd.f32 0.0, %v4288
        %v4290 = vpop.f32.mrb[0].mxu0
        %4291 = vmatprep.mubr.f32.mxu0 0.0
        %4292 = vmatmul.mubr.f32.gmra.mrb[0].mxu0 %v4027
        %v4293 = vpop.f32.mrb[0].mxu0
        %v4294 = vadd.f32 0.0, %v4293
        %v4295 = vpop.f32.mrb[0].mxu0
        %4296 = vmatprep.mubr.f32.mxu0 0.0
        %4297 = vmatmul.mubr.f32.gmra.mrb[0].mxu0 %v4030
        %v4298 = vpop.f32.mrb[0].mxu0
        %v4299 = vadd.f32 0.0, %v4298
        %v4300 = vpop.f32.mrb[0].mxu0
        %4301 = vmatprep.mubr.f32.mxu0 0.0
        %4302 = vmatmul.mubr.f32.gmra.mrb[0].mxu0 %v4032
        %v4303 = vpop.f32.mrb[0].mxu0
        %v4304 = vadd.f32 0.0, %v4303
        %v4305 = vpop.f32.mrb[0].mxu0
        %4306 = vdwg.mxu0
        %v4307 = vadd.f32 %v3795, %v4149
        %v4308 = vadd.f32 %v3800, %v4154
        %v4309 = vadd.f32 %v3805, %v4159
        %v4310 = vadd.f32 %v3810, %v4164
        %v4311 = vadd.f32 %v3815, %v4169
        %v4312 = vadd.f32 %v3820, %v4174
        %v4313 = vadd.f32 %v3825, %v4179
        %v4314 = vadd.f32 %v3830, %v4184
        %v4315 = vadd.f32 %v3835, %v4189
        %v4316 = vadd.f32 %v3840, %v4194
        %v4317 = vadd.f32 %v3845, %v4199
        %v4318 = vadd.f32 %v3850, %v4204
        %v4319 = vadd.f32 %v3855, %v4209
        %v4320 = vadd.f32 %v3860, %v4214
        %v4321 = vadd.f32 %v3865, %v4219
        %v4322 = vadd.f32 %v3870, %v4224
        %v4323 = vadd.f32 %v3875, %v4229
        %v4324 = vadd.f32 %v3880, %v4234
        %v4325 = vadd.f32 %v3885, %v4239
        %v4326 = vadd.f32 %v3890, %v4244
        %v4327 = vadd.f32 %v3895, %v4249
        %v4328 = vadd.f32 %v3900, %v4254
        %v4329 = vadd.f32 %v3905, %v4259
        %v4330 = vadd.f32 %v3910, %v4264
        %v4331 = vadd.f32 %v3915, %v4269
        %v4332 = vadd.f32 %v3920, %v4274
        %v4333 = vadd.f32 %v3925, %v4279
        %v4334 = vadd.f32 %v3930, %v4284
        %v4335 = vadd.f32 %v3935, %v4289
        %v4336 = vadd.f32 %v3940, %v4294
        %v4337 = vadd.f32 %v3945, %v4299
        %v4338 = vadd.f32 %v3950, %v4304
        %s4339 = scalar_lea.vmem [#allocation3], 384
        %v4340 = vld [vmem:[%s4339] sm:$0xff]
        %v4341 = vld [vmem:[%s4339 + $0x8] sm:$0xff]
        %v4342 = vld [vmem:[%s4339 + $0x10] sm:$0xff]
        %v4343 = vld [vmem:[%s4339 + $0x18] sm:$0xff]
        %v4344 = vld [vmem:[%s4339 + $0x20] sm:$0xff]
        %v4345 = vld [vmem:[%s4339 + $0x28] sm:$0xff]
        %v4346 = vld [vmem:[%s4339 + $0x30] sm:$0xff]
        %v4347 = vld [vmem:[%s4339 + $0x38] sm:$0xff]
        %v4348 = vld [vmem:[%s4339 + $0x40] sm:$0xff]
        %v4349 = vld [vmem:[%s4339 + $0x48] sm:$0xff]
        %v4350 = vld [vmem:[%s4339 + $0x50] sm:$0xff]
        %v4351 = vld [vmem:[%s4339 + $0x58] sm:$0xff]
        %v4352 = vld [vmem:[%s4339 + $0x60] sm:$0xff]
        %v4353 = vld [vmem:[%s4339 + $0x68] sm:$0xff]
        %v4354 = vld [vmem:[%s4339 + $0x70] sm:$0xff]
        %v4355 = vld [vmem:[%s4339 + $0x78] sm:$0xff]
        %4356 = vmatprep.subr.mxu0 0.0
        %4357 = vmatpush1.msra.mxu0 %v4340
        %4358 = vmatprep.subr.mxu0 0.0
        %4359 = vmatpush1.msra.mxu0 %v4341
        %4360 = vmatprep.subr.mxu0 0.0
        %4361 = vmatpush1.msra.mxu0 %v4342
        %4362 = vmatprep.subr.mxu0 0.0
        %4363 = vmatpush1.msra.mxu0 %v4343
        %4364 = vmatprep.subr.mxu0 0.0
        %4365 = vmatpush1.msra.mxu0 %v4344
        %4366 = vmatprep.subr.mxu0 0.0
        %4367 = vmatpush1.msra.mxu0 %v4345
        %4368 = vmatprep.subr.mxu0 0.0
        %4369 = vmatpush1.msra.mxu0 %v4346
        %4370 = vmatprep.subr.mxu0 0.0
        %4371 = vmatpush1.msra.mxu0 %v4347
        %4372 = vmatprep.subr.mxu0 0.0
        %4373 = vmatpush1.msra.mxu0 %v4348
        %4374 = vmatprep.subr.mxu0 0.0
        %4375 = vmatpush1.msra.mxu0 %v4349
        %4376 = vmatprep.subr.mxu0 0.0
        %4377 = vmatpush1.msra.mxu0 %v4350
        %4378 = vmatprep.subr.mxu0 0.0
        %4379 = vmatpush1.msra.mxu0 %v4351
        %4380 = vmatprep.subr.mxu0 0.0
        %4381 = vmatpush1.msra.mxu0 %v4352
        %4382 = vmatprep.subr.mxu0 0.0
        %4383 = vmatpush1.msra.mxu0 %v4353
        %4384 = vmatprep.subr.mxu0 0.0
        %4385 = vmatpush1.msra.mxu0 %v4354
        %4386 = vmatprep.subr.mxu0 0.0
        %4387 = vmatpush1.msra.mxu0 %v4355
        %4388 = vmatprep.subr.mxu0 0.0
        %4389 = vmatpush1.msra.mxu0 0.0
        %4390 = vmatprep.subr.mxu0 0.0
        %4391 = vmatpush1.msra.mxu0 0.0
        %4392 = vmatprep.subr.mxu0 0.0
        %4393 = vmatpush1.msra.mxu0 0.0
        %4394 = vmatprep.subr.mxu0 0.0
        %4395 = vmatpush1.msra.mxu0 0.0
        %4396 = vmatprep.subr.mxu0 0.0
        %4397 = vmatpush1.msra.mxu0 0.0
        %4398 = vmatprep.subr.mxu0 0.0
        %4399 = vmatpush1.msra.mxu0 0.0
        %4400 = vmatprep.subr.mxu0 0.0
        %4401 = vmatpush1.msra.mxu0 0.0
        %4402 = vmatprep.subr.mxu0 0.0
        %4403 = vmatpush1.msra.mxu0 0.0
        %4404 = vmatprep.subr.mxu0 0.0
        %4405 = vmatpush1.msra.mxu0 0.0
        %4406 = vmatprep.subr.mxu0 0.0
        %4407 = vmatpush1.msra.mxu0 0.0
        %4408 = vmatprep.subr.mxu0 0.0
        %4409 = vmatpush1.msra.mxu0 0.0
        %4410 = vmatprep.subr.mxu0 0.0
        %4411 = vmatpush1.msra.mxu0 0.0
        %4412 = vmatprep.subr.mxu0 0.0
        %4413 = vmatpush1.msra.mxu0 0.0
        %4414 = vmatprep.subr.mxu0 0.0
        %4415 = vmatpush1.msra.mxu0 0.0
        %4416 = vmatprep.subr.mxu0 0.0
        %4417 = vmatpush1.msra.mxu0 0.0
        %4418 = vmatprep.subr.mxu0 0.0
        %4419 = vmatpush1.msra.mxu0 0.0
        %4420 = vmatprep.mubr.f32.mxu0 0.0
        %4421 = vmatmul.mubr.f32.gmra.mrb[0].mxu0 %v3259
        %v4422 = vpop.f32.mrb[0].mxu0
        %v4423 = vadd.f32 0.0, %v4422
        %v4424 = vpop.f32.mrb[0].mxu0
        %4425 = vmatprep.mubr.f32.mxu0 0.0
        %4426 = vmatmul.mubr.f32.gmra.mrb[0].mxu0 %v3260
        %v4427 = vpop.f32.mrb[0].mxu0
        %v4428 = vadd.f32 0.0, %v4427
        %v4429 = vpop.f32.mrb[0].mxu0
        %4430 = vmatprep.mubr.f32.mxu0 0.0
        %4431 = vmatmul.mubr.f32.gmra.mrb[0].mxu0 %v3262
        %v4432 = vpop.f32.mrb[0].mxu0
        %v4433 = vadd.f32 0.0, %v4432
        %v4434 = vpop.f32.mrb[0].mxu0
        %4435 = vmatprep.mubr.f32.mxu0 0.0
        %4436 = vmatmul.mubr.f32.gmra.mrb[0].mxu0 %v3263
        %v4437 = vpop.f32.mrb[0].mxu0
        %v4438 = vadd.f32 0.0, %v4437
        %v4439 = vpop.f32.mrb[0].mxu0
        %4440 = vmatprep.mubr.f32.mxu0 0.0
        %4441 = vmatmul.mubr.f32.gmra.mrb[0].mxu0 %v3265
        %v4442 = vpop.f32.mrb[0].mxu0
        %v4443 = vadd.f32 0.0, %v4442
        %v4444 = vpop.f32.mrb[0].mxu0
        %4445 = vmatprep.mubr.f32.mxu0 0.0
        %4446 = vmatmul.mubr.f32.gmra.mrb[0].mxu0 %v3266
        %v4447 = vpop.f32.mrb[0].mxu0
        %v4448 = vadd.f32 0.0, %v4447
        %v4449 = vpop.f32.mrb[0].mxu0
        %4450 = vmatprep.mubr.f32.mxu0 0.0
        %4451 = vmatmul.mubr.f32.gmra.mrb[0].mxu0 %v3268
        %v4452 = vpop.f32.mrb[0].mxu0
        %v4453 = vadd.f32 0.0, %v4452
        %v4454 = vpop.f32.mrb[0].mxu0
        %4455 = vmatprep.mubr.f32.mxu0 0.0
        %4456 = vmatmul.mubr.f32.gmra.mrb[0].mxu0 %v3269
        %v4457 = vpop.f32.mrb[0].mxu0
        %v4458 = vadd.f32 0.0, %v4457
        %v4459 = vpop.f32.mrb[0].mxu0
        %4460 = vmatprep.mubr.f32.mxu0 0.0
        %4461 = vmatmul.mubr.f32.gmra.mrb[0].mxu0 %v3271
        %v4462 = vpop.f32.mrb[0].mxu0
        %v4463 = vadd.f32 0.0, %v4462
        %v4464 = vpop.f32.mrb[0].mxu0
        %4465 = vmatprep.mubr.f32.mxu0 0.0
        %4466 = vmatmul.mubr.f32.gmra.mrb[0].mxu0 %v3272
        %v4467 = vpop.f32.mrb[0].mxu0
        %v4468 = vadd.f32 0.0, %v4467
        %v4469 = vpop.f32.mrb[0].mxu0
        %4470 = vmatprep.mubr.f32.mxu0 0.0
        %4471 = vmatmul.mubr.f32.gmra.mrb[0].mxu0 %v3274
        %v4472 = vpop.f32.mrb[0].mxu0
        %v4473 = vadd.f32 0.0, %v4472
        %v4474 = vpop.f32.mrb[0].mxu0
        %4475 = vmatprep.mubr.f32.mxu0 0.0
        %4476 = vmatmul.mubr.f32.gmra.mrb[0].mxu0 %v3275
        %v4477 = vpop.f32.mrb[0].mxu0
        %v4478 = vadd.f32 0.0, %v4477
        %v4479 = vpop.f32.mrb[0].mxu0
        %4480 = vmatprep.mubr.f32.mxu0 0.0
        %4481 = vmatmul.mubr.f32.gmra.mrb[0].mxu0 %v3277
        %v4482 = vpop.f32.mrb[0].mxu0
        %v4483 = vadd.f32 0.0, %v4482
        %v4484 = vpop.f32.mrb[0].mxu0
        %4485 = vmatprep.mubr.f32.mxu0 0.0
        %4486 = vmatmul.mubr.f32.gmra.mrb[0].mxu0 %v3278
        %v4487 = vpop.f32.mrb[0].mxu0
        %v4488 = vadd.f32 0.0, %v4487
        %v4489 = vpop.f32.mrb[0].mxu0
        %4490 = vmatprep.mubr.f32.mxu0 0.0
        %4491 = vmatmul.mubr.f32.gmra.mrb[0].mxu0 %v3280
        %v4492 = vpop.f32.mrb[0].mxu0
        %v4493 = vadd.f32 0.0, %v4492
        %v4494 = vpop.f32.mrb[0].mxu0
        %4495 = vmatprep.mubr.f32.mxu0 0.0
        %4496 = vmatmul.mubr.f32.gmra.mrb[0].mxu0 %v3281
        %v4497 = vpop.f32.mrb[0].mxu0
        %v4498 = vadd.f32 0.0, %v4497
        %v4499 = vpop.f32.mrb[0].mxu0
        %4500 = vmatprep.mubr.f32.mxu0 0.0
        %4501 = vmatmul.mubr.f32.gmra.mrb[0].mxu0 %v3283
        %v4502 = vpop.f32.mrb[0].mxu0
        %v4503 = vadd.f32 0.0, %v4502
        %v4504 = vpop.f32.mrb[0].mxu0
        %4505 = vmatprep.mubr.f32.mxu0 0.0
        %4506 = vmatmul.mubr.f32.gmra.mrb[0].mxu0 %v3284
        %v4507 = vpop.f32.mrb[0].mxu0
        %v4508 = vadd.f32 0.0, %v4507
        %v4509 = vpop.f32.mrb[0].mxu0
        %4510 = vmatprep.mubr.f32.mxu0 0.0
        %4511 = vmatmul.mubr.f32.gmra.mrb[0].mxu0 %v3286
        %v4512 = vpop.f32.mrb[0].mxu0
        %v4513 = vadd.f32 0.0, %v4512
        %v4514 = vpop.f32.mrb[0].mxu0
        %4515 = vmatprep.mubr.f32.mxu0 0.0
        %4516 = vmatmul.mubr.f32.gmra.mrb[0].mxu0 %v3287
        %v4517 = vpop.f32.mrb[0].mxu0
        %v4518 = vadd.f32 0.0, %v4517
        %v4519 = vpop.f32.mrb[0].mxu0
        %4520 = vmatprep.mubr.f32.mxu0 0.0
        %4521 = vmatmul.mubr.f32.gmra.mrb[0].mxu0 %v3289
        %v4522 = vpop.f32.mrb[0].mxu0
        %v4523 = vadd.f32 0.0, %v4522
        %v4524 = vpop.f32.mrb[0].mxu0
        %4525 = vmatprep.mubr.f32.mxu0 0.0
        %4526 = vmatmul.mubr.f32.gmra.mrb[0].mxu0 %v3290
        %v4527 = vpop.f32.mrb[0].mxu0
        %v4528 = vadd.f32 0.0, %v4527
        %v4529 = vpop.f32.mrb[0].mxu0
        %4530 = vmatprep.mubr.f32.mxu0 0.0
        %4531 = vmatmul.mubr.f32.gmra.mrb[0].mxu0 %v3292
        %v4532 = vpop.f32.mrb[0].mxu0
        %v4533 = vadd.f32 0.0, %v4532
        %v4534 = vpop.f32.mrb[0].mxu0
        %4535 = vmatprep.mubr.f32.mxu0 0.0
        %4536 = vmatmul.mubr.f32.gmra.mrb[0].mxu0 %v3293
        %v4537 = vpop.f32.mrb[0].mxu0
        %v4538 = vadd.f32 0.0, %v4537
        %v4539 = vpop.f32.mrb[0].mxu0
        %4540 = vmatprep.mubr.f32.mxu0 0.0
        %4541 = vmatmul.mubr.f32.gmra.mrb[0].mxu0 %v3295
        %v4542 = vpop.f32.mrb[0].mxu0
        %v4543 = vadd.f32 0.0, %v4542
        %v4544 = vpop.f32.mrb[0].mxu0
        %4545 = vmatprep.mubr.f32.mxu0 0.0
        %4546 = vmatmul.mubr.f32.gmra.mrb[0].mxu0 %v3296
        %v4547 = vpop.f32.mrb[0].mxu0
        %v4548 = vadd.f32 0.0, %v4547
        %v4549 = vpop.f32.mrb[0].mxu0
        %4550 = vmatprep.mubr.f32.mxu0 0.0
        %4551 = vmatmul.mubr.f32.gmra.mrb[0].mxu0 %v3298
        %v4552 = vpop.f32.mrb[0].mxu0
        %v4553 = vadd.f32 0.0, %v4552
        %v4554 = vpop.f32.mrb[0].mxu0
        %4555 = vmatprep.mubr.f32.mxu0 0.0
        %4556 = vmatmul.mubr.f32.gmra.mrb[0].mxu0 %v3299
        %v4557 = vpop.f32.mrb[0].mxu0
        %v4558 = vadd.f32 0.0, %v4557
        %v4559 = vpop.f32.mrb[0].mxu0
        %4560 = vmatprep.mubr.f32.mxu0 0.0
        %4561 = vmatmul.mubr.f32.gmra.mrb[0].mxu0 %v3301
        %v4562 = vpop.f32.mrb[0].mxu0
        %v4563 = vadd.f32 0.0, %v4562
        %v4564 = vpop.f32.mrb[0].mxu0
        %4565 = vmatprep.mubr.f32.mxu0 0.0
        %4566 = vmatmul.mubr.f32.gmra.mrb[0].mxu0 %v3302
        %v4567 = vpop.f32.mrb[0].mxu0
        %v4568 = vadd.f32 0.0, %v4567
        %v4569 = vpop.f32.mrb[0].mxu0
        %4570 = vmatprep.mubr.f32.mxu0 0.0
        %4571 = vmatmul.mubr.f32.gmra.mrb[0].mxu0 %v3304
        %v4572 = vpop.f32.mrb[0].mxu0
        %v4573 = vadd.f32 0.0, %v4572
        %v4574 = vpop.f32.mrb[0].mxu0
        %4575 = vmatprep.mubr.f32.mxu0 0.0
        %4576 = vmatmul.mubr.f32.gmra.mrb[0].mxu0 %v3305
        %v4577 = vpop.f32.mrb[0].mxu0
        %v4578 = vadd.f32 0.0, %v4577
        %v4579 = vpop.f32.mrb[0].mxu0
        %4580 = vdwg.mxu0
        %v4581 = vadd.f32 %v4307, %v4423
        %v4582 = vadd.f32 %v4308, %v4428
        %v4583 = vadd.f32 %v4309, %v4433
        %v4584 = vadd.f32 %v4310, %v4438
        %v4585 = vadd.f32 %v4311, %v4443
        %v4586 = vadd.f32 %v4312, %v4448
        %v4587 = vadd.f32 %v4313, %v4453
        %v4588 = vadd.f32 %v4314, %v4458
        %v4589 = vadd.f32 %v4315, %v4463
        %v4590 = vadd.f32 %v4316, %v4468
        %v4591 = vadd.f32 %v4317, %v4473
        %v4592 = vadd.f32 %v4318, %v4478
        %v4593 = vadd.f32 %v4319, %v4483
        %v4594 = vadd.f32 %v4320, %v4488
        %v4595 = vadd.f32 %v4321, %v4493
        %v4596 = vadd.f32 %v4322, %v4498
        %v4597 = vadd.f32 %v4323, %v4503
        %v4598 = vadd.f32 %v4324, %v4508
        %v4599 = vadd.f32 %v4325, %v4513
        %v4600 = vadd.f32 %v4326, %v4518
        %v4601 = vadd.f32 %v4327, %v4523
        %v4602 = vadd.f32 %v4328, %v4528
        %v4603 = vadd.f32 %v4329, %v4533
        %v4604 = vadd.f32 %v4330, %v4538
        %v4605 = vadd.f32 %v4331, %v4543
        %v4606 = vadd.f32 %v4332, %v4548
        %v4607 = vadd.f32 %v4333, %v4553
        %v4608 = vadd.f32 %v4334, %v4558
        %v4609 = vadd.f32 %v4335, %v4563
        %v4610 = vadd.f32 %v4336, %v4568
        %v4611 = vadd.f32 %v4337, %v4573
        %v4612 = vadd.f32 %v4338, %v4578
        %v4616 = vrot.slane %v3304, 1
        %v4617 = vrot.slane %v3305, 1
        %v4618 = vsel %vm468, %v4616, %v4617
        %v4619 = vrot.slane %v3306, 1
        %v4620 = vsel %vm468, %v4617, %v4619
        %s4623 = scalar_lea.vmem [#allocation3], 512
        %v4624 = vld [vmem:[%s4623] sm:$0xff]
        %v4625 = vld [vmem:[%s4623 + $0x8] sm:$0xff]
        %v4626 = vld [vmem:[%s4623 + $0x10] sm:$0xff]
        %v4627 = vld [vmem:[%s4623 + $0x18] sm:$0xff]
        %v4628 = vld [vmem:[%s4623 + $0x20] sm:$0xff]
        %v4629 = vld [vmem:[%s4623 + $0x28] sm:$0xff]
        %v4630 = vld [vmem:[%s4623 + $0x30] sm:$0xff]
        %v4631 = vld [vmem:[%s4623 + $0x38] sm:$0xff]
        %v4632 = vld [vmem:[%s4623 + $0x40] sm:$0xff]
        %v4633 = vld [vmem:[%s4623 + $0x48] sm:$0xff]
        %v4634 = vld [vmem:[%s4623 + $0x50] sm:$0xff]
        %v4635 = vld [vmem:[%s4623 + $0x58] sm:$0xff]
        %v4636 = vld [vmem:[%s4623 + $0x60] sm:$0xff]
        %v4637 = vld [vmem:[%s4623 + $0x68] sm:$0xff]
        %v4638 = vld [vmem:[%s4623 + $0x70] sm:$0xff]
        %v4639 = vld [vmem:[%s4623 + $0x78] sm:$0xff]
        %4640 = vmatprep.subr.mxu0 0.0
        %4641 = vmatpush1.msra.mxu0 %v4624
        %4642 = vmatprep.subr.mxu0 0.0
        %4643 = vmatpush1.msra.mxu0 %v4625
        %4644 = vmatprep.subr.mxu0 0.0
        %4645 = vmatpush1.msra.mxu0 %v4626
        %4646 = vmatprep.subr.mxu0 0.0
        %4647 = vmatpush1.msra.mxu0 %v4627
        %4648 = vmatprep.subr.mxu0 0.0
        %4649 = vmatpush1.msra.mxu0 %v4628
        %4650 = vmatprep.subr.mxu0 0.0
        %4651 = vmatpush1.msra.mxu0 %v4629
        %4652 = vmatprep.subr.mxu0 0.0
        %4653 = vmatpush1.msra.mxu0 %v4630
        %4654 = vmatprep.subr.mxu0 0.0
        %4655 = vmatpush1.msra.mxu0 %v4631
        %4656 = vmatprep.subr.mxu0 0.0
        %4657 = vmatpush1.msra.mxu0 %v4632
        %4658 = vmatprep.subr.mxu0 0.0
        %4659 = vmatpush1.msra.mxu0 %v4633
        %4660 = vmatprep.subr.mxu0 0.0
        %4661 = vmatpush1.msra.mxu0 %v4634
        %4662 = vmatprep.subr.mxu0 0.0
        %4663 = vmatpush1.msra.mxu0 %v4635
        %4664 = vmatprep.subr.mxu0 0.0
        %4665 = vmatpush1.msra.mxu0 %v4636
        %4666 = vmatprep.subr.mxu0 0.0
        %4667 = vmatpush1.msra.mxu0 %v4637
        %4668 = vmatprep.subr.mxu0 0.0
        %4669 = vmatpush1.msra.mxu0 %v4638
        %4670 = vmatprep.subr.mxu0 0.0
        %4671 = vmatpush1.msra.mxu0 %v4639
        %4672 = vmatprep.subr.mxu0 0.0
        %4673 = vmatpush1.msra.mxu0 0.0
        %4674 = vmatprep.subr.mxu0 0.0
        %4675 = vmatpush1.msra.mxu0 0.0
        %4676 = vmatprep.subr.mxu0 0.0
        %4677 = vmatpush1.msra.mxu0 0.0
        %4678 = vmatprep.subr.mxu0 0.0
        %4679 = vmatpush1.msra.mxu0 0.0
        %4680 = vmatprep.subr.mxu0 0.0
        %4681 = vmatpush1.msra.mxu0 0.0
        %4682 = vmatprep.subr.mxu0 0.0
        %4683 = vmatpush1.msra.mxu0 0.0
        %4684 = vmatprep.subr.mxu0 0.0
        %4685 = vmatpush1.msra.mxu0 0.0
        %4686 = vmatprep.subr.mxu0 0.0
        %4687 = vmatpush1.msra.mxu0 0.0
        %4688 = vmatprep.subr.mxu0 0.0
        %4689 = vmatpush1.msra.mxu0 0.0
        %4690 = vmatprep.subr.mxu0 0.0
        %4691 = vmatpush1.msra.mxu0 0.0
        %4692 = vmatprep.subr.mxu0 0.0
        %4693 = vmatpush1.msra.mxu0 0.0
        %4694 = vmatprep.subr.mxu0 0.0
        %4695 = vmatpush1.msra.mxu0 0.0
        %4696 = vmatprep.subr.mxu0 0.0
        %4697 = vmatpush1.msra.mxu0 0.0
        %4698 = vmatprep.subr.mxu0 0.0
        %4699 = vmatpush1.msra.mxu0 0.0
        %4700 = vmatprep.subr.mxu0 0.0
        %4701 = vmatpush1.msra.mxu0 0.0
        %4702 = vmatprep.subr.mxu0 0.0
        %4703 = vmatpush1.msra.mxu0 0.0
        %4704 = vmatprep.mubr.f32.mxu0 0.0
        %4705 = vmatmul.mubr.f32.gmra.mrb[0].mxu0 %v3381
        %v4706 = vpop.f32.mrb[0].mxu0
        %v4707 = vadd.f32 0.0, %v4706
        %v4708 = vpop.f32.mrb[0].mxu0
        %4709 = vmatprep.mubr.f32.mxu0 0.0
        %4710 = vmatmul.mubr.f32.gmra.mrb[0].mxu0 %v3383
        %v4711 = vpop.f32.mrb[0].mxu0
        %v4712 = vadd.f32 0.0, %v4711
        %v4713 = vpop.f32.mrb[0].mxu0
        %4714 = vmatprep.mubr.f32.mxu0 0.0
        %4715 = vmatmul.mubr.f32.gmra.mrb[0].mxu0 %v3386
        %v4716 = vpop.f32.mrb[0].mxu0
        %v4717 = vadd.f32 0.0, %v4716
        %v4718 = vpop.f32.mrb[0].mxu0
        %4719 = vmatprep.mubr.f32.mxu0 0.0
        %4720 = vmatmul.mubr.f32.gmra.mrb[0].mxu0 %v3388
        %v4721 = vpop.f32.mrb[0].mxu0
        %v4722 = vadd.f32 0.0, %v4721
        %v4723 = vpop.f32.mrb[0].mxu0
        %4724 = vmatprep.mubr.f32.mxu0 0.0
        %4725 = vmatmul.mubr.f32.gmra.mrb[0].mxu0 %v3391
        %v4726 = vpop.f32.mrb[0].mxu0
        %v4727 = vadd.f32 0.0, %v4726
        %v4728 = vpop.f32.mrb[0].mxu0
        %4729 = vmatprep.mubr.f32.mxu0 0.0
        %4730 = vmatmul.mubr.f32.gmra.mrb[0].mxu0 %v3393
        %v4731 = vpop.f32.mrb[0].mxu0
        %v4732 = vadd.f32 0.0, %v4731
        %v4733 = vpop.f32.mrb[0].mxu0
        %4734 = vmatprep.mubr.f32.mxu0 0.0
        %4735 = vmatmul.mubr.f32.gmra.mrb[0].mxu0 %v3396
        %v4736 = vpop.f32.mrb[0].mxu0
        %v4737 = vadd.f32 0.0, %v4736
        %v4738 = vpop.f32.mrb[0].mxu0
        %4739 = vmatprep.mubr.f32.mxu0 0.0
        %4740 = vmatmul.mubr.f32.gmra.mrb[0].mxu0 %v3398
        %v4741 = vpop.f32.mrb[0].mxu0
        %v4742 = vadd.f32 0.0, %v4741
        %v4743 = vpop.f32.mrb[0].mxu0
        %4744 = vmatprep.mubr.f32.mxu0 0.0
        %4745 = vmatmul.mubr.f32.gmra.mrb[0].mxu0 %v3401
        %v4746 = vpop.f32.mrb[0].mxu0
        %v4747 = vadd.f32 0.0, %v4746
        %v4748 = vpop.f32.mrb[0].mxu0
        %4749 = vmatprep.mubr.f32.mxu0 0.0
        %4750 = vmatmul.mubr.f32.gmra.mrb[0].mxu0 %v3403
        %v4751 = vpop.f32.mrb[0].mxu0
        %v4752 = vadd.f32 0.0, %v4751
        %v4753 = vpop.f32.mrb[0].mxu0
        %4754 = vmatprep.mubr.f32.mxu0 0.0
        %4755 = vmatmul.mubr.f32.gmra.mrb[0].mxu0 %v3406
        %v4756 = vpop.f32.mrb[0].mxu0
        %v4757 = vadd.f32 0.0, %v4756
        %v4758 = vpop.f32.mrb[0].mxu0
        %4759 = vmatprep.mubr.f32.mxu0 0.0
        %4760 = vmatmul.mubr.f32.gmra.mrb[0].mxu0 %v3408
        %v4761 = vpop.f32.mrb[0].mxu0
        %v4762 = vadd.f32 0.0, %v4761
        %v4763 = vpop.f32.mrb[0].mxu0
        %4764 = vmatprep.mubr.f32.mxu0 0.0
        %4765 = vmatmul.mubr.f32.gmra.mrb[0].mxu0 %v3411
        %v4766 = vpop.f32.mrb[0].mxu0
        %v4767 = vadd.f32 0.0, %v4766
        %v4768 = vpop.f32.mrb[0].mxu0
        %4769 = vmatprep.mubr.f32.mxu0 0.0
        %4770 = vmatmul.mubr.f32.gmra.mrb[0].mxu0 %v3413
        %v4771 = vpop.f32.mrb[0].mxu0
        %v4772 = vadd.f32 0.0, %v4771
        %v4773 = vpop.f32.mrb[0].mxu0
        %4774 = vmatprep.mubr.f32.mxu0 0.0
        %4775 = vmatmul.mubr.f32.gmra.mrb[0].mxu0 %v3416
        %v4776 = vpop.f32.mrb[0].mxu0
        %v4777 = vadd.f32 0.0, %v4776
        %v4778 = vpop.f32.mrb[0].mxu0
        %4779 = vmatprep.mubr.f32.mxu0 0.0
        %4780 = vmatmul.mubr.f32.gmra.mrb[0].mxu0 %v3418
        %v4781 = vpop.f32.mrb[0].mxu0
        %v4782 = vadd.f32 0.0, %v4781
        %v4783 = vpop.f32.mrb[0].mxu0
        %4784 = vmatprep.mubr.f32.mxu0 0.0
        %4785 = vmatmul.mubr.f32.gmra.mrb[0].mxu0 %v3421
        %v4786 = vpop.f32.mrb[0].mxu0
        %v4787 = vadd.f32 0.0, %v4786
        %v4788 = vpop.f32.mrb[0].mxu0
        %4789 = vmatprep.mubr.f32.mxu0 0.0
        %4790 = vmatmul.mubr.f32.gmra.mrb[0].mxu0 %v3423
        %v4791 = vpop.f32.mrb[0].mxu0
        %v4792 = vadd.f32 0.0, %v4791
        %v4793 = vpop.f32.mrb[0].mxu0
        %4794 = vmatprep.mubr.f32.mxu0 0.0
        %4795 = vmatmul.mubr.f32.gmra.mrb[0].mxu0 %v3426
        %v4796 = vpop.f32.mrb[0].mxu0
        %v4797 = vadd.f32 0.0, %v4796
        %v4798 = vpop.f32.mrb[0].mxu0
        %4799 = vmatprep.mubr.f32.mxu0 0.0
        %4800 = vmatmul.mubr.f32.gmra.mrb[0].mxu0 %v3428
        %v4801 = vpop.f32.mrb[0].mxu0
        %v4802 = vadd.f32 0.0, %v4801
        %v4803 = vpop.f32.mrb[0].mxu0
        %4804 = vmatprep.mubr.f32.mxu0 0.0
        %4805 = vmatmul.mubr.f32.gmra.mrb[0].mxu0 %v3431
        %v4806 = vpop.f32.mrb[0].mxu0
        %v4807 = vadd.f32 0.0, %v4806
        %v4808 = vpop.f32.mrb[0].mxu0
        %4809 = vmatprep.mubr.f32.mxu0 0.0
        %4810 = vmatmul.mubr.f32.gmra.mrb[0].mxu0 %v3433
        %v4811 = vpop.f32.mrb[0].mxu0
        %v4812 = vadd.f32 0.0, %v4811
        %v4813 = vpop.f32.mrb[0].mxu0
        %4814 = vmatprep.mubr.f32.mxu0 0.0
        %4815 = vmatmul.mubr.f32.gmra.mrb[0].mxu0 %v3436
        %v4816 = vpop.f32.mrb[0].mxu0
        %v4817 = vadd.f32 0.0, %v4816
        %v4818 = vpop.f32.mrb[0].mxu0
        %4819 = vmatprep.mubr.f32.mxu0 0.0
        %4820 = vmatmul.mubr.f32.gmra.mrb[0].mxu0 %v3438
        %v4821 = vpop.f32.mrb[0].mxu0
        %v4822 = vadd.f32 0.0, %v4821
        %v4823 = vpop.f32.mrb[0].mxu0
        %4824 = vmatprep.mubr.f32.mxu0 0.0
        %4825 = vmatmul.mubr.f32.gmra.mrb[0].mxu0 %v3441
        %v4826 = vpop.f32.mrb[0].mxu0
        %v4827 = vadd.f32 0.0, %v4826
        %v4828 = vpop.f32.mrb[0].mxu0
        %4829 = vmatprep.mubr.f32.mxu0 0.0
        %4830 = vmatmul.mubr.f32.gmra.mrb[0].mxu0 %v3443
        %v4831 = vpop.f32.mrb[0].mxu0
        %v4832 = vadd.f32 0.0, %v4831
        %v4833 = vpop.f32.mrb[0].mxu0
        %4834 = vmatprep.mubr.f32.mxu0 0.0
        %4835 = vmatmul.mubr.f32.gmra.mrb[0].mxu0 %v3446
        %v4836 = vpop.f32.mrb[0].mxu0
        %v4837 = vadd.f32 0.0, %v4836
        %v4838 = vpop.f32.mrb[0].mxu0
        %4839 = vmatprep.mubr.f32.mxu0 0.0
        %4840 = vmatmul.mubr.f32.gmra.mrb[0].mxu0 %v3448
        %v4841 = vpop.f32.mrb[0].mxu0
        %v4842 = vadd.f32 0.0, %v4841
        %v4843 = vpop.f32.mrb[0].mxu0
        %4844 = vmatprep.mubr.f32.mxu0 0.0
        %4845 = vmatmul.mubr.f32.gmra.mrb[0].mxu0 %v3451
        %v4846 = vpop.f32.mrb[0].mxu0
        %v4847 = vadd.f32 0.0, %v4846
        %v4848 = vpop.f32.mrb[0].mxu0
        %4849 = vmatprep.mubr.f32.mxu0 0.0
        %4850 = vmatmul.mubr.f32.gmra.mrb[0].mxu0 %v3453
        %v4851 = vpop.f32.mrb[0].mxu0
        %v4852 = vadd.f32 0.0, %v4851
        %v4853 = vpop.f32.mrb[0].mxu0
        %4854 = vmatprep.mubr.f32.mxu0 0.0
        %4855 = vmatmul.mubr.f32.gmra.mrb[0].mxu0 %v4618
        %v4856 = vpop.f32.mrb[0].mxu0
        %v4857 = vadd.f32 0.0, %v4856
        %v4858 = vpop.f32.mrb[0].mxu0
        %4859 = vmatprep.mubr.f32.mxu0 0.0
        %4860 = vmatmul.mubr.f32.gmra.mrb[0].mxu0 %v4620
        %v4861 = vpop.f32.mrb[0].mxu0
        %v4862 = vadd.f32 0.0, %v4861
        %v4863 = vpop.f32.mrb[0].mxu0
        %4864 = vdwg.mxu0
        %v4865 = vadd.f32 %v4581, %v4707
        %v4866 = vadd.f32 %v4582, %v4712
        %v4867 = vadd.f32 %v4583, %v4717
        %v4868 = vadd.f32 %v4584, %v4722
        %v4869 = vadd.f32 %v4585, %v4727
        %v4870 = vadd.f32 %v4586, %v4732
        %v4871 = vadd.f32 %v4587, %v4737
        %v4872 = vadd.f32 %v4588, %v4742
        %v4873 = vadd.f32 %v4589, %v4747
        %v4874 = vadd.f32 %v4590, %v4752
        %v4875 = vadd.f32 %v4591, %v4757
        %v4876 = vadd.f32 %v4592, %v4762
        %v4877 = vadd.f32 %v4593, %v4767
        %v4878 = vadd.f32 %v4594, %v4772
        %v4879 = vadd.f32 %v4595, %v4777
        %v4880 = vadd.f32 %v4596, %v4782
        %v4881 = vadd.f32 %v4597, %v4787
        %v4882 = vadd.f32 %v4598, %v4792
        %v4883 = vadd.f32 %v4599, %v4797
        %v4884 = vadd.f32 %v4600, %v4802
        %v4885 = vadd.f32 %v4601, %v4807
        %v4886 = vadd.f32 %v4602, %v4812
        %v4887 = vadd.f32 %v4603, %v4817
        %v4888 = vadd.f32 %v4604, %v4822
        %v4889 = vadd.f32 %v4605, %v4827
        %v4890 = vadd.f32 %v4606, %v4832
        %v4891 = vadd.f32 %v4607, %v4837
        %v4892 = vadd.f32 %v4608, %v4842
        %v4893 = vadd.f32 %v4609, %v4847
        %v4894 = vadd.f32 %v4610, %v4852
        %v4895 = vadd.f32 %v4611, %v4857
        %v4896 = vadd.f32 %v4612, %v4862
        %v4897 = vrot.slane %v3304, 2
        %v4898 = vrot.slane %v3305, 2
        %v4899 = vsel %vm1048, %v4897, %v4898
        %v4900 = vrot.slane %v3306, 2
        %v4901 = vsel %vm1048, %v4898, %v4900
        %s4904 = scalar_lea.vmem [#allocation3], 640
        %v4905 = vld [vmem:[%s4904] sm:$0xff]
        %v4906 = vld [vmem:[%s4904 + $0x8] sm:$0xff]
        %v4907 = vld [vmem:[%s4904 + $0x10] sm:$0xff]
        %v4908 = vld [vmem:[%s4904 + $0x18] sm:$0xff]
        %v4909 = vld [vmem:[%s4904 + $0x20] sm:$0xff]
        %v4910 = vld [vmem:[%s4904 + $0x28] sm:$0xff]
        %v4911 = vld [vmem:[%s4904 + $0x30] sm:$0xff]
        %v4912 = vld [vmem:[%s4904 + $0x38] sm:$0xff]
        %v4913 = vld [vmem:[%s4904 + $0x40] sm:$0xff]
        %v4914 = vld [vmem:[%s4904 + $0x48] sm:$0xff]
        %v4915 = vld [vmem:[%s4904 + $0x50] sm:$0xff]
        %v4916 = vld [vmem:[%s4904 + $0x58] sm:$0xff]
        %v4917 = vld [vmem:[%s4904 + $0x60] sm:$0xff]
        %v4918 = vld [vmem:[%s4904 + $0x68] sm:$0xff]
        %v4919 = vld [vmem:[%s4904 + $0x70] sm:$0xff]
        %v4920 = vld [vmem:[%s4904 + $0x78] sm:$0xff]
        %4921 = vmatprep.subr.mxu0 0.0
        %4922 = vmatpush1.msra.mxu0 %v4905
        %4923 = vmatprep.subr.mxu0 0.0
        %4924 = vmatpush1.msra.mxu0 %v4906
        %4925 = vmatprep.subr.mxu0 0.0
        %4926 = vmatpush1.msra.mxu0 %v4907
        %4927 = vmatprep.subr.mxu0 0.0
        %4928 = vmatpush1.msra.mxu0 %v4908
        %4929 = vmatprep.subr.mxu0 0.0
        %4930 = vmatpush1.msra.mxu0 %v4909
        %4931 = vmatprep.subr.mxu0 0.0
        %4932 = vmatpush1.msra.mxu0 %v4910
        %4933 = vmatprep.subr.mxu0 0.0
        %4934 = vmatpush1.msra.mxu0 %v4911
        %4935 = vmatprep.subr.mxu0 0.0
        %4936 = vmatpush1.msra.mxu0 %v4912
        %4937 = vmatprep.subr.mxu0 0.0
        %4938 = vmatpush1.msra.mxu0 %v4913
        %4939 = vmatprep.subr.mxu0 0.0
        %4940 = vmatpush1.msra.mxu0 %v4914
        %4941 = vmatprep.subr.mxu0 0.0
        %4942 = vmatpush1.msra.mxu0 %v4915
        %4943 = vmatprep.subr.mxu0 0.0
        %4944 = vmatpush1.msra.mxu0 %v4916
        %4945 = vmatprep.subr.mxu0 0.0
        %4946 = vmatpush1.msra.mxu0 %v4917
        %4947 = vmatprep.subr.mxu0 0.0
        %4948 = vmatpush1.msra.mxu0 %v4918
        %4949 = vmatprep.subr.mxu0 0.0
        %4950 = vmatpush1.msra.mxu0 %v4919
        %4951 = vmatprep.subr.mxu0 0.0
        %4952 = vmatpush1.msra.mxu0 %v4920
        %4953 = vmatprep.subr.mxu0 0.0
        %4954 = vmatpush1.msra.mxu0 0.0
        %4955 = vmatprep.subr.mxu0 0.0
        %4956 = vmatpush1.msra.mxu0 0.0
        %4957 = vmatprep.subr.mxu0 0.0
        %4958 = vmatpush1.msra.mxu0 0.0
        %4959 = vmatprep.subr.mxu0 0.0
        %4960 = vmatpush1.msra.mxu0 0.0
        %4961 = vmatprep.subr.mxu0 0.0
        %4962 = vmatpush1.msra.mxu0 0.0
        %4963 = vmatprep.subr.mxu0 0.0
        %4964 = vmatpush1.msra.mxu0 0.0
        %4965 = vmatprep.subr.mxu0 0.0
        %4966 = vmatpush1.msra.mxu0 0.0
        %4967 = vmatprep.subr.mxu0 0.0
        %4968 = vmatpush1.msra.mxu0 0.0
        %4969 = vmatprep.subr.mxu0 0.0
        %4970 = vmatpush1.msra.mxu0 0.0
        %4971 = vmatprep.subr.mxu0 0.0
        %4972 = vmatpush1.msra.mxu0 0.0
        %4973 = vmatprep.subr.mxu0 0.0
        %4974 = vmatpush1.msra.mxu0 0.0
        %4975 = vmatprep.subr.mxu0 0.0
        %4976 = vmatpush1.msra.mxu0 0.0
        %4977 = vmatprep.subr.mxu0 0.0
        %4978 = vmatpush1.msra.mxu0 0.0
        %4979 = vmatprep.subr.mxu0 0.0
        %4980 = vmatpush1.msra.mxu0 0.0
        %4981 = vmatprep.subr.mxu0 0.0
        %4982 = vmatpush1.msra.mxu0 0.0
        %4983 = vmatprep.subr.mxu0 0.0
        %4984 = vmatpush1.msra.mxu0 0.0
        %4985 = vmatprep.mubr.f32.mxu0 0.0
        %4986 = vmatmul.mubr.f32.gmra.mrb[0].mxu0 %v3960
        %v4987 = vpop.f32.mrb[0].mxu0
        %v4988 = vadd.f32 0.0, %v4987
        %v4989 = vpop.f32.mrb[0].mxu0
        %4990 = vmatprep.mubr.f32.mxu0 0.0
        %4991 = vmatmul.mubr.f32.gmra.mrb[0].mxu0 %v3962
        %v4992 = vpop.f32.mrb[0].mxu0
        %v4993 = vadd.f32 0.0, %v4992
        %v4994 = vpop.f32.mrb[0].mxu0
        %4995 = vmatprep.mubr.f32.mxu0 0.0
        %4996 = vmatmul.mubr.f32.gmra.mrb[0].mxu0 %v3965
        %v4997 = vpop.f32.mrb[0].mxu0
        %v4998 = vadd.f32 0.0, %v4997
        %v4999 = vpop.f32.mrb[0].mxu0
        %5000 = vmatprep.mubr.f32.mxu0 0.0
        %5001 = vmatmul.mubr.f32.gmra.mrb[0].mxu0 %v3967
        %v5002 = vpop.f32.mrb[0].mxu0
        %v5003 = vadd.f32 0.0, %v5002
        %v5004 = vpop.f32.mrb[0].mxu0
        %5005 = vmatprep.mubr.f32.mxu0 0.0
        %5006 = vmatmul.mubr.f32.gmra.mrb[0].mxu0 %v3970
        %v5007 = vpop.f32.mrb[0].mxu0
        %v5008 = vadd.f32 0.0, %v5007
        %v5009 = vpop.f32.mrb[0].mxu0
        %5010 = vmatprep.mubr.f32.mxu0 0.0
        %5011 = vmatmul.mubr.f32.gmra.mrb[0].mxu0 %v3972
        %v5012 = vpop.f32.mrb[0].mxu0
        %v5013 = vadd.f32 0.0, %v5012
        %v5014 = vpop.f32.mrb[0].mxu0
        %5015 = vmatprep.mubr.f32.mxu0 0.0
        %5016 = vmatmul.mubr.f32.gmra.mrb[0].mxu0 %v3975
        %v5017 = vpop.f32.mrb[0].mxu0
        %v5018 = vadd.f32 0.0, %v5017
        %v5019 = vpop.f32.mrb[0].mxu0
        %5020 = vmatprep.mubr.f32.mxu0 0.0
        %5021 = vmatmul.mubr.f32.gmra.mrb[0].mxu0 %v3977
        %v5022 = vpop.f32.mrb[0].mxu0
        %v5023 = vadd.f32 0.0, %v5022
        %v5024 = vpop.f32.mrb[0].mxu0
        %5025 = vmatprep.mubr.f32.mxu0 0.0
        %5026 = vmatmul.mubr.f32.gmra.mrb[0].mxu0 %v3980
        %v5027 = vpop.f32.mrb[0].mxu0
        %v5028 = vadd.f32 0.0, %v5027
        %v5029 = vpop.f32.mrb[0].mxu0
        %5030 = vmatprep.mubr.f32.mxu0 0.0
        %5031 = vmatmul.mubr.f32.gmra.mrb[0].mxu0 %v3982
        %v5032 = vpop.f32.mrb[0].mxu0
        %v5033 = vadd.f32 0.0, %v5032
        %v5034 = vpop.f32.mrb[0].mxu0
        %5035 = vmatprep.mubr.f32.mxu0 0.0
        %5036 = vmatmul.mubr.f32.gmra.mrb[0].mxu0 %v3985
        %v5037 = vpop.f32.mrb[0].mxu0
        %v5038 = vadd.f32 0.0, %v5037
        %v5039 = vpop.f32.mrb[0].mxu0
        %5040 = vmatprep.mubr.f32.mxu0 0.0
        %5041 = vmatmul.mubr.f32.gmra.mrb[0].mxu0 %v3987
        %v5042 = vpop.f32.mrb[0].mxu0
        %v5043 = vadd.f32 0.0, %v5042
        %v5044 = vpop.f32.mrb[0].mxu0
        %5045 = vmatprep.mubr.f32.mxu0 0.0
        %5046 = vmatmul.mubr.f32.gmra.mrb[0].mxu0 %v3990
        %v5047 = vpop.f32.mrb[0].mxu0
        %v5048 = vadd.f32 0.0, %v5047
        %v5049 = vpop.f32.mrb[0].mxu0
        %5050 = vmatprep.mubr.f32.mxu0 0.0
        %5051 = vmatmul.mubr.f32.gmra.mrb[0].mxu0 %v3992
        %v5052 = vpop.f32.mrb[0].mxu0
        %v5053 = vadd.f32 0.0, %v5052
        %v5054 = vpop.f32.mrb[0].mxu0
        %5055 = vmatprep.mubr.f32.mxu0 0.0
        %5056 = vmatmul.mubr.f32.gmra.mrb[0].mxu0 %v3995
        %v5057 = vpop.f32.mrb[0].mxu0
        %v5058 = vadd.f32 0.0, %v5057
        %v5059 = vpop.f32.mrb[0].mxu0
        %5060 = vmatprep.mubr.f32.mxu0 0.0
        %5061 = vmatmul.mubr.f32.gmra.mrb[0].mxu0 %v3997
        %v5062 = vpop.f32.mrb[0].mxu0
        %v5063 = vadd.f32 0.0, %v5062
        %v5064 = vpop.f32.mrb[0].mxu0
        %5065 = vmatprep.mubr.f32.mxu0 0.0
        %5066 = vmatmul.mubr.f32.gmra.mrb[0].mxu0 %v4000
        %v5067 = vpop.f32.mrb[0].mxu0
        %v5068 = vadd.f32 0.0, %v5067
        %v5069 = vpop.f32.mrb[0].mxu0
        %5070 = vmatprep.mubr.f32.mxu0 0.0
        %5071 = vmatmul.mubr.f32.gmra.mrb[0].mxu0 %v4002
        %v5072 = vpop.f32.mrb[0].mxu0
        %v5073 = vadd.f32 0.0, %v5072
        %v5074 = vpop.f32.mrb[0].mxu0
        %5075 = vmatprep.mubr.f32.mxu0 0.0
        %5076 = vmatmul.mubr.f32.gmra.mrb[0].mxu0 %v4005
        %v5077 = vpop.f32.mrb[0].mxu0
        %v5078 = vadd.f32 0.0, %v5077
        %v5079 = vpop.f32.mrb[0].mxu0
        %5080 = vmatprep.mubr.f32.mxu0 0.0
        %5081 = vmatmul.mubr.f32.gmra.mrb[0].mxu0 %v4007
        %v5082 = vpop.f32.mrb[0].mxu0
        %v5083 = vadd.f32 0.0, %v5082
        %v5084 = vpop.f32.mrb[0].mxu0
        %5085 = vmatprep.mubr.f32.mxu0 0.0
        %5086 = vmatmul.mubr.f32.gmra.mrb[0].mxu0 %v4010
        %v5087 = vpop.f32.mrb[0].mxu0
        %v5088 = vadd.f32 0.0, %v5087
        %v5089 = vpop.f32.mrb[0].mxu0
        %5090 = vmatprep.mubr.f32.mxu0 0.0
        %5091 = vmatmul.mubr.f32.gmra.mrb[0].mxu0 %v4012
        %v5092 = vpop.f32.mrb[0].mxu0
        %v5093 = vadd.f32 0.0, %v5092
        %v5094 = vpop.f32.mrb[0].mxu0
        %5095 = vmatprep.mubr.f32.mxu0 0.0
        %5096 = vmatmul.mubr.f32.gmra.mrb[0].mxu0 %v4015
        %v5097 = vpop.f32.mrb[0].mxu0
        %v5098 = vadd.f32 0.0, %v5097
        %v5099 = vpop.f32.mrb[0].mxu0
        %5100 = vmatprep.mubr.f32.mxu0 0.0
        %5101 = vmatmul.mubr.f32.gmra.mrb[0].mxu0 %v4017
        %v5102 = vpop.f32.mrb[0].mxu0
        %v5103 = vadd.f32 0.0, %v5102
        %v5104 = vpop.f32.mrb[0].mxu0
        %5105 = vmatprep.mubr.f32.mxu0 0.0
        %5106 = vmatmul.mubr.f32.gmra.mrb[0].mxu0 %v4020
        %v5107 = vpop.f32.mrb[0].mxu0
        %v5108 = vadd.f32 0.0, %v5107
        %v5109 = vpop.f32.mrb[0].mxu0
        %5110 = vmatprep.mubr.f32.mxu0 0.0
        %5111 = vmatmul.mubr.f32.gmra.mrb[0].mxu0 %v4022
        %v5112 = vpop.f32.mrb[0].mxu0
        %v5113 = vadd.f32 0.0, %v5112
        %v5114 = vpop.f32.mrb[0].mxu0
        %5115 = vmatprep.mubr.f32.mxu0 0.0
        %5116 = vmatmul.mubr.f32.gmra.mrb[0].mxu0 %v4025
        %v5117 = vpop.f32.mrb[0].mxu0
        %v5118 = vadd.f32 0.0, %v5117
        %v5119 = vpop.f32.mrb[0].mxu0
        %5120 = vmatprep.mubr.f32.mxu0 0.0
        %5121 = vmatmul.mubr.f32.gmra.mrb[0].mxu0 %v4027
        %v5122 = vpop.f32.mrb[0].mxu0
        %v5123 = vadd.f32 0.0, %v5122
        %v5124 = vpop.f32.mrb[0].mxu0
        %5125 = vmatprep.mubr.f32.mxu0 0.0
        %5126 = vmatmul.mubr.f32.gmra.mrb[0].mxu0 %v4030
        %v5127 = vpop.f32.mrb[0].mxu0
        %v5128 = vadd.f32 0.0, %v5127
        %v5129 = vpop.f32.mrb[0].mxu0
        %5130 = vmatprep.mubr.f32.mxu0 0.0
        %5131 = vmatmul.mubr.f32.gmra.mrb[0].mxu0 %v4032
        %v5132 = vpop.f32.mrb[0].mxu0
        %v5133 = vadd.f32 0.0, %v5132
        %v5134 = vpop.f32.mrb[0].mxu0
        %5135 = vmatprep.mubr.f32.mxu0 0.0
        %5136 = vmatmul.mubr.f32.gmra.mrb[0].mxu0 %v4899
        %v5137 = vpop.f32.mrb[0].mxu0
        %v5138 = vadd.f32 0.0, %v5137
        %v5139 = vpop.f32.mrb[0].mxu0
        %5140 = vmatprep.mubr.f32.mxu0 0.0
        %5141 = vmatmul.mubr.f32.gmra.mrb[0].mxu0 %v4901
        %v5142 = vpop.f32.mrb[0].mxu0
        %v5143 = vadd.f32 0.0, %v5142
        %v5144 = vpop.f32.mrb[0].mxu0
        %5145 = vdwg.mxu0
        %v5146 = vadd.f32 %v4865, %v4988
        %v5147 = vadd.f32 %v4866, %v4993
        %v5148 = vadd.f32 %v4867, %v4998
        %v5149 = vadd.f32 %v4868, %v5003
        %v5150 = vadd.f32 %v4869, %v5008
        %v5151 = vadd.f32 %v4870, %v5013
        %v5152 = vadd.f32 %v4871, %v5018
        %v5153 = vadd.f32 %v4872, %v5023
        %v5154 = vadd.f32 %v4873, %v5028
        %v5155 = vadd.f32 %v4874, %v5033
        %v5156 = vadd.f32 %v4875, %v5038
        %v5157 = vadd.f32 %v4876, %v5043
        %v5158 = vadd.f32 %v4877, %v5048
        %v5159 = vadd.f32 %v4878, %v5053
        %v5160 = vadd.f32 %v4879, %v5058
        %v5161 = vadd.f32 %v4880, %v5063
        %v5162 = vadd.f32 %v4881, %v5068
        %v5163 = vadd.f32 %v4882, %v5073
        %v5164 = vadd.f32 %v4883, %v5078
        %v5165 = vadd.f32 %v4884, %v5083
        %v5166 = vadd.f32 %v4885, %v5088
        %v5167 = vadd.f32 %v4886, %v5093
        %v5168 = vadd.f32 %v4887, %v5098
        %v5169 = vadd.f32 %v4888, %v5103
        %v5170 = vadd.f32 %v4889, %v5108
        %v5171 = vadd.f32 %v4890, %v5113
        %v5172 = vadd.f32 %v4891, %v5118
        %v5173 = vadd.f32 %v4892, %v5123
        %v5174 = vadd.f32 %v4893, %v5128
        %v5175 = vadd.f32 %v4894, %v5133
        %v5176 = vadd.f32 %v4895, %v5138
        %v5177 = vadd.f32 %v4896, %v5143
        %s5178 = scalar_lea.vmem [#allocation3], 768
        %v5179 = vld [vmem:[%s5178] sm:$0xff]
        %v5180 = vld [vmem:[%s5178 + $0x8] sm:$0xff]
        %v5181 = vld [vmem:[%s5178 + $0x10] sm:$0xff]
        %v5182 = vld [vmem:[%s5178 + $0x18] sm:$0xff]
        %v5183 = vld [vmem:[%s5178 + $0x20] sm:$0xff]
        %v5184 = vld [vmem:[%s5178 + $0x28] sm:$0xff]
        %v5185 = vld [vmem:[%s5178 + $0x30] sm:$0xff]
        %v5186 = vld [vmem:[%s5178 + $0x38] sm:$0xff]
        %v5187 = vld [vmem:[%s5178 + $0x40] sm:$0xff]
        %v5188 = vld [vmem:[%s5178 + $0x48] sm:$0xff]
        %v5189 = vld [vmem:[%s5178 + $0x50] sm:$0xff]
        %v5190 = vld [vmem:[%s5178 + $0x58] sm:$0xff]
        %v5191 = vld [vmem:[%s5178 + $0x60] sm:$0xff]
        %v5192 = vld [vmem:[%s5178 + $0x68] sm:$0xff]
        %v5193 = vld [vmem:[%s5178 + $0x70] sm:$0xff]
        %v5194 = vld [vmem:[%s5178 + $0x78] sm:$0xff]
        %5195 = vmatprep.subr.mxu0 0.0
        %5196 = vmatpush1.msra.mxu0 %v5179
        %5197 = vmatprep.subr.mxu0 0.0
        %5198 = vmatpush1.msra.mxu0 %v5180
        %5199 = vmatprep.subr.mxu0 0.0
        %5200 = vmatpush1.msra.mxu0 %v5181
        %5201 = vmatprep.subr.mxu0 0.0
        %5202 = vmatpush1.msra.mxu0 %v5182
        %5203 = vmatprep.subr.mxu0 0.0
        %5204 = vmatpush1.msra.mxu0 %v5183
        %5205 = vmatprep.subr.mxu0 0.0
        %5206 = vmatpush1.msra.mxu0 %v5184
        %5207 = vmatprep.subr.mxu0 0.0
        %5208 = vmatpush1.msra.mxu0 %v5185
        %5209 = vmatprep.subr.mxu0 0.0
        %5210 = vmatpush1.msra.mxu0 %v5186
        %5211 = vmatprep.subr.mxu0 0.0
        %5212 = vmatpush1.msra.mxu0 %v5187
        %5213 = vmatprep.subr.mxu0 0.0
        %5214 = vmatpush1.msra.mxu0 %v5188
        %5215 = vmatprep.subr.mxu0 0.0
        %5216 = vmatpush1.msra.mxu0 %v5189
        %5217 = vmatprep.subr.mxu0 0.0
        %5218 = vmatpush1.msra.mxu0 %v5190
        %5219 = vmatprep.subr.mxu0 0.0
        %5220 = vmatpush1.msra.mxu0 %v5191
        %5221 = vmatprep.subr.mxu0 0.0
        %5222 = vmatpush1.msra.mxu0 %v5192
        %5223 = vmatprep.subr.mxu0 0.0
        %5224 = vmatpush1.msra.mxu0 %v5193
        %5225 = vmatprep.subr.mxu0 0.0
        %5226 = vmatpush1.msra.mxu0 %v5194
        %5227 = vmatprep.subr.mxu0 0.0
        %5228 = vmatpush1.msra.mxu0 0.0
        %5229 = vmatprep.subr.mxu0 0.0
        %5230 = vmatpush1.msra.mxu0 0.0
        %5231 = vmatprep.subr.mxu0 0.0
        %5232 = vmatpush1.msra.mxu0 0.0
        %5233 = vmatprep.subr.mxu0 0.0
        %5234 = vmatpush1.msra.mxu0 0.0
        %5235 = vmatprep.subr.mxu0 0.0
        %5236 = vmatpush1.msra.mxu0 0.0
        %5237 = vmatprep.subr.mxu0 0.0
        %5238 = vmatpush1.msra.mxu0 0.0
        %5239 = vmatprep.subr.mxu0 0.0
        %5240 = vmatpush1.msra.mxu0 0.0
        %5241 = vmatprep.subr.mxu0 0.0
        %5242 = vmatpush1.msra.mxu0 0.0
        %5243 = vmatprep.subr.mxu0 0.0
        %5244 = vmatpush1.msra.mxu0 0.0
        %5245 = vmatprep.subr.mxu0 0.0
        %5246 = vmatpush1.msra.mxu0 0.0
        %5247 = vmatprep.subr.mxu0 0.0
        %5248 = vmatpush1.msra.mxu0 0.0
        %5249 = vmatprep.subr.mxu0 0.0
        %5250 = vmatpush1.msra.mxu0 0.0
        %5251 = vmatprep.subr.mxu0 0.0
        %5252 = vmatpush1.msra.mxu0 0.0
        %5253 = vmatprep.subr.mxu0 0.0
        %5254 = vmatpush1.msra.mxu0 0.0
        %5255 = vmatprep.subr.mxu0 0.0
        %5256 = vmatpush1.msra.mxu0 0.0
        %5257 = vmatprep.subr.mxu0 0.0
        %5258 = vmatpush1.msra.mxu0 0.0
        %5259 = vmatprep.mubr.f32.mxu0 0.0
        %5260 = vmatmul.mubr.f32.gmra.mrb[0].mxu0 %v3262
        %v5261 = vpop.f32.mrb[0].mxu0
        %v5262 = vadd.f32 0.0, %v5261
        %v5263 = vpop.f32.mrb[0].mxu0
        %5264 = vmatprep.mubr.f32.mxu0 0.0
        %5265 = vmatmul.mubr.f32.gmra.mrb[0].mxu0 %v3263
        %v5266 = vpop.f32.mrb[0].mxu0
        %v5267 = vadd.f32 0.0, %v5266
        %v5268 = vpop.f32.mrb[0].mxu0
        %5269 = vmatprep.mubr.f32.mxu0 0.0
        %5270 = vmatmul.mubr.f32.gmra.mrb[0].mxu0 %v3265
        %v5271 = vpop.f32.mrb[0].mxu0
        %v5272 = vadd.f32 0.0, %v5271
        %v5273 = vpop.f32.mrb[0].mxu0
        %5274 = vmatprep.mubr.f32.mxu0 0.0
        %5275 = vmatmul.mubr.f32.gmra.mrb[0].mxu0 %v3266
        %v5276 = vpop.f32.mrb[0].mxu0
        %v5277 = vadd.f32 0.0, %v5276
        %v5278 = vpop.f32.mrb[0].mxu0
        %5279 = vmatprep.mubr.f32.mxu0 0.0
        %5280 = vmatmul.mubr.f32.gmra.mrb[0].mxu0 %v3268
        %v5281 = vpop.f32.mrb[0].mxu0
        %v5282 = vadd.f32 0.0, %v5281
        %v5283 = vpop.f32.mrb[0].mxu0
        %5284 = vmatprep.mubr.f32.mxu0 0.0
        %5285 = vmatmul.mubr.f32.gmra.mrb[0].mxu0 %v3269
        %v5286 = vpop.f32.mrb[0].mxu0
        %v5287 = vadd.f32 0.0, %v5286
        %v5288 = vpop.f32.mrb[0].mxu0
        %5289 = vmatprep.mubr.f32.mxu0 0.0
        %5290 = vmatmul.mubr.f32.gmra.mrb[0].mxu0 %v3271
        %v5291 = vpop.f32.mrb[0].mxu0
        %v5292 = vadd.f32 0.0, %v5291
        %v5293 = vpop.f32.mrb[0].mxu0
        %5294 = vmatprep.mubr.f32.mxu0 0.0
        %5295 = vmatmul.mubr.f32.gmra.mrb[0].mxu0 %v3272
        %v5296 = vpop.f32.mrb[0].mxu0
        %v5297 = vadd.f32 0.0, %v5296
        %v5298 = vpop.f32.mrb[0].mxu0
        %5299 = vmatprep.mubr.f32.mxu0 0.0
        %5300 = vmatmul.mubr.f32.gmra.mrb[0].mxu0 %v3274
        %v5301 = vpop.f32.mrb[0].mxu0
        %v5302 = vadd.f32 0.0, %v5301
        %v5303 = vpop.f32.mrb[0].mxu0
        %5304 = vmatprep.mubr.f32.mxu0 0.0
        %5305 = vmatmul.mubr.f32.gmra.mrb[0].mxu0 %v3275
        %v5306 = vpop.f32.mrb[0].mxu0
        %v5307 = vadd.f32 0.0, %v5306
        %v5308 = vpop.f32.mrb[0].mxu0
        %5309 = vmatprep.mubr.f32.mxu0 0.0
        %5310 = vmatmul.mubr.f32.gmra.mrb[0].mxu0 %v3277
        %v5311 = vpop.f32.mrb[0].mxu0
        %v5312 = vadd.f32 0.0, %v5311
        %v5313 = vpop.f32.mrb[0].mxu0
        %5314 = vmatprep.mubr.f32.mxu0 0.0
        %5315 = vmatmul.mubr.f32.gmra.mrb[0].mxu0 %v3278
        %v5316 = vpop.f32.mrb[0].mxu0
        %v5317 = vadd.f32 0.0, %v5316
        %v5318 = vpop.f32.mrb[0].mxu0
        %5319 = vmatprep.mubr.f32.mxu0 0.0
        %5320 = vmatmul.mubr.f32.gmra.mrb[0].mxu0 %v3280
        %v5321 = vpop.f32.mrb[0].mxu0
        %v5322 = vadd.f32 0.0, %v5321
        %v5323 = vpop.f32.mrb[0].mxu0
        %5324 = vmatprep.mubr.f32.mxu0 0.0
        %5325 = vmatmul.mubr.f32.gmra.mrb[0].mxu0 %v3281
        %v5326 = vpop.f32.mrb[0].mxu0
        %v5327 = vadd.f32 0.0, %v5326
        %v5328 = vpop.f32.mrb[0].mxu0
        %5329 = vmatprep.mubr.f32.mxu0 0.0
        %5330 = vmatmul.mubr.f32.gmra.mrb[0].mxu0 %v3283
        %v5331 = vpop.f32.mrb[0].mxu0
        %v5332 = vadd.f32 0.0, %v5331
        %v5333 = vpop.f32.mrb[0].mxu0
        %5334 = vmatprep.mubr.f32.mxu0 0.0
        %5335 = vmatmul.mubr.f32.gmra.mrb[0].mxu0 %v3284
        %v5336 = vpop.f32.mrb[0].mxu0
        %v5337 = vadd.f32 0.0, %v5336
        %v5338 = vpop.f32.mrb[0].mxu0
        %5339 = vmatprep.mubr.f32.mxu0 0.0
        %5340 = vmatmul.mubr.f32.gmra.mrb[0].mxu0 %v3286
        %v5341 = vpop.f32.mrb[0].mxu0
        %v5342 = vadd.f32 0.0, %v5341
        %v5343 = vpop.f32.mrb[0].mxu0
        %5344 = vmatprep.mubr.f32.mxu0 0.0
        %5345 = vmatmul.mubr.f32.gmra.mrb[0].mxu0 %v3287
        %v5346 = vpop.f32.mrb[0].mxu0
        %v5347 = vadd.f32 0.0, %v5346
        %v5348 = vpop.f32.mrb[0].mxu0
        %5349 = vmatprep.mubr.f32.mxu0 0.0
        %5350 = vmatmul.mubr.f32.gmra.mrb[0].mxu0 %v3289
        %v5351 = vpop.f32.mrb[0].mxu0
        %v5352 = vadd.f32 0.0, %v5351
        %v5353 = vpop.f32.mrb[0].mxu0
        %5354 = vmatprep.mubr.f32.mxu0 0.0
        %5355 = vmatmul.mubr.f32.gmra.mrb[0].mxu0 %v3290
        %v5356 = vpop.f32.mrb[0].mxu0
        %v5357 = vadd.f32 0.0, %v5356
        %v5358 = vpop.f32.mrb[0].mxu0
        %5359 = vmatprep.mubr.f32.mxu0 0.0
        %5360 = vmatmul.mubr.f32.gmra.mrb[0].mxu0 %v3292
        %v5361 = vpop.f32.mrb[0].mxu0
        %v5362 = vadd.f32 0.0, %v5361
        %v5363 = vpop.f32.mrb[0].mxu0
        %5364 = vmatprep.mubr.f32.mxu0 0.0
        %5365 = vmatmul.mubr.f32.gmra.mrb[0].mxu0 %v3293
        %v5366 = vpop.f32.mrb[0].mxu0
        %v5367 = vadd.f32 0.0, %v5366
        %v5368 = vpop.f32.mrb[0].mxu0
        %5369 = vmatprep.mubr.f32.mxu0 0.0
        %5370 = vmatmul.mubr.f32.gmra.mrb[0].mxu0 %v3295
        %v5371 = vpop.f32.mrb[0].mxu0
        %v5372 = vadd.f32 0.0, %v5371
        %v5373 = vpop.f32.mrb[0].mxu0
        %5374 = vmatprep.mubr.f32.mxu0 0.0
        %5375 = vmatmul.mubr.f32.gmra.mrb[0].mxu0 %v3296
        %v5376 = vpop.f32.mrb[0].mxu0
        %v5377 = vadd.f32 0.0, %v5376
        %v5378 = vpop.f32.mrb[0].mxu0
        %5379 = vmatprep.mubr.f32.mxu0 0.0
        %5380 = vmatmul.mubr.f32.gmra.mrb[0].mxu0 %v3298
        %v5381 = vpop.f32.mrb[0].mxu0
        %v5382 = vadd.f32 0.0, %v5381
        %v5383 = vpop.f32.mrb[0].mxu0
        %5384 = vmatprep.mubr.f32.mxu0 0.0
        %5385 = vmatmul.mubr.f32.gmra.mrb[0].mxu0 %v3299
        %v5386 = vpop.f32.mrb[0].mxu0
        %v5387 = vadd.f32 0.0, %v5386
        %v5388 = vpop.f32.mrb[0].mxu0
        %5389 = vmatprep.mubr.f32.mxu0 0.0
        %5390 = vmatmul.mubr.f32.gmra.mrb[0].mxu0 %v3301
        %v5391 = vpop.f32.mrb[0].mxu0
        %v5392 = vadd.f32 0.0, %v5391
        %v5393 = vpop.f32.mrb[0].mxu0
        %5394 = vmatprep.mubr.f32.mxu0 0.0
        %5395 = vmatmul.mubr.f32.gmra.mrb[0].mxu0 %v3302
        %v5396 = vpop.f32.mrb[0].mxu0
        %v5397 = vadd.f32 0.0, %v5396
        %v5398 = vpop.f32.mrb[0].mxu0
        %5399 = vmatprep.mubr.f32.mxu0 0.0
        %5400 = vmatmul.mubr.f32.gmra.mrb[0].mxu0 %v3304
        %v5401 = vpop.f32.mrb[0].mxu0
        %v5402 = vadd.f32 0.0, %v5401
        %v5403 = vpop.f32.mrb[0].mxu0
        %5404 = vmatprep.mubr.f32.mxu0 0.0
        %5405 = vmatmul.mubr.f32.gmra.mrb[0].mxu0 %v3305
        %v5406 = vpop.f32.mrb[0].mxu0
        %v5407 = vadd.f32 0.0, %v5406
        %v5408 = vpop.f32.mrb[0].mxu0
        %5409 = vmatprep.mubr.f32.mxu0 0.0
        %5410 = vmatmul.mubr.f32.gmra.mrb[0].mxu0 %v3307
        %v5411 = vpop.f32.mrb[0].mxu0
        %v5412 = vadd.f32 0.0, %v5411
        %v5413 = vpop.f32.mrb[0].mxu0
        %5414 = vmatprep.mubr.f32.mxu0 0.0
        %5415 = vmatmul.mubr.f32.gmra.mrb[0].mxu0 %v3308
        %v5416 = vpop.f32.mrb[0].mxu0
        %v5417 = vadd.f32 0.0, %v5416
        %v5418 = vpop.f32.mrb[0].mxu0
        %5419 = vdwg.mxu0
        %v5420 = vadd.f32 %v5146, %v5262
        %v5421 = vadd.f32 %v5147, %v5267
        %v5422 = vadd.f32 %v5148, %v5272
        %v5423 = vadd.f32 %v5149, %v5277
        %v5424 = vadd.f32 %v5150, %v5282
        %v5425 = vadd.f32 %v5151, %v5287
        %v5426 = vadd.f32 %v5152, %v5292
        %v5427 = vadd.f32 %v5153, %v5297
        %v5428 = vadd.f32 %v5154, %v5302
        %v5429 = vadd.f32 %v5155, %v5307
        %v5430 = vadd.f32 %v5156, %v5312
        %v5431 = vadd.f32 %v5157, %v5317
        %v5432 = vadd.f32 %v5158, %v5322
        %v5433 = vadd.f32 %v5159, %v5327
        %v5434 = vadd.f32 %v5160, %v5332
        %v5435 = vadd.f32 %v5161, %v5337
        %v5436 = vadd.f32 %v5162, %v5342
        %v5437 = vadd.f32 %v5163, %v5347
        %v5438 = vadd.f32 %v5164, %v5352
        %v5439 = vadd.f32 %v5165, %v5357
        %v5440 = vadd.f32 %v5166, %v5362
        %v5441 = vadd.f32 %v5167, %v5367
        %v5442 = vadd.f32 %v5168, %v5372
        %v5443 = vadd.f32 %v5169, %v5377
        %v5444 = vadd.f32 %v5170, %v5382
        %v5445 = vadd.f32 %v5171, %v5387
        %v5446 = vadd.f32 %v5172, %v5392
        %v5447 = vadd.f32 %v5173, %v5397
        %v5448 = vadd.f32 %v5174, %v5402
        %v5449 = vadd.f32 %v5175, %v5407
        %v5450 = vadd.f32 %v5176, %v5412
        %v5451 = vadd.f32 %v5177, %v5417
        %v5455 = vrot.slane %v3307, 1
        %v5456 = vrot.slane %v3308, 1
        %v5457 = vsel %vm468, %v5455, %v5456
        %v5458 = vrot.slane %v3309, 1
        %v5459 = vsel %vm468, %v5456, %v5458
        %s5462 = scalar_lea.vmem [#allocation3], 896
        %v5463 = vld [vmem:[%s5462] sm:$0xff]
        %v5464 = vld [vmem:[%s5462 + $0x8] sm:$0xff]
        %v5465 = vld [vmem:[%s5462 + $0x10] sm:$0xff]
        %v5466 = vld [vmem:[%s5462 + $0x18] sm:$0xff]
        %v5467 = vld [vmem:[%s5462 + $0x20] sm:$0xff]
        %v5468 = vld [vmem:[%s5462 + $0x28] sm:$0xff]
        %v5469 = vld [vmem:[%s5462 + $0x30] sm:$0xff]
        %v5470 = vld [vmem:[%s5462 + $0x38] sm:$0xff]
        %v5471 = vld [vmem:[%s5462 + $0x40] sm:$0xff]
        %v5472 = vld [vmem:[%s5462 + $0x48] sm:$0xff]
        %v5473 = vld [vmem:[%s5462 + $0x50] sm:$0xff]
        %v5474 = vld [vmem:[%s5462 + $0x58] sm:$0xff]
        %v5475 = vld [vmem:[%s5462 + $0x60] sm:$0xff]
        %v5476 = vld [vmem:[%s5462 + $0x68] sm:$0xff]
        %v5477 = vld [vmem:[%s5462 + $0x70] sm:$0xff]
        %v5478 = vld [vmem:[%s5462 + $0x78] sm:$0xff]
        %5479 = vmatprep.subr.mxu0 0.0
        %5480 = vmatpush1.msra.mxu0 %v5463
        %5481 = vmatprep.subr.mxu0 0.0
        %5482 = vmatpush1.msra.mxu0 %v5464
        %5483 = vmatprep.subr.mxu0 0.0
        %5484 = vmatpush1.msra.mxu0 %v5465
        %5485 = vmatprep.subr.mxu0 0.0
        %5486 = vmatpush1.msra.mxu0 %v5466
        %5487 = vmatprep.subr.mxu0 0.0
        %5488 = vmatpush1.msra.mxu0 %v5467
        %5489 = vmatprep.subr.mxu0 0.0
        %5490 = vmatpush1.msra.mxu0 %v5468
        %5491 = vmatprep.subr.mxu0 0.0
        %5492 = vmatpush1.msra.mxu0 %v5469
        %5493 = vmatprep.subr.mxu0 0.0
        %5494 = vmatpush1.msra.mxu0 %v5470
        %5495 = vmatprep.subr.mxu0 0.0
        %5496 = vmatpush1.msra.mxu0 %v5471
        %5497 = vmatprep.subr.mxu0 0.0
        %5498 = vmatpush1.msra.mxu0 %v5472
        %5499 = vmatprep.subr.mxu0 0.0
        %5500 = vmatpush1.msra.mxu0 %v5473
        %5501 = vmatprep.subr.mxu0 0.0
        %5502 = vmatpush1.msra.mxu0 %v5474
        %5503 = vmatprep.subr.mxu0 0.0
        %5504 = vmatpush1.msra.mxu0 %v5475
        %5505 = vmatprep.subr.mxu0 0.0
        %5506 = vmatpush1.msra.mxu0 %v5476
        %5507 = vmatprep.subr.mxu0 0.0
        %5508 = vmatpush1.msra.mxu0 %v5477
        %5509 = vmatprep.subr.mxu0 0.0
        %5510 = vmatpush1.msra.mxu0 %v5478
        %5511 = vmatprep.subr.mxu0 0.0
        %5512 = vmatpush1.msra.mxu0 0.0
        %5513 = vmatprep.subr.mxu0 0.0
        %5514 = vmatpush1.msra.mxu0 0.0
        %5515 = vmatprep.subr.mxu0 0.0
        %5516 = vmatpush1.msra.mxu0 0.0
        %5517 = vmatprep.subr.mxu0 0.0
        %5518 = vmatpush1.msra.mxu0 0.0
        %5519 = vmatprep.subr.mxu0 0.0
        %5520 = vmatpush1.msra.mxu0 0.0
        %5521 = vmatprep.subr.mxu0 0.0
        %5522 = vmatpush1.msra.mxu0 0.0
        %5523 = vmatprep.subr.mxu0 0.0
        %5524 = vmatpush1.msra.mxu0 0.0
        %5525 = vmatprep.subr.mxu0 0.0
        %5526 = vmatpush1.msra.mxu0 0.0
        %5527 = vmatprep.subr.mxu0 0.0
        %5528 = vmatpush1.msra.mxu0 0.0
        %5529 = vmatprep.subr.mxu0 0.0
        %5530 = vmatpush1.msra.mxu0 0.0
        %5531 = vmatprep.subr.mxu0 0.0
        %5532 = vmatpush1.msra.mxu0 0.0
        %5533 = vmatprep.subr.mxu0 0.0
        %5534 = vmatpush1.msra.mxu0 0.0
        %5535 = vmatprep.subr.mxu0 0.0
        %5536 = vmatpush1.msra.mxu0 0.0
        %5537 = vmatprep.subr.mxu0 0.0
        %5538 = vmatpush1.msra.mxu0 0.0
        %5539 = vmatprep.subr.mxu0 0.0
        %5540 = vmatpush1.msra.mxu0 0.0
        %5541 = vmatprep.subr.mxu0 0.0
        %5542 = vmatpush1.msra.mxu0 0.0
        %5543 = vmatprep.mubr.f32.mxu0 0.0
        %5544 = vmatmul.mubr.f32.gmra.mrb[0].mxu0 %v3386
        %v5545 = vpop.f32.mrb[0].mxu0
        %v5546 = vadd.f32 0.0, %v5545
        %v5547 = vpop.f32.mrb[0].mxu0
        %5548 = vmatprep.mubr.f32.mxu0 0.0
        %5549 = vmatmul.mubr.f32.gmra.mrb[0].mxu0 %v3388
        %v5550 = vpop.f32.mrb[0].mxu0
        %v5551 = vadd.f32 0.0, %v5550
        %v5552 = vpop.f32.mrb[0].mxu0
        %5553 = vmatprep.mubr.f32.mxu0 0.0
        %5554 = vmatmul.mubr.f32.gmra.mrb[0].mxu0 %v3391
        %v5555 = vpop.f32.mrb[0].mxu0
        %v5556 = vadd.f32 0.0, %v5555
        %v5557 = vpop.f32.mrb[0].mxu0
        %5558 = vmatprep.mubr.f32.mxu0 0.0
        %5559 = vmatmul.mubr.f32.gmra.mrb[0].mxu0 %v3393
        %v5560 = vpop.f32.mrb[0].mxu0
        %v5561 = vadd.f32 0.0, %v5560
        %v5562 = vpop.f32.mrb[0].mxu0
        %5563 = vmatprep.mubr.f32.mxu0 0.0
        %5564 = vmatmul.mubr.f32.gmra.mrb[0].mxu0 %v3396
        %v5565 = vpop.f32.mrb[0].mxu0
        %v5566 = vadd.f32 0.0, %v5565
        %v5567 = vpop.f32.mrb[0].mxu0
        %5568 = vmatprep.mubr.f32.mxu0 0.0
        %5569 = vmatmul.mubr.f32.gmra.mrb[0].mxu0 %v3398
        %v5570 = vpop.f32.mrb[0].mxu0
        %v5571 = vadd.f32 0.0, %v5570
        %v5572 = vpop.f32.mrb[0].mxu0
        %5573 = vmatprep.mubr.f32.mxu0 0.0
        %5574 = vmatmul.mubr.f32.gmra.mrb[0].mxu0 %v3401
        %v5575 = vpop.f32.mrb[0].mxu0
        %v5576 = vadd.f32 0.0, %v5575
        %v5577 = vpop.f32.mrb[0].mxu0
        %5578 = vmatprep.mubr.f32.mxu0 0.0
        %5579 = vmatmul.mubr.f32.gmra.mrb[0].mxu0 %v3403
        %v5580 = vpop.f32.mrb[0].mxu0
        %v5581 = vadd.f32 0.0, %v5580
        %v5582 = vpop.f32.mrb[0].mxu0
        %5583 = vmatprep.mubr.f32.mxu0 0.0
        %5584 = vmatmul.mubr.f32.gmra.mrb[0].mxu0 %v3406
        %v5585 = vpop.f32.mrb[0].mxu0
        %v5586 = vadd.f32 0.0, %v5585
        %v5587 = vpop.f32.mrb[0].mxu0
        %5588 = vmatprep.mubr.f32.mxu0 0.0
        %5589 = vmatmul.mubr.f32.gmra.mrb[0].mxu0 %v3408
        %v5590 = vpop.f32.mrb[0].mxu0
        %v5591 = vadd.f32 0.0, %v5590
        %v5592 = vpop.f32.mrb[0].mxu0
        %5593 = vmatprep.mubr.f32.mxu0 0.0
        %5594 = vmatmul.mubr.f32.gmra.mrb[0].mxu0 %v3411
        %v5595 = vpop.f32.mrb[0].mxu0
        %v5596 = vadd.f32 0.0, %v5595
        %v5597 = vpop.f32.mrb[0].mxu0
        %5598 = vmatprep.mubr.f32.mxu0 0.0
        %5599 = vmatmul.mubr.f32.gmra.mrb[0].mxu0 %v3413
        %v5600 = vpop.f32.mrb[0].mxu0
        %v5601 = vadd.f32 0.0, %v5600
        %v5602 = vpop.f32.mrb[0].mxu0
        %5603 = vmatprep.mubr.f32.mxu0 0.0
        %5604 = vmatmul.mubr.f32.gmra.mrb[0].mxu0 %v3416
        %v5605 = vpop.f32.mrb[0].mxu0
        %v5606 = vadd.f32 0.0, %v5605
        %v5607 = vpop.f32.mrb[0].mxu0
        %5608 = vmatprep.mubr.f32.mxu0 0.0
        %5609 = vmatmul.mubr.f32.gmra.mrb[0].mxu0 %v3418
        %v5610 = vpop.f32.mrb[0].mxu0
        %v5611 = vadd.f32 0.0, %v5610
        %v5612 = vpop.f32.mrb[0].mxu0
        %5613 = vmatprep.mubr.f32.mxu0 0.0
        %5614 = vmatmul.mubr.f32.gmra.mrb[0].mxu0 %v3421
        %v5615 = vpop.f32.mrb[0].mxu0
        %v5616 = vadd.f32 0.0, %v5615
        %v5617 = vpop.f32.mrb[0].mxu0
        %5618 = vmatprep.mubr.f32.mxu0 0.0
        %5619 = vmatmul.mubr.f32.gmra.mrb[0].mxu0 %v3423
        %v5620 = vpop.f32.mrb[0].mxu0
        %v5621 = vadd.f32 0.0, %v5620
        %v5622 = vpop.f32.mrb[0].mxu0
        %5623 = vmatprep.mubr.f32.mxu0 0.0
        %5624 = vmatmul.mubr.f32.gmra.mrb[0].mxu0 %v3426
        %v5625 = vpop.f32.mrb[0].mxu0
        %v5626 = vadd.f32 0.0, %v5625
        %v5627 = vpop.f32.mrb[0].mxu0
        %5628 = vmatprep.mubr.f32.mxu0 0.0
        %5629 = vmatmul.mubr.f32.gmra.mrb[0].mxu0 %v3428
        %v5630 = vpop.f32.mrb[0].mxu0
        %v5631 = vadd.f32 0.0, %v5630
        %v5632 = vpop.f32.mrb[0].mxu0
        %5633 = vmatprep.mubr.f32.mxu0 0.0
        %5634 = vmatmul.mubr.f32.gmra.mrb[0].mxu0 %v3431
        %v5635 = vpop.f32.mrb[0].mxu0
        %v5636 = vadd.f32 0.0, %v5635
        %v5637 = vpop.f32.mrb[0].mxu0
        %5638 = vmatprep.mubr.f32.mxu0 0.0
        %5639 = vmatmul.mubr.f32.gmra.mrb[0].mxu0 %v3433
        %v5640 = vpop.f32.mrb[0].mxu0
        %v5641 = vadd.f32 0.0, %v5640
        %v5642 = vpop.f32.mrb[0].mxu0
        %5643 = vmatprep.mubr.f32.mxu0 0.0
        %5644 = vmatmul.mubr.f32.gmra.mrb[0].mxu0 %v3436
        %v5645 = vpop.f32.mrb[0].mxu0
        %v5646 = vadd.f32 0.0, %v5645
        %v5647 = vpop.f32.mrb[0].mxu0
        %5648 = vmatprep.mubr.f32.mxu0 0.0
        %5649 = vmatmul.mubr.f32.gmra.mrb[0].mxu0 %v3438
        %v5650 = vpop.f32.mrb[0].mxu0
        %v5651 = vadd.f32 0.0, %v5650
        %v5652 = vpop.f32.mrb[0].mxu0
        %5653 = vmatprep.mubr.f32.mxu0 0.0
        %5654 = vmatmul.mubr.f32.gmra.mrb[0].mxu0 %v3441
        %v5655 = vpop.f32.mrb[0].mxu0
        %v5656 = vadd.f32 0.0, %v5655
        %v5657 = vpop.f32.mrb[0].mxu0
        %5658 = vmatprep.mubr.f32.mxu0 0.0
        %5659 = vmatmul.mubr.f32.gmra.mrb[0].mxu0 %v3443
        %v5660 = vpop.f32.mrb[0].mxu0
        %v5661 = vadd.f32 0.0, %v5660
        %v5662 = vpop.f32.mrb[0].mxu0
        %5663 = vmatprep.mubr.f32.mxu0 0.0
        %5664 = vmatmul.mubr.f32.gmra.mrb[0].mxu0 %v3446
        %v5665 = vpop.f32.mrb[0].mxu0
        %v5666 = vadd.f32 0.0, %v5665
        %v5667 = vpop.f32.mrb[0].mxu0
        %5668 = vmatprep.mubr.f32.mxu0 0.0
        %5669 = vmatmul.mubr.f32.gmra.mrb[0].mxu0 %v3448
        %v5670 = vpop.f32.mrb[0].mxu0
        %v5671 = vadd.f32 0.0, %v5670
        %v5672 = vpop.f32.mrb[0].mxu0
        %5673 = vmatprep.mubr.f32.mxu0 0.0
        %5674 = vmatmul.mubr.f32.gmra.mrb[0].mxu0 %v3451
        %v5675 = vpop.f32.mrb[0].mxu0
        %v5676 = vadd.f32 0.0, %v5675
        %v5677 = vpop.f32.mrb[0].mxu0
        %5678 = vmatprep.mubr.f32.mxu0 0.0
        %5679 = vmatmul.mubr.f32.gmra.mrb[0].mxu0 %v3453
        %v5680 = vpop.f32.mrb[0].mxu0
        %v5681 = vadd.f32 0.0, %v5680
        %v5682 = vpop.f32.mrb[0].mxu0
        %5683 = vmatprep.mubr.f32.mxu0 0.0
        %5684 = vmatmul.mubr.f32.gmra.mrb[0].mxu0 %v4618
        %v5685 = vpop.f32.mrb[0].mxu0
        %v5686 = vadd.f32 0.0, %v5685
        %v5687 = vpop.f32.mrb[0].mxu0
        %5688 = vmatprep.mubr.f32.mxu0 0.0
        %5689 = vmatmul.mubr.f32.gmra.mrb[0].mxu0 %v4620
        %v5690 = vpop.f32.mrb[0].mxu0
        %v5691 = vadd.f32 0.0, %v5690
        %v5692 = vpop.f32.mrb[0].mxu0
        %5693 = vmatprep.mubr.f32.mxu0 0.0
        %5694 = vmatmul.mubr.f32.gmra.mrb[0].mxu0 %v5457
        %v5695 = vpop.f32.mrb[0].mxu0
        %v5696 = vadd.f32 0.0, %v5695
        %v5697 = vpop.f32.mrb[0].mxu0
        %5698 = vmatprep.mubr.f32.mxu0 0.0
        %5699 = vmatmul.mubr.f32.gmra.mrb[0].mxu0 %v5459
        %v5700 = vpop.f32.mrb[0].mxu0
        %v5701 = vadd.f32 0.0, %v5700
        %v5702 = vpop.f32.mrb[0].mxu0
        %5703 = vdwg.mxu0
        %v5704 = vadd.f32 %v5420, %v5546
        %v5705 = vadd.f32 %v5421, %v5551
        %v5706 = vadd.f32 %v5422, %v5556
        %v5707 = vadd.f32 %v5423, %v5561
        %v5708 = vadd.f32 %v5424, %v5566
        %v5709 = vadd.f32 %v5425, %v5571
        %v5710 = vadd.f32 %v5426, %v5576
        %v5711 = vadd.f32 %v5427, %v5581
        %v5712 = vadd.f32 %v5428, %v5586
        %v5713 = vadd.f32 %v5429, %v5591
        %v5714 = vadd.f32 %v5430, %v5596
        %v5715 = vadd.f32 %v5431, %v5601
        %v5716 = vadd.f32 %v5432, %v5606
        %v5717 = vadd.f32 %v5433, %v5611
        %v5718 = vadd.f32 %v5434, %v5616
        %v5719 = vadd.f32 %v5435, %v5621
        %v5720 = vadd.f32 %v5436, %v5626
        %v5721 = vadd.f32 %v5437, %v5631
        %v5722 = vadd.f32 %v5438, %v5636
        %v5723 = vadd.f32 %v5439, %v5641
        %v5724 = vadd.f32 %v5440, %v5646
        %v5725 = vadd.f32 %v5441, %v5651
        %v5726 = vadd.f32 %v5442, %v5656
        %v5727 = vadd.f32 %v5443, %v5661
        %v5728 = vadd.f32 %v5444, %v5666
        %v5729 = vadd.f32 %v5445, %v5671
        %v5730 = vadd.f32 %v5446, %v5676
        %v5731 = vadd.f32 %v5447, %v5681
        %v5732 = vadd.f32 %v5448, %v5686
        %v5733 = vadd.f32 %v5449, %v5691
        %v5734 = vadd.f32 %v5450, %v5696
        %v5735 = vadd.f32 %v5451, %v5701
        %v5736 = vrot.slane %v3307, 2
        %v5737 = vrot.slane %v3308, 2
        %v5738 = vsel %vm1048, %v5736, %v5737
        %v5739 = vrot.slane %v3309, 2
        %v5740 = vsel %vm1048, %v5737, %v5739
        %s5743 = scalar_lea.vmem [#allocation3], 1024
        %v5744 = vld [vmem:[%s5743] sm:$0xff]
        %v5745 = vld [vmem:[%s5743 + $0x8] sm:$0xff]
        %v5746 = vld [vmem:[%s5743 + $0x10] sm:$0xff]
        %v5747 = vld [vmem:[%s5743 + $0x18] sm:$0xff]
        %v5748 = vld [vmem:[%s5743 + $0x20] sm:$0xff]
        %v5749 = vld [vmem:[%s5743 + $0x28] sm:$0xff]
        %v5750 = vld [vmem:[%s5743 + $0x30] sm:$0xff]
        %v5751 = vld [vmem:[%s5743 + $0x38] sm:$0xff]
        %v5752 = vld [vmem:[%s5743 + $0x40] sm:$0xff]
        %v5753 = vld [vmem:[%s5743 + $0x48] sm:$0xff]
        %v5754 = vld [vmem:[%s5743 + $0x50] sm:$0xff]
        %v5755 = vld [vmem:[%s5743 + $0x58] sm:$0xff]
        %v5756 = vld [vmem:[%s5743 + $0x60] sm:$0xff]
        %v5757 = vld [vmem:[%s5743 + $0x68] sm:$0xff]
        %v5758 = vld [vmem:[%s5743 + $0x70] sm:$0xff]
        %v5759 = vld [vmem:[%s5743 + $0x78] sm:$0xff]
        %5760 = vmatprep.subr.mxu0 0.0
        %5761 = vmatpush1.msra.mxu0 %v5744
        %5762 = vmatprep.subr.mxu0 0.0
        %5763 = vmatpush1.msra.mxu0 %v5745
        %5764 = vmatprep.subr.mxu0 0.0
        %5765 = vmatpush1.msra.mxu0 %v5746
        %5766 = vmatprep.subr.mxu0 0.0
        %5767 = vmatpush1.msra.mxu0 %v5747
        %5768 = vmatprep.subr.mxu0 0.0
        %5769 = vmatpush1.msra.mxu0 %v5748
        %5770 = vmatprep.subr.mxu0 0.0
        %5771 = vmatpush1.msra.mxu0 %v5749
        %5772 = vmatprep.subr.mxu0 0.0
        %5773 = vmatpush1.msra.mxu0 %v5750
        %5774 = vmatprep.subr.mxu0 0.0
        %5775 = vmatpush1.msra.mxu0 %v5751
        %5776 = vmatprep.subr.mxu0 0.0
        %5777 = vmatpush1.msra.mxu0 %v5752
        %5778 = vmatprep.subr.mxu0 0.0
        %5779 = vmatpush1.msra.mxu0 %v5753
        %5780 = vmatprep.subr.mxu0 0.0
        %5781 = vmatpush1.msra.mxu0 %v5754
        %5782 = vmatprep.subr.mxu0 0.0
        %5783 = vmatpush1.msra.mxu0 %v5755
        %5784 = vmatprep.subr.mxu0 0.0
        %5785 = vmatpush1.msra.mxu0 %v5756
        %5786 = vmatprep.subr.mxu0 0.0
        %5787 = vmatpush1.msra.mxu0 %v5757
        %5788 = vmatprep.subr.mxu0 0.0
        %5789 = vmatpush1.msra.mxu0 %v5758
        %5790 = vmatprep.subr.mxu0 0.0
        %5791 = vmatpush1.msra.mxu0 %v5759
        %5792 = vmatprep.subr.mxu0 0.0
        %5793 = vmatpush1.msra.mxu0 0.0
        %5794 = vmatprep.subr.mxu0 0.0
        %5795 = vmatpush1.msra.mxu0 0.0
        %5796 = vmatprep.subr.mxu0 0.0
        %5797 = vmatpush1.msra.mxu0 0.0
        %5798 = vmatprep.subr.mxu0 0.0
        %5799 = vmatpush1.msra.mxu0 0.0
        %5800 = vmatprep.subr.mxu0 0.0
        %5801 = vmatpush1.msra.mxu0 0.0
        %5802 = vmatprep.subr.mxu0 0.0
        %5803 = vmatpush1.msra.mxu0 0.0
        %5804 = vmatprep.subr.mxu0 0.0
        %5805 = vmatpush1.msra.mxu0 0.0
        %5806 = vmatprep.subr.mxu0 0.0
        %5807 = vmatpush1.msra.mxu0 0.0
        %5808 = vmatprep.subr.mxu0 0.0
        %5809 = vmatpush1.msra.mxu0 0.0
        %5810 = vmatprep.subr.mxu0 0.0
        %5811 = vmatpush1.msra.mxu0 0.0
        %5812 = vmatprep.subr.mxu0 0.0
        %5813 = vmatpush1.msra.mxu0 0.0
        %5814 = vmatprep.subr.mxu0 0.0
        %5815 = vmatpush1.msra.mxu0 0.0
        %5816 = vmatprep.subr.mxu0 0.0
        %5817 = vmatpush1.msra.mxu0 0.0
        %5818 = vmatprep.subr.mxu0 0.0
        %5819 = vmatpush1.msra.mxu0 0.0
        %5820 = vmatprep.subr.mxu0 0.0
        %5821 = vmatpush1.msra.mxu0 0.0
        %5822 = vmatprep.subr.mxu0 0.0
        %5823 = vmatpush1.msra.mxu0 0.0
        %5824 = vmatprep.mubr.f32.mxu0 0.0
        %5825 = vmatmul.mubr.f32.gmra.mrb[0].mxu0 %v3965
        %v5826 = vpop.f32.mrb[0].mxu0
        %v5827 = vadd.f32 0.0, %v5826
        %v5828 = vpop.f32.mrb[0].mxu0
        %5829 = vmatprep.mubr.f32.mxu0 0.0
        %5830 = vmatmul.mubr.f32.gmra.mrb[0].mxu0 %v3967
        %v5831 = vpop.f32.mrb[0].mxu0
        %v5832 = vadd.f32 0.0, %v5831
        %v5833 = vpop.f32.mrb[0].mxu0
        %5834 = vmatprep.mubr.f32.mxu0 0.0
        %5835 = vmatmul.mubr.f32.gmra.mrb[0].mxu0 %v3970
        %v5836 = vpop.f32.mrb[0].mxu0
        %v5837 = vadd.f32 0.0, %v5836
        %v5838 = vpop.f32.mrb[0].mxu0
        %5839 = vmatprep.mubr.f32.mxu0 0.0
        %5840 = vmatmul.mubr.f32.gmra.mrb[0].mxu0 %v3972
        %v5841 = vpop.f32.mrb[0].mxu0
        %v5842 = vadd.f32 0.0, %v5841
        %v5843 = vpop.f32.mrb[0].mxu0
        %5844 = vmatprep.mubr.f32.mxu0 0.0
        %5845 = vmatmul.mubr.f32.gmra.mrb[0].mxu0 %v3975
        %v5846 = vpop.f32.mrb[0].mxu0
        %v5847 = vadd.f32 0.0, %v5846
        %v5848 = vpop.f32.mrb[0].mxu0
        %5849 = vmatprep.mubr.f32.mxu0 0.0
        %5850 = vmatmul.mubr.f32.gmra.mrb[0].mxu0 %v3977
        %v5851 = vpop.f32.mrb[0].mxu0
        %v5852 = vadd.f32 0.0, %v5851
        %v5853 = vpop.f32.mrb[0].mxu0
        %5854 = vmatprep.mubr.f32.mxu0 0.0
        %5855 = vmatmul.mubr.f32.gmra.mrb[0].mxu0 %v3980
        %v5856 = vpop.f32.mrb[0].mxu0
        %v5857 = vadd.f32 0.0, %v5856
        %v5858 = vpop.f32.mrb[0].mxu0
        %5859 = vmatprep.mubr.f32.mxu0 0.0
        %5860 = vmatmul.mubr.f32.gmra.mrb[0].mxu0 %v3982
        %v5861 = vpop.f32.mrb[0].mxu0
        %v5862 = vadd.f32 0.0, %v5861
        %v5863 = vpop.f32.mrb[0].mxu0
        %5864 = vmatprep.mubr.f32.mxu0 0.0
        %5865 = vmatmul.mubr.f32.gmra.mrb[0].mxu0 %v3985
        %v5866 = vpop.f32.mrb[0].mxu0
        %v5867 = vadd.f32 0.0, %v5866
        %v5868 = vpop.f32.mrb[0].mxu0
        %5869 = vmatprep.mubr.f32.mxu0 0.0
        %5870 = vmatmul.mubr.f32.gmra.mrb[0].mxu0 %v3987
        %v5871 = vpop.f32.mrb[0].mxu0
        %v5872 = vadd.f32 0.0, %v5871
        %v5873 = vpop.f32.mrb[0].mxu0
        %5874 = vmatprep.mubr.f32.mxu0 0.0
        %5875 = vmatmul.mubr.f32.gmra.mrb[0].mxu0 %v3990
        %v5876 = vpop.f32.mrb[0].mxu0
        %v5877 = vadd.f32 0.0, %v5876
        %v5878 = vpop.f32.mrb[0].mxu0
        %5879 = vmatprep.mubr.f32.mxu0 0.0
        %5880 = vmatmul.mubr.f32.gmra.mrb[0].mxu0 %v3992
        %v5881 = vpop.f32.mrb[0].mxu0
        %v5882 = vadd.f32 0.0, %v5881
        %v5883 = vpop.f32.mrb[0].mxu0
        %5884 = vmatprep.mubr.f32.mxu0 0.0
        %5885 = vmatmul.mubr.f32.gmra.mrb[0].mxu0 %v3995
        %v5886 = vpop.f32.mrb[0].mxu0
        %v5887 = vadd.f32 0.0, %v5886
        %v5888 = vpop.f32.mrb[0].mxu0
        %5889 = vmatprep.mubr.f32.mxu0 0.0
        %5890 = vmatmul.mubr.f32.gmra.mrb[0].mxu0 %v3997
        %v5891 = vpop.f32.mrb[0].mxu0
        %v5892 = vadd.f32 0.0, %v5891
        %v5893 = vpop.f32.mrb[0].mxu0
        %5894 = vmatprep.mubr.f32.mxu0 0.0
        %5895 = vmatmul.mubr.f32.gmra.mrb[0].mxu0 %v4000
        %v5896 = vpop.f32.mrb[0].mxu0
        %v5897 = vadd.f32 0.0, %v5896
        %v5898 = vpop.f32.mrb[0].mxu0
        %5899 = vmatprep.mubr.f32.mxu0 0.0
        %5900 = vmatmul.mubr.f32.gmra.mrb[0].mxu0 %v4002
        %v5901 = vpop.f32.mrb[0].mxu0
        %v5902 = vadd.f32 0.0, %v5901
        %v5903 = vpop.f32.mrb[0].mxu0
        %5904 = vmatprep.mubr.f32.mxu0 0.0
        %5905 = vmatmul.mubr.f32.gmra.mrb[0].mxu0 %v4005
        %v5906 = vpop.f32.mrb[0].mxu0
        %v5907 = vadd.f32 0.0, %v5906
        %v5908 = vpop.f32.mrb[0].mxu0
        %5909 = vmatprep.mubr.f32.mxu0 0.0
        %5910 = vmatmul.mubr.f32.gmra.mrb[0].mxu0 %v4007
        %v5911 = vpop.f32.mrb[0].mxu0
        %v5912 = vadd.f32 0.0, %v5911
        %v5913 = vpop.f32.mrb[0].mxu0
        %5914 = vmatprep.mubr.f32.mxu0 0.0
        %5915 = vmatmul.mubr.f32.gmra.mrb[0].mxu0 %v4010
        %v5916 = vpop.f32.mrb[0].mxu0
        %v5917 = vadd.f32 0.0, %v5916
        %v5918 = vpop.f32.mrb[0].mxu0
        %5919 = vmatprep.mubr.f32.mxu0 0.0
        %5920 = vmatmul.mubr.f32.gmra.mrb[0].mxu0 %v4012
        %v5921 = vpop.f32.mrb[0].mxu0
        %v5922 = vadd.f32 0.0, %v5921
        %v5923 = vpop.f32.mrb[0].mxu0
        %5924 = vmatprep.mubr.f32.mxu0 0.0
        %5925 = vmatmul.mubr.f32.gmra.mrb[0].mxu0 %v4015
        %v5926 = vpop.f32.mrb[0].mxu0
        %v5927 = vadd.f32 0.0, %v5926
        %v5928 = vpop.f32.mrb[0].mxu0
        %5929 = vmatprep.mubr.f32.mxu0 0.0
        %5930 = vmatmul.mubr.f32.gmra.mrb[0].mxu0 %v4017
        %v5931 = vpop.f32.mrb[0].mxu0
        %v5932 = vadd.f32 0.0, %v5931
        %v5933 = vpop.f32.mrb[0].mxu0
        %5934 = vmatprep.mubr.f32.mxu0 0.0
        %5935 = vmatmul.mubr.f32.gmra.mrb[0].mxu0 %v4020
        %v5936 = vpop.f32.mrb[0].mxu0
        %v5937 = vadd.f32 0.0, %v5936
        %v5938 = vpop.f32.mrb[0].mxu0
        %5939 = vmatprep.mubr.f32.mxu0 0.0
        %5940 = vmatmul.mubr.f32.gmra.mrb[0].mxu0 %v4022
        %v5941 = vpop.f32.mrb[0].mxu0
        %v5942 = vadd.f32 0.0, %v5941
        %v5943 = vpop.f32.mrb[0].mxu0
        %5944 = vmatprep.mubr.f32.mxu0 0.0
        %5945 = vmatmul.mubr.f32.gmra.mrb[0].mxu0 %v4025
        %v5946 = vpop.f32.mrb[0].mxu0
        %v5947 = vadd.f32 0.0, %v5946
        %v5948 = vpop.f32.mrb[0].mxu0
        %5949 = vmatprep.mubr.f32.mxu0 0.0
        %5950 = vmatmul.mubr.f32.gmra.mrb[0].mxu0 %v4027
        %v5951 = vpop.f32.mrb[0].mxu0
        %v5952 = vadd.f32 0.0, %v5951
        %v5953 = vpop.f32.mrb[0].mxu0
        %5954 = vmatprep.mubr.f32.mxu0 0.0
        %5955 = vmatmul.mubr.f32.gmra.mrb[0].mxu0 %v4030
        %v5956 = vpop.f32.mrb[0].mxu0
        %v5957 = vadd.f32 0.0, %v5956
        %v5958 = vpop.f32.mrb[0].mxu0
        %5959 = vmatprep.mubr.f32.mxu0 0.0
        %5960 = vmatmul.mubr.f32.gmra.mrb[0].mxu0 %v4032
        %v5961 = vpop.f32.mrb[0].mxu0
        %v5962 = vadd.f32 0.0, %v5961
        %v5963 = vpop.f32.mrb[0].mxu0
        %5964 = vmatprep.mubr.f32.mxu0 0.0
        %5965 = vmatmul.mubr.f32.gmra.mrb[0].mxu0 %v4899
        %v5966 = vpop.f32.mrb[0].mxu0
        %v5967 = vadd.f32 0.0, %v5966
        %v5968 = vpop.f32.mrb[0].mxu0
        %5969 = vmatprep.mubr.f32.mxu0 0.0
        %5970 = vmatmul.mubr.f32.gmra.mrb[0].mxu0 %v4901
        %v5971 = vpop.f32.mrb[0].mxu0
        %v5972 = vadd.f32 0.0, %v5971
        %v5973 = vpop.f32.mrb[0].mxu0
        %5974 = vmatprep.mubr.f32.mxu0 0.0
        %5975 = vmatmul.mubr.f32.gmra.mrb[0].mxu0 %v5738
        %v5976 = vpop.f32.mrb[0].mxu0
        %v5977 = vadd.f32 0.0, %v5976
        %v5978 = vpop.f32.mrb[0].mxu0
        %5979 = vmatprep.mubr.f32.mxu0 0.0
        %5980 = vmatmul.mubr.f32.gmra.mrb[0].mxu0 %v5740
        %v5981 = vpop.f32.mrb[0].mxu0
        %v5982 = vadd.f32 0.0, %v5981
        %v5983 = vpop.f32.mrb[0].mxu0
        %5984 = vdwg.mxu0
        %v5985 = vadd.f32 %v5704, %v5827
        %v5986 = vadd.f32 %v5705, %v5832
        %v5987 = vadd.f32 %v5706, %v5837
        %v5988 = vadd.f32 %v5707, %v5842
        %v5989 = vadd.f32 %v5708, %v5847
        %v5990 = vadd.f32 %v5709, %v5852
        %v5991 = vadd.f32 %v5710, %v5857
        %v5992 = vadd.f32 %v5711, %v5862
        %v5993 = vadd.f32 %v5712, %v5867
        %v5994 = vadd.f32 %v5713, %v5872
        %v5995 = vadd.f32 %v5714, %v5877
        %v5996 = vadd.f32 %v5715, %v5882
        %v5997 = vadd.f32 %v5716, %v5887
        %v5998 = vadd.f32 %v5717, %v5892
        %v5999 = vadd.f32 %v5718, %v5897
        %v6000 = vadd.f32 %v5719, %v5902
        %v6001 = vadd.f32 %v5720, %v5907
        %v6002 = vadd.f32 %v5721, %v5912
        %v6003 = vadd.f32 %v5722, %v5917
        %v6004 = vadd.f32 %v5723, %v5922
        %v6005 = vadd.f32 %v5724, %v5927
        %v6006 = vadd.f32 %v5725, %v5932
        %v6007 = vadd.f32 %v5726, %v5937
        %v6008 = vadd.f32 %v5727, %v5942
        %v6009 = vadd.f32 %v5728, %v5947
        %v6010 = vadd.f32 %v5729, %v5952
        %v6011 = vadd.f32 %v5730, %v5957
        %v6012 = vadd.f32 %v5731, %v5962
        %v6013 = vadd.f32 %v5732, %v5967
        %v6014 = vadd.f32 %v5733, %v5972
        %v6015 = vadd.f32 %v5734, %v5977
        %v6016 = vadd.f32 %v5735, %v5982
        %v6017 = vld [vmem:[%s5] sm:$0x1]
        %v6019 = vlaneseq
        %v6020 = vshrl.u32 %v6019, 7
        %v6021 = vsub.s32 0, %v6020
        %v6022 = vrot.slane %v6017, %v6021
        %v6024 = vmul.f32 %v5985, %v6022
        %v6025 = vmul.f32 %v5986, %v6022
        %v6026 = vmul.f32 %v5987, %v6022
        %v6027 = vmul.f32 %v5988, %v6022
        %v6028 = vmul.f32 %v5989, %v6022
        %v6029 = vmul.f32 %v5990, %v6022
        %v6030 = vmul.f32 %v5991, %v6022
        %v6031 = vmul.f32 %v5992, %v6022
        %v6032 = vmul.f32 %v5993, %v6022
        %v6033 = vmul.f32 %v5994, %v6022
        %v6034 = vmul.f32 %v5995, %v6022
        %v6035 = vmul.f32 %v5996, %v6022
        %v6036 = vmul.f32 %v5997, %v6022
        %v6037 = vmul.f32 %v5998, %v6022
        %v6038 = vmul.f32 %v5999, %v6022
        %v6039 = vmul.f32 %v6000, %v6022
        %v6040 = vmul.f32 %v6001, %v6022
        %v6041 = vmul.f32 %v6002, %v6022
        %v6042 = vmul.f32 %v6003, %v6022
        %v6043 = vmul.f32 %v6004, %v6022
        %v6044 = vmul.f32 %v6005, %v6022
        %v6045 = vmul.f32 %v6006, %v6022
        %v6046 = vmul.f32 %v6007, %v6022
        %v6047 = vmul.f32 %v6008, %v6022
        %v6048 = vmul.f32 %v6009, %v6022
        %v6049 = vmul.f32 %v6010, %v6022
        %v6050 = vmul.f32 %v6011, %v6022
        %v6051 = vmul.f32 %v6012, %v6022
        %v6052 = vmul.f32 %v6013, %v6022
        %v6053 = vmul.f32 %v6014, %v6022
        %v6054 = vmul.f32 %v6015, %v6022
        %v6055 = vmul.f32 %v6016, %v6022
        %v6056 = vld [vmem:[%s6] sm:$0x1]
        %v6058 = vlaneseq
        %v6059 = vshrl.u32 %v6058, 7
        %v6060 = vsub.s32 0, %v6059
        %v6061 = vrot.slane %v6056, %v6060
        %v6063 = vadd.f32 %v6024, %v6061
        %v6064 = vadd.f32 %v6025, %v6061
        %v6065 = vadd.f32 %v6026, %v6061
        %v6066 = vadd.f32 %v6027, %v6061
        %v6067 = vadd.f32 %v6028, %v6061
        %v6068 = vadd.f32 %v6029, %v6061
        %v6069 = vadd.f32 %v6030, %v6061
        %v6070 = vadd.f32 %v6031, %v6061
        %v6071 = vadd.f32 %v6032, %v6061
        %v6072 = vadd.f32 %v6033, %v6061
        %v6073 = vadd.f32 %v6034, %v6061
        %v6074 = vadd.f32 %v6035, %v6061
        %v6075 = vadd.f32 %v6036, %v6061
        %v6076 = vadd.f32 %v6037, %v6061
        %v6077 = vadd.f32 %v6038, %v6061
        %v6078 = vadd.f32 %v6039, %v6061
        %v6079 = vadd.f32 %v6040, %v6061
        %v6080 = vadd.f32 %v6041, %v6061
        %v6081 = vadd.f32 %v6042, %v6061
        %v6082 = vadd.f32 %v6043, %v6061
        %v6083 = vadd.f32 %v6044, %v6061
        %v6084 = vadd.f32 %v6045, %v6061
        %v6085 = vadd.f32 %v6046, %v6061
        %v6086 = vadd.f32 %v6047, %v6061
        %v6087 = vadd.f32 %v6048, %v6061
        %v6088 = vadd.f32 %v6049, %v6061
        %v6089 = vadd.f32 %v6050, %v6061
        %v6090 = vadd.f32 %v6051, %v6061
        %v6091 = vadd.f32 %v6052, %v6061
        %v6092 = vadd.f32 %v6053, %v6061
        %v6093 = vadd.f32 %v6054, %v6061
        %v6094 = vadd.f32 %v6055, %v6061
        %v6095 = vadd.f32 %v6063, %v476
        %v6096 = vadd.f32 %v6064, %v478
        %v6097 = vadd.f32 %v6065, %v481
        %v6098 = vadd.f32 %v6066, %v483
        %v6099 = vadd.f32 %v6067, %v486
        %v6100 = vadd.f32 %v6068, %v488
        %v6101 = vadd.f32 %v6069, %v491
        %v6102 = vadd.f32 %v6070, %v493
        %v6103 = vadd.f32 %v6071, %v496
        %v6104 = vadd.f32 %v6072, %v498
        %v6105 = vadd.f32 %v6073, %v501
        %v6106 = vadd.f32 %v6074, %v503
        %v6107 = vadd.f32 %v6075, %v506
        %v6108 = vadd.f32 %v6076, %v508
        %v6109 = vadd.f32 %v6077, %v511
        %v6110 = vadd.f32 %v6078, %v513
        %v6111 = vadd.f32 %v6079, %v516
        %v6112 = vadd.f32 %v6080, %v518
        %v6113 = vadd.f32 %v6081, %v521
        %v6114 = vadd.f32 %v6082, %v523
        %v6115 = vadd.f32 %v6083, %v526
        %v6116 = vadd.f32 %v6084, %v528
        %v6117 = vadd.f32 %v6085, %v531
        %v6118 = vadd.f32 %v6086, %v533
        %v6119 = vadd.f32 %v6087, %v536
        %v6120 = vadd.f32 %v6088, %v538
        %v6121 = vadd.f32 %v6089, %v541
        %v6122 = vadd.f32 %v6090, %v543
        %v6123 = vadd.f32 %v6091, %v546
        %v6124 = vadd.f32 %v6092, %v548
        %v6125 = vadd.f32 %v6093, %v1714
        %v6126 = vadd.f32 %v6094, %v1716
        %v6127 = vmax.f32 %v6095, 0.0
        %v6128 = vmax.f32 %v6096, 0.0
        %v6129 = vmax.f32 %v6097, 0.0
        %v6130 = vmax.f32 %v6098, 0.0
        %v6131 = vmax.f32 %v6099, 0.0
        %v6132 = vmax.f32 %v6100, 0.0
        %v6133 = vmax.f32 %v6101, 0.0
        %v6134 = vmax.f32 %v6102, 0.0
        %v6135 = vmax.f32 %v6103, 0.0
        %v6136 = vmax.f32 %v6104, 0.0
        %v6137 = vmax.f32 %v6105, 0.0
        %v6138 = vmax.f32 %v6106, 0.0
        %v6139 = vmax.f32 %v6107, 0.0
        %v6140 = vmax.f32 %v6108, 0.0
        %v6141 = vmax.f32 %v6109, 0.0
        %v6142 = vmax.f32 %v6110, 0.0
        %v6143 = vmax.f32 %v6111, 0.0
        %v6144 = vmax.f32 %v6112, 0.0
        %v6145 = vmax.f32 %v6113, 0.0
        %v6146 = vmax.f32 %v6114, 0.0
        %v6147 = vmax.f32 %v6115, 0.0
        %v6148 = vmax.f32 %v6116, 0.0
        %v6149 = vmax.f32 %v6117, 0.0
        %v6150 = vmax.f32 %v6118, 0.0
        %v6151 = vmax.f32 %v6119, 0.0
        %v6152 = vmax.f32 %v6120, 0.0
        %v6153 = vmax.f32 %v6121, 0.0
        %v6154 = vmax.f32 %v6122, 0.0
        %v6155 = vmax.f32 %v6123, 0.0
        %v6156 = vmax.f32 %v6124, 0.0
        %v6157 = vmax.f32 %v6125, 0.0
        %v6158 = vmax.f32 %v6126, 0.0
        %6159 = vst [vmem:[%s286] sm:$0xff] %v6127
        %6160 = vst [vmem:[%s286 + $0x8] sm:$0xff] %v6128
        %6161 = vst [vmem:[%s286 + $0x10] sm:$0xff] %v6129
        %6162 = vst [vmem:[%s286 + $0x18] sm:$0xff] %v6130
        %6163 = vst [vmem:[%s286 + $0x20] sm:$0xff] %v6131
        %6164 = vst [vmem:[%s286 + $0x28] sm:$0xff] %v6132
        %6165 = vst [vmem:[%s286 + $0x30] sm:$0xff] %v6133
        %6166 = vst [vmem:[%s286 + $0x38] sm:$0xff] %v6134
        %6167 = vst [vmem:[%s286 + $0x40] sm:$0xff] %v6135
        %6168 = vst [vmem:[%s286 + $0x48] sm:$0xff] %v6136
        %6169 = vst [vmem:[%s286 + $0x50] sm:$0xff] %v6137
        %6170 = vst [vmem:[%s286 + $0x58] sm:$0xff] %v6138
        %6171 = vst [vmem:[%s286 + $0x60] sm:$0xff] %v6139
        %6172 = vst [vmem:[%s286 + $0x68] sm:$0xff] %v6140
        %6173 = vst [vmem:[%s286 + $0x70] sm:$0xff] %v6141
        %6174 = vst [vmem:[%s286 + $0x78] sm:$0xff] %v6142
        %6175 = vst [vmem:[%s286 + $0x80] sm:$0xff] %v6143
        %6176 = vst [vmem:[%s286 + $0x88] sm:$0xff] %v6144
        %6177 = vst [vmem:[%s286 + $0x90] sm:$0xff] %v6145
        %6178 = vst [vmem:[%s286 + $0x98] sm:$0xff] %v6146
        %6179 = vst [vmem:[%s286 + $0xa0] sm:$0xff] %v6147
        %6180 = vst [vmem:[%s286 + $0xa8] sm:$0xff] %v6148
        %6181 = vst [vmem:[%s286 + $0xb0] sm:$0xff] %v6149
        %6182 = vst [vmem:[%s286 + $0xb8] sm:$0xff] %v6150
        %6183 = vst [vmem:[%s286 + $0xc0] sm:$0xff] %v6151
        %6184 = vst [vmem:[%s286 + $0xc8] sm:$0xff] %v6152
        %6185 = vst [vmem:[%s286 + $0xd0] sm:$0xff] %v6153
        %6186 = vst [vmem:[%s286 + $0xd8] sm:$0xff] %v6154
        %6187 = vst [vmem:[%s286 + $0xe0] sm:$0xff] %v6155
        %6188 = vst [vmem:[%s286 + $0xe8] sm:$0xff] %v6156
        %6189 = vst [vmem:[%s286 + $0xf0] sm:$0xff] %v6157
        %6190 = vst [vmem:[%s286 + $0xf8] sm:$0xff] %v6158
        %s6191 = sand.u32 %s182, 1
        %s6192 = scalar_lea.sflag [#allocation5], %s6191
        %s6193 = sand.u32 %s182, 1
        %s6194 = smul.addr %s6193, 256
        %s6195 = scalar_lea.vmem [#allocation6], %s6194
        // Predicated region
        $region57: #{tpu_custom_call.1} parent=47 // pred_check
          %p6196 = pneg %p192
        $region58: #{tpu_custom_call.1} parent=47 // pred_check_branch
          %6198 = sbr.rel (%p6196) target = $region60
        $region59: #{tpu_custom_call.1} parent=47 // pred_region
          %s6200 = ssub.s32 4096, 4096
          %6201 = vsyncadd %s6192, %s6200
          %s6202 = smul.addr %s22, 32
          %s6203 = smul.addr %s6202, 128
          %s6204 = scalar_lea.hbm %s7, %s6203
          %s6205 = sshll.u32 %s6195, 4
          %s6206 = int_to_ptr.vmem [resolvable:$true] %s6205
          %6211 = dma.vmem_to_hbm [thread:$0]  %s6206, 4096, %s6204, %s6192, 128, 128, 8
        $region60: #{tpu_custom_call.1} parent=47 // pred_fallthru
          _
      $region48: #{tpu_custom_call.1} parent=5 // pred_fallthru
        _
      %p6212 = scmp.le.s32.totalorder 2, %s17
      // Predicated region
      $region61: #{tpu_custom_call.1} parent=5 // pred_check
        %p6213 = pneg %p6212
      $region62: #{tpu_custom_call.1} parent=5 // pred_check_branch
        %6215 = sbr.rel (%p6213) target = $region64
      $region63: #{tpu_custom_call.1} parent=5 // pred_region
        %s6216 = ssub.s32 %s17, 2
        // Predicated region
        $region65: #{tpu_custom_call.1} parent=63 // pred_check
          %p6217 = pneg %p198
        $region66: #{tpu_custom_call.1} parent=63 // pred_check_branch
          %6219 = sbr.rel (%p6217) target = $region68
        $region67: #{tpu_custom_call.1} parent=63 // pred_region
          %s6220 = sand.u32 %s183, 1
          %s6221 = scalar_lea.sflag [#allocation5], %s6220
          %s6222 = sand.u32 %s183, 1
          %s6223 = smul.addr %s6222, 256
          %s6224 = scalar_lea.vmem [#allocation6], %s6223
          %6225 = dma.done %s6221, 4096
        $region68: #{tpu_custom_call.1} parent=63 // pred_fallthru
          _
      $region64: #{tpu_custom_call.1} parent=5 // pred_fallthru
        _
    $region6: #{tpu_custom_call.1} parent=1 // loop_footer
      %s21 = sadd.s32 1, %s17
    $region7: #{tpu_custom_call.1} parent=1 // loop_footer_branch
      %16 = sbr.rel target = $region3
    $region8: #{tpu_custom_call.1} parent=1 // loop_exit
      _
    %6226 = vsyncpa [#allocation4], 1
    %s6227 = scalar_lea.sflag [#allocation4], 1
    %6228 = vsyncpa %s6227, 1
    %6229 = vsyncpa [#allocation5], 1
    %s6230 = scalar_lea.sflag [#allocation5], 1
    %6231 = vsyncpa %s6230, 1

</llo_original>
